<compile_context>
chip_gen: v7x
topology: tpu7x:2x2x1
jax: 0.10.0
libtpu: 0.0.40
codegen_flags: <defaults>
</compile_context>

<pallas_src>
import functools

import jax
import jax.numpy as jnp
from jax.experimental import pallas as pl
from jax.experimental.pallas import tpu as pltpu

_LANE = 128          # channel padding target (lane width)
_TM_CAP_MM = 512     # matmul-pass row-tile cap (fits v7x's 64 MiB VMEM even at
                     # cep=2048; v5e/v6e could raise to 1024)
_TM_CAP_EW = 1024    # elementwise-pass row-tile cap (HBM-bound; bigger tiles
                     # amortize the ~0.35us per-grid-step overhead)
_ACC_BUDGET = 512 * 1024   # target f32 accumulator bytes for the 3x3 conv


def _round_up(x, m):
    return (x + m - 1) // m * m


def _choose_tm(m, cap):
    """Largest row tile <= cap, multiple of 8, dividing m if possible."""
    cap = max(8, min(cap, _round_up(m, 8)))
    start = (cap // 8) * 8
    for tm in range(start, 7, -8):
        if m % tm == 0:
            return tm
    return start  # caller zero-pads m up to a multiple of tm


def _choose_th(hout, wout, cout):
    """Largest divisor of hout keeping the f32 accumulator <= _ACC_BUDGET."""
    cap = max(1, min(hout, _ACC_BUDGET // max(1, wout * cout * 4)))
    for th in range(cap, 0, -1):
        if hout % th == 0:
            return th
    return 1


_VMEM_LIMIT = None


def _vmem_limit_bytes():
    """Per-generation scoped-VMEM limit (~48 MiB on v7x, 96 MiB on v5e/v6e)."""
    global _VMEM_LIMIT
    if _VMEM_LIMIT is None:
        try:
            cap = int(pltpu.get_tpu_info().vmem_capacity_bytes)
        except Exception:            # query unavailable -> safe everywhere
            cap = 64 << 20
        _VMEM_LIMIT = int(min(max(cap - (16 << 20), 32 << 20), 96 << 20))
    return _VMEM_LIMIT


def _cparams(sem):
    return pltpu.CompilerParams(dimension_semantics=sem,
                                vmem_limit_bytes=_vmem_limit_bytes())


# ---------------------------------------------------------------------------
# Pallas kernels
# ---------------------------------------------------------------------------
def _mm_stats_kernel(x_ref, w_ref, y_ref, st_ref):
    """1x1 conv pass: y = x @ w (bf16 in, f32 acc); bf16 pre-BN store + f32
    per-tile BN partial sums taken from the f32 accumulator."""
    y = jnp.dot(x_ref[...], w_ref[...], preferred_element_type=jnp.float32)
    y_ref[...] = y.astype(y_ref.dtype)
    st_ref[0:1, :] = jnp.sum(y, axis=0, keepdims=True)
    st_ref[1:2, :] = jnp.sum(y * y, axis=0, keepdims=True)


def _affine_mm_stats_kernel(y_ref, s_ref, t_ref, w_ref, o_ref, st_ref, *,
                            rows_valid, tm):
    """conv3 pass with the previous conv's BN+ReLU fused in:
    x = relu(y*s + t) (f32), matmul in bf16, bf16 pre-BN store + stats."""
    x = jnp.maximum(y_ref[...].astype(jnp.float32) * s_ref[...] + t_ref[...], 0.0)
    if rows_valid is not None:        # zero any M-padding rows (stats safety)
        row = (pl.program_id(0) * tm
               + jax.lax.broadcasted_iota(jnp.int32, x.shape, 0))
        x = jnp.where(row < rows_valid, x, 0.0)
    y = jnp.dot(x.astype(jnp.bfloat16), w_ref[...],
                preferred_element_type=jnp.float32)
    o_ref[...] = y.astype(o_ref.dtype)
    st_ref[0:1, :] = jnp.sum(y, axis=0, keepdims=True)
    st_ref[1:2, :] = jnp.sum(y * y, axis=0, keepdims=True)


def _conv3x3_fused_kernel(y1_ref, s_ref, t_ref, w_ref, y_ref, st_ref, xpad_ref,
                          *, stride, th, wout, h, w):
    """3x3 conv (stride, pad=1) with conv1's BN+ReLU and the halo pad applied
    in-kernel on a VMEM scratch; 3 merged-K (K=3*C) MXU matmuls per row tile."""
    r = pl.program_id(1)
    cp = xpad_ref.shape[-1]
    cout = y_ref.shape[-1]

    @pl.when(r == 0)
    def _():
        # Build the spatially padded post-BN+ReLU image once per batch image.
        xpad_ref[...] = jnp.zeros_like(xpad_ref)
        a = y1_ref[...].astype(jnp.float32) * s_ref[...] + t_ref[...]
        xpad_ref[1:h + 1, 1:w + 1, :] = jnp.maximum(a, 0.0).astype(xpad_ref.dtype)

    row0 = pl.multiple_of(r * (th * stride), th * stride)
    acc = jnp.zeros((th * wout, cout), jnp.float32)
    for ky in range(3):
        wins = []
        for kx in range(3):
            if stride == 1:
                win = xpad_ref[pl.ds(row0 + ky, th), pl.ds(kx, wout), :]
            else:   # stride folded into the in-kernel window read
                win = xpad_ref[pl.ds(row0 + ky, th, stride=stride),
                               pl.ds(kx, wout, stride=stride), :]
            wins.append(win.reshape(th * wout, cp))
        xcat = jnp.concatenate(wins, axis=-1)          # (th*wout, 3*cp)
        acc = acc + jnp.dot(xcat, w_ref[ky], preferred_element_type=jnp.float32)
    y_ref[...] = acc.reshape(th, wout, cout).astype(y_ref.dtype)
    st_ref[0:1, :] = jnp.sum(acc, axis=0, keepdims=True)
    st_ref[1:2, :] = jnp.sum(acc * acc, axis=0, keepdims=True)


def _affine_add_relu_kernel(y_ref, s_ref, t_ref, r_ref, sr_ref, tr_ref, o_ref):
    """Final pass: out = relu( (y*s + t) + (res*sr + tr) )."""
    main = y_ref[...].astype(jnp.float32) * s_ref[...] + t_ref[...]
    res = r_ref[...].astype(jnp.float32) * sr_ref[...] + tr_ref[...]
    o_ref[...] = jnp.maximum(main + res, 0.0).astype(o_ref.dtype)


# ---------------------------------------------------------------------------
# pallas_call wrappers
# ---------------------------------------------------------------------------
def _tile_counts(m, tm, gm):
    last = m - (gm - 1) * tm
    return jnp.concatenate([jnp.full((gm - 1,), float(tm), jnp.float32),
                            jnp.full((1,), float(last), jnp.float32)])


def _matmul_stats(x2d, w, *, out_dtype=jnp.bfloat16, tm_cap=_TM_CAP_MM):
    m, k = x2d.shape
    ncols = w.shape[1]
    tm = _choose_tm(m, tm_cap)
    mp = _round_up(m, tm)
    if mp != m:                    # zero rows contribute nothing to the stats
        x2d = jnp.pad(x2d, ((0, mp - m), (0, 0)))
    gm = mp // tm
    y, stats = pl.pallas_call(
        _mm_stats_kernel,
        out_shape=(jax.ShapeDtypeStruct((mp, ncols), out_dtype),
                   jax.ShapeDtypeStruct((gm, 2, ncols), jnp.float32)),
        grid=(gm,),
        in_specs=[pl.BlockSpec((tm, k), lambda i: (i, 0)),
                  pl.BlockSpec((k, ncols), lambda i: (0, 0))],
        out_specs=(pl.BlockSpec((tm, ncols), lambda i: (i, 0)),
                   pl.BlockSpec((None, 2, ncols), lambda i: (i, 0, 0))),
        compiler_params=_cparams(("parallel",)),
    )(x2d, w)
    if mp != m:
        y = y[:m]
    return y, stats, _tile_counts(m, tm, gm)


def _affine_matmul_stats(y2d, s, t, w, *, out_dtype=jnp.bfloat16,
                         tm_cap=_TM_CAP_MM):
    m, k = y2d.shape
    ncols = w.shape[1]
    tm = _choose_tm(m, tm_cap)
    mp = _round_up(m, tm)
    if mp != m:
        y2d = jnp.pad(y2d, ((0, mp - m), (0, 0)))
    gm = mp // tm
    kern = functools.partial(_affine_mm_stats_kernel,
                             rows_valid=(m if mp != m else None), tm=tm)
    y, stats = pl.pallas_call(
        kern,
        out_shape=(jax.ShapeDtypeStruct((mp, ncols), out_dtype),
                   jax.ShapeDtypeStruct((gm, 2, ncols), jnp.float32)),
        grid=(gm,),
        in_specs=[pl.BlockSpec((tm, k), lambda i: (i, 0)),
                  pl.BlockSpec((1, k), lambda i: (0, 0)),
                  pl.BlockSpec((1, k), lambda i: (0, 0)),
                  pl.BlockSpec((k, ncols), lambda i: (0, 0))],
        out_specs=(pl.BlockSpec((tm, ncols), lambda i: (i, 0)),
                   pl.BlockSpec((None, 2, ncols), lambda i: (i, 0, 0))),
        compiler_params=_cparams(("parallel",)),
    )(y2d, s, t, w)
    if mp != m:
        y = y[:m]
    return y, stats, _tile_counts(m, tm, gm)


def _conv3x3_bn_fused(y1_pre, s1, t1, w_taps, *, stride):
    """y1_pre: (n, h, w, cp) pre-BN bf16 conv1 output.  Applies conv1's BN
    affine + ReLU and the halo pad in-kernel, then the 3x3 conv (stride)."""
    n, h, w, cp = y1_pre.shape
    cout = w_taps.shape[-1]
    hout = (h - 1) // stride + 1
    wout = (w - 1) // stride + 1
    th = _choose_th(hout, wout, cout)
    n_rt = hout // th
    kern = functools.partial(_conv3x3_fused_kernel, stride=stride, th=th,
                             wout=wout, h=h, w=w)
    y2, stats = pl.pallas_call(
        kern,
        out_shape=(jax.ShapeDtypeStruct((n, hout, wout, cout), jnp.bfloat16),
                   jax.ShapeDtypeStruct((n, n_rt, 2, cout), jnp.float32)),
        grid=(n, n_rt),
        in_specs=[pl.BlockSpec((None, h, w, cp), lambda b, r: (b, 0, 0, 0)),
                  pl.BlockSpec((1, cp), lambda b, r: (0, 0)),
                  pl.BlockSpec((1, cp), lambda b, r: (0, 0)),
                  pl.BlockSpec((3, 3 * cp, cout), lambda b, r: (0, 0, 0))],
        out_specs=(pl.BlockSpec((None, th, wout, cout),
                                lambda b, r: (b, r, 0, 0)),
                   pl.BlockSpec((None, None, 2, cout),
                                lambda b, r: (b, r, 0, 0))),
        scratch_shapes=[pltpu.VMEM((h + 2, w + 2, cp), jnp.bfloat16)],
        compiler_params=_cparams(("parallel", "arbitrary")),
    )(y1_pre, s1, t1, w_taps)
    counts = jnp.full((n * n_rt,), float(th * wout), jnp.float32)
    return y2, stats, counts


def _affine_add_relu(y2d, s, t, res2d, sr, tr, *, out_dtype,
                     tm_cap=_TM_CAP_EW):
    m, ncols = y2d.shape
    tm = _choose_tm(m, tm_cap)
    mp = _round_up(m, tm)
    if mp != m:
        y2d = jnp.pad(y2d, ((0, mp - m), (0, 0)))
        res2d = jnp.pad(res2d, ((0, mp - m), (0, 0)))
    out = pl.pallas_call(
        _affine_add_relu_kernel,
        out_shape=jax.ShapeDtypeStruct((mp, ncols), out_dtype),
        grid=(mp // tm,),
        in_specs=[pl.BlockSpec((tm, ncols), lambda i: (i, 0)),
                  pl.BlockSpec((1, ncols), lambda i: (0, 0)),
                  pl.BlockSpec((1, ncols), lambda i: (0, 0)),
                  pl.BlockSpec((tm, ncols), lambda i: (i, 0)),
                  pl.BlockSpec((1, ncols), lambda i: (0, 0)),
                  pl.BlockSpec((1, ncols), lambda i: (0, 0))],
        out_specs=pl.BlockSpec((tm, ncols), lambda i: (i, 0)),
        compiler_params=_cparams(("parallel",)),
    )(y2d, s, t, res2d, sr, tr)
    return out[:m] if mp != m else out


# ---------------------------------------------------------------------------
# BN stats -> fused per-channel scale/shift (grouped mean/M2 combine)
# ---------------------------------------------------------------------------
def _bn_scale_shift(stats, counts, gamma, beta, eps):
    c = stats.shape[-1]
    stats = stats.reshape(-1, 2, c)
    counts = counts.reshape(-1, 1)
    m = jnp.sum(counts)
    sum_i = stats[:, 0, :]
    sq_i = stats[:, 1, :]
    mean_i = sum_i / counts
    m2_i = jnp.maximum(sq_i - counts * mean_i * mean_i, 0.0)
    mu = jnp.sum(sum_i, axis=0) / m
    m2 = jnp.sum(m2_i, axis=0) + jnp.sum(counts * (mean_i - mu) ** 2, axis=0)
    var = m2 / m                                   # biased, as PyTorch
    s = gamma * jax.lax.rsqrt(var + eps)
    t = beta - mu * s
    return s.reshape(1, -1), t.reshape(1, -1)


# ---------------------------------------------------------------------------
# Padding helpers (lane-dense channel layout; zero channels contribute zero)
# ---------------------------------------------------------------------------
def _pad_last(a, target):
    if a.shape[-1] == target:
        return a
    pad = [(0, 0)] * a.ndim
    pad[-1] = (0, target - a.shape[-1])
    return jnp.pad(a, pad)


def _pad2(w, rows, cols):
    return jnp.pad(w, ((0, rows - w.shape[0]), (0, cols - w.shape[1])))


# ---------------------------------------------------------------------------
# Bottleneck forward
# ---------------------------------------------------------------------------
def bottleneck_forward_nhwc(x, params, *, stride=1, downsample=False,
                            eps=1e-5, out_dtype=jnp.float32):
    n, h, w, cin = x.shape
    c = params["w1"].shape[1]
    cexp = params["w3"].shape[1]
    if not downsample:
        assert stride == 1 and cin == cexp, (
            "identity shortcut requires stride == 1 and in_channels == channels*4")

    cinp = _round_up(cin, _LANE)
    cp = _round_up(c, _LANE)
    cep = _round_up(cexp, _LANE)
    hout = (h - 1) // stride + 1
    wout = (w - 1) // stride + 1
    m1 = n * h * w
    m2 = n * hout * wout

    # lane-dense bf16 weights (padded channels are zero -> contribute nothing)
    w1p = _pad2(params["w1"], cinp, cp).astype(jnp.bfloat16)
    w3p = _pad2(params["w3"], cp, cep).astype(jnp.bfloat16)
    # (3,3,ci,co) -> pad -> (3, 3*cp, cp): per ky the 3 kx taps are concatenated
    # along input channels (matches the in-kernel window concat / merged-K dot).
    w2p = jnp.pad(params["w2"], ((0, 0), (0, 0), (0, cp - c), (0, cp - c))
                  ).reshape(3, 3 * cp, cp).astype(jnp.bfloat16)
    g1 = _pad_last(params["g1"], cp); b1 = _pad_last(params["b1"], cp)
    g2 = _pad_last(params["g2"], cp); b2 = _pad_last(params["b2"], cp)
    g3 = _pad_last(params["g3"], cep); b3 = _pad_last(params["b3"], cep)

    xpad = _pad_last(x, cinp)                                # (n,h,w,cinp)
    x2d_bf = xpad.reshape(m1, cinp).astype(jnp.bfloat16)     # MXU input

    # conv1 (1x1): bf16 pre-BN activation + BN partials (affine fused downstream)
    y1, st1, cnt1 = _matmul_stats(x2d_bf, w1p)
    s1, t1 = _bn_scale_shift(st1, cnt1, g1, b1, eps)

    # conv2 (3x3, stride, pad=1): conv1 BN+ReLU + halo pad applied in-kernel on
    # a VMEM scratch; merged-K taps; row-tiled f32 accumulator.
    y2, st2, cnt2 = _conv3x3_bn_fused(y1.reshape(n, h, w, cp), s1, t1, w2p,
                                      stride=stride)
    s2, t2 = _bn_scale_shift(st2, cnt2, g2, b2, eps)

    # conv3 (1x1): conv2's BN+ReLU fused into the matmul pass.
    y3, st3, cnt3 = _affine_matmul_stats(y2.reshape(m2, cp), s2, t2, w3p)
    s3, t3 = _bn_scale_shift(st3, cnt3, g3, b3, eps)

    # shortcut branch (pre-BN output in bf16; its BN affine fused into the
    # final elementwise pass).
    if downsample:
        gs = _pad_last(params["gs"], cep); bs = _pad_last(params["bs"], cep)
        wsp = _pad2(params["ws"], cinp, cep).astype(jnp.bfloat16)
        if stride == 1:
            xs_bf = x2d_bf
        else:   # wrapper-side strided slice, regular M-tiled matmul pass
            xs_bf = xpad[:, ::stride, ::stride, :].reshape(m2, cinp
                                                           ).astype(jnp.bfloat16)
        res, sts, cnts = _matmul_stats(xs_bf, wsp)
        s_r, t_r = _bn_scale_shift(sts, cnts, gs, bs, eps)
    else:
        res = x2d_bf                                        # identity (bf16)
        s_r = jnp.ones((1, cep), jnp.float32)
        t_r = jnp.zeros((1, cep), jnp.float32)

    # conv3 BN + residual BN + add + ReLU in one elementwise pass
    out2d = _affine_add_relu(y3, s3, t3, res, s_r, t_r, out_dtype=out_dtype)
    return out2d.reshape(n, hout, wout, cep)[..., :cexp]


def bottleneck_forward(x_nchw, params, *, stride=1, downsample=False, eps=1e-5):
    # NCHW public API to match PyTorch; when chaining blocks keep NHWC and call
    # bottleneck_forward_nhwc directly (out_dtype=jnp.bfloat16) to avoid
    # per-block transposes and f32 HBM writes of the block output.
    x = jnp.transpose(x_nchw, (0, 2, 3, 1))
    out = bottleneck_forward_nhwc(x, params, stride=stride,
                                  downsample=downsample, eps=eps,
                                  out_dtype=jnp.float32)
    return jnp.transpose(out, (0, 3, 1, 2))


# ---------------------------------------------------------------------------
# Deterministic parameter init (kaiming-normal convs, default BN gamma/beta)
# ---------------------------------------------------------------------------
def init_params(key, in_channels, channels, expansion=4):
    k1, k2, k3, k4 = jax.random.split(key, 4)

    def kaiming(k, shape, fan_in):
        return jax.random.normal(k, shape, jnp.float32) * jnp.sqrt(2.0 / fan_in)

    cexp = channels * expansion
    ones = lambda ch: jnp.ones((ch,), jnp.float32)
    zeros = lambda ch: jnp.zeros((ch,), jnp.float32)
    return {
        "w1": kaiming(k1, (in_channels, channels), in_channels),
        "g1": ones(channels), "b1": zeros(channels),
        "w2": kaiming(k2, (3, 3, channels, channels), 9 * channels),
        "g2": ones(channels), "b2": zeros(channels),
        "w3": kaiming(k3, (channels, cexp), channels),
        "g3": ones(cexp), "b3": zeros(cexp),
        "ws": kaiming(k4, (in_channels, cexp), in_channels),
        "gs": ones(cexp), "bs": zeros(cexp),
    }


# ---------------------------------------------------------------------------
# Pure-JAX f32 reference (loose numerical sanity check; kernel path is bf16)
# ---------------------------------------------------------------------------
def _reference_forward(x_nchw, params, *, stride=1, downsample=False, eps=1e-5):
    x = jnp.transpose(x_nchw, (0, 2, 3, 1))
    dn = ("NHWC", "HWIO", "NHWC")

    def conv(v, wgt, s, pad):
        return jax.lax.conv_general_dilated(v, wgt, (s, s), pad,
                                            dimension_numbers=dn)

    def bn(v, g, b):
        mean = v.mean(axis=(0, 1, 2))
        var = v.var(axis=(0, 1, 2))
        return (v - mean) * jax.lax.rsqrt(var + eps) * g + b

    y = jax.nn.relu(bn(conv(x, params["w1"][None, None], 1, "VALID"),
                       params["g1"], params["b1"]))
    y = jax.nn.relu(bn(conv(y, params["w2"], stride, ((1, 1), (1, 1))),
                       params["g2"], params["b2"]))
    y = bn(conv(y, params["w3"][None, None], 1, "VALID"),
           params["g3"], params["b3"])
    if downsample:
        sc = bn(conv(x, params["ws"][None, None], stride, "VALID"),
                params["gs"], params["bs"])
    else:
        sc = x
    out = jax.nn.relu(y + sc)
    return jnp.transpose(out, (0, 3, 1, 2))


if __name__ == "__main__":
    key = jax.random.PRNGKey(0)
    kx, kp = jax.random.split(key)

    in_channels, channels, stride, downsample = 8, 4, 1, True
    x = jax.random.normal(kx, (2, in_channels, 16, 16), jnp.float32)  # NCHW
    params = init_params(kp, in_channels, channels)

    fwd = jax.jit(functools.partial(
        bottleneck_forward, stride=stride, downsample=downsample))
    out = fwd(x, params)
    jax.block_until_ready(out)

    assert out.shape == (2, channels * 4, 16, 16), out.shape
    assert bool(jnp.all(jnp.isfinite(out))), "non-finite output"
    assert bool(jnp.all(out >= 0.0)), "ReLU output must be non-negative"

    # loose check vs a pure-JAX f32 reference (kernel stores bf16 intermediates)
    ref = _reference_forward(x, params, stride=stride, downsample=downsample)
    assert bool(jnp.allclose(out, ref, rtol=0.1, atol=0.2)), (
        "max abs diff vs reference: %f" % float(jnp.max(jnp.abs(out - ref))))

    print("KERNEL_OK")
</pallas_src>

<mosaic_0001>
module attributes {stable_mosaic.version = 11 : i64} {
  func.func @_mm_stats_kernel(%arg0: i32, %arg1: memref<512x128xbf16, #tpu.memory_space<vmem>>, %arg2: memref<128x128xbf16, #tpu.memory_space<vmem>>, %arg3: memref<512x128xbf16, #tpu.memory_space<vmem>>, %arg4: memref<1x2x128xf32, #tpu.memory_space<vmem>>) attributes {dimension_semantics = [#tpu.dimension_semantics<parallel>], iteration_bounds = array<i64: 1>, scalar_prefetch = 0 : i64, scratch_operands = 0 : i64, tpu.core_type = #tpu.core_type<tc>, window_params = [{transform_indices = @transform_0, window_bounds = array<i64: 512, 128>}, {pipeline_mode = #tpu.pipeline_mode<synchronous>, transform_indices = @transform_1, window_bounds = array<i64: 128, 128>}, {transform_indices = @transform_2, window_bounds = array<i64: 512, 128>}, {transform_indices = @transform_3, window_bounds = array<i64: 1, 2, 128>}]} {
    %c0 = arith.constant 0 : index
    %c0_0 = arith.constant 0 : index
    %0 = vector.load %arg1[%c0, %c0_0] : memref<512x128xbf16, #tpu.memory_space<vmem>>, vector<512x128xbf16>
    %c0_1 = arith.constant 0 : index
    %c0_2 = arith.constant 0 : index
    %1 = vector.load %arg2[%c0_1, %c0_2] : memref<128x128xbf16, #tpu.memory_space<vmem>>, vector<128x128xbf16>
    %cst = arith.constant dense<0.000000e+00> : vector<512x128xf32>
    %2 = tpu.matmul %0, %1, %cst {dimension_numbers = #tpu.dot_dimension_numbers<[1], [0], [0], [1], [0, 0, 1, 1], [], []>} : vector<512x128xbf16>, vector<128x128xbf16>, vector<512x128xf32> -> vector<512x128xf32>
    %3 = arith.truncf %2 : vector<512x128xf32> to vector<512x128xbf16>
    %c0_3 = arith.constant 0 : index
    %c0_4 = arith.constant 0 : index
    %4 = vector.load %arg3[%c0_3, %c0_4] : memref<512x128xbf16, #tpu.memory_space<vmem>>, vector<512x128xbf16>
    tpu.vector_store %arg3[%c0_3, %c0_4], %3 {strides = array<i32>} : memref<512x128xbf16, #tpu.memory_space<vmem>>, vector<512x128xbf16>,
    %cst_5 = arith.constant dense<0.000000e+00> : vector<128xf32>
    %5 = vector.multi_reduction <add>, %2, %cst_5 [0] : vector<512x128xf32> to vector<128xf32>
    %6 = vector.shape_cast %5 : vector<128xf32> to vector<1x128xf32>
    %c0_6 = arith.constant 0 : index
    %c0_7 = arith.constant 0 : index
    %c0_8 = arith.constant 0 : index
    %7 = vector.load %arg4[%c0_6, %c0_7, %c0_8] : memref<1x2x128xf32, #tpu.memory_space<vmem>>, vector<1x1x128xf32>
    %8 = vector.shape_cast %7 : vector<1x1x128xf32> to vector<1x128xf32>
    %9 = vector.shape_cast %6 : vector<1x128xf32> to vector<1x1x128xf32>
    tpu.vector_store %arg4[%c0_6, %c0_7, %c0_8], %9 {strides = array<i32>} : memref<1x2x128xf32, #tpu.memory_space<vmem>>, vector<1x1x128xf32>,
    %10 = arith.mulf %2, %2 : vector<512x128xf32>
    %cst_9 = arith.constant dense<0.000000e+00> : vector<128xf32>
    %11 = vector.multi_reduction <add>, %10, %cst_9 [0] : vector<512x128xf32> to vector<128xf32>
    %12 = vector.shape_cast %11 : vector<128xf32> to vector<1x128xf32>
    %c0_10 = arith.constant 0 : index
    %c1 = arith.constant 1 : index
    %c0_11 = arith.constant 0 : index
    %13 = vector.load %arg4[%c0_10, %c1, %c0_11] : memref<1x2x128xf32, #tpu.memory_space<vmem>>, vector<1x1x128xf32>
    %14 = vector.shape_cast %13 : vector<1x1x128xf32> to vector<1x128xf32>
    %15 = vector.shape_cast %12 : vector<1x128xf32> to vector<1x1x128xf32>
    tpu.vector_store %arg4[%c0_10, %c1, %c0_11], %15 {strides = array<i32>} : memref<1x2x128xf32, #tpu.memory_space<vmem>>, vector<1x1x128xf32>,
    return
  }
  func.func @transform_0(%arg0: i32) -> (i32, i32) {
    %c0_i32 = arith.constant 0 : i32
    %c0_i32_0 = arith.constant 0 : i32
    return %arg0, %c0_i32 : i32, i32
  }
  func.func @transform_1(%arg0: i32) -> (i32, i32) {
    %c0_i32 = arith.constant 0 : i32
    %c0_i32_0 = arith.constant 0 : i32
    %c0_i32_1 = arith.constant 0 : i32
    return %c0_i32, %c0_i32_0 : i32, i32
  }
  func.func @transform_2(%arg0: i32) -> (i32, i32) {
    %c0_i32 = arith.constant 0 : i32
    %c0_i32_0 = arith.constant 0 : i32
    return %arg0, %c0_i32 : i32, i32
  }
  func.func @transform_3(%arg0: i32) -> (i32, i32, i32) {
    %c0_i32 = arith.constant 0 : i32
    %c0_i32_0 = arith.constant 0 : i32
    %c0_i32_1 = arith.constant 0 : i32
    return %arg0, %c0_i32, %c0_i32_0 : i32, i32, i32
  }
}

module attributes {stable_mosaic.version = 11 : i64} {
  func.func @_conv3x3_fused_kernel(%arg0: i32, %arg1: i32, %arg2: memref<1x16x16x128xbf16, #tpu.memory_space<vmem>>, %arg3: memref<1x128xf32, #tpu.memory_space<vmem>>, %arg4: memref<1x128xf32, #tpu.memory_space<vmem>>, %arg5: memref<3x384x128xbf16, #tpu.memory_space<vmem>>, %arg6: memref<1x16x16x128xbf16, #tpu.memory_space<vmem>>, %arg7: memref<1x1x2x128xf32, #tpu.memory_space<vmem>>, %arg8: memref<18x18x128xbf16, #tpu.memory_space<vmem>>) attributes {dimension_semantics = [#tpu.dimension_semantics<parallel>, #tpu.dimension_semantics<arbitrary>], iteration_bounds = array<i64: 2, 1>, scalar_prefetch = 0 : i64, scratch_operands = 1 : i64, tpu.core_type = #tpu.core_type<tc>, window_params = [{transform_indices = @transform_0, window_bounds = array<i64: 1, 16, 16, 128>}, {pipeline_mode = #tpu.pipeline_mode<synchronous>, transform_indices = @transform_1, window_bounds = array<i64: 1, 128>}, {pipeline_mode = #tpu.pipeline_mode<synchronous>, transform_indices = @transform_2, window_bounds = array<i64: 1, 128>}, {pipeline_mode = #tpu.pipeline_mode<synchronous>, transform_indices = @transform_3, window_bounds = array<i64: 3, 384, 128>}, {transform_indices = @transform_4, window_bounds = array<i64: 1, 16, 16, 128>}, {transform_indices = @transform_5, window_bounds = array<i64: 1, 1, 2, 128>}]} {
    %c0_i32 = arith.constant 0 : i32
    %0 = arith.cmpi eq, %arg1, %c0_i32 : i32
    %1 = arith.extui %0 : i1 to i32
    %c0_i32_0 = arith.constant 0 : i32
    %2 = arith.cmpi ne, %1, %c0_i32_0 : i32
    scf.if %2 {
      %cst_49 = arith.constant 0.000000e+00 : bf16
      %73 = vector.broadcast %cst_49 : bf16 to vector<18x18x128xbf16>
      %c0_50 = arith.constant 0 : index
      %c0_51 = arith.constant 0 : index
      %c0_52 = arith.constant 0 : index
      %74 = vector.load %arg8[%c0_50, %c0_51, %c0_52] : memref<18x18x128xbf16, #tpu.memory_space<vmem>>, vector<18x18x128xbf16>
      tpu.vector_store %arg8[%c0_50, %c0_51, %c0_52], %73 {strides = array<i32>} : memref<18x18x128xbf16, #tpu.memory_space<vmem>>, vector<18x18x128xbf16>,
      %c0_53 = arith.constant 0 : index
      %c0_54 = arith.constant 0 : index
      %c0_55 = arith.constant 0 : index
      %c0_56 = arith.constant 0 : index
      %75 = vector.load %arg2[%c0_53, %c0_54, %c0_55, %c0_56] : memref<1x16x16x128xbf16, #tpu.memory_space<vmem>>, vector<1x16x16x128xbf16>
      %76 = vector.shape_cast %75 : vector<1x16x16x128xbf16> to vector<16x16x128xbf16>
      %77 = arith.extf %76 : vector<16x16x128xbf16> to vector<16x16x128xf32>
      %c0_57 = arith.constant 0 : index
      %c0_58 = arith.constant 0 : index
      %78 = vector.load %arg3[%c0_57, %c0_58] : memref<1x128xf32, #tpu.memory_space<vmem>>, vector<1x128xf32>
      %79 = vector.shape_cast %78 : vector<1x128xf32> to vector<1x1x128xf32>
      %80 = vector.broadcast %79 : vector<1x1x128xf32> to vector<16x16x128xf32>
      %81 = arith.mulf %77, %80 : vector<16x16x128xf32>
      %c0_59 = arith.constant 0 : index
      %c0_60 = arith.constant 0 : index
      %82 = vector.load %arg4[%c0_59, %c0_60] : memref<1x128xf32, #tpu.memory_space<vmem>>, vector<1x128xf32>
      %83 = vector.shape_cast %82 : vector<1x128xf32> to vector<1x1x128xf32>
      %84 = vector.broadcast %83 : vector<1x1x128xf32> to vector<16x16x128xf32>
      %85 = arith.addf %81, %84 : vector<16x16x128xf32>
      %cst_61 = arith.constant 0.000000e+00 : f32
      %86 = vector.broadcast %cst_61 : f32 to vector<16x16x128xf32>
      %87 = arith.maximumf %85, %86 : vector<16x16x128xf32>
      %88 = arith.truncf %87 : vector<16x16x128xf32> to vector<16x16x128xbf16>
      %c1_62 = arith.constant 1 : index
      %c1_63 = arith.constant 1 : index
      %c0_64 = arith.constant 0 : index
      %89 = vector.load %arg8[%c1_62, %c1_63, %c0_64] : memref<18x18x128xbf16, #tpu.memory_space<vmem>>, vector<16x16x128xbf16>
      tpu.vector_store %arg8[%c1_62, %c1_63, %c0_64], %88 {strides = array<i32>} : memref<18x18x128xbf16, #tpu.memory_space<vmem>>, vector<16x16x128xbf16>,
    } else {
    }
    %c16_i32 = arith.constant 16 : i32
    %3 = arith.muli %arg1, %c16_i32 : i32
    %4 = tpu.assume_multiple %3, 16 : i32
    %cst = arith.constant 0.000000e+00 : f32
    %5 = vector.broadcast %cst : f32 to vector<256x128xf32>
    %c0_i32_1 = arith.constant 0 : i32
    %6 = arith.addi %4, %c0_i32_1 : i32
    %7 = arith.index_cast %6 : i32 to index
    %c0 = arith.constant 0 : index
    %c0_2 = arith.constant 0 : index
    %8 = vector.load %arg8[%7, %c0, %c0_2] : memref<18x18x128xbf16, #tpu.memory_space<vmem>>, vector<16x16x128xbf16>
    %9 = vector.shape_cast %8 : vector<16x16x128xbf16> to vector<256x128xbf16>
    %c0_i32_3 = arith.constant 0 : i32
    %10 = arith.addi %4, %c0_i32_3 : i32
    %11 = arith.index_cast %10 : i32 to index
    %c1 = arith.constant 1 : index
    %c0_4 = arith.constant 0 : index
    %12 = vector.load %arg8[%11, %c1, %c0_4] : memref<18x18x128xbf16, #tpu.memory_space<vmem>>, vector<16x16x128xbf16>
    %13 = vector.shape_cast %12 : vector<16x16x128xbf16> to vector<256x128xbf16>
    %c0_i32_5 = arith.constant 0 : i32
    %14 = arith.addi %4, %c0_i32_5 : i32
    %15 = arith.index_cast %14 : i32 to index
    %c2 = arith.constant 2 : index
    %c0_6 = arith.constant 0 : index
    %16 = vector.load %arg8[%15, %c2, %c0_6] : memref<18x18x128xbf16, #tpu.memory_space<vmem>>, vector<16x16x128xbf16>
    %17 = vector.shape_cast %16 : vector<16x16x128xbf16> to vector<256x128xbf16>
    %18 = tpu.concatenate %9, %13, %17 in 1 : vector<256x128xbf16>, vector<256x128xbf16>, vector<256x128xbf16> -> vector<256x384xbf16>
    %c0_7 = arith.constant 0 : index
    %c0_8 = arith.constant 0 : index
    %c0_9 = arith.constant 0 : index
    %19 = vector.load %arg5[%c0_7, %c0_8, %c0_9] : memref<3x384x128xbf16, #tpu.memory_space<vmem>>, vector<1x384x128xbf16>
    %20 = vector.shape_cast %19 : vector<1x384x128xbf16> to vector<384x128xbf16>
    %cst_10 = arith.constant dense<0.000000e+00> : vector<256x128xf32>
    %21 = tpu.matmul %18, %20, %cst_10 {dimension_numbers = #tpu.dot_dimension_numbers<[1], [0], [0], [1], [0, 0, 1, 1], [], []>} : vector<256x384xbf16>, vector<384x128xbf16>, vector<256x128xf32> -> vector<256x128xf32>
    %22 = arith.addf %5, %21 : vector<256x128xf32>
    %c1_i32 = arith.constant 1 : i32
    %23 = arith.addi %4, %c1_i32 : i32
    %24 = arith.index_cast %23 : i32 to index
    %c0_11 = arith.constant 0 : index
    %c0_12 = arith.constant 0 : index
    %25 = vector.load %arg8[%24, %c0_11, %c0_12] : memref<18x18x128xbf16, #tpu.memory_space<vmem>>, vector<16x16x128xbf16>
    %26 = vector.shape_cast %25 : vector<16x16x128xbf16> to vector<256x128xbf16>
    %c1_i32_13 = arith.constant 1 : i32
    %27 = arith.addi %4, %c1_i32_13 : i32
    %28 = arith.index_cast %27 : i32 to index
    %c1_14 = arith.constant 1 : index
    %c0_15 = arith.constant 0 : index
    %29 = vector.load %arg8[%28, %c1_14, %c0_15] : memref<18x18x128xbf16, #tpu.memory_space<vmem>>, vector<16x16x128xbf16>
    %30 = vector.shape_cast %29 : vector<16x16x128xbf16> to vector<256x128xbf16>
    %c1_i32_16 = arith.constant 1 : i32
    %31 = arith.addi %4, %c1_i32_16 : i32
    %32 = arith.index_cast %31 : i32 to index
    %c2_17 = arith.constant 2 : index
    %c0_18 = arith.constant 0 : index
    %33 = vector.load %arg8[%32, %c2_17, %c0_18] : memref<18x18x128xbf16, #tpu.memory_space<vmem>>, vector<16x16x128xbf16>
    %34 = vector.shape_cast %33 : vector<16x16x128xbf16> to vector<256x128xbf16>
    %35 = tpu.concatenate %26, %30, %34 in 1 : vector<256x128xbf16>, vector<256x128xbf16>, vector<256x128xbf16> -> vector<256x384xbf16>
    %c1_19 = arith.constant 1 : index
    %c0_20 = arith.constant 0 : index
    %c0_21 = arith.constant 0 : index
    %36 = vector.load %arg5[%c1_19, %c0_20, %c0_21] : memref<3x384x128xbf16, #tpu.memory_space<vmem>>, vector<1x384x128xbf16>
    %37 = vector.shape_cast %36 : vector<1x384x128xbf16> to vector<384x128xbf16>
    %cst_22 = arith.constant dense<0.000000e+00> : vector<256x128xf32>
    %38 = tpu.matmul %35, %37, %cst_22 {dimension_numbers = #tpu.dot_dimension_numbers<[1], [0], [0], [1], [0, 0, 1, 1], [], []>} : vector<256x384xbf16>, vector<384x128xbf16>, vector<256x128xf32> -> vector<256x128xf32>
    %39 = arith.addf %22, %38 : vector<256x128xf32>
    %c2_i32 = arith.constant 2 : i32
    %40 = arith.addi %4, %c2_i32 : i32
    %41 = arith.index_cast %40 : i32 to index
    %c0_23 = arith.constant 0 : index
    %c0_24 = arith.constant 0 : index
    %42 = vector.load %arg8[%41, %c0_23, %c0_24] : memref<18x18x128xbf16, #tpu.memory_space<vmem>>, vector<16x16x128xbf16>
    %43 = vector.shape_cast %42 : vector<16x16x128xbf16> to vector<256x128xbf16>
    %c2_i32_25 = arith.constant 2 : i32
    %44 = arith.addi %4, %c2_i32_25 : i32
    %45 = arith.index_cast %44 : i32 to index
    %c1_26 = arith.constant 1 : index
    %c0_27 = arith.constant 0 : index
    %46 = vector.load %arg8[%45, %c1_26, %c0_27] : memref<18x18x128xbf16, #tpu.memory_space<vmem>>, vector<16x16x128xbf16>
    %47 = vector.shape_cast %46 : vector<16x16x128xbf16> to vector<256x128xbf16>
    %c2_i32_28 = arith.constant 2 : i32
    %48 = arith.addi %4, %c2_i32_28 : i32
    %49 = arith.index_cast %48 : i32 to index
    %c2_29 = arith.constant 2 : index
    %c0_30 = arith.constant 0 : index
    %50 = vector.load %arg8[%49, %c2_29, %c0_30] : memref<18x18x128xbf16, #tpu.memory_space<vmem>>, vector<16x16x128xbf16>
    %51 = vector.shape_cast %50 : vector<16x16x128xbf16> to vector<256x128xbf16>
    %52 = tpu.concatenate %43, %47, %51 in 1 : vector<256x128xbf16>, vector<256x128xbf16>, vector<256x128xbf16> -> vector<256x384xbf16>
    %c2_31 = arith.constant 2 : index
    %c0_32 = arith.constant 0 : index
    %c0_33 = arith.constant 0 : index
    %53 = vector.load %arg5[%c2_31, %c0_32, %c0_33] : memref<3x384x128xbf16, #tpu.memory_space<vmem>>, vector<1x384x128xbf16>
    %54 = vector.shape_cast %53 : vector<1x384x128xbf16> to vector<384x128xbf16>
    %cst_34 = arith.constant dense<0.000000e+00> : vector<256x128xf32>
    %55 = tpu.matmul %52, %54, %cst_34 {dimension_numbers = #tpu.dot_dimension_numbers<[1], [0], [0], [1], [0, 0, 1, 1], [], []>} : vector<256x384xbf16>, vector<384x128xbf16>, vector<256x128xf32> -> vector<256x128xf32>
    %56 = arith.addf %39, %55 : vector<256x128xf32>
    %57 = vector.shape_cast %56 : vector<256x128xf32> to vector<16x16x128xf32>
    %58 = arith.truncf %57 : vector<16x16x128xf32> to vector<16x16x128xbf16>
    %c0_35 = arith.constant 0 : index
    %c0_36 = arith.constant 0 : index
    %c0_37 = arith.constant 0 : index
    %c0_38 = arith.constant 0 : index
    %59 = vector.load %arg6[%c0_35, %c0_36, %c0_37, %c0_38] : memref<1x16x16x128xbf16, #tpu.memory_space<vmem>>, vector<1x16x16x128xbf16>
    %60 = vector.shape_cast %59 : vector<1x16x16x128xbf16> to vector<16x16x128xbf16>
    %61 = vector.shape_cast %58 : vector<16x16x128xbf16> to vector<1x16x16x128xbf16>
    tpu.vector_store %arg6[%c0_35, %c0_36, %c0_37, %c0_38], %61 {strides = array<i32>} : memref<1x16x16x128xbf16, #tpu.memory_space<vmem>>, vector<1x16x16x128xbf16>,
    %cst_39 = arith.constant dense<0.000000e+00> : vector<128xf32>
    %62 = vector.multi_reduction <add>, %56, %cst_39 [0] : vector<256x128xf32> to vector<128xf32>
    %63 = vector.shape_cast %62 : vector<128xf32> to vector<1x128xf32>
    %c0_40 = arith.constant 0 : index
    %c0_41 = arith.constant 0 : index
    %c0_42 = arith.constant 0 : index
    %c0_43 = arith.constant 0 : index
    %64 = vector.load %arg7[%c0_40, %c0_41, %c0_42, %c0_43] : memref<1x1x2x128xf32, #tpu.memory_space<vmem>>, vector<1x1x1x128xf32>
    %65 = vector.shape_cast %64 : vector<1x1x1x128xf32> to vector<1x128xf32>
    %66 = vector.shape_cast %63 : vector<1x128xf32> to vector<1x1x1x128xf32>
    tpu.vector_store %arg7[%c0_40, %c0_41, %c0_42, %c0_43], %66 {strides = array<i32>} : memref<1x1x2x128xf32, #tpu.memory_space<vmem>>, vector<1x1x1x128xf32>,
    %67 = arith.mulf %56, %56 : vector<256x128xf32>
    %cst_44 = arith.constant dense<0.000000e+00> : vector<128xf32>
    %68 = vector.multi_reduction <add>, %67, %cst_44 [0] : vector<256x128xf32> to vector<128xf32>
    %69 = vector.shape_cast %68 : vector<128xf32> to vector<1x128xf32>
    %c0_45 = arith.constant 0 : index
    %c0_46 = arith.constant 0 : index
    %c1_47 = arith.constant 1 : index
    %c0_48 = arith.constant 0 : index
    %70 = vector.load %arg7[%c0_45, %c0_46, %c1_47, %c0_48] : memref<1x1x2x128xf32, #tpu.memory_space<vmem>>, vector<1x1x1x128xf32>
    %71 = vector.shape_cast %70 : vector<1x1x1x128xf32> to vector<1x128xf32>
    %72 = vector.shape_cast %69 : vector<1x128xf32> to vector<1x1x1x128xf32>
    tpu.vector_store %arg7[%c0_45, %c0_46, %c1_47, %c0_48], %72 {strides = array<i32>} : memref<1x1x2x128xf32, #tpu.memory_space<vmem>>, vector<1x1x1x128xf32>,
    return
  }
  func.func @transform_0(%arg0: i32, %arg1: i32) -> (i32, i32, i32, i32) {
    %c0_i32 = arith.constant 0 : i32
    %c0_i32_0 = arith.constant 0 : i32
    %c0_i32_1 = arith.constant 0 : i32
    %c0_i32_2 = arith.constant 0 : i32
    return %arg0, %c0_i32, %c0_i32_0, %c0_i32_1 : i32, i32, i32, i32
  }
  func.func @transform_1(%arg0: i32, %arg1: i32) -> (i32, i32) {
    %c0_i32 = arith.constant 0 : i32
    %c0_i32_0 = arith.constant 0 : i32
    %c0_i32_1 = arith.constant 0 : i32
    return %c0_i32, %c0_i32_0 : i32, i32
  }
  func.func @transform_2(%arg0: i32, %arg1: i32) -> (i32, i32) {
    %c0_i32 = arith.constant 0 : i32
    %c0_i32_0 = arith.constant 0 : i32
    %c0_i32_1 = arith.constant 0 : i32
    return %c0_i32, %c0_i32_0 : i32, i32
  }
  func.func @transform_3(%arg0: i32, %arg1: i32) -> (i32, i32, i32) {
    %c0_i32 = arith.constant 0 : i32
    %c0_i32_0 = arith.constant 0 : i32
    %c0_i32_1 = arith.constant 0 : i32
    %c0_i32_2 = arith.constant 0 : i32
    return %c0_i32, %c0_i32_0, %c0_i32_1 : i32, i32, i32
  }
  func.func @transform_4(%arg0: i32, %arg1: i32) -> (i32, i32, i32, i32) {
    %c0_i32 = arith.constant 0 : i32
    %c0_i32_0 = arith.constant 0 : i32
    %c0_i32_1 = arith.constant 0 : i32
    return %arg0, %arg1, %c0_i32, %c0_i32_0 : i32, i32, i32, i32
  }
  func.func @transform_5(%arg0: i32, %arg1: i32) -> (i32, i32, i32, i32) {
    %c0_i32 = arith.constant 0 : i32
    %c0_i32_0 = arith.constant 0 : i32
    %c0_i32_1 = arith.constant 0 : i32
    return %arg0, %arg1, %c0_i32, %c0_i32_0 : i32, i32, i32, i32
  }
}

module attributes {stable_mosaic.version = 11 : i64} {
  func.func @_affine_mm_stats_kernel(%arg0: i32, %arg1: memref<512x128xbf16, #tpu.memory_space<vmem>>, %arg2: memref<1x128xf32, #tpu.memory_space<vmem>>, %arg3: memref<1x128xf32, #tpu.memory_space<vmem>>, %arg4: memref<128x128xbf16, #tpu.memory_space<vmem>>, %arg5: memref<512x128xbf16, #tpu.memory_space<vmem>>, %arg6: memref<1x2x128xf32, #tpu.memory_space<vmem>>) attributes {dimension_semantics = [#tpu.dimension_semantics<parallel>], iteration_bounds = array<i64: 1>, scalar_prefetch = 0 : i64, scratch_operands = 0 : i64, tpu.core_type = #tpu.core_type<tc>, window_params = [{transform_indices = @transform_0, window_bounds = array<i64: 512, 128>}, {pipeline_mode = #tpu.pipeline_mode<synchronous>, transform_indices = @transform_1, window_bounds = array<i64: 1, 128>}, {pipeline_mode = #tpu.pipeline_mode<synchronous>, transform_indices = @transform_2, window_bounds = array<i64: 1, 128>}, {pipeline_mode = #tpu.pipeline_mode<synchronous>, transform_indices = @transform_3, window_bounds = array<i64: 128, 128>}, {transform_indices = @transform_4, window_bounds = array<i64: 512, 128>}, {transform_indices = @transform_5, window_bounds = array<i64: 1, 2, 128>}]} {
    %c0 = arith.constant 0 : index
    %c0_0 = arith.constant 0 : index
    %0 = vector.load %arg1[%c0, %c0_0] : memref<512x128xbf16, #tpu.memory_space<vmem>>, vector<512x128xbf16>
    %1 = arith.extf %0 : vector<512x128xbf16> to vector<512x128xf32>
    %c0_1 = arith.constant 0 : index
    %c0_2 = arith.constant 0 : index
    %2 = vector.load %arg2[%c0_1, %c0_2] : memref<1x128xf32, #tpu.memory_space<vmem>>, vector<1x128xf32>
    %3 = vector.broadcast %2 : vector<1x128xf32> to vector<512x128xf32>
    %4 = arith.mulf %1, %3 : vector<512x128xf32>
    %c0_3 = arith.constant 0 : index
    %c0_4 = arith.constant 0 : index
    %5 = vector.load %arg3[%c0_3, %c0_4] : memref<1x128xf32, #tpu.memory_space<vmem>>, vector<1x128xf32>
    %6 = vector.broadcast %5 : vector<1x128xf32> to vector<512x128xf32>
    %7 = arith.addf %4, %6 : vector<512x128xf32>
    %cst = arith.constant 0.000000e+00 : f32
    %8 = vector.broadcast %cst : f32 to vector<512x128xf32>
    %9 = arith.maximumf %7, %8 : vector<512x128xf32>
    %10 = arith.truncf %9 : vector<512x128xf32> to vector<512x128xbf16>
    %c0_5 = arith.constant 0 : index
    %c0_6 = arith.constant 0 : index
    %11 = vector.load %arg4[%c0_5, %c0_6] : memref<128x128xbf16, #tpu.memory_space<vmem>>, vector<128x128xbf16>
    %cst_7 = arith.constant dense<0.000000e+00> : vector<512x128xf32>
    %12 = tpu.matmul %10, %11, %cst_7 {dimension_numbers = #tpu.dot_dimension_numbers<[1], [0], [0], [1], [0, 0, 1, 1], [], []>} : vector<512x128xbf16>, vector<128x128xbf16>, vector<512x128xf32> -> vector<512x128xf32>
    %13 = arith.truncf %12 : vector<512x128xf32> to vector<512x128xbf16>
    %c0_8 = arith.constant 0 : index
    %c0_9 = arith.constant 0 : index
    %14 = vector.load %arg5[%c0_8, %c0_9] : memref<512x128xbf16, #tpu.memory_space<vmem>>, vector<512x128xbf16>
    tpu.vector_store %arg5[%c0_8, %c0_9], %13 {strides = array<i32>} : memref<512x128xbf16, #tpu.memory_space<vmem>>, vector<512x128xbf16>,
    %cst_10 = arith.constant dense<0.000000e+00> : vector<128xf32>
    %15 = vector.multi_reduction <add>, %12, %cst_10 [0] : vector<512x128xf32> to vector<128xf32>
    %16 = vector.shape_cast %15 : vector<128xf32> to vector<1x128xf32>
    %c0_11 = arith.constant 0 : index
    %c0_12 = arith.constant 0 : index
    %c0_13 = arith.constant 0 : index
    %17 = vector.load %arg6[%c0_11, %c0_12, %c0_13] : memref<1x2x128xf32, #tpu.memory_space<vmem>>, vector<1x1x128xf32>
    %18 = vector.shape_cast %17 : vector<1x1x128xf32> to vector<1x128xf32>
    %19 = vector.shape_cast %16 : vector<1x128xf32> to vector<1x1x128xf32>
    tpu.vector_store %arg6[%c0_11, %c0_12, %c0_13], %19 {strides = array<i32>} : memref<1x2x128xf32, #tpu.memory_space<vmem>>, vector<1x1x128xf32>,
    %20 = arith.mulf %12, %12 : vector<512x128xf32>
    %cst_14 = arith.constant dense<0.000000e+00> : vector<128xf32>
    %21 = vector.multi_reduction <add>, %20, %cst_14 [0] : vector<512x128xf32> to vector<128xf32>
    %22 = vector.shape_cast %21 : vector<128xf32> to vector<1x128xf32>
    %c0_15 = arith.constant 0 : index
    %c1 = arith.constant 1 : index
    %c0_16 = arith.constant 0 : index
    %23 = vector.load %arg6[%c0_15, %c1, %c0_16] : memref<1x2x128xf32, #tpu.memory_space<vmem>>, vector<1x1x128xf32>
    %24 = vector.shape_cast %23 : vector<1x1x128xf32> to vector<1x128xf32>
    %25 = vector.shape_cast %22 : vector<1x128xf32> to vector<1x1x128xf32>
    tpu.vector_store %arg6[%c0_15, %c1, %c0_16], %25 {strides = array<i32>} : memref<1x2x128xf32, #tpu.memory_space<vmem>>, vector<1x1x128xf32>,
    return
  }
  func.func @transform_0(%arg0: i32) -> (i32, i32) {
    %c0_i32 = arith.constant 0 : i32
    %c0_i32_0 = arith.constant 0 : i32
    return %arg0, %c0_i32 : i32, i32
  }
  func.func @transform_1(%arg0: i32) -> (i32, i32) {
    %c0_i32 = arith.constant 0 : i32
    %c0_i32_0 = arith.constant 0 : i32
    %c0_i32_1 = arith.constant 0 : i32
    return %c0_i32, %c0_i32_0 : i32, i32
  }
  func.func @transform_2(%arg0: i32) -> (i32, i32) {
    %c0_i32 = arith.constant 0 : i32
    %c0_i32_0 = arith.constant 0 : i32
    %c0_i32_1 = arith.constant 0 : i32
    return %c0_i32, %c0_i32_0 : i32, i32
  }
  func.func @transform_3(%arg0: i32) -> (i32, i32) {
    %c0_i32 = arith.constant 0 : i32
    %c0_i32_0 = arith.constant 0 : i32
    %c0_i32_1 = arith.constant 0 : i32
    return %c0_i32, %c0_i32_0 : i32, i32
  }
  func.func @transform_4(%arg0: i32) -> (i32, i32) {
    %c0_i32 = arith.constant 0 : i32
    %c0_i32_0 = arith.constant 0 : i32
    return %arg0, %c0_i32 : i32, i32
  }
  func.func @transform_5(%arg0: i32) -> (i32, i32, i32) {
    %c0_i32 = arith.constant 0 : i32
    %c0_i32_0 = arith.constant 0 : i32
    %c0_i32_1 = arith.constant 0 : i32
    return %arg0, %c0_i32, %c0_i32_0 : i32, i32, i32
  }
}

module attributes {stable_mosaic.version = 11 : i64} {
  func.func @_affine_add_relu_kernel(%arg0: i32, %arg1: memref<512x128xbf16, #tpu.memory_space<vmem>>, %arg2: memref<1x128xf32, #tpu.memory_space<vmem>>, %arg3: memref<1x128xf32, #tpu.memory_space<vmem>>, %arg4: memref<512x128xbf16, #tpu.memory_space<vmem>>, %arg5: memref<1x128xf32, #tpu.memory_space<vmem>>, %arg6: memref<1x128xf32, #tpu.memory_space<vmem>>, %arg7: memref<512x128xf32, #tpu.memory_space<vmem>>) attributes {dimension_semantics = [#tpu.dimension_semantics<parallel>], iteration_bounds = array<i64: 1>, scalar_prefetch = 0 : i64, scratch_operands = 0 : i64, tpu.core_type = #tpu.core_type<tc>, window_params = [{transform_indices = @transform_0, window_bounds = array<i64: 512, 128>}, {pipeline_mode = #tpu.pipeline_mode<synchronous>, transform_indices = @transform_1, window_bounds = array<i64: 1, 128>}, {pipeline_mode = #tpu.pipeline_mode<synchronous>, transform_indices = @transform_2, window_bounds = array<i64: 1, 128>}, {transform_indices = @transform_3, window_bounds = array<i64: 512, 128>}, {pipeline_mode = #tpu.pipeline_mode<synchronous>, transform_indices = @transform_4, window_bounds = array<i64: 1, 128>}, {pipeline_mode = #tpu.pipeline_mode<synchronous>, transform_indices = @transform_5, window_bounds = array<i64: 1, 128>}, {transform_indices = @transform_6, window_bounds = array<i64: 512, 128>}]} {
    %c0 = arith.constant 0 : index
    %c0_0 = arith.constant 0 : index
    %0 = vector.load %arg1[%c0, %c0_0] : memref<512x128xbf16, #tpu.memory_space<vmem>>, vector<512x128xbf16>
    %1 = arith.extf %0 : vector<512x128xbf16> to vector<512x128xf32>
    %c0_1 = arith.constant 0 : index
    %c0_2 = arith.constant 0 : index
    %2 = vector.load %arg2[%c0_1, %c0_2] : memref<1x128xf32, #tpu.memory_space<vmem>>, vector<1x128xf32>
    %3 = vector.broadcast %2 : vector<1x128xf32> to vector<512x128xf32>
    %4 = arith.mulf %1, %3 : vector<512x128xf32>
    %c0_3 = arith.constant 0 : index
    %c0_4 = arith.constant 0 : index
    %5 = vector.load %arg3[%c0_3, %c0_4] : memref<1x128xf32, #tpu.memory_space<vmem>>, vector<1x128xf32>
    %6 = vector.broadcast %5 : vector<1x128xf32> to vector<512x128xf32>
    %7 = arith.addf %4, %6 : vector<512x128xf32>
    %c0_5 = arith.constant 0 : index
    %c0_6 = arith.constant 0 : index
    %8 = vector.load %arg4[%c0_5, %c0_6] : memref<512x128xbf16, #tpu.memory_space<vmem>>, vector<512x128xbf16>
    %9 = arith.extf %8 : vector<512x128xbf16> to vector<512x128xf32>
    %c0_7 = arith.constant 0 : index
    %c0_8 = arith.constant 0 : index
    %10 = vector.load %arg5[%c0_7, %c0_8] : memref<1x128xf32, #tpu.memory_space<vmem>>, vector<1x128xf32>
    %11 = vector.broadcast %10 : vector<1x128xf32> to vector<512x128xf32>
    %12 = arith.mulf %9, %11 : vector<512x128xf32>
    %c0_9 = arith.constant 0 : index
    %c0_10 = arith.constant 0 : index
    %13 = vector.load %arg6[%c0_9, %c0_10] : memref<1x128xf32, #tpu.memory_space<vmem>>, vector<1x128xf32>
    %14 = vector.broadcast %13 : vector<1x128xf32> to vector<512x128xf32>
    %15 = arith.addf %12, %14 : vector<512x128xf32>
    %16 = arith.addf %7, %15 : vector<512x128xf32>
    %cst = arith.constant 0.000000e+00 : f32
    %17 = vector.broadcast %cst : f32 to vector<512x128xf32>
    %18 = arith.maximumf %16, %17 : vector<512x128xf32>
    %c0_11 = arith.constant 0 : index
    %c0_12 = arith.constant 0 : index
    %19 = vector.load %arg7[%c0_11, %c0_12] : memref<512x128xf32, #tpu.memory_space<vmem>>, vector<512x128xf32>
    tpu.vector_store %arg7[%c0_11, %c0_12], %18 {strides = array<i32>} : memref<512x128xf32, #tpu.memory_space<vmem>>, vector<512x128xf32>,
    return
  }
  func.func @transform_0(%arg0: i32) -> (i32, i32) {
    %c0_i32 = arith.constant 0 : i32
    %c0_i32_0 = arith.constant 0 : i32
    return %arg0, %c0_i32 : i32, i32
  }
  func.func @transform_1(%arg0: i32) -> (i32, i32) {
    %c0_i32 = arith.constant 0 : i32
    %c0_i32_0 = arith.constant 0 : i32
    %c0_i32_1 = arith.constant 0 : i32
    return %c0_i32, %c0_i32_0 : i32, i32
  }
  func.func @transform_2(%arg0: i32) -> (i32, i32) {
    %c0_i32 = arith.constant 0 : i32
    %c0_i32_0 = arith.constant 0 : i32
    %c0_i32_1 = arith.constant 0 : i32
    return %c0_i32, %c0_i32_0 : i32, i32
  }
  func.func @transform_3(%arg0: i32) -> (i32, i32) {
    %c0_i32 = arith.constant 0 : i32
    %c0_i32_0 = arith.constant 0 : i32
    return %arg0, %c0_i32 : i32, i32
  }
  func.func @transform_4(%arg0: i32) -> (i32, i32) {
    %c0_i32 = arith.constant 0 : i32
    %c0_i32_0 = arith.constant 0 : i32
    %c0_i32_1 = arith.constant 0 : i32
    return %c0_i32, %c0_i32_0 : i32, i32
  }
  func.func @transform_5(%arg0: i32) -> (i32, i32) {
    %c0_i32 = arith.constant 0 : i32
    %c0_i32_0 = arith.constant 0 : i32
    %c0_i32_1 = arith.constant 0 : i32
    return %c0_i32, %c0_i32_0 : i32, i32
  }
  func.func @transform_6(%arg0: i32) -> (i32, i32) {
    %c0_i32 = arith.constant 0 : i32
    %c0_i32_0 = arith.constant 0 : i32
    return %arg0, %c0_i32 : i32, i32
  }
}

</mosaic_0001>

<llo_original>
// kernel: bottleneck_forward.5
$region0: #{bottleneck_forward.5}
  #allocation0 [shape = 'u32[]', space=smem, size = 0x4, offset = 0x4, fixed_abs, tag = 'smem constant byte address 0x4 - core index']
  #allocation1 [shape = 'u32[144,128]{1,0:T(1,128)}', space=vmem, size = 0x12000, scoped, tag = 'internal scratch']
  %s0 = inlined_call_operand.vmem [shape: bf16[512,128], index: 0, kind: input, shape index: {}]
  %s1 = inlined_call_operand.vmem [shape: bf16[128,128], index: 1, kind: input, shape index: {}]
  %s2 = inlined_call_operand.vmem [shape: bf16[512,128], index: 2, kind: output, shape index: {0}]
  %s3 = inlined_call_operand.vmem [shape: f32[1,2,128], index: 3, kind: output, shape index: {1}]
  %4 = xla_tuple %s2, %s3
  %s5 = sld [smem:[#allocation0]]
  $region26: #{bottleneck_forward.5} parent=0
    _
  %s7 = ssub.s32 1, %s5
  %s8 = scalar_select 0, %s7, %s5
  // Predicated region
  $region2: #{bottleneck_forward.5} parent=0 // pred_check
    _
  $region3: #{bottleneck_forward.5} parent=0 // pred_check_branch
    %10 = sbr.rel (0) target = $region5
  $region4: #{bottleneck_forward.5} parent=0 // pred_region
    _
  $region5: #{bottleneck_forward.5} parent=0 // pred_fallthru
    _
  // Predicated region
  $region6: #{bottleneck_forward.5} parent=0 // pred_check
    _
  $region7: #{bottleneck_forward.5} parent=0 // pred_check_branch
    %12 = sbr.rel (0) target = $region9
  $region8: #{bottleneck_forward.5} parent=0 // pred_region
    _
  $region9: #{bottleneck_forward.5} parent=0 // pred_fallthru
    _
  %v14 = vld [vmem:[%s0] sm:$0xf]
  %v15 = vld [vmem:[%s0 + $0x4] sm:$0xf]
  %v16 = vld [vmem:[%s0 + $0x8] sm:$0xf]
  %v17 = vld [vmem:[%s0 + $0xc] sm:$0xf]
  %v18 = vld [vmem:[%s0 + $0x10] sm:$0xf]
  %v19 = vld [vmem:[%s0 + $0x14] sm:$0xf]
  %v20 = vld [vmem:[%s0 + $0x18] sm:$0xf]
  %v21 = vld [vmem:[%s0 + $0x1c] sm:$0xf]
  %v22 = vld [vmem:[%s0 + $0x20] sm:$0xf]
  %v23 = vld [vmem:[%s0 + $0x24] sm:$0xf]
  %v24 = vld [vmem:[%s0 + $0x28] sm:$0xf]
  %v25 = vld [vmem:[%s0 + $0x2c] sm:$0xf]
  %v26 = vld [vmem:[%s0 + $0x30] sm:$0xf]
  %v27 = vld [vmem:[%s0 + $0x34] sm:$0xf]
  %v28 = vld [vmem:[%s0 + $0x38] sm:$0xf]
  %v29 = vld [vmem:[%s0 + $0x3c] sm:$0xf]
  %v30 = vld [vmem:[%s0 + $0x40] sm:$0xf]
  %v31 = vld [vmem:[%s0 + $0x44] sm:$0xf]
  %v32 = vld [vmem:[%s0 + $0x48] sm:$0xf]
  %v33 = vld [vmem:[%s0 + $0x4c] sm:$0xf]
  %v34 = vld [vmem:[%s0 + $0x50] sm:$0xf]
  %v35 = vld [vmem:[%s0 + $0x54] sm:$0xf]
  %v36 = vld [vmem:[%s0 + $0x58] sm:$0xf]
  %v37 = vld [vmem:[%s0 + $0x5c] sm:$0xf]
  %v38 = vld [vmem:[%s0 + $0x60] sm:$0xf]
  %v39 = vld [vmem:[%s0 + $0x64] sm:$0xf]
  %v40 = vld [vmem:[%s0 + $0x68] sm:$0xf]
  %v41 = vld [vmem:[%s0 + $0x6c] sm:$0xf]
  %v42 = vld [vmem:[%s0 + $0x70] sm:$0xf]
  %v43 = vld [vmem:[%s0 + $0x74] sm:$0xf]
  %v44 = vld [vmem:[%s0 + $0x78] sm:$0xf]
  %v45 = vld [vmem:[%s0 + $0x7c] sm:$0xf]
  %v46 = vld [vmem:[%s0 + $0x80] sm:$0xf]
  %v47 = vld [vmem:[%s0 + $0x84] sm:$0xf]
  %v48 = vld [vmem:[%s0 + $0x88] sm:$0xf]
  %v49 = vld [vmem:[%s0 + $0x8c] sm:$0xf]
  %v50 = vld [vmem:[%s0 + $0x90] sm:$0xf]
  %v51 = vld [vmem:[%s0 + $0x94] sm:$0xf]
  %v52 = vld [vmem:[%s0 + $0x98] sm:$0xf]
  %v53 = vld [vmem:[%s0 + $0x9c] sm:$0xf]
  %v54 = vld [vmem:[%s0 + $0xa0] sm:$0xf]
  %v55 = vld [vmem:[%s0 + $0xa4] sm:$0xf]
  %v56 = vld [vmem:[%s0 + $0xa8] sm:$0xf]
  %v57 = vld [vmem:[%s0 + $0xac] sm:$0xf]
  %v58 = vld [vmem:[%s0 + $0xb0] sm:$0xf]
  %v59 = vld [vmem:[%s0 + $0xb4] sm:$0xf]
  %v60 = vld [vmem:[%s0 + $0xb8] sm:$0xf]
  %v61 = vld [vmem:[%s0 + $0xbc] sm:$0xf]
  %v62 = vld [vmem:[%s0 + $0xc0] sm:$0xf]
  %v63 = vld [vmem:[%s0 + $0xc4] sm:$0xf]
  %v64 = vld [vmem:[%s0 + $0xc8] sm:$0xf]
  %v65 = vld [vmem:[%s0 + $0xcc] sm:$0xf]
  %v66 = vld [vmem:[%s0 + $0xd0] sm:$0xf]
  %v67 = vld [vmem:[%s0 + $0xd4] sm:$0xf]
  %v68 = vld [vmem:[%s0 + $0xd8] sm:$0xf]
  %v69 = vld [vmem:[%s0 + $0xdc] sm:$0xf]
  %v70 = vld [vmem:[%s0 + $0xe0] sm:$0xf]
  %v71 = vld [vmem:[%s0 + $0xe4] sm:$0xf]
  %v72 = vld [vmem:[%s0 + $0xe8] sm:$0xf]
  %v73 = vld [vmem:[%s0 + $0xec] sm:$0xf]
  %v74 = vld [vmem:[%s0 + $0xf0] sm:$0xf]
  %v75 = vld [vmem:[%s0 + $0xf4] sm:$0xf]
  %v76 = vld [vmem:[%s0 + $0xf8] sm:$0xf]
  %v77 = vld [vmem:[%s0 + $0xfc] sm:$0xf]
  %v78 = vld [vmem:[%s1] sm:$0xf]
  %v79 = vld [vmem:[%s1 + $0x4] sm:$0xf]
  %v80 = vld [vmem:[%s1 + $0x8] sm:$0xf]
  %v81 = vld [vmem:[%s1 + $0xc] sm:$0xf]
  %v82 = vld [vmem:[%s1 + $0x10] sm:$0xf]
  %v83 = vld [vmem:[%s1 + $0x14] sm:$0xf]
  %v84 = vld [vmem:[%s1 + $0x18] sm:$0xf]
  %v85 = vld [vmem:[%s1 + $0x1c] sm:$0xf]
  %v86 = vld [vmem:[%s1 + $0x20] sm:$0xf]
  %v87 = vld [vmem:[%s1 + $0x24] sm:$0xf]
  %v88 = vld [vmem:[%s1 + $0x28] sm:$0xf]
  %v89 = vld [vmem:[%s1 + $0x2c] sm:$0xf]
  %v90 = vld [vmem:[%s1 + $0x30] sm:$0xf]
  %v91 = vld [vmem:[%s1 + $0x34] sm:$0xf]
  %v92 = vld [vmem:[%s1 + $0x38] sm:$0xf]
  %v93 = vld [vmem:[%s1 + $0x3c] sm:$0xf]
  %v158 = vunpack.c.l.b16 %v14
  %v159 = vunpack.c.l.b16 %v15
  %v160 = vunpack.c.l.b16 %v16
  %v161 = vunpack.c.l.b16 %v17
  %v162 = vunpack.c.l.b16 %v18
  %v163 = vunpack.c.l.b16 %v19
  %v164 = vunpack.c.l.b16 %v20
  %v165 = vunpack.c.l.b16 %v21
  %v166 = vunpack.c.l.b16 %v22
  %v167 = vunpack.c.l.b16 %v23
  %v168 = vunpack.c.l.b16 %v24
  %v169 = vunpack.c.l.b16 %v25
  %v170 = vunpack.c.l.b16 %v26
  %v171 = vunpack.c.l.b16 %v27
  %v172 = vunpack.c.l.b16 %v28
  %v173 = vunpack.c.l.b16 %v29
  %v174 = vunpack.c.l.b16 %v30
  %v175 = vunpack.c.l.b16 %v31
  %v176 = vunpack.c.l.b16 %v32
  %v177 = vunpack.c.l.b16 %v33
  %v178 = vunpack.c.l.b16 %v34
  %v179 = vunpack.c.l.b16 %v35
  %v180 = vunpack.c.l.b16 %v36
  %v181 = vunpack.c.l.b16 %v37
  %v182 = vunpack.c.l.b16 %v38
  %v183 = vunpack.c.l.b16 %v39
  %v184 = vunpack.c.l.b16 %v40
  %v185 = vunpack.c.l.b16 %v41
  %v186 = vunpack.c.l.b16 %v42
  %v187 = vunpack.c.l.b16 %v43
  %v188 = vunpack.c.l.b16 %v44
  %v189 = vunpack.c.l.b16 %v45
  %v190 = vunpack.c.l.b16 %v46
  %v191 = vunpack.c.l.b16 %v47
  %v192 = vunpack.c.l.b16 %v48
  %v193 = vunpack.c.l.b16 %v49
  %v194 = vunpack.c.l.b16 %v50
  %v195 = vunpack.c.l.b16 %v51
  %v196 = vunpack.c.l.b16 %v52
  %v197 = vunpack.c.l.b16 %v53
  %v198 = vunpack.c.l.b16 %v54
  %v199 = vunpack.c.l.b16 %v55
  %v200 = vunpack.c.l.b16 %v56
  %v201 = vunpack.c.l.b16 %v57
  %v202 = vunpack.c.l.b16 %v58
  %v203 = vunpack.c.l.b16 %v59
  %v204 = vunpack.c.l.b16 %v60
  %v205 = vunpack.c.l.b16 %v61
  %v206 = vunpack.c.l.b16 %v62
  %v207 = vunpack.c.l.b16 %v63
  %v208 = vunpack.c.l.b16 %v64
  %v209 = vunpack.c.l.b16 %v65
  %v210 = vunpack.c.l.b16 %v66
  %v211 = vunpack.c.l.b16 %v67
  %v212 = vunpack.c.l.b16 %v68
  %v213 = vunpack.c.l.b16 %v69
  %v214 = vunpack.c.l.b16 %v70
  %v215 = vunpack.c.l.b16 %v71
  %v216 = vunpack.c.l.b16 %v72
  %v217 = vunpack.c.l.b16 %v73
  %v218 = vunpack.c.l.b16 %v74
  %v219 = vunpack.c.l.b16 %v75
  %v220 = vunpack.c.l.b16 %v76
  %v221 = vunpack.c.l.b16 %v77
  %v222 = vpack.c.b16 %v159, %v158
  %v223 = vpack.c.b16 %v161, %v160
  %v224 = vpack.c.b16 %v163, %v162
  %v225 = vpack.c.b16 %v165, %v164
  %v226 = vpack.c.b16 %v167, %v166
  %v227 = vpack.c.b16 %v169, %v168
  %v228 = vpack.c.b16 %v171, %v170
  %v229 = vpack.c.b16 %v173, %v172
  %v230 = vpack.c.b16 %v175, %v174
  %v231 = vpack.c.b16 %v177, %v176
  %v232 = vpack.c.b16 %v179, %v178
  %v233 = vpack.c.b16 %v181, %v180
  %v234 = vpack.c.b16 %v183, %v182
  %v235 = vpack.c.b16 %v185, %v184
  %v236 = vpack.c.b16 %v187, %v186
  %v237 = vpack.c.b16 %v189, %v188
  %v238 = vpack.c.b16 %v191, %v190
  %v239 = vpack.c.b16 %v193, %v192
  %v240 = vpack.c.b16 %v195, %v194
  %v241 = vpack.c.b16 %v197, %v196
  %v242 = vpack.c.b16 %v199, %v198
  %v243 = vpack.c.b16 %v201, %v200
  %v244 = vpack.c.b16 %v203, %v202
  %v245 = vpack.c.b16 %v205, %v204
  %v246 = vpack.c.b16 %v207, %v206
  %v247 = vpack.c.b16 %v209, %v208
  %v248 = vpack.c.b16 %v211, %v210
  %v249 = vpack.c.b16 %v213, %v212
  %v250 = vpack.c.b16 %v215, %v214
  %v251 = vpack.c.b16 %v217, %v216
  %v252 = vpack.c.b16 %v219, %v218
  %v253 = vpack.c.b16 %v221, %v220
  %v302 = vunpack.c.l.b16 %v78
  %v303 = vunpack.c.l.b16 %v79
  %v304 = vunpack.c.l.b16 %v80
  %v305 = vunpack.c.l.b16 %v81
  %v306 = vunpack.c.l.b16 %v82
  %v307 = vunpack.c.l.b16 %v83
  %v308 = vunpack.c.l.b16 %v84
  %v309 = vunpack.c.l.b16 %v85
  %v310 = vunpack.c.l.b16 %v86
  %v311 = vunpack.c.l.b16 %v87
  %v312 = vunpack.c.l.b16 %v88
  %v313 = vunpack.c.l.b16 %v89
  %v314 = vunpack.c.l.b16 %v90
  %v315 = vunpack.c.l.b16 %v91
  %v316 = vunpack.c.l.b16 %v92
  %v317 = vunpack.c.l.b16 %v93
  %v318 = vpack.c.b16 %v303, %v302
  %v319 = vpack.c.b16 %v305, %v304
  %v320 = vpack.c.b16 %v307, %v306
  %v321 = vpack.c.b16 %v309, %v308
  %v322 = vpack.c.b16 %v311, %v310
  %v323 = vpack.c.b16 %v313, %v312
  %v324 = vpack.c.b16 %v315, %v314
  %v325 = vpack.c.b16 %v317, %v316
  %334 = vmatprep.subr.bf16.mxu0 0
  %335 = vmatpush1.bf16.msra.mxu0 %v318
  %336 = vmatprep.subr.bf16.mxu0 0
  %337 = vmatpush1.bf16.msra.mxu0 %v319
  %338 = vmatprep.subr.bf16.mxu0 0
  %339 = vmatpush1.bf16.msra.mxu0 %v320
  %340 = vmatprep.subr.bf16.mxu0 0
  %341 = vmatpush1.bf16.msra.mxu0 %v321
  %342 = vmatprep.subr.bf16.mxu0 0
  %343 = vmatpush1.bf16.msra.mxu0 %v322
  %344 = vmatprep.subr.bf16.mxu0 0
  %345 = vmatpush1.bf16.msra.mxu0 %v323
  %346 = vmatprep.subr.bf16.mxu0 0
  %347 = vmatpush1.bf16.msra.mxu0 %v324
  %348 = vmatprep.subr.bf16.mxu0 0
  %349 = vmatpush1.bf16.msra.mxu0 %v325
  %350 = vmatprep.subr.bf16.mxu0 0
  %351 = vmatpush1.bf16.msra.mxu0 0
  %352 = vmatprep.subr.bf16.mxu0 0
  %353 = vmatpush1.bf16.msra.mxu0 0
  %354 = vmatprep.subr.bf16.mxu0 0
  %355 = vmatpush1.bf16.msra.mxu0 0
  %356 = vmatprep.subr.bf16.mxu0 0
  %357 = vmatpush1.bf16.msra.mxu0 0
  %358 = vmatprep.subr.bf16.mxu0 0
  %359 = vmatpush1.bf16.msra.mxu0 0
  %360 = vmatprep.subr.bf16.mxu0 0
  %361 = vmatpush1.bf16.msra.mxu0 0
  %362 = vmatprep.subr.bf16.mxu0 0
  %363 = vmatpush1.bf16.msra.mxu0 0
  %364 = vmatprep.subr.bf16.mxu0 0
  %365 = vmatpush1.bf16.msra.mxu0 0
  %366 = vmatprep.mubr.bf16.mxu0 0
  %367 = vmatmul.mubr.bf16.gmra.mrb[0].mxu0 %v222
  %v368 = vpop.f32.mrb[0].mxu0
  %v369 = vadd.f32 0.0, %v368
  %v370 = vpop.f32.mrb[0].mxu0
  %v371 = vpop.f32.mrb[0].mxu0
  %v372 = vadd.f32 0.0, %v371
  %v373 = vpop.f32.mrb[0].mxu0
  %374 = vmatprep.mubr.bf16.mxu0 0
  %375 = vmatmul.mubr.bf16.gmra.mrb[0].mxu0 %v223
  %v376 = vpop.f32.mrb[0].mxu0
  %v377 = vadd.f32 0.0, %v376
  %v378 = vpop.f32.mrb[0].mxu0
  %v379 = vpop.f32.mrb[0].mxu0
  %v380 = vadd.f32 0.0, %v379
  %v381 = vpop.f32.mrb[0].mxu0
  %382 = vmatprep.mubr.bf16.mxu0 0
  %383 = vmatmul.mubr.bf16.gmra.mrb[0].mxu0 %v224
  %v384 = vpop.f32.mrb[0].mxu0
  %v385 = vadd.f32 0.0, %v384
  %v386 = vpop.f32.mrb[0].mxu0
  %v387 = vpop.f32.mrb[0].mxu0
  %v388 = vadd.f32 0.0, %v387
  %v389 = vpop.f32.mrb[0].mxu0
  %390 = vmatprep.mubr.bf16.mxu0 0
  %391 = vmatmul.mubr.bf16.gmra.mrb[0].mxu0 %v225
  %v392 = vpop.f32.mrb[0].mxu0
  %v393 = vadd.f32 0.0, %v392
  %v394 = vpop.f32.mrb[0].mxu0
  %v395 = vpop.f32.mrb[0].mxu0
  %v396 = vadd.f32 0.0, %v395
  %v397 = vpop.f32.mrb[0].mxu0
  %398 = vmatprep.mubr.bf16.mxu0 0
  %399 = vmatmul.mubr.bf16.gmra.mrb[0].mxu0 %v226
  %v400 = vpop.f32.mrb[0].mxu0
  %v401 = vadd.f32 0.0, %v400
  %v402 = vpop.f32.mrb[0].mxu0
  %v403 = vpop.f32.mrb[0].mxu0
  %v404 = vadd.f32 0.0, %v403
  %v405 = vpop.f32.mrb[0].mxu0
  %406 = vmatprep.mubr.bf16.mxu0 0
  %407 = vmatmul.mubr.bf16.gmra.mrb[0].mxu0 %v227
  %v408 = vpop.f32.mrb[0].mxu0
  %v409 = vadd.f32 0.0, %v408
  %v410 = vpop.f32.mrb[0].mxu0
  %v411 = vpop.f32.mrb[0].mxu0
  %v412 = vadd.f32 0.0, %v411
  %v413 = vpop.f32.mrb[0].mxu0
  %414 = vmatprep.mubr.bf16.mxu0 0
  %415 = vmatmul.mubr.bf16.gmra.mrb[0].mxu0 %v228
  %v416 = vpop.f32.mrb[0].mxu0
  %v417 = vadd.f32 0.0, %v416
  %v418 = vpop.f32.mrb[0].mxu0
  %v419 = vpop.f32.mrb[0].mxu0
  %v420 = vadd.f32 0.0, %v419
  %v421 = vpop.f32.mrb[0].mxu0
  %422 = vmatprep.mubr.bf16.mxu0 0
  %423 = vmatmul.mubr.bf16.gmra.mrb[0].mxu0 %v229
  %v424 = vpop.f32.mrb[0].mxu0
  %v425 = vadd.f32 0.0, %v424
  %v426 = vpop.f32.mrb[0].mxu0
  %v427 = vpop.f32.mrb[0].mxu0
  %v428 = vadd.f32 0.0, %v427
  %v429 = vpop.f32.mrb[0].mxu0
  %430 = vmatprep.mubr.bf16.mxu0 0
  %431 = vmatmul.mubr.bf16.gmra.mrb[0].mxu0 %v230
  %v432 = vpop.f32.mrb[0].mxu0
  %v433 = vadd.f32 0.0, %v432
  %v434 = vpop.f32.mrb[0].mxu0
  %v435 = vpop.f32.mrb[0].mxu0
  %v436 = vadd.f32 0.0, %v435
  %v437 = vpop.f32.mrb[0].mxu0
  %438 = vmatprep.mubr.bf16.mxu0 0
  %439 = vmatmul.mubr.bf16.gmra.mrb[0].mxu0 %v231
  %v440 = vpop.f32.mrb[0].mxu0
  %v441 = vadd.f32 0.0, %v440
  %v442 = vpop.f32.mrb[0].mxu0
  %v443 = vpop.f32.mrb[0].mxu0
  %v444 = vadd.f32 0.0, %v443
  %v445 = vpop.f32.mrb[0].mxu0
  %446 = vmatprep.mubr.bf16.mxu0 0
  %447 = vmatmul.mubr.bf16.gmra.mrb[0].mxu0 %v232
  %v448 = vpop.f32.mrb[0].mxu0
  %v449 = vadd.f32 0.0, %v448
  %v450 = vpop.f32.mrb[0].mxu0
  %v451 = vpop.f32.mrb[0].mxu0
  %v452 = vadd.f32 0.0, %v451
  %v453 = vpop.f32.mrb[0].mxu0
  %454 = vmatprep.mubr.bf16.mxu0 0
  %455 = vmatmul.mubr.bf16.gmra.mrb[0].mxu0 %v233
  %v456 = vpop.f32.mrb[0].mxu0
  %v457 = vadd.f32 0.0, %v456
  %v458 = vpop.f32.mrb[0].mxu0
  %v459 = vpop.f32.mrb[0].mxu0
  %v460 = vadd.f32 0.0, %v459
  %v461 = vpop.f32.mrb[0].mxu0
  %462 = vmatprep.mubr.bf16.mxu0 0
  %463 = vmatmul.mubr.bf16.gmra.mrb[0].mxu0 %v234
  %v464 = vpop.f32.mrb[0].mxu0
  %v465 = vadd.f32 0.0, %v464
  %v466 = vpop.f32.mrb[0].mxu0
  %v467 = vpop.f32.mrb[0].mxu0
  %v468 = vadd.f32 0.0, %v467
  %v469 = vpop.f32.mrb[0].mxu0
  %470 = vmatprep.mubr.bf16.mxu0 0
  %471 = vmatmul.mubr.bf16.gmra.mrb[0].mxu0 %v235
  %v472 = vpop.f32.mrb[0].mxu0
  %v473 = vadd.f32 0.0, %v472
  %v474 = vpop.f32.mrb[0].mxu0
  %v475 = vpop.f32.mrb[0].mxu0
  %v476 = vadd.f32 0.0, %v475
  %v477 = vpop.f32.mrb[0].mxu0
  %478 = vmatprep.mubr.bf16.mxu0 0
  %479 = vmatmul.mubr.bf16.gmra.mrb[0].mxu0 %v236
  %v480 = vpop.f32.mrb[0].mxu0
  %v481 = vadd.f32 0.0, %v480
  %v482 = vpop.f32.mrb[0].mxu0
  %v483 = vpop.f32.mrb[0].mxu0
  %v484 = vadd.f32 0.0, %v483
  %v485 = vpop.f32.mrb[0].mxu0
  %486 = vmatprep.mubr.bf16.mxu0 0
  %487 = vmatmul.mubr.bf16.gmra.mrb[0].mxu0 %v237
  %v488 = vpop.f32.mrb[0].mxu0
  %v489 = vadd.f32 0.0, %v488
  %v490 = vpop.f32.mrb[0].mxu0
  %v491 = vpop.f32.mrb[0].mxu0
  %v492 = vadd.f32 0.0, %v491
  %v493 = vpop.f32.mrb[0].mxu0
  %494 = vmatprep.mubr.bf16.mxu0 0
  %495 = vmatmul.mubr.bf16.gmra.mrb[0].mxu0 %v238
  %v496 = vpop.f32.mrb[0].mxu0
  %v497 = vadd.f32 0.0, %v496
  %v498 = vpop.f32.mrb[0].mxu0
  %v499 = vpop.f32.mrb[0].mxu0
  %v500 = vadd.f32 0.0, %v499
  %v501 = vpop.f32.mrb[0].mxu0
  %502 = vmatprep.mubr.bf16.mxu0 0
  %503 = vmatmul.mubr.bf16.gmra.mrb[0].mxu0 %v239
  %v504 = vpop.f32.mrb[0].mxu0
  %v505 = vadd.f32 0.0, %v504
  %v506 = vpop.f32.mrb[0].mxu0
  %v507 = vpop.f32.mrb[0].mxu0
  %v508 = vadd.f32 0.0, %v507
  %v509 = vpop.f32.mrb[0].mxu0
  %510 = vmatprep.mubr.bf16.mxu0 0
  %511 = vmatmul.mubr.bf16.gmra.mrb[0].mxu0 %v240
  %v512 = vpop.f32.mrb[0].mxu0
  %v513 = vadd.f32 0.0, %v512
  %v514 = vpop.f32.mrb[0].mxu0
  %v515 = vpop.f32.mrb[0].mxu0
  %v516 = vadd.f32 0.0, %v515
  %v517 = vpop.f32.mrb[0].mxu0
  %518 = vmatprep.mubr.bf16.mxu0 0
  %519 = vmatmul.mubr.bf16.gmra.mrb[0].mxu0 %v241
  %v520 = vpop.f32.mrb[0].mxu0
  %v521 = vadd.f32 0.0, %v520
  %v522 = vpop.f32.mrb[0].mxu0
  %v523 = vpop.f32.mrb[0].mxu0
  %v524 = vadd.f32 0.0, %v523
  %v525 = vpop.f32.mrb[0].mxu0
  %526 = vmatprep.mubr.bf16.mxu0 0
  %527 = vmatmul.mubr.bf16.gmra.mrb[0].mxu0 %v242
  %v528 = vpop.f32.mrb[0].mxu0
  %v529 = vadd.f32 0.0, %v528
  %v530 = vpop.f32.mrb[0].mxu0
  %v531 = vpop.f32.mrb[0].mxu0
  %v532 = vadd.f32 0.0, %v531
  %v533 = vpop.f32.mrb[0].mxu0
  %534 = vmatprep.mubr.bf16.mxu0 0
  %535 = vmatmul.mubr.bf16.gmra.mrb[0].mxu0 %v243
  %v536 = vpop.f32.mrb[0].mxu0
  %v537 = vadd.f32 0.0, %v536
  %v538 = vpop.f32.mrb[0].mxu0
  %v539 = vpop.f32.mrb[0].mxu0
  %v540 = vadd.f32 0.0, %v539
  %v541 = vpop.f32.mrb[0].mxu0
  %542 = vmatprep.mubr.bf16.mxu0 0
  %543 = vmatmul.mubr.bf16.gmra.mrb[0].mxu0 %v244
  %v544 = vpop.f32.mrb[0].mxu0
  %v545 = vadd.f32 0.0, %v544
  %v546 = vpop.f32.mrb[0].mxu0
  %v547 = vpop.f32.mrb[0].mxu0
  %v548 = vadd.f32 0.0, %v547
  %v549 = vpop.f32.mrb[0].mxu0
  %550 = vmatprep.mubr.bf16.mxu0 0
  %551 = vmatmul.mubr.bf16.gmra.mrb[0].mxu0 %v245
  %v552 = vpop.f32.mrb[0].mxu0
  %v553 = vadd.f32 0.0, %v552
  %v554 = vpop.f32.mrb[0].mxu0
  %v555 = vpop.f32.mrb[0].mxu0
  %v556 = vadd.f32 0.0, %v555
  %v557 = vpop.f32.mrb[0].mxu0
  %558 = vmatprep.mubr.bf16.mxu0 0
  %559 = vmatmul.mubr.bf16.gmra.mrb[0].mxu0 %v246
  %v560 = vpop.f32.mrb[0].mxu0
  %v561 = vadd.f32 0.0, %v560
  %v562 = vpop.f32.mrb[0].mxu0
  %v563 = vpop.f32.mrb[0].mxu0
  %v564 = vadd.f32 0.0, %v563
  %v565 = vpop.f32.mrb[0].mxu0
  %566 = vmatprep.mubr.bf16.mxu0 0
  %567 = vmatmul.mubr.bf16.gmra.mrb[0].mxu0 %v247
  %v568 = vpop.f32.mrb[0].mxu0
  %v569 = vadd.f32 0.0, %v568
  %v570 = vpop.f32.mrb[0].mxu0
  %v571 = vpop.f32.mrb[0].mxu0
  %v572 = vadd.f32 0.0, %v571
  %v573 = vpop.f32.mrb[0].mxu0
  %574 = vmatprep.mubr.bf16.mxu0 0
  %575 = vmatmul.mubr.bf16.gmra.mrb[0].mxu0 %v248
  %v576 = vpop.f32.mrb[0].mxu0
  %v577 = vadd.f32 0.0, %v576
  %v578 = vpop.f32.mrb[0].mxu0
  %v579 = vpop.f32.mrb[0].mxu0
  %v580 = vadd.f32 0.0, %v579
  %v581 = vpop.f32.mrb[0].mxu0
  %582 = vmatprep.mubr.bf16.mxu0 0
  %583 = vmatmul.mubr.bf16.gmra.mrb[0].mxu0 %v249
  %v584 = vpop.f32.mrb[0].mxu0
  %v585 = vadd.f32 0.0, %v584
  %v586 = vpop.f32.mrb[0].mxu0
  %v587 = vpop.f32.mrb[0].mxu0
  %v588 = vadd.f32 0.0, %v587
  %v589 = vpop.f32.mrb[0].mxu0
  %590 = vmatprep.mubr.bf16.mxu0 0
  %591 = vmatmul.mubr.bf16.gmra.mrb[0].mxu0 %v250
  %v592 = vpop.f32.mrb[0].mxu0
  %v593 = vadd.f32 0.0, %v592
  %v594 = vpop.f32.mrb[0].mxu0
  %v595 = vpop.f32.mrb[0].mxu0
  %v596 = vadd.f32 0.0, %v595
  %v597 = vpop.f32.mrb[0].mxu0
  %598 = vmatprep.mubr.bf16.mxu0 0
  %599 = vmatmul.mubr.bf16.gmra.mrb[0].mxu0 %v251
  %v600 = vpop.f32.mrb[0].mxu0
  %v601 = vadd.f32 0.0, %v600
  %v602 = vpop.f32.mrb[0].mxu0
  %v603 = vpop.f32.mrb[0].mxu0
  %v604 = vadd.f32 0.0, %v603
  %v605 = vpop.f32.mrb[0].mxu0
  %606 = vmatprep.mubr.bf16.mxu0 0
  %607 = vmatmul.mubr.bf16.gmra.mrb[0].mxu0 %v252
  %v608 = vpop.f32.mrb[0].mxu0
  %v609 = vadd.f32 0.0, %v608
  %v610 = vpop.f32.mrb[0].mxu0
  %v611 = vpop.f32.mrb[0].mxu0
  %v612 = vadd.f32 0.0, %v611
  %v613 = vpop.f32.mrb[0].mxu0
  %614 = vmatprep.mubr.bf16.mxu0 0
  %615 = vmatmul.mubr.bf16.gmra.mrb[0].mxu0 %v253
  %v616 = vpop.f32.mrb[0].mxu0
  %v617 = vadd.f32 0.0, %v616
  %v618 = vpop.f32.mrb[0].mxu0
  %v619 = vpop.f32.mrb[0].mxu0
  %v620 = vadd.f32 0.0, %v619
  %v621 = vpop.f32.mrb[0].mxu0
  %622 = vdwg.mxu0
  %v623 = vpack.c.bf16 %v372, %v369
  %v624 = vpack.c.bf16 %v380, %v377
  %v625 = vpack.c.bf16 %v388, %v385
  %v626 = vpack.c.bf16 %v396, %v393
  %v627 = vpack.c.bf16 %v404, %v401
  %v628 = vpack.c.bf16 %v412, %v409
  %v629 = vpack.c.bf16 %v420, %v417
  %v630 = vpack.c.bf16 %v428, %v425
  %v631 = vpack.c.bf16 %v436, %v433
  %v632 = vpack.c.bf16 %v444, %v441
  %v633 = vpack.c.bf16 %v452, %v449
  %v634 = vpack.c.bf16 %v460, %v457
  %v635 = vpack.c.bf16 %v468, %v465
  %v636 = vpack.c.bf16 %v476, %v473
  %v637 = vpack.c.bf16 %v484, %v481
  %v638 = vpack.c.bf16 %v492, %v489
  %v639 = vpack.c.bf16 %v500, %v497
  %v640 = vpack.c.bf16 %v508, %v505
  %v641 = vpack.c.bf16 %v516, %v513
  %v642 = vpack.c.bf16 %v524, %v521
  %v643 = vpack.c.bf16 %v532, %v529
  %v644 = vpack.c.bf16 %v540, %v537
  %v645 = vpack.c.bf16 %v548, %v545
  %v646 = vpack.c.bf16 %v556, %v553
  %v647 = vpack.c.bf16 %v564, %v561
  %v648 = vpack.c.bf16 %v572, %v569
  %v649 = vpack.c.bf16 %v580, %v577
  %v650 = vpack.c.bf16 %v588, %v585
  %v651 = vpack.c.bf16 %v596, %v593
  %v652 = vpack.c.bf16 %v604, %v601
  %v653 = vpack.c.bf16 %v612, %v609
  %v654 = vpack.c.bf16 %v620, %v617
  %v687 = vunpack.c.l.b16 %v623
  %v688 = vunpack.c.h.b16 %v623
  %v689 = vunpack.c.l.b16 %v624
  %v690 = vunpack.c.h.b16 %v624
  %v691 = vunpack.c.l.b16 %v625
  %v692 = vunpack.c.h.b16 %v625
  %v693 = vunpack.c.l.b16 %v626
  %v694 = vunpack.c.h.b16 %v626
  %v695 = vunpack.c.l.b16 %v627
  %v696 = vunpack.c.h.b16 %v627
  %v697 = vunpack.c.l.b16 %v628
  %v698 = vunpack.c.h.b16 %v628
  %v699 = vunpack.c.l.b16 %v629
  %v700 = vunpack.c.h.b16 %v629
  %v701 = vunpack.c.l.b16 %v630
  %v702 = vunpack.c.h.b16 %v630
  %v703 = vunpack.c.l.b16 %v631
  %v704 = vunpack.c.h.b16 %v631
  %v705 = vunpack.c.l.b16 %v632
  %v706 = vunpack.c.h.b16 %v632
  %v707 = vunpack.c.l.b16 %v633
  %v708 = vunpack.c.h.b16 %v633
  %v709 = vunpack.c.l.b16 %v634
  %v710 = vunpack.c.h.b16 %v634
  %v711 = vunpack.c.l.b16 %v635
  %v712 = vunpack.c.h.b16 %v635
  %v713 = vunpack.c.l.b16 %v636
  %v714 = vunpack.c.h.b16 %v636
  %v715 = vunpack.c.l.b16 %v637
  %v716 = vunpack.c.h.b16 %v637
  %v717 = vunpack.c.l.b16 %v638
  %v718 = vunpack.c.h.b16 %v638
  %v719 = vunpack.c.l.b16 %v639
  %v720 = vunpack.c.h.b16 %v639
  %v721 = vunpack.c.l.b16 %v640
  %v722 = vunpack.c.h.b16 %v640
  %v723 = vunpack.c.l.b16 %v641
  %v724 = vunpack.c.h.b16 %v641
  %v725 = vunpack.c.l.b16 %v642
  %v726 = vunpack.c.h.b16 %v642
  %v727 = vunpack.c.l.b16 %v643
  %v728 = vunpack.c.h.b16 %v643
  %v729 = vunpack.c.l.b16 %v644
  %v730 = vunpack.c.h.b16 %v644
  %v731 = vunpack.c.l.b16 %v645
  %v732 = vunpack.c.h.b16 %v645
  %v733 = vunpack.c.l.b16 %v646
  %v734 = vunpack.c.h.b16 %v646
  %v735 = vunpack.c.l.b16 %v647
  %v736 = vunpack.c.h.b16 %v647
  %v737 = vunpack.c.l.b16 %v648
  %v738 = vunpack.c.h.b16 %v648
  %v739 = vunpack.c.l.b16 %v649
  %v740 = vunpack.c.h.b16 %v649
  %v741 = vunpack.c.l.b16 %v650
  %v742 = vunpack.c.h.b16 %v650
  %v743 = vunpack.c.l.b16 %v651
  %v744 = vunpack.c.h.b16 %v651
  %v745 = vunpack.c.l.b16 %v652
  %v746 = vunpack.c.h.b16 %v652
  %v747 = vunpack.c.l.b16 %v653
  %v748 = vunpack.c.h.b16 %v653
  %v749 = vunpack.c.l.b16 %v654
  %v750 = vunpack.c.h.b16 %v654
  %v751 = vpack.c.b16 %v687, %v687
  %v752 = vpack.c.b16 %v688, %v688
  %v753 = vpack.c.b16 %v689, %v689
  %v754 = vpack.c.b16 %v690, %v690
  %v755 = vpack.c.b16 %v691, %v691
  %v756 = vpack.c.b16 %v692, %v692
  %v757 = vpack.c.b16 %v693, %v693
  %v758 = vpack.c.b16 %v694, %v694
  %v759 = vpack.c.b16 %v695, %v695
  %v760 = vpack.c.b16 %v696, %v696
  %v761 = vpack.c.b16 %v697, %v697
  %v762 = vpack.c.b16 %v698, %v698
  %v763 = vpack.c.b16 %v699, %v699
  %v764 = vpack.c.b16 %v700, %v700
  %v765 = vpack.c.b16 %v701, %v701
  %v766 = vpack.c.b16 %v702, %v702
  %v767 = vpack.c.b16 %v703, %v703
  %v768 = vpack.c.b16 %v704, %v704
  %v769 = vpack.c.b16 %v705, %v705
  %v770 = vpack.c.b16 %v706, %v706
  %v771 = vpack.c.b16 %v707, %v707
  %v772 = vpack.c.b16 %v708, %v708
  %v773 = vpack.c.b16 %v709, %v709
  %v774 = vpack.c.b16 %v710, %v710
  %v775 = vpack.c.b16 %v711, %v711
  %v776 = vpack.c.b16 %v712, %v712
  %v777 = vpack.c.b16 %v713, %v713
  %v778 = vpack.c.b16 %v714, %v714
  %v779 = vpack.c.b16 %v715, %v715
  %v780 = vpack.c.b16 %v716, %v716
  %v781 = vpack.c.b16 %v717, %v717
  %v782 = vpack.c.b16 %v718, %v718
  %v783 = vpack.c.b16 %v719, %v719
  %v784 = vpack.c.b16 %v720, %v720
  %v785 = vpack.c.b16 %v721, %v721
  %v786 = vpack.c.b16 %v722, %v722
  %v787 = vpack.c.b16 %v723, %v723
  %v788 = vpack.c.b16 %v724, %v724
  %v789 = vpack.c.b16 %v725, %v725
  %v790 = vpack.c.b16 %v726, %v726
  %v791 = vpack.c.b16 %v727, %v727
  %v792 = vpack.c.b16 %v728, %v728
  %v793 = vpack.c.b16 %v729, %v729
  %v794 = vpack.c.b16 %v730, %v730
  %v795 = vpack.c.b16 %v731, %v731
  %v796 = vpack.c.b16 %v732, %v732
  %v797 = vpack.c.b16 %v733, %v733
  %v798 = vpack.c.b16 %v734, %v734
  %v799 = vpack.c.b16 %v735, %v735
  %v800 = vpack.c.b16 %v736, %v736
  %v801 = vpack.c.b16 %v737, %v737
  %v802 = vpack.c.b16 %v738, %v738
  %v803 = vpack.c.b16 %v739, %v739
  %v804 = vpack.c.b16 %v740, %v740
  %v805 = vpack.c.b16 %v741, %v741
  %v806 = vpack.c.b16 %v742, %v742
  %v807 = vpack.c.b16 %v743, %v743
  %v808 = vpack.c.b16 %v744, %v744
  %v809 = vpack.c.b16 %v745, %v745
  %v810 = vpack.c.b16 %v746, %v746
  %v811 = vpack.c.b16 %v747, %v747
  %v812 = vpack.c.b16 %v748, %v748
  %v813 = vpack.c.b16 %v749, %v749
  %v814 = vpack.c.b16 %v750, %v750
  %879 = vst [vmem:[%s2] sm:$0xf] %v751
  %880 = vst [vmem:[%s2 + $0x4] sm:$0xf] %v752
  %881 = vst [vmem:[%s2 + $0x8] sm:$0xf] %v753
  %882 = vst [vmem:[%s2 + $0xc] sm:$0xf] %v754
  %883 = vst [vmem:[%s2 + $0x10] sm:$0xf] %v755
  %884 = vst [vmem:[%s2 + $0x14] sm:$0xf] %v756
  %885 = vst [vmem:[%s2 + $0x18] sm:$0xf] %v757
  %886 = vst [vmem:[%s2 + $0x1c] sm:$0xf] %v758
  %887 = vst [vmem:[%s2 + $0x20] sm:$0xf] %v759
  %888 = vst [vmem:[%s2 + $0x24] sm:$0xf] %v760
  %889 = vst [vmem:[%s2 + $0x28] sm:$0xf] %v761
  %890 = vst [vmem:[%s2 + $0x2c] sm:$0xf] %v762
  %891 = vst [vmem:[%s2 + $0x30] sm:$0xf] %v763
  %892 = vst [vmem:[%s2 + $0x34] sm:$0xf] %v764
  %893 = vst [vmem:[%s2 + $0x38] sm:$0xf] %v765
  %894 = vst [vmem:[%s2 + $0x3c] sm:$0xf] %v766
  %895 = vst [vmem:[%s2 + $0x40] sm:$0xf] %v767
  %896 = vst [vmem:[%s2 + $0x44] sm:$0xf] %v768
  %897 = vst [vmem:[%s2 + $0x48] sm:$0xf] %v769
  %898 = vst [vmem:[%s2 + $0x4c] sm:$0xf] %v770
  %899 = vst [vmem:[%s2 + $0x50] sm:$0xf] %v771
  %900 = vst [vmem:[%s2 + $0x54] sm:$0xf] %v772
  %901 = vst [vmem:[%s2 + $0x58] sm:$0xf] %v773
  %902 = vst [vmem:[%s2 + $0x5c] sm:$0xf] %v774
  %903 = vst [vmem:[%s2 + $0x60] sm:$0xf] %v775
  %904 = vst [vmem:[%s2 + $0x64] sm:$0xf] %v776
  %905 = vst [vmem:[%s2 + $0x68] sm:$0xf] %v777
  %906 = vst [vmem:[%s2 + $0x6c] sm:$0xf] %v778
  %907 = vst [vmem:[%s2 + $0x70] sm:$0xf] %v779
  %908 = vst [vmem:[%s2 + $0x74] sm:$0xf] %v780
  %909 = vst [vmem:[%s2 + $0x78] sm:$0xf] %v781
  %910 = vst [vmem:[%s2 + $0x7c] sm:$0xf] %v782
  %911 = vst [vmem:[%s2 + $0x80] sm:$0xf] %v783
  %912 = vst [vmem:[%s2 + $0x84] sm:$0xf] %v784
  %913 = vst [vmem:[%s2 + $0x88] sm:$0xf] %v785
  %914 = vst [vmem:[%s2 + $0x8c] sm:$0xf] %v786
  %915 = vst [vmem:[%s2 + $0x90] sm:$0xf] %v787
  %916 = vst [vmem:[%s2 + $0x94] sm:$0xf] %v788
  %917 = vst [vmem:[%s2 + $0x98] sm:$0xf] %v789
  %918 = vst [vmem:[%s2 + $0x9c] sm:$0xf] %v790
  %919 = vst [vmem:[%s2 + $0xa0] sm:$0xf] %v791
  %920 = vst [vmem:[%s2 + $0xa4] sm:$0xf] %v792
  %921 = vst [vmem:[%s2 + $0xa8] sm:$0xf] %v793
  %922 = vst [vmem:[%s2 + $0xac] sm:$0xf] %v794
  %923 = vst [vmem:[%s2 + $0xb0] sm:$0xf] %v795
  %924 = vst [vmem:[%s2 + $0xb4] sm:$0xf] %v796
  %925 = vst [vmem:[%s2 + $0xb8] sm:$0xf] %v797
  %926 = vst [vmem:[%s2 + $0xbc] sm:$0xf] %v798
  %927 = vst [vmem:[%s2 + $0xc0] sm:$0xf] %v799
  %928 = vst [vmem:[%s2 + $0xc4] sm:$0xf] %v800
  %929 = vst [vmem:[%s2 + $0xc8] sm:$0xf] %v801
  %930 = vst [vmem:[%s2 + $0xcc] sm:$0xf] %v802
  %931 = vst [vmem:[%s2 + $0xd0] sm:$0xf] %v803
  %932 = vst [vmem:[%s2 + $0xd4] sm:$0xf] %v804
  %933 = vst [vmem:[%s2 + $0xd8] sm:$0xf] %v805
  %934 = vst [vmem:[%s2 + $0xdc] sm:$0xf] %v806
  %935 = vst [vmem:[%s2 + $0xe0] sm:$0xf] %v807
  %936 = vst [vmem:[%s2 + $0xe4] sm:$0xf] %v808
  %937 = vst [vmem:[%s2 + $0xe8] sm:$0xf] %v809
  %938 = vst [vmem:[%s2 + $0xec] sm:$0xf] %v810
  %939 = vst [vmem:[%s2 + $0xf0] sm:$0xf] %v811
  %940 = vst [vmem:[%s2 + $0xf4] sm:$0xf] %v812
  %941 = vst [vmem:[%s2 + $0xf8] sm:$0xf] %v813
  %942 = vst [vmem:[%s2 + $0xfc] sm:$0xf] %v814
  %v943 = vadd.f32 %v369, %v372
  %v944 = vadd.f32 %v943, %v377
  %v945 = vadd.f32 %v944, %v380
  %v946 = vadd.f32 %v945, %v385
  %v947 = vadd.f32 %v946, %v388
  %v948 = vadd.f32 %v947, %v393
  %v949 = vadd.f32 %v948, %v396
  %v950 = vadd.f32 %v949, %v401
  %v951 = vadd.f32 %v950, %v404
  %v952 = vadd.f32 %v951, %v409
  %v953 = vadd.f32 %v952, %v412
  %v954 = vadd.f32 %v953, %v417
  %v955 = vadd.f32 %v954, %v420
  %v956 = vadd.f32 %v955, %v425
  %v957 = vadd.f32 %v956, %v428
  %v958 = vadd.f32 %v957, %v433
  %v959 = vadd.f32 %v958, %v436
  %v960 = vadd.f32 %v959, %v441
  %v961 = vadd.f32 %v960, %v444
  %v962 = vadd.f32 %v961, %v449
  %v963 = vadd.f32 %v962, %v452
  %v964 = vadd.f32 %v963, %v457
  %v965 = vadd.f32 %v964, %v460
  %v966 = vadd.f32 %v965, %v465
  %v967 = vadd.f32 %v966, %v468
  %v968 = vadd.f32 %v967, %v473
  %v969 = vadd.f32 %v968, %v476
  %v970 = vadd.f32 %v969, %v481
  %v971 = vadd.f32 %v970, %v484
  %v972 = vadd.f32 %v971, %v489
  %v973 = vadd.f32 %v972, %v492
  %v974 = vadd.f32 %v973, %v497
  %v975 = vadd.f32 %v974, %v500
  %v976 = vadd.f32 %v975, %v505
  %v977 = vadd.f32 %v976, %v508
  %v978 = vadd.f32 %v977, %v513
  %v979 = vadd.f32 %v978, %v516
  %v980 = vadd.f32 %v979, %v521
  %v981 = vadd.f32 %v980, %v524
  %v982 = vadd.f32 %v981, %v529
  %v983 = vadd.f32 %v982, %v532
  %v984 = vadd.f32 %v983, %v537
  %v985 = vadd.f32 %v984, %v540
  %v986 = vadd.f32 %v985, %v545
  %v987 = vadd.f32 %v986, %v548
  %v988 = vadd.f32 %v987, %v553
  %v989 = vadd.f32 %v988, %v556
  %v990 = vadd.f32 %v989, %v561
  %v991 = vadd.f32 %v990, %v564
  %v992 = vadd.f32 %v991, %v569
  %v993 = vadd.f32 %v992, %v572
  %v994 = vadd.f32 %v993, %v577
  %v995 = vadd.f32 %v994, %v580
  %v996 = vadd.f32 %v995, %v585
  %v997 = vadd.f32 %v996, %v588
  %v998 = vadd.f32 %v997, %v593
  %v999 = vadd.f32 %v998, %v596
  %v1000 = vadd.f32 %v999, %v601
  %v1001 = vadd.f32 %v1000, %v604
  %v1002 = vadd.f32 %v1001, %v609
  %v1003 = vadd.f32 %v1002, %v612
  %v1004 = vadd.f32 %v1003, %v617
  %v1005 = vadd.f32 %v1004, %v620
  %v1006 = vrot.slane %v1005, 4
  %v1007 = vadd.f32 %v1005, %v1006
  %v1008 = vrot.slane %v1007, 2
  %v1009 = vadd.f32 %v1007, %v1008
  %v1010 = vrot.slane %v1009, 1
  %v1011 = vadd.f32 %v1009, %v1010
  %1012 = vst [vmem:[%s3] sm:$0x1] %v1011
  %v1013 = vmul.f32 %v369, %v369
  %v1014 = vmul.f32 %v372, %v372
  %v1015 = vmul.f32 %v377, %v377
  %v1016 = vmul.f32 %v380, %v380
  %v1017 = vmul.f32 %v385, %v385
  %v1018 = vmul.f32 %v388, %v388
  %v1019 = vmul.f32 %v393, %v393
  %v1020 = vmul.f32 %v396, %v396
  %v1021 = vmul.f32 %v401, %v401
  %v1022 = vmul.f32 %v404, %v404
  %v1023 = vmul.f32 %v409, %v409
  %v1024 = vmul.f32 %v412, %v412
  %v1025 = vmul.f32 %v417, %v417
  %v1026 = vmul.f32 %v420, %v420
  %v1027 = vmul.f32 %v425, %v425
  %v1028 = vmul.f32 %v428, %v428
  %v1029 = vmul.f32 %v433, %v433
  %v1030 = vmul.f32 %v436, %v436
  %v1031 = vmul.f32 %v441, %v441
  %v1032 = vmul.f32 %v444, %v444
  %v1033 = vmul.f32 %v449, %v449
  %v1034 = vmul.f32 %v452, %v452
  %v1035 = vmul.f32 %v457, %v457
  %v1036 = vmul.f32 %v460, %v460
  %v1037 = vmul.f32 %v465, %v465
  %v1038 = vmul.f32 %v468, %v468
  %v1039 = vmul.f32 %v473, %v473
  %v1040 = vmul.f32 %v476, %v476
  %v1041 = vmul.f32 %v481, %v481
  %v1042 = vmul.f32 %v484, %v484
  %v1043 = vmul.f32 %v489, %v489
  %v1044 = vmul.f32 %v492, %v492
  %v1045 = vmul.f32 %v497, %v497
  %v1046 = vmul.f32 %v500, %v500
  %v1047 = vmul.f32 %v505, %v505
  %v1048 = vmul.f32 %v508, %v508
  %v1049 = vmul.f32 %v513, %v513
  %v1050 = vmul.f32 %v516, %v516
  %v1051 = vmul.f32 %v521, %v521
  %v1052 = vmul.f32 %v524, %v524
  %v1053 = vmul.f32 %v529, %v529
  %v1054 = vmul.f32 %v532, %v532
  %v1055 = vmul.f32 %v537, %v537
  %v1056 = vmul.f32 %v540, %v540
  %v1057 = vmul.f32 %v545, %v545
  %v1058 = vmul.f32 %v548, %v548
  %v1059 = vmul.f32 %v553, %v553
  %v1060 = vmul.f32 %v556, %v556
  %v1061 = vmul.f32 %v561, %v561
  %v1062 = vmul.f32 %v564, %v564
  %v1063 = vmul.f32 %v569, %v569
  %v1064 = vmul.f32 %v572, %v572
  %v1065 = vmul.f32 %v577, %v577
  %v1066 = vmul.f32 %v580, %v580
  %v1067 = vmul.f32 %v585, %v585
  %v1068 = vmul.f32 %v588, %v588
  %v1069 = vmul.f32 %v593, %v593
  %v1070 = vmul.f32 %v596, %v596
  %v1071 = vmul.f32 %v601, %v601
  %v1072 = vmul.f32 %v604, %v604
  %v1073 = vmul.f32 %v609, %v609
  %v1074 = vmul.f32 %v612, %v612
  %v1075 = vmul.f32 %v617, %v617
  %v1076 = vmul.f32 %v620, %v620
  %v1077 = vadd.f32 %v1013, %v1014
  %v1078 = vadd.f32 %v1077, %v1015
  %v1079 = vadd.f32 %v1078, %v1016
  %v1080 = vadd.f32 %v1079, %v1017
  %v1081 = vadd.f32 %v1080, %v1018
  %v1082 = vadd.f32 %v1081, %v1019
  %v1083 = vadd.f32 %v1082, %v1020
  %v1084 = vadd.f32 %v1083, %v1021
  %v1085 = vadd.f32 %v1084, %v1022
  %v1086 = vadd.f32 %v1085, %v1023
  %v1087 = vadd.f32 %v1086, %v1024
  %v1088 = vadd.f32 %v1087, %v1025
  %v1089 = vadd.f32 %v1088, %v1026
  %v1090 = vadd.f32 %v1089, %v1027
  %v1091 = vadd.f32 %v1090, %v1028
  %v1092 = vadd.f32 %v1091, %v1029
  %v1093 = vadd.f32 %v1092, %v1030
  %v1094 = vadd.f32 %v1093, %v1031
  %v1095 = vadd.f32 %v1094, %v1032
  %v1096 = vadd.f32 %v1095, %v1033
  %v1097 = vadd.f32 %v1096, %v1034
  %v1098 = vadd.f32 %v1097, %v1035
  %v1099 = vadd.f32 %v1098, %v1036
  %v1100 = vadd.f32 %v1099, %v1037
  %v1101 = vadd.f32 %v1100, %v1038
  %v1102 = vadd.f32 %v1101, %v1039
  %v1103 = vadd.f32 %v1102, %v1040
  %v1104 = vadd.f32 %v1103, %v1041
  %v1105 = vadd.f32 %v1104, %v1042
  %v1106 = vadd.f32 %v1105, %v1043
  %v1107 = vadd.f32 %v1106, %v1044
  %v1108 = vadd.f32 %v1107, %v1045
  %v1109 = vadd.f32 %v1108, %v1046
  %v1110 = vadd.f32 %v1109, %v1047
  %v1111 = vadd.f32 %v1110, %v1048
  %v1112 = vadd.f32 %v1111, %v1049
  %v1113 = vadd.f32 %v1112, %v1050
  %v1114 = vadd.f32 %v1113, %v1051
  %v1115 = vadd.f32 %v1114, %v1052
  %v1116 = vadd.f32 %v1115, %v1053
  %v1117 = vadd.f32 %v1116, %v1054
  %v1118 = vadd.f32 %v1117, %v1055
  %v1119 = vadd.f32 %v1118, %v1056
  %v1120 = vadd.f32 %v1119, %v1057
  %v1121 = vadd.f32 %v1120, %v1058
  %v1122 = vadd.f32 %v1121, %v1059
  %v1123 = vadd.f32 %v1122, %v1060
  %v1124 = vadd.f32 %v1123, %v1061
  %v1125 = vadd.f32 %v1124, %v1062
  %v1126 = vadd.f32 %v1125, %v1063
  %v1127 = vadd.f32 %v1126, %v1064
  %v1128 = vadd.f32 %v1127, %v1065
  %v1129 = vadd.f32 %v1128, %v1066
  %v1130 = vadd.f32 %v1129, %v1067
  %v1131 = vadd.f32 %v1130, %v1068
  %v1132 = vadd.f32 %v1131, %v1069
  %v1133 = vadd.f32 %v1132, %v1070
  %v1134 = vadd.f32 %v1133, %v1071
  %v1135 = vadd.f32 %v1134, %v1072
  %v1136 = vadd.f32 %v1135, %v1073
  %v1137 = vadd.f32 %v1136, %v1074
  %v1138 = vadd.f32 %v1137, %v1075
  %v1139 = vadd.f32 %v1138, %v1076
  %v1140 = vrot.slane %v1139, 4
  %v1141 = vadd.f32 %v1139, %v1140
  %v1142 = vrot.slane %v1141, 2
  %v1143 = vadd.f32 %v1141, %v1142
  %v1144 = vrot.slane %v1143, 1
  %v1145 = vadd.f32 %v1143, %v1144
  %1146 = vst [vmem:[%s3 + $0x1] sm:$0x1] %v1145
  // Predicated region
  $region10: #{bottleneck_forward.5} parent=0 // pred_check
    _
  $region11: #{bottleneck_forward.5} parent=0 // pred_check_branch
    %1148 = sbr.rel (0) target = $region13
  $region12: #{bottleneck_forward.5} parent=0 // pred_region
    _
  $region13: #{bottleneck_forward.5} parent=0 // pred_fallthru
    _
  // Predicated region
  $region14: #{bottleneck_forward.5} parent=0 // pred_check
    _
  $region15: #{bottleneck_forward.5} parent=0 // pred_check_branch
    %1150 = sbr.rel (0) target = $region17
  $region16: #{bottleneck_forward.5} parent=0 // pred_region
    _
  $region17: #{bottleneck_forward.5} parent=0 // pred_fallthru
    _
  // Predicated region
  $region18: #{bottleneck_forward.5} parent=0 // pred_check
    _
  $region19: #{bottleneck_forward.5} parent=0 // pred_check_branch
    %1152 = sbr.rel (0) target = $region21
  $region20: #{bottleneck_forward.5} parent=0 // pred_region
    _
  $region21: #{bottleneck_forward.5} parent=0 // pred_fallthru
    _
  // Predicated region
  $region22: #{bottleneck_forward.5} parent=0 // pred_check
    _
  $region23: #{bottleneck_forward.5} parent=0 // pred_check_branch
    %1154 = sbr.rel (0) target = $region25
  $region24: #{bottleneck_forward.5} parent=0 // pred_region
    _
  $region25: #{bottleneck_forward.5} parent=0 // pred_fallthru
    _

// kernel: bottleneck_forward.7
$region0: #{bottleneck_forward.7}
  #allocation0 [shape = 'u32[]', space=smem, size = 0x4, offset = 0x4, fixed_abs, tag = 'smem constant byte address 0x4 - core index']
  #allocation1 [shape = 'u32[144,128]{1,0:T(1,128)}', space=vmem, size = 0x12000, scoped, tag = 'internal scratch']
  %s0 = inlined_call_operand.vmem [shape: bf16[512,128], index: 0, kind: input, shape index: {}]
  %s1 = inlined_call_operand.vmem [shape: f32[1,128], index: 1, kind: input, shape index: {}]
  %s2 = inlined_call_operand.vmem [shape: f32[1,128], index: 2, kind: input, shape index: {}]
  %s3 = inlined_call_operand.vmem [shape: bf16[128,128], index: 3, kind: input, shape index: {}]
  %s4 = inlined_call_operand.vmem [shape: bf16[512,128], index: 4, kind: output, shape index: {0}]
  %s5 = inlined_call_operand.vmem [shape: f32[1,2,128], index: 5, kind: output, shape index: {1}]
  %6 = xla_tuple %s4, %s5
  %s7 = sld [smem:[#allocation0]]
  $region34: #{bottleneck_forward.7} parent=0
    _
  %s9 = ssub.s32 1, %s7
  %s10 = scalar_select 0, %s9, %s7
  // Predicated region
  $region2: #{bottleneck_forward.7} parent=0 // pred_check
    _
  $region3: #{bottleneck_forward.7} parent=0 // pred_check_branch
    %12 = sbr.rel (0) target = $region5
  $region4: #{bottleneck_forward.7} parent=0 // pred_region
    _
  $region5: #{bottleneck_forward.7} parent=0 // pred_fallthru
    _
  // Predicated region
  $region6: #{bottleneck_forward.7} parent=0 // pred_check
    _
  $region7: #{bottleneck_forward.7} parent=0 // pred_check_branch
    %14 = sbr.rel (0) target = $region9
  $region8: #{bottleneck_forward.7} parent=0 // pred_region
    _
  $region9: #{bottleneck_forward.7} parent=0 // pred_fallthru
    _
  // Predicated region
  $region10: #{bottleneck_forward.7} parent=0 // pred_check
    _
  $region11: #{bottleneck_forward.7} parent=0 // pred_check_branch
    %16 = sbr.rel (0) target = $region13
  $region12: #{bottleneck_forward.7} parent=0 // pred_region
    _
  $region13: #{bottleneck_forward.7} parent=0 // pred_fallthru
    _
  // Predicated region
  $region14: #{bottleneck_forward.7} parent=0 // pred_check
    _
  $region15: #{bottleneck_forward.7} parent=0 // pred_check_branch
    %18 = sbr.rel (0) target = $region17
  $region16: #{bottleneck_forward.7} parent=0 // pred_region
    _
  $region17: #{bottleneck_forward.7} parent=0 // pred_fallthru
    _
  %v20 = vld [vmem:[%s0] sm:$0xf]
  %v21 = vld [vmem:[%s0 + $0x4] sm:$0xf]
  %v22 = vld [vmem:[%s0 + $0x8] sm:$0xf]
  %v23 = vld [vmem:[%s0 + $0xc] sm:$0xf]
  %v24 = vld [vmem:[%s0 + $0x10] sm:$0xf]
  %v25 = vld [vmem:[%s0 + $0x14] sm:$0xf]
  %v26 = vld [vmem:[%s0 + $0x18] sm:$0xf]
  %v27 = vld [vmem:[%s0 + $0x1c] sm:$0xf]
  %v28 = vld [vmem:[%s0 + $0x20] sm:$0xf]
  %v29 = vld [vmem:[%s0 + $0x24] sm:$0xf]
  %v30 = vld [vmem:[%s0 + $0x28] sm:$0xf]
  %v31 = vld [vmem:[%s0 + $0x2c] sm:$0xf]
  %v32 = vld [vmem:[%s0 + $0x30] sm:$0xf]
  %v33 = vld [vmem:[%s0 + $0x34] sm:$0xf]
  %v34 = vld [vmem:[%s0 + $0x38] sm:$0xf]
  %v35 = vld [vmem:[%s0 + $0x3c] sm:$0xf]
  %v36 = vld [vmem:[%s0 + $0x40] sm:$0xf]
  %v37 = vld [vmem:[%s0 + $0x44] sm:$0xf]
  %v38 = vld [vmem:[%s0 + $0x48] sm:$0xf]
  %v39 = vld [vmem:[%s0 + $0x4c] sm:$0xf]
  %v40 = vld [vmem:[%s0 + $0x50] sm:$0xf]
  %v41 = vld [vmem:[%s0 + $0x54] sm:$0xf]
  %v42 = vld [vmem:[%s0 + $0x58] sm:$0xf]
  %v43 = vld [vmem:[%s0 + $0x5c] sm:$0xf]
  %v44 = vld [vmem:[%s0 + $0x60] sm:$0xf]
  %v45 = vld [vmem:[%s0 + $0x64] sm:$0xf]
  %v46 = vld [vmem:[%s0 + $0x68] sm:$0xf]
  %v47 = vld [vmem:[%s0 + $0x6c] sm:$0xf]
  %v48 = vld [vmem:[%s0 + $0x70] sm:$0xf]
  %v49 = vld [vmem:[%s0 + $0x74] sm:$0xf]
  %v50 = vld [vmem:[%s0 + $0x78] sm:$0xf]
  %v51 = vld [vmem:[%s0 + $0x7c] sm:$0xf]
  %v52 = vld [vmem:[%s0 + $0x80] sm:$0xf]
  %v53 = vld [vmem:[%s0 + $0x84] sm:$0xf]
  %v54 = vld [vmem:[%s0 + $0x88] sm:$0xf]
  %v55 = vld [vmem:[%s0 + $0x8c] sm:$0xf]
  %v56 = vld [vmem:[%s0 + $0x90] sm:$0xf]
  %v57 = vld [vmem:[%s0 + $0x94] sm:$0xf]
  %v58 = vld [vmem:[%s0 + $0x98] sm:$0xf]
  %v59 = vld [vmem:[%s0 + $0x9c] sm:$0xf]
  %v60 = vld [vmem:[%s0 + $0xa0] sm:$0xf]
  %v61 = vld [vmem:[%s0 + $0xa4] sm:$0xf]
  %v62 = vld [vmem:[%s0 + $0xa8] sm:$0xf]
  %v63 = vld [vmem:[%s0 + $0xac] sm:$0xf]
  %v64 = vld [vmem:[%s0 + $0xb0] sm:$0xf]
  %v65 = vld [vmem:[%s0 + $0xb4] sm:$0xf]
  %v66 = vld [vmem:[%s0 + $0xb8] sm:$0xf]
  %v67 = vld [vmem:[%s0 + $0xbc] sm:$0xf]
  %v68 = vld [vmem:[%s0 + $0xc0] sm:$0xf]
  %v69 = vld [vmem:[%s0 + $0xc4] sm:$0xf]
  %v70 = vld [vmem:[%s0 + $0xc8] sm:$0xf]
  %v71 = vld [vmem:[%s0 + $0xcc] sm:$0xf]
  %v72 = vld [vmem:[%s0 + $0xd0] sm:$0xf]
  %v73 = vld [vmem:[%s0 + $0xd4] sm:$0xf]
  %v74 = vld [vmem:[%s0 + $0xd8] sm:$0xf]
  %v75 = vld [vmem:[%s0 + $0xdc] sm:$0xf]
  %v76 = vld [vmem:[%s0 + $0xe0] sm:$0xf]
  %v77 = vld [vmem:[%s0 + $0xe4] sm:$0xf]
  %v78 = vld [vmem:[%s0 + $0xe8] sm:$0xf]
  %v79 = vld [vmem:[%s0 + $0xec] sm:$0xf]
  %v80 = vld [vmem:[%s0 + $0xf0] sm:$0xf]
  %v81 = vld [vmem:[%s0 + $0xf4] sm:$0xf]
  %v82 = vld [vmem:[%s0 + $0xf8] sm:$0xf]
  %v83 = vld [vmem:[%s0 + $0xfc] sm:$0xf]
  %v84 = vunpack.c.l.bf16 %v20
  %v85 = vunpack.c.l.bf16 %v21
  %v86 = vunpack.c.l.bf16 %v22
  %v87 = vunpack.c.l.bf16 %v23
  %v88 = vunpack.c.l.bf16 %v24
  %v89 = vunpack.c.l.bf16 %v25
  %v90 = vunpack.c.l.bf16 %v26
  %v91 = vunpack.c.l.bf16 %v27
  %v92 = vunpack.c.l.bf16 %v28
  %v93 = vunpack.c.l.bf16 %v29
  %v94 = vunpack.c.l.bf16 %v30
  %v95 = vunpack.c.l.bf16 %v31
  %v96 = vunpack.c.l.bf16 %v32
  %v97 = vunpack.c.l.bf16 %v33
  %v98 = vunpack.c.l.bf16 %v34
  %v99 = vunpack.c.l.bf16 %v35
  %v100 = vunpack.c.l.bf16 %v36
  %v101 = vunpack.c.l.bf16 %v37
  %v102 = vunpack.c.l.bf16 %v38
  %v103 = vunpack.c.l.bf16 %v39
  %v104 = vunpack.c.l.bf16 %v40
  %v105 = vunpack.c.l.bf16 %v41
  %v106 = vunpack.c.l.bf16 %v42
  %v107 = vunpack.c.l.bf16 %v43
  %v108 = vunpack.c.l.bf16 %v44
  %v109 = vunpack.c.l.bf16 %v45
  %v110 = vunpack.c.l.bf16 %v46
  %v111 = vunpack.c.l.bf16 %v47
  %v112 = vunpack.c.l.bf16 %v48
  %v113 = vunpack.c.l.bf16 %v49
  %v114 = vunpack.c.l.bf16 %v50
  %v115 = vunpack.c.l.bf16 %v51
  %v116 = vunpack.c.l.bf16 %v52
  %v117 = vunpack.c.l.bf16 %v53
  %v118 = vunpack.c.l.bf16 %v54
  %v119 = vunpack.c.l.bf16 %v55
  %v120 = vunpack.c.l.bf16 %v56
  %v121 = vunpack.c.l.bf16 %v57
  %v122 = vunpack.c.l.bf16 %v58
  %v123 = vunpack.c.l.bf16 %v59
  %v124 = vunpack.c.l.bf16 %v60
  %v125 = vunpack.c.l.bf16 %v61
  %v126 = vunpack.c.l.bf16 %v62
  %v127 = vunpack.c.l.bf16 %v63
  %v128 = vunpack.c.l.bf16 %v64
  %v129 = vunpack.c.l.bf16 %v65
  %v130 = vunpack.c.l.bf16 %v66
  %v131 = vunpack.c.l.bf16 %v67
  %v132 = vunpack.c.l.bf16 %v68
  %v133 = vunpack.c.l.bf16 %v69
  %v134 = vunpack.c.l.bf16 %v70
  %v135 = vunpack.c.l.bf16 %v71
  %v136 = vunpack.c.l.bf16 %v72
  %v137 = vunpack.c.l.bf16 %v73
  %v138 = vunpack.c.l.bf16 %v74
  %v139 = vunpack.c.l.bf16 %v75
  %v140 = vunpack.c.l.bf16 %v76
  %v141 = vunpack.c.l.bf16 %v77
  %v142 = vunpack.c.l.bf16 %v78
  %v143 = vunpack.c.l.bf16 %v79
  %v144 = vunpack.c.l.bf16 %v80
  %v145 = vunpack.c.l.bf16 %v81
  %v146 = vunpack.c.l.bf16 %v82
  %v147 = vunpack.c.l.bf16 %v83
  %v148 = vld [vmem:[%s1] sm:$0x1]
  %v150 = vlaneseq
  %v151 = vshrl.u32 %v150, 7
  %v152 = vsub.s32 0, %v151
  %v153 = vrot.slane %v148, %v152
  %v155 = vmul.f32 %v84, %v153
  %v156 = vmul.f32 %v85, %v153
  %v157 = vmul.f32 %v86, %v153
  %v158 = vmul.f32 %v87, %v153
  %v159 = vmul.f32 %v88, %v153
  %v160 = vmul.f32 %v89, %v153
  %v161 = vmul.f32 %v90, %v153
  %v162 = vmul.f32 %v91, %v153
  %v163 = vmul.f32 %v92, %v153
  %v164 = vmul.f32 %v93, %v153
  %v165 = vmul.f32 %v94, %v153
  %v166 = vmul.f32 %v95, %v153
  %v167 = vmul.f32 %v96, %v153
  %v168 = vmul.f32 %v97, %v153
  %v169 = vmul.f32 %v98, %v153
  %v170 = vmul.f32 %v99, %v153
  %v171 = vmul.f32 %v100, %v153
  %v172 = vmul.f32 %v101, %v153
  %v173 = vmul.f32 %v102, %v153
  %v174 = vmul.f32 %v103, %v153
  %v175 = vmul.f32 %v104, %v153
  %v176 = vmul.f32 %v105, %v153
  %v177 = vmul.f32 %v106, %v153
  %v178 = vmul.f32 %v107, %v153
  %v179 = vmul.f32 %v108, %v153
  %v180 = vmul.f32 %v109, %v153
  %v181 = vmul.f32 %v110, %v153
  %v182 = vmul.f32 %v111, %v153
  %v183 = vmul.f32 %v112, %v153
  %v184 = vmul.f32 %v113, %v153
  %v185 = vmul.f32 %v114, %v153
  %v186 = vmul.f32 %v115, %v153
  %v187 = vmul.f32 %v116, %v153
  %v188 = vmul.f32 %v117, %v153
  %v189 = vmul.f32 %v118, %v153
  %v190 = vmul.f32 %v119, %v153
  %v191 = vmul.f32 %v120, %v153
  %v192 = vmul.f32 %v121, %v153
  %v193 = vmul.f32 %v122, %v153
  %v194 = vmul.f32 %v123, %v153
  %v195 = vmul.f32 %v124, %v153
  %v196 = vmul.f32 %v125, %v153
  %v197 = vmul.f32 %v126, %v153
  %v198 = vmul.f32 %v127, %v153
  %v199 = vmul.f32 %v128, %v153
  %v200 = vmul.f32 %v129, %v153
  %v201 = vmul.f32 %v130, %v153
  %v202 = vmul.f32 %v131, %v153
  %v203 = vmul.f32 %v132, %v153
  %v204 = vmul.f32 %v133, %v153
  %v205 = vmul.f32 %v134, %v153
  %v206 = vmul.f32 %v135, %v153
  %v207 = vmul.f32 %v136, %v153
  %v208 = vmul.f32 %v137, %v153
  %v209 = vmul.f32 %v138, %v153
  %v210 = vmul.f32 %v139, %v153
  %v211 = vmul.f32 %v140, %v153
  %v212 = vmul.f32 %v141, %v153
  %v213 = vmul.f32 %v142, %v153
  %v214 = vmul.f32 %v143, %v153
  %v215 = vmul.f32 %v144, %v153
  %v216 = vmul.f32 %v145, %v153
  %v217 = vmul.f32 %v146, %v153
  %v218 = vmul.f32 %v147, %v153
  %v219 = vld [vmem:[%s2] sm:$0x1]
  %v221 = vlaneseq
  %v222 = vshrl.u32 %v221, 7
  %v223 = vsub.s32 0, %v222
  %v224 = vrot.slane %v219, %v223
  %v226 = vadd.f32 %v155, %v224
  %v227 = vadd.f32 %v156, %v224
  %v228 = vadd.f32 %v157, %v224
  %v229 = vadd.f32 %v158, %v224
  %v230 = vadd.f32 %v159, %v224
  %v231 = vadd.f32 %v160, %v224
  %v232 = vadd.f32 %v161, %v224
  %v233 = vadd.f32 %v162, %v224
  %v234 = vadd.f32 %v163, %v224
  %v235 = vadd.f32 %v164, %v224
  %v236 = vadd.f32 %v165, %v224
  %v237 = vadd.f32 %v166, %v224
  %v238 = vadd.f32 %v167, %v224
  %v239 = vadd.f32 %v168, %v224
  %v240 = vadd.f32 %v169, %v224
  %v241 = vadd.f32 %v170, %v224
  %v242 = vadd.f32 %v171, %v224
  %v243 = vadd.f32 %v172, %v224
  %v244 = vadd.f32 %v173, %v224
  %v245 = vadd.f32 %v174, %v224
  %v246 = vadd.f32 %v175, %v224
  %v247 = vadd.f32 %v176, %v224
  %v248 = vadd.f32 %v177, %v224
  %v249 = vadd.f32 %v178, %v224
  %v250 = vadd.f32 %v179, %v224
  %v251 = vadd.f32 %v180, %v224
  %v252 = vadd.f32 %v181, %v224
  %v253 = vadd.f32 %v182, %v224
  %v254 = vadd.f32 %v183, %v224
  %v255 = vadd.f32 %v184, %v224
  %v256 = vadd.f32 %v185, %v224
  %v257 = vadd.f32 %v186, %v224
  %v258 = vadd.f32 %v187, %v224
  %v259 = vadd.f32 %v188, %v224
  %v260 = vadd.f32 %v189, %v224
  %v261 = vadd.f32 %v190, %v224
  %v262 = vadd.f32 %v191, %v224
  %v263 = vadd.f32 %v192, %v224
  %v264 = vadd.f32 %v193, %v224
  %v265 = vadd.f32 %v194, %v224
  %v266 = vadd.f32 %v195, %v224
  %v267 = vadd.f32 %v196, %v224
  %v268 = vadd.f32 %v197, %v224
  %v269 = vadd.f32 %v198, %v224
  %v270 = vadd.f32 %v199, %v224
  %v271 = vadd.f32 %v200, %v224
  %v272 = vadd.f32 %v201, %v224
  %v273 = vadd.f32 %v202, %v224
  %v274 = vadd.f32 %v203, %v224
  %v275 = vadd.f32 %v204, %v224
  %v276 = vadd.f32 %v205, %v224
  %v277 = vadd.f32 %v206, %v224
  %v278 = vadd.f32 %v207, %v224
  %v279 = vadd.f32 %v208, %v224
  %v280 = vadd.f32 %v209, %v224
  %v281 = vadd.f32 %v210, %v224
  %v282 = vadd.f32 %v211, %v224
  %v283 = vadd.f32 %v212, %v224
  %v284 = vadd.f32 %v213, %v224
  %v285 = vadd.f32 %v214, %v224
  %v286 = vadd.f32 %v215, %v224
  %v287 = vadd.f32 %v216, %v224
  %v288 = vadd.f32 %v217, %v224
  %v289 = vadd.f32 %v218, %v224
  %v290 = vmax.f32 %v226, 0.0
  %v291 = vmax.f32 %v227, 0.0
  %v292 = vmax.f32 %v228, 0.0
  %v293 = vmax.f32 %v229, 0.0
  %v294 = vmax.f32 %v230, 0.0
  %v295 = vmax.f32 %v231, 0.0
  %v296 = vmax.f32 %v232, 0.0
  %v297 = vmax.f32 %v233, 0.0
  %v298 = vmax.f32 %v234, 0.0
  %v299 = vmax.f32 %v235, 0.0
  %v300 = vmax.f32 %v236, 0.0
  %v301 = vmax.f32 %v237, 0.0
  %v302 = vmax.f32 %v238, 0.0
  %v303 = vmax.f32 %v239, 0.0
  %v304 = vmax.f32 %v240, 0.0
  %v305 = vmax.f32 %v241, 0.0
  %v306 = vmax.f32 %v242, 0.0
  %v307 = vmax.f32 %v243, 0.0
  %v308 = vmax.f32 %v244, 0.0
  %v309 = vmax.f32 %v245, 0.0
  %v310 = vmax.f32 %v246, 0.0
  %v311 = vmax.f32 %v247, 0.0
  %v312 = vmax.f32 %v248, 0.0
  %v313 = vmax.f32 %v249, 0.0
  %v314 = vmax.f32 %v250, 0.0
  %v315 = vmax.f32 %v251, 0.0
  %v316 = vmax.f32 %v252, 0.0
  %v317 = vmax.f32 %v253, 0.0
  %v318 = vmax.f32 %v254, 0.0
  %v319 = vmax.f32 %v255, 0.0
  %v320 = vmax.f32 %v256, 0.0
  %v321 = vmax.f32 %v257, 0.0
  %v322 = vmax.f32 %v258, 0.0
  %v323 = vmax.f32 %v259, 0.0
  %v324 = vmax.f32 %v260, 0.0
  %v325 = vmax.f32 %v261, 0.0
  %v326 = vmax.f32 %v262, 0.0
  %v327 = vmax.f32 %v263, 0.0
  %v328 = vmax.f32 %v264, 0.0
  %v329 = vmax.f32 %v265, 0.0
  %v330 = vmax.f32 %v266, 0.0
  %v331 = vmax.f32 %v267, 0.0
  %v332 = vmax.f32 %v268, 0.0
  %v333 = vmax.f32 %v269, 0.0
  %v334 = vmax.f32 %v270, 0.0
  %v335 = vmax.f32 %v271, 0.0
  %v336 = vmax.f32 %v272, 0.0
  %v337 = vmax.f32 %v273, 0.0
  %v338 = vmax.f32 %v274, 0.0
  %v339 = vmax.f32 %v275, 0.0
  %v340 = vmax.f32 %v276, 0.0
  %v341 = vmax.f32 %v277, 0.0
  %v342 = vmax.f32 %v278, 0.0
  %v343 = vmax.f32 %v279, 0.0
  %v344 = vmax.f32 %v280, 0.0
  %v345 = vmax.f32 %v281, 0.0
  %v346 = vmax.f32 %v282, 0.0
  %v347 = vmax.f32 %v283, 0.0
  %v348 = vmax.f32 %v284, 0.0
  %v349 = vmax.f32 %v285, 0.0
  %v350 = vmax.f32 %v286, 0.0
  %v351 = vmax.f32 %v287, 0.0
  %v352 = vmax.f32 %v288, 0.0
  %v353 = vmax.f32 %v289, 0.0
  %v354 = vpack.c.bf16 %v291, %v290
  %v355 = vpack.c.bf16 %v293, %v292
  %v356 = vpack.c.bf16 %v295, %v294
  %v357 = vpack.c.bf16 %v297, %v296
  %v358 = vpack.c.bf16 %v299, %v298
  %v359 = vpack.c.bf16 %v301, %v300
  %v360 = vpack.c.bf16 %v303, %v302
  %v361 = vpack.c.bf16 %v305, %v304
  %v362 = vpack.c.bf16 %v307, %v306
  %v363 = vpack.c.bf16 %v309, %v308
  %v364 = vpack.c.bf16 %v311, %v310
  %v365 = vpack.c.bf16 %v313, %v312
  %v366 = vpack.c.bf16 %v315, %v314
  %v367 = vpack.c.bf16 %v317, %v316
  %v368 = vpack.c.bf16 %v319, %v318
  %v369 = vpack.c.bf16 %v321, %v320
  %v370 = vpack.c.bf16 %v323, %v322
  %v371 = vpack.c.bf16 %v325, %v324
  %v372 = vpack.c.bf16 %v327, %v326
  %v373 = vpack.c.bf16 %v329, %v328
  %v374 = vpack.c.bf16 %v331, %v330
  %v375 = vpack.c.bf16 %v333, %v332
  %v376 = vpack.c.bf16 %v335, %v334
  %v377 = vpack.c.bf16 %v337, %v336
  %v378 = vpack.c.bf16 %v339, %v338
  %v379 = vpack.c.bf16 %v341, %v340
  %v380 = vpack.c.bf16 %v343, %v342
  %v381 = vpack.c.bf16 %v345, %v344
  %v382 = vpack.c.bf16 %v347, %v346
  %v383 = vpack.c.bf16 %v349, %v348
  %v384 = vpack.c.bf16 %v351, %v350
  %v385 = vpack.c.bf16 %v353, %v352
  %v386 = vld [vmem:[%s3] sm:$0xf]
  %v387 = vld [vmem:[%s3 + $0x4] sm:$0xf]
  %v388 = vld [vmem:[%s3 + $0x8] sm:$0xf]
  %v389 = vld [vmem:[%s3 + $0xc] sm:$0xf]
  %v390 = vld [vmem:[%s3 + $0x10] sm:$0xf]
  %v391 = vld [vmem:[%s3 + $0x14] sm:$0xf]
  %v392 = vld [vmem:[%s3 + $0x18] sm:$0xf]
  %v393 = vld [vmem:[%s3 + $0x1c] sm:$0xf]
  %v394 = vld [vmem:[%s3 + $0x20] sm:$0xf]
  %v395 = vld [vmem:[%s3 + $0x24] sm:$0xf]
  %v396 = vld [vmem:[%s3 + $0x28] sm:$0xf]
  %v397 = vld [vmem:[%s3 + $0x2c] sm:$0xf]
  %v398 = vld [vmem:[%s3 + $0x30] sm:$0xf]
  %v399 = vld [vmem:[%s3 + $0x34] sm:$0xf]
  %v400 = vld [vmem:[%s3 + $0x38] sm:$0xf]
  %v401 = vld [vmem:[%s3 + $0x3c] sm:$0xf]
  %v418 = vunpack.c.l.b16 %v386
  %v419 = vunpack.c.l.b16 %v387
  %v420 = vunpack.c.l.b16 %v388
  %v421 = vunpack.c.l.b16 %v389
  %v422 = vunpack.c.l.b16 %v390
  %v423 = vunpack.c.l.b16 %v391
  %v424 = vunpack.c.l.b16 %v392
  %v425 = vunpack.c.l.b16 %v393
  %v426 = vunpack.c.l.b16 %v394
  %v427 = vunpack.c.l.b16 %v395
  %v428 = vunpack.c.l.b16 %v396
  %v429 = vunpack.c.l.b16 %v397
  %v430 = vunpack.c.l.b16 %v398
  %v431 = vunpack.c.l.b16 %v399
  %v432 = vunpack.c.l.b16 %v400
  %v433 = vunpack.c.l.b16 %v401
  %v434 = vpack.c.b16 %v419, %v418
  %v435 = vpack.c.b16 %v421, %v420
  %v436 = vpack.c.b16 %v423, %v422
  %v437 = vpack.c.b16 %v425, %v424
  %v438 = vpack.c.b16 %v427, %v426
  %v439 = vpack.c.b16 %v429, %v428
  %v440 = vpack.c.b16 %v431, %v430
  %v441 = vpack.c.b16 %v433, %v432
  %450 = vmatprep.subr.bf16.mxu0 0
  %451 = vmatpush1.bf16.msra.mxu0 %v434
  %452 = vmatprep.subr.bf16.mxu0 0
  %453 = vmatpush1.bf16.msra.mxu0 %v435
  %454 = vmatprep.subr.bf16.mxu0 0
  %455 = vmatpush1.bf16.msra.mxu0 %v436
  %456 = vmatprep.subr.bf16.mxu0 0
  %457 = vmatpush1.bf16.msra.mxu0 %v437
  %458 = vmatprep.subr.bf16.mxu0 0
  %459 = vmatpush1.bf16.msra.mxu0 %v438
  %460 = vmatprep.subr.bf16.mxu0 0
  %461 = vmatpush1.bf16.msra.mxu0 %v439
  %462 = vmatprep.subr.bf16.mxu0 0
  %463 = vmatpush1.bf16.msra.mxu0 %v440
  %464 = vmatprep.subr.bf16.mxu0 0
  %465 = vmatpush1.bf16.msra.mxu0 %v441
  %466 = vmatprep.subr.bf16.mxu0 0
  %467 = vmatpush1.bf16.msra.mxu0 0
  %468 = vmatprep.subr.bf16.mxu0 0
  %469 = vmatpush1.bf16.msra.mxu0 0
  %470 = vmatprep.subr.bf16.mxu0 0
  %471 = vmatpush1.bf16.msra.mxu0 0
  %472 = vmatprep.subr.bf16.mxu0 0
  %473 = vmatpush1.bf16.msra.mxu0 0
  %474 = vmatprep.subr.bf16.mxu0 0
  %475 = vmatpush1.bf16.msra.mxu0 0
  %476 = vmatprep.subr.bf16.mxu0 0
  %477 = vmatpush1.bf16.msra.mxu0 0
  %478 = vmatprep.subr.bf16.mxu0 0
  %479 = vmatpush1.bf16.msra.mxu0 0
  %480 = vmatprep.subr.bf16.mxu0 0
  %481 = vmatpush1.bf16.msra.mxu0 0
  %482 = vmatprep.mubr.bf16.mxu0 0
  %483 = vmatmul.mubr.bf16.gmra.mrb[0].mxu0 %v354
  %v484 = vpop.f32.mrb[0].mxu0
  %v485 = vadd.f32 0.0, %v484
  %v486 = vpop.f32.mrb[0].mxu0
  %v487 = vpop.f32.mrb[0].mxu0
  %v488 = vadd.f32 0.0, %v487
  %v489 = vpop.f32.mrb[0].mxu0
  %490 = vmatprep.mubr.bf16.mxu0 0
  %491 = vmatmul.mubr.bf16.gmra.mrb[0].mxu0 %v355
  %v492 = vpop.f32.mrb[0].mxu0
  %v493 = vadd.f32 0.0, %v492
  %v494 = vpop.f32.mrb[0].mxu0
  %v495 = vpop.f32.mrb[0].mxu0
  %v496 = vadd.f32 0.0, %v495
  %v497 = vpop.f32.mrb[0].mxu0
  %498 = vmatprep.mubr.bf16.mxu0 0
  %499 = vmatmul.mubr.bf16.gmra.mrb[0].mxu0 %v356
  %v500 = vpop.f32.mrb[0].mxu0
  %v501 = vadd.f32 0.0, %v500
  %v502 = vpop.f32.mrb[0].mxu0
  %v503 = vpop.f32.mrb[0].mxu0
  %v504 = vadd.f32 0.0, %v503
  %v505 = vpop.f32.mrb[0].mxu0
  %506 = vmatprep.mubr.bf16.mxu0 0
  %507 = vmatmul.mubr.bf16.gmra.mrb[0].mxu0 %v357
  %v508 = vpop.f32.mrb[0].mxu0
  %v509 = vadd.f32 0.0, %v508
  %v510 = vpop.f32.mrb[0].mxu0
  %v511 = vpop.f32.mrb[0].mxu0
  %v512 = vadd.f32 0.0, %v511
  %v513 = vpop.f32.mrb[0].mxu0
  %514 = vmatprep.mubr.bf16.mxu0 0
  %515 = vmatmul.mubr.bf16.gmra.mrb[0].mxu0 %v358
  %v516 = vpop.f32.mrb[0].mxu0
  %v517 = vadd.f32 0.0, %v516
  %v518 = vpop.f32.mrb[0].mxu0
  %v519 = vpop.f32.mrb[0].mxu0
  %v520 = vadd.f32 0.0, %v519
  %v521 = vpop.f32.mrb[0].mxu0
  %522 = vmatprep.mubr.bf16.mxu0 0
  %523 = vmatmul.mubr.bf16.gmra.mrb[0].mxu0 %v359
  %v524 = vpop.f32.mrb[0].mxu0
  %v525 = vadd.f32 0.0, %v524
  %v526 = vpop.f32.mrb[0].mxu0
  %v527 = vpop.f32.mrb[0].mxu0
  %v528 = vadd.f32 0.0, %v527
  %v529 = vpop.f32.mrb[0].mxu0
  %530 = vmatprep.mubr.bf16.mxu0 0
  %531 = vmatmul.mubr.bf16.gmra.mrb[0].mxu0 %v360
  %v532 = vpop.f32.mrb[0].mxu0
  %v533 = vadd.f32 0.0, %v532
  %v534 = vpop.f32.mrb[0].mxu0
  %v535 = vpop.f32.mrb[0].mxu0
  %v536 = vadd.f32 0.0, %v535
  %v537 = vpop.f32.mrb[0].mxu0
  %538 = vmatprep.mubr.bf16.mxu0 0
  %539 = vmatmul.mubr.bf16.gmra.mrb[0].mxu0 %v361
  %v540 = vpop.f32.mrb[0].mxu0
  %v541 = vadd.f32 0.0, %v540
  %v542 = vpop.f32.mrb[0].mxu0
  %v543 = vpop.f32.mrb[0].mxu0
  %v544 = vadd.f32 0.0, %v543
  %v545 = vpop.f32.mrb[0].mxu0
  %546 = vmatprep.mubr.bf16.mxu0 0
  %547 = vmatmul.mubr.bf16.gmra.mrb[0].mxu0 %v362
  %v548 = vpop.f32.mrb[0].mxu0
  %v549 = vadd.f32 0.0, %v548
  %v550 = vpop.f32.mrb[0].mxu0
  %v551 = vpop.f32.mrb[0].mxu0
  %v552 = vadd.f32 0.0, %v551
  %v553 = vpop.f32.mrb[0].mxu0
  %554 = vmatprep.mubr.bf16.mxu0 0
  %555 = vmatmul.mubr.bf16.gmra.mrb[0].mxu0 %v363
  %v556 = vpop.f32.mrb[0].mxu0
  %v557 = vadd.f32 0.0, %v556
  %v558 = vpop.f32.mrb[0].mxu0
  %v559 = vpop.f32.mrb[0].mxu0
  %v560 = vadd.f32 0.0, %v559
  %v561 = vpop.f32.mrb[0].mxu0
  %562 = vmatprep.mubr.bf16.mxu0 0
  %563 = vmatmul.mubr.bf16.gmra.mrb[0].mxu0 %v364
  %v564 = vpop.f32.mrb[0].mxu0
  %v565 = vadd.f32 0.0, %v564
  %v566 = vpop.f32.mrb[0].mxu0
  %v567 = vpop.f32.mrb[0].mxu0
  %v568 = vadd.f32 0.0, %v567
  %v569 = vpop.f32.mrb[0].mxu0
  %570 = vmatprep.mubr.bf16.mxu0 0
  %571 = vmatmul.mubr.bf16.gmra.mrb[0].mxu0 %v365
  %v572 = vpop.f32.mrb[0].mxu0
  %v573 = vadd.f32 0.0, %v572
  %v574 = vpop.f32.mrb[0].mxu0
  %v575 = vpop.f32.mrb[0].mxu0
  %v576 = vadd.f32 0.0, %v575
  %v577 = vpop.f32.mrb[0].mxu0
  %578 = vmatprep.mubr.bf16.mxu0 0
  %579 = vmatmul.mubr.bf16.gmra.mrb[0].mxu0 %v366
  %v580 = vpop.f32.mrb[0].mxu0
  %v581 = vadd.f32 0.0, %v580
  %v582 = vpop.f32.mrb[0].mxu0
  %v583 = vpop.f32.mrb[0].mxu0
  %v584 = vadd.f32 0.0, %v583
  %v585 = vpop.f32.mrb[0].mxu0
  %586 = vmatprep.mubr.bf16.mxu0 0
  %587 = vmatmul.mubr.bf16.gmra.mrb[0].mxu0 %v367
  %v588 = vpop.f32.mrb[0].mxu0
  %v589 = vadd.f32 0.0, %v588
  %v590 = vpop.f32.mrb[0].mxu0
  %v591 = vpop.f32.mrb[0].mxu0
  %v592 = vadd.f32 0.0, %v591
  %v593 = vpop.f32.mrb[0].mxu0
  %594 = vmatprep.mubr.bf16.mxu0 0
  %595 = vmatmul.mubr.bf16.gmra.mrb[0].mxu0 %v368
  %v596 = vpop.f32.mrb[0].mxu0
  %v597 = vadd.f32 0.0, %v596
  %v598 = vpop.f32.mrb[0].mxu0
  %v599 = vpop.f32.mrb[0].mxu0
  %v600 = vadd.f32 0.0, %v599
  %v601 = vpop.f32.mrb[0].mxu0
  %602 = vmatprep.mubr.bf16.mxu0 0
  %603 = vmatmul.mubr.bf16.gmra.mrb[0].mxu0 %v369
  %v604 = vpop.f32.mrb[0].mxu0
  %v605 = vadd.f32 0.0, %v604
  %v606 = vpop.f32.mrb[0].mxu0
  %v607 = vpop.f32.mrb[0].mxu0
  %v608 = vadd.f32 0.0, %v607
  %v609 = vpop.f32.mrb[0].mxu0
  %610 = vmatprep.mubr.bf16.mxu0 0
  %611 = vmatmul.mubr.bf16.gmra.mrb[0].mxu0 %v370
  %v612 = vpop.f32.mrb[0].mxu0
  %v613 = vadd.f32 0.0, %v612
  %v614 = vpop.f32.mrb[0].mxu0
  %v615 = vpop.f32.mrb[0].mxu0
  %v616 = vadd.f32 0.0, %v615
  %v617 = vpop.f32.mrb[0].mxu0
  %618 = vmatprep.mubr.bf16.mxu0 0
  %619 = vmatmul.mubr.bf16.gmra.mrb[0].mxu0 %v371
  %v620 = vpop.f32.mrb[0].mxu0
  %v621 = vadd.f32 0.0, %v620
  %v622 = vpop.f32.mrb[0].mxu0
  %v623 = vpop.f32.mrb[0].mxu0
  %v624 = vadd.f32 0.0, %v623
  %v625 = vpop.f32.mrb[0].mxu0
  %626 = vmatprep.mubr.bf16.mxu0 0
  %627 = vmatmul.mubr.bf16.gmra.mrb[0].mxu0 %v372
  %v628 = vpop.f32.mrb[0].mxu0
  %v629 = vadd.f32 0.0, %v628
  %v630 = vpop.f32.mrb[0].mxu0
  %v631 = vpop.f32.mrb[0].mxu0
  %v632 = vadd.f32 0.0, %v631
  %v633 = vpop.f32.mrb[0].mxu0
  %634 = vmatprep.mubr.bf16.mxu0 0
  %635 = vmatmul.mubr.bf16.gmra.mrb[0].mxu0 %v373
  %v636 = vpop.f32.mrb[0].mxu0
  %v637 = vadd.f32 0.0, %v636
  %v638 = vpop.f32.mrb[0].mxu0
  %v639 = vpop.f32.mrb[0].mxu0
  %v640 = vadd.f32 0.0, %v639
  %v641 = vpop.f32.mrb[0].mxu0
  %642 = vmatprep.mubr.bf16.mxu0 0
  %643 = vmatmul.mubr.bf16.gmra.mrb[0].mxu0 %v374
  %v644 = vpop.f32.mrb[0].mxu0
  %v645 = vadd.f32 0.0, %v644
  %v646 = vpop.f32.mrb[0].mxu0
  %v647 = vpop.f32.mrb[0].mxu0
  %v648 = vadd.f32 0.0, %v647
  %v649 = vpop.f32.mrb[0].mxu0
  %650 = vmatprep.mubr.bf16.mxu0 0
  %651 = vmatmul.mubr.bf16.gmra.mrb[0].mxu0 %v375
  %v652 = vpop.f32.mrb[0].mxu0
  %v653 = vadd.f32 0.0, %v652
  %v654 = vpop.f32.mrb[0].mxu0
  %v655 = vpop.f32.mrb[0].mxu0
  %v656 = vadd.f32 0.0, %v655
  %v657 = vpop.f32.mrb[0].mxu0
  %658 = vmatprep.mubr.bf16.mxu0 0
  %659 = vmatmul.mubr.bf16.gmra.mrb[0].mxu0 %v376
  %v660 = vpop.f32.mrb[0].mxu0
  %v661 = vadd.f32 0.0, %v660
  %v662 = vpop.f32.mrb[0].mxu0
  %v663 = vpop.f32.mrb[0].mxu0
  %v664 = vadd.f32 0.0, %v663
  %v665 = vpop.f32.mrb[0].mxu0
  %666 = vmatprep.mubr.bf16.mxu0 0
  %667 = vmatmul.mubr.bf16.gmra.mrb[0].mxu0 %v377
  %v668 = vpop.f32.mrb[0].mxu0
  %v669 = vadd.f32 0.0, %v668
  %v670 = vpop.f32.mrb[0].mxu0
  %v671 = vpop.f32.mrb[0].mxu0
  %v672 = vadd.f32 0.0, %v671
  %v673 = vpop.f32.mrb[0].mxu0
  %674 = vmatprep.mubr.bf16.mxu0 0
  %675 = vmatmul.mubr.bf16.gmra.mrb[0].mxu0 %v378
  %v676 = vpop.f32.mrb[0].mxu0
  %v677 = vadd.f32 0.0, %v676
  %v678 = vpop.f32.mrb[0].mxu0
  %v679 = vpop.f32.mrb[0].mxu0
  %v680 = vadd.f32 0.0, %v679
  %v681 = vpop.f32.mrb[0].mxu0
  %682 = vmatprep.mubr.bf16.mxu0 0
  %683 = vmatmul.mubr.bf16.gmra.mrb[0].mxu0 %v379
  %v684 = vpop.f32.mrb[0].mxu0
  %v685 = vadd.f32 0.0, %v684
  %v686 = vpop.f32.mrb[0].mxu0
  %v687 = vpop.f32.mrb[0].mxu0
  %v688 = vadd.f32 0.0, %v687
  %v689 = vpop.f32.mrb[0].mxu0
  %690 = vmatprep.mubr.bf16.mxu0 0
  %691 = vmatmul.mubr.bf16.gmra.mrb[0].mxu0 %v380
  %v692 = vpop.f32.mrb[0].mxu0
  %v693 = vadd.f32 0.0, %v692
  %v694 = vpop.f32.mrb[0].mxu0
  %v695 = vpop.f32.mrb[0].mxu0
  %v696 = vadd.f32 0.0, %v695
  %v697 = vpop.f32.mrb[0].mxu0
  %698 = vmatprep.mubr.bf16.mxu0 0
  %699 = vmatmul.mubr.bf16.gmra.mrb[0].mxu0 %v381
  %v700 = vpop.f32.mrb[0].mxu0
  %v701 = vadd.f32 0.0, %v700
  %v702 = vpop.f32.mrb[0].mxu0
  %v703 = vpop.f32.mrb[0].mxu0
  %v704 = vadd.f32 0.0, %v703
  %v705 = vpop.f32.mrb[0].mxu0
  %706 = vmatprep.mubr.bf16.mxu0 0
  %707 = vmatmul.mubr.bf16.gmra.mrb[0].mxu0 %v382
  %v708 = vpop.f32.mrb[0].mxu0
  %v709 = vadd.f32 0.0, %v708
  %v710 = vpop.f32.mrb[0].mxu0
  %v711 = vpop.f32.mrb[0].mxu0
  %v712 = vadd.f32 0.0, %v711
  %v713 = vpop.f32.mrb[0].mxu0
  %714 = vmatprep.mubr.bf16.mxu0 0
  %715 = vmatmul.mubr.bf16.gmra.mrb[0].mxu0 %v383
  %v716 = vpop.f32.mrb[0].mxu0
  %v717 = vadd.f32 0.0, %v716
  %v718 = vpop.f32.mrb[0].mxu0
  %v719 = vpop.f32.mrb[0].mxu0
  %v720 = vadd.f32 0.0, %v719
  %v721 = vpop.f32.mrb[0].mxu0
  %722 = vmatprep.mubr.bf16.mxu0 0
  %723 = vmatmul.mubr.bf16.gmra.mrb[0].mxu0 %v384
  %v724 = vpop.f32.mrb[0].mxu0
  %v725 = vadd.f32 0.0, %v724
  %v726 = vpop.f32.mrb[0].mxu0
  %v727 = vpop.f32.mrb[0].mxu0
  %v728 = vadd.f32 0.0, %v727
  %v729 = vpop.f32.mrb[0].mxu0
  %730 = vmatprep.mubr.bf16.mxu0 0
  %731 = vmatmul.mubr.bf16.gmra.mrb[0].mxu0 %v385
  %v732 = vpop.f32.mrb[0].mxu0
  %v733 = vadd.f32 0.0, %v732
  %v734 = vpop.f32.mrb[0].mxu0
  %v735 = vpop.f32.mrb[0].mxu0
  %v736 = vadd.f32 0.0, %v735
  %v737 = vpop.f32.mrb[0].mxu0
  %738 = vdwg.mxu0
  %v739 = vpack.c.bf16 %v488, %v485
  %v740 = vpack.c.bf16 %v496, %v493
  %v741 = vpack.c.bf16 %v504, %v501
  %v742 = vpack.c.bf16 %v512, %v509
  %v743 = vpack.c.bf16 %v520, %v517
  %v744 = vpack.c.bf16 %v528, %v525
  %v745 = vpack.c.bf16 %v536, %v533
  %v746 = vpack.c.bf16 %v544, %v541
  %v747 = vpack.c.bf16 %v552, %v549
  %v748 = vpack.c.bf16 %v560, %v557
  %v749 = vpack.c.bf16 %v568, %v565
  %v750 = vpack.c.bf16 %v576, %v573
  %v751 = vpack.c.bf16 %v584, %v581
  %v752 = vpack.c.bf16 %v592, %v589
  %v753 = vpack.c.bf16 %v600, %v597
  %v754 = vpack.c.bf16 %v608, %v605
  %v755 = vpack.c.bf16 %v616, %v613
  %v756 = vpack.c.bf16 %v624, %v621
  %v757 = vpack.c.bf16 %v632, %v629
  %v758 = vpack.c.bf16 %v640, %v637
  %v759 = vpack.c.bf16 %v648, %v645
  %v760 = vpack.c.bf16 %v656, %v653
  %v761 = vpack.c.bf16 %v664, %v661
  %v762 = vpack.c.bf16 %v672, %v669
  %v763 = vpack.c.bf16 %v680, %v677
  %v764 = vpack.c.bf16 %v688, %v685
  %v765 = vpack.c.bf16 %v696, %v693
  %v766 = vpack.c.bf16 %v704, %v701
  %v767 = vpack.c.bf16 %v712, %v709
  %v768 = vpack.c.bf16 %v720, %v717
  %v769 = vpack.c.bf16 %v728, %v725
  %v770 = vpack.c.bf16 %v736, %v733
  %v803 = vunpack.c.l.b16 %v739
  %v804 = vunpack.c.h.b16 %v739
  %v805 = vunpack.c.l.b16 %v740
  %v806 = vunpack.c.h.b16 %v740
  %v807 = vunpack.c.l.b16 %v741
  %v808 = vunpack.c.h.b16 %v741
  %v809 = vunpack.c.l.b16 %v742
  %v810 = vunpack.c.h.b16 %v742
  %v811 = vunpack.c.l.b16 %v743
  %v812 = vunpack.c.h.b16 %v743
  %v813 = vunpack.c.l.b16 %v744
  %v814 = vunpack.c.h.b16 %v744
  %v815 = vunpack.c.l.b16 %v745
  %v816 = vunpack.c.h.b16 %v745
  %v817 = vunpack.c.l.b16 %v746
  %v818 = vunpack.c.h.b16 %v746
  %v819 = vunpack.c.l.b16 %v747
  %v820 = vunpack.c.h.b16 %v747
  %v821 = vunpack.c.l.b16 %v748
  %v822 = vunpack.c.h.b16 %v748
  %v823 = vunpack.c.l.b16 %v749
  %v824 = vunpack.c.h.b16 %v749
  %v825 = vunpack.c.l.b16 %v750
  %v826 = vunpack.c.h.b16 %v750
  %v827 = vunpack.c.l.b16 %v751
  %v828 = vunpack.c.h.b16 %v751
  %v829 = vunpack.c.l.b16 %v752
  %v830 = vunpack.c.h.b16 %v752
  %v831 = vunpack.c.l.b16 %v753
  %v832 = vunpack.c.h.b16 %v753
  %v833 = vunpack.c.l.b16 %v754
  %v834 = vunpack.c.h.b16 %v754
  %v835 = vunpack.c.l.b16 %v755
  %v836 = vunpack.c.h.b16 %v755
  %v837 = vunpack.c.l.b16 %v756
  %v838 = vunpack.c.h.b16 %v756
  %v839 = vunpack.c.l.b16 %v757
  %v840 = vunpack.c.h.b16 %v757
  %v841 = vunpack.c.l.b16 %v758
  %v842 = vunpack.c.h.b16 %v758
  %v843 = vunpack.c.l.b16 %v759
  %v844 = vunpack.c.h.b16 %v759
  %v845 = vunpack.c.l.b16 %v760
  %v846 = vunpack.c.h.b16 %v760
  %v847 = vunpack.c.l.b16 %v761
  %v848 = vunpack.c.h.b16 %v761
  %v849 = vunpack.c.l.b16 %v762
  %v850 = vunpack.c.h.b16 %v762
  %v851 = vunpack.c.l.b16 %v763
  %v852 = vunpack.c.h.b16 %v763
  %v853 = vunpack.c.l.b16 %v764
  %v854 = vunpack.c.h.b16 %v764
  %v855 = vunpack.c.l.b16 %v765
  %v856 = vunpack.c.h.b16 %v765
  %v857 = vunpack.c.l.b16 %v766
  %v858 = vunpack.c.h.b16 %v766
  %v859 = vunpack.c.l.b16 %v767
  %v860 = vunpack.c.h.b16 %v767
  %v861 = vunpack.c.l.b16 %v768
  %v862 = vunpack.c.h.b16 %v768
  %v863 = vunpack.c.l.b16 %v769
  %v864 = vunpack.c.h.b16 %v769
  %v865 = vunpack.c.l.b16 %v770
  %v866 = vunpack.c.h.b16 %v770
  %v867 = vpack.c.b16 %v803, %v803
  %v868 = vpack.c.b16 %v804, %v804
  %v869 = vpack.c.b16 %v805, %v805
  %v870 = vpack.c.b16 %v806, %v806
  %v871 = vpack.c.b16 %v807, %v807
  %v872 = vpack.c.b16 %v808, %v808
  %v873 = vpack.c.b16 %v809, %v809
  %v874 = vpack.c.b16 %v810, %v810
  %v875 = vpack.c.b16 %v811, %v811
  %v876 = vpack.c.b16 %v812, %v812
  %v877 = vpack.c.b16 %v813, %v813
  %v878 = vpack.c.b16 %v814, %v814
  %v879 = vpack.c.b16 %v815, %v815
  %v880 = vpack.c.b16 %v816, %v816
  %v881 = vpack.c.b16 %v817, %v817
  %v882 = vpack.c.b16 %v818, %v818
  %v883 = vpack.c.b16 %v819, %v819
  %v884 = vpack.c.b16 %v820, %v820
  %v885 = vpack.c.b16 %v821, %v821
  %v886 = vpack.c.b16 %v822, %v822
  %v887 = vpack.c.b16 %v823, %v823
  %v888 = vpack.c.b16 %v824, %v824
  %v889 = vpack.c.b16 %v825, %v825
  %v890 = vpack.c.b16 %v826, %v826
  %v891 = vpack.c.b16 %v827, %v827
  %v892 = vpack.c.b16 %v828, %v828
  %v893 = vpack.c.b16 %v829, %v829
  %v894 = vpack.c.b16 %v830, %v830
  %v895 = vpack.c.b16 %v831, %v831
  %v896 = vpack.c.b16 %v832, %v832
  %v897 = vpack.c.b16 %v833, %v833
  %v898 = vpack.c.b16 %v834, %v834
  %v899 = vpack.c.b16 %v835, %v835
  %v900 = vpack.c.b16 %v836, %v836
  %v901 = vpack.c.b16 %v837, %v837
  %v902 = vpack.c.b16 %v838, %v838
  %v903 = vpack.c.b16 %v839, %v839
  %v904 = vpack.c.b16 %v840, %v840
  %v905 = vpack.c.b16 %v841, %v841
  %v906 = vpack.c.b16 %v842, %v842
  %v907 = vpack.c.b16 %v843, %v843
  %v908 = vpack.c.b16 %v844, %v844
  %v909 = vpack.c.b16 %v845, %v845
  %v910 = vpack.c.b16 %v846, %v846
  %v911 = vpack.c.b16 %v847, %v847
  %v912 = vpack.c.b16 %v848, %v848
  %v913 = vpack.c.b16 %v849, %v849
  %v914 = vpack.c.b16 %v850, %v850
  %v915 = vpack.c.b16 %v851, %v851
  %v916 = vpack.c.b16 %v852, %v852
  %v917 = vpack.c.b16 %v853, %v853
  %v918 = vpack.c.b16 %v854, %v854
  %v919 = vpack.c.b16 %v855, %v855
  %v920 = vpack.c.b16 %v856, %v856
  %v921 = vpack.c.b16 %v857, %v857
  %v922 = vpack.c.b16 %v858, %v858
  %v923 = vpack.c.b16 %v859, %v859
  %v924 = vpack.c.b16 %v860, %v860
  %v925 = vpack.c.b16 %v861, %v861
  %v926 = vpack.c.b16 %v862, %v862
  %v927 = vpack.c.b16 %v863, %v863
  %v928 = vpack.c.b16 %v864, %v864
  %v929 = vpack.c.b16 %v865, %v865
  %v930 = vpack.c.b16 %v866, %v866
  %995 = vst [vmem:[%s4] sm:$0xf] %v867
  %996 = vst [vmem:[%s4 + $0x4] sm:$0xf] %v868
  %997 = vst [vmem:[%s4 + $0x8] sm:$0xf] %v869
  %998 = vst [vmem:[%s4 + $0xc] sm:$0xf] %v870
  %999 = vst [vmem:[%s4 + $0x10] sm:$0xf] %v871
  %1000 = vst [vmem:[%s4 + $0x14] sm:$0xf] %v872
  %1001 = vst [vmem:[%s4 + $0x18] sm:$0xf] %v873
  %1002 = vst [vmem:[%s4 + $0x1c] sm:$0xf] %v874
  %1003 = vst [vmem:[%s4 + $0x20] sm:$0xf] %v875
  %1004 = vst [vmem:[%s4 + $0x24] sm:$0xf] %v876
  %1005 = vst [vmem:[%s4 + $0x28] sm:$0xf] %v877
  %1006 = vst [vmem:[%s4 + $0x2c] sm:$0xf] %v878
  %1007 = vst [vmem:[%s4 + $0x30] sm:$0xf] %v879
  %1008 = vst [vmem:[%s4 + $0x34] sm:$0xf] %v880
  %1009 = vst [vmem:[%s4 + $0x38] sm:$0xf] %v881
  %1010 = vst [vmem:[%s4 + $0x3c] sm:$0xf] %v882
  %1011 = vst [vmem:[%s4 + $0x40] sm:$0xf] %v883
  %1012 = vst [vmem:[%s4 + $0x44] sm:$0xf] %v884
  %1013 = vst [vmem:[%s4 + $0x48] sm:$0xf] %v885
  %1014 = vst [vmem:[%s4 + $0x4c] sm:$0xf] %v886
  %1015 = vst [vmem:[%s4 + $0x50] sm:$0xf] %v887
  %1016 = vst [vmem:[%s4 + $0x54] sm:$0xf] %v888
  %1017 = vst [vmem:[%s4 + $0x58] sm:$0xf] %v889
  %1018 = vst [vmem:[%s4 + $0x5c] sm:$0xf] %v890
  %1019 = vst [vmem:[%s4 + $0x60] sm:$0xf] %v891
  %1020 = vst [vmem:[%s4 + $0x64] sm:$0xf] %v892
  %1021 = vst [vmem:[%s4 + $0x68] sm:$0xf] %v893
  %1022 = vst [vmem:[%s4 + $0x6c] sm:$0xf] %v894
  %1023 = vst [vmem:[%s4 + $0x70] sm:$0xf] %v895
  %1024 = vst [vmem:[%s4 + $0x74] sm:$0xf] %v896
  %1025 = vst [vmem:[%s4 + $0x78] sm:$0xf] %v897
  %1026 = vst [vmem:[%s4 + $0x7c] sm:$0xf] %v898
  %1027 = vst [vmem:[%s4 + $0x80] sm:$0xf] %v899
  %1028 = vst [vmem:[%s4 + $0x84] sm:$0xf] %v900
  %1029 = vst [vmem:[%s4 + $0x88] sm:$0xf] %v901
  %1030 = vst [vmem:[%s4 + $0x8c] sm:$0xf] %v902
  %1031 = vst [vmem:[%s4 + $0x90] sm:$0xf] %v903
  %1032 = vst [vmem:[%s4 + $0x94] sm:$0xf] %v904
  %1033 = vst [vmem:[%s4 + $0x98] sm:$0xf] %v905
  %1034 = vst [vmem:[%s4 + $0x9c] sm:$0xf] %v906
  %1035 = vst [vmem:[%s4 + $0xa0] sm:$0xf] %v907
  %1036 = vst [vmem:[%s4 + $0xa4] sm:$0xf] %v908
  %1037 = vst [vmem:[%s4 + $0xa8] sm:$0xf] %v909
  %1038 = vst [vmem:[%s4 + $0xac] sm:$0xf] %v910
  %1039 = vst [vmem:[%s4 + $0xb0] sm:$0xf] %v911
  %1040 = vst [vmem:[%s4 + $0xb4] sm:$0xf] %v912
  %1041 = vst [vmem:[%s4 + $0xb8] sm:$0xf] %v913
  %1042 = vst [vmem:[%s4 + $0xbc] sm:$0xf] %v914
  %1043 = vst [vmem:[%s4 + $0xc0] sm:$0xf] %v915
  %1044 = vst [vmem:[%s4 + $0xc4] sm:$0xf] %v916
  %1045 = vst [vmem:[%s4 + $0xc8] sm:$0xf] %v917
  %1046 = vst [vmem:[%s4 + $0xcc] sm:$0xf] %v918
  %1047 = vst [vmem:[%s4 + $0xd0] sm:$0xf] %v919
  %1048 = vst [vmem:[%s4 + $0xd4] sm:$0xf] %v920
  %1049 = vst [vmem:[%s4 + $0xd8] sm:$0xf] %v921
  %1050 = vst [vmem:[%s4 + $0xdc] sm:$0xf] %v922
  %1051 = vst [vmem:[%s4 + $0xe0] sm:$0xf] %v923
  %1052 = vst [vmem:[%s4 + $0xe4] sm:$0xf] %v924
  %1053 = vst [vmem:[%s4 + $0xe8] sm:$0xf] %v925
  %1054 = vst [vmem:[%s4 + $0xec] sm:$0xf] %v926
  %1055 = vst [vmem:[%s4 + $0xf0] sm:$0xf] %v927
  %1056 = vst [vmem:[%s4 + $0xf4] sm:$0xf] %v928
  %1057 = vst [vmem:[%s4 + $0xf8] sm:$0xf] %v929
  %1058 = vst [vmem:[%s4 + $0xfc] sm:$0xf] %v930
  %v1059 = vadd.f32 %v485, %v488
  %v1060 = vadd.f32 %v1059, %v493
  %v1061 = vadd.f32 %v1060, %v496
  %v1062 = vadd.f32 %v1061, %v501
  %v1063 = vadd.f32 %v1062, %v504
  %v1064 = vadd.f32 %v1063, %v509
  %v1065 = vadd.f32 %v1064, %v512
  %v1066 = vadd.f32 %v1065, %v517
  %v1067 = vadd.f32 %v1066, %v520
  %v1068 = vadd.f32 %v1067, %v525
  %v1069 = vadd.f32 %v1068, %v528
  %v1070 = vadd.f32 %v1069, %v533
  %v1071 = vadd.f32 %v1070, %v536
  %v1072 = vadd.f32 %v1071, %v541
  %v1073 = vadd.f32 %v1072, %v544
  %v1074 = vadd.f32 %v1073, %v549
  %v1075 = vadd.f32 %v1074, %v552
  %v1076 = vadd.f32 %v1075, %v557
  %v1077 = vadd.f32 %v1076, %v560
  %v1078 = vadd.f32 %v1077, %v565
  %v1079 = vadd.f32 %v1078, %v568
  %v1080 = vadd.f32 %v1079, %v573
  %v1081 = vadd.f32 %v1080, %v576
  %v1082 = vadd.f32 %v1081, %v581
  %v1083 = vadd.f32 %v1082, %v584
  %v1084 = vadd.f32 %v1083, %v589
  %v1085 = vadd.f32 %v1084, %v592
  %v1086 = vadd.f32 %v1085, %v597
  %v1087 = vadd.f32 %v1086, %v600
  %v1088 = vadd.f32 %v1087, %v605
  %v1089 = vadd.f32 %v1088, %v608
  %v1090 = vadd.f32 %v1089, %v613
  %v1091 = vadd.f32 %v1090, %v616
  %v1092 = vadd.f32 %v1091, %v621
  %v1093 = vadd.f32 %v1092, %v624
  %v1094 = vadd.f32 %v1093, %v629
  %v1095 = vadd.f32 %v1094, %v632
  %v1096 = vadd.f32 %v1095, %v637
  %v1097 = vadd.f32 %v1096, %v640
  %v1098 = vadd.f32 %v1097, %v645
  %v1099 = vadd.f32 %v1098, %v648
  %v1100 = vadd.f32 %v1099, %v653
  %v1101 = vadd.f32 %v1100, %v656
  %v1102 = vadd.f32 %v1101, %v661
  %v1103 = vadd.f32 %v1102, %v664
  %v1104 = vadd.f32 %v1103, %v669
  %v1105 = vadd.f32 %v1104, %v672
  %v1106 = vadd.f32 %v1105, %v677
  %v1107 = vadd.f32 %v1106, %v680
  %v1108 = vadd.f32 %v1107, %v685
  %v1109 = vadd.f32 %v1108, %v688
  %v1110 = vadd.f32 %v1109, %v693
  %v1111 = vadd.f32 %v1110, %v696
  %v1112 = vadd.f32 %v1111, %v701
  %v1113 = vadd.f32 %v1112, %v704
  %v1114 = vadd.f32 %v1113, %v709
  %v1115 = vadd.f32 %v1114, %v712
  %v1116 = vadd.f32 %v1115, %v717
  %v1117 = vadd.f32 %v1116, %v720
  %v1118 = vadd.f32 %v1117, %v725
  %v1119 = vadd.f32 %v1118, %v728
  %v1120 = vadd.f32 %v1119, %v733
  %v1121 = vadd.f32 %v1120, %v736
  %v1122 = vrot.slane %v1121, 4
  %v1123 = vadd.f32 %v1121, %v1122
  %v1124 = vrot.slane %v1123, 2
  %v1125 = vadd.f32 %v1123, %v1124
  %v1126 = vrot.slane %v1125, 1
  %v1127 = vadd.f32 %v1125, %v1126
  %1128 = vst [vmem:[%s5] sm:$0x1] %v1127
  %v1129 = vmul.f32 %v485, %v485
  %v1130 = vmul.f32 %v488, %v488
  %v1131 = vmul.f32 %v493, %v493
  %v1132 = vmul.f32 %v496, %v496
  %v1133 = vmul.f32 %v501, %v501
  %v1134 = vmul.f32 %v504, %v504
  %v1135 = vmul.f32 %v509, %v509
  %v1136 = vmul.f32 %v512, %v512
  %v1137 = vmul.f32 %v517, %v517
  %v1138 = vmul.f32 %v520, %v520
  %v1139 = vmul.f32 %v525, %v525
  %v1140 = vmul.f32 %v528, %v528
  %v1141 = vmul.f32 %v533, %v533
  %v1142 = vmul.f32 %v536, %v536
  %v1143 = vmul.f32 %v541, %v541
  %v1144 = vmul.f32 %v544, %v544
  %v1145 = vmul.f32 %v549, %v549
  %v1146 = vmul.f32 %v552, %v552
  %v1147 = vmul.f32 %v557, %v557
  %v1148 = vmul.f32 %v560, %v560
  %v1149 = vmul.f32 %v565, %v565
  %v1150 = vmul.f32 %v568, %v568
  %v1151 = vmul.f32 %v573, %v573
  %v1152 = vmul.f32 %v576, %v576
  %v1153 = vmul.f32 %v581, %v581
  %v1154 = vmul.f32 %v584, %v584
  %v1155 = vmul.f32 %v589, %v589
  %v1156 = vmul.f32 %v592, %v592
  %v1157 = vmul.f32 %v597, %v597
  %v1158 = vmul.f32 %v600, %v600
  %v1159 = vmul.f32 %v605, %v605
  %v1160 = vmul.f32 %v608, %v608
  %v1161 = vmul.f32 %v613, %v613
  %v1162 = vmul.f32 %v616, %v616
  %v1163 = vmul.f32 %v621, %v621
  %v1164 = vmul.f32 %v624, %v624
  %v1165 = vmul.f32 %v629, %v629
  %v1166 = vmul.f32 %v632, %v632
  %v1167 = vmul.f32 %v637, %v637
  %v1168 = vmul.f32 %v640, %v640
  %v1169 = vmul.f32 %v645, %v645
  %v1170 = vmul.f32 %v648, %v648
  %v1171 = vmul.f32 %v653, %v653
  %v1172 = vmul.f32 %v656, %v656
  %v1173 = vmul.f32 %v661, %v661
  %v1174 = vmul.f32 %v664, %v664
  %v1175 = vmul.f32 %v669, %v669
  %v1176 = vmul.f32 %v672, %v672
  %v1177 = vmul.f32 %v677, %v677
  %v1178 = vmul.f32 %v680, %v680
  %v1179 = vmul.f32 %v685, %v685
  %v1180 = vmul.f32 %v688, %v688
  %v1181 = vmul.f32 %v693, %v693
  %v1182 = vmul.f32 %v696, %v696
  %v1183 = vmul.f32 %v701, %v701
  %v1184 = vmul.f32 %v704, %v704
  %v1185 = vmul.f32 %v709, %v709
  %v1186 = vmul.f32 %v712, %v712
  %v1187 = vmul.f32 %v717, %v717
  %v1188 = vmul.f32 %v720, %v720
  %v1189 = vmul.f32 %v725, %v725
  %v1190 = vmul.f32 %v728, %v728
  %v1191 = vmul.f32 %v733, %v733
  %v1192 = vmul.f32 %v736, %v736
  %v1193 = vadd.f32 %v1129, %v1130
  %v1194 = vadd.f32 %v1193, %v1131
  %v1195 = vadd.f32 %v1194, %v1132
  %v1196 = vadd.f32 %v1195, %v1133
  %v1197 = vadd.f32 %v1196, %v1134
  %v1198 = vadd.f32 %v1197, %v1135
  %v1199 = vadd.f32 %v1198, %v1136
  %v1200 = vadd.f32 %v1199, %v1137
  %v1201 = vadd.f32 %v1200, %v1138
  %v1202 = vadd.f32 %v1201, %v1139
  %v1203 = vadd.f32 %v1202, %v1140
  %v1204 = vadd.f32 %v1203, %v1141
  %v1205 = vadd.f32 %v1204, %v1142
  %v1206 = vadd.f32 %v1205, %v1143
  %v1207 = vadd.f32 %v1206, %v1144
  %v1208 = vadd.f32 %v1207, %v1145
  %v1209 = vadd.f32 %v1208, %v1146
  %v1210 = vadd.f32 %v1209, %v1147
  %v1211 = vadd.f32 %v1210, %v1148
  %v1212 = vadd.f32 %v1211, %v1149
  %v1213 = vadd.f32 %v1212, %v1150
  %v1214 = vadd.f32 %v1213, %v1151
  %v1215 = vadd.f32 %v1214, %v1152
  %v1216 = vadd.f32 %v1215, %v1153
  %v1217 = vadd.f32 %v1216, %v1154
  %v1218 = vadd.f32 %v1217, %v1155
  %v1219 = vadd.f32 %v1218, %v1156
  %v1220 = vadd.f32 %v1219, %v1157
  %v1221 = vadd.f32 %v1220, %v1158
  %v1222 = vadd.f32 %v1221, %v1159
  %v1223 = vadd.f32 %v1222, %v1160
  %v1224 = vadd.f32 %v1223, %v1161
  %v1225 = vadd.f32 %v1224, %v1162
  %v1226 = vadd.f32 %v1225, %v1163
  %v1227 = vadd.f32 %v1226, %v1164
  %v1228 = vadd.f32 %v1227, %v1165
  %v1229 = vadd.f32 %v1228, %v1166
  %v1230 = vadd.f32 %v1229, %v1167
  %v1231 = vadd.f32 %v1230, %v1168
  %v1232 = vadd.f32 %v1231, %v1169
  %v1233 = vadd.f32 %v1232, %v1170
  %v1234 = vadd.f32 %v1233, %v1171
  %v1235 = vadd.f32 %v1234, %v1172
  %v1236 = vadd.f32 %v1235, %v1173
  %v1237 = vadd.f32 %v1236, %v1174
  %v1238 = vadd.f32 %v1237, %v1175
  %v1239 = vadd.f32 %v1238, %v1176
  %v1240 = vadd.f32 %v1239, %v1177
  %v1241 = vadd.f32 %v1240, %v1178
  %v1242 = vadd.f32 %v1241, %v1179
  %v1243 = vadd.f32 %v1242, %v1180
  %v1244 = vadd.f32 %v1243, %v1181
  %v1245 = vadd.f32 %v1244, %v1182
  %v1246 = vadd.f32 %v1245, %v1183
  %v1247 = vadd.f32 %v1246, %v1184
  %v1248 = vadd.f32 %v1247, %v1185
  %v1249 = vadd.f32 %v1248, %v1186
  %v1250 = vadd.f32 %v1249, %v1187
  %v1251 = vadd.f32 %v1250, %v1188
  %v1252 = vadd.f32 %v1251, %v1189
  %v1253 = vadd.f32 %v1252, %v1190
  %v1254 = vadd.f32 %v1253, %v1191
  %v1255 = vadd.f32 %v1254, %v1192
  %v1256 = vrot.slane %v1255, 4
  %v1257 = vadd.f32 %v1255, %v1256
  %v1258 = vrot.slane %v1257, 2
  %v1259 = vadd.f32 %v1257, %v1258
  %v1260 = vrot.slane %v1259, 1
  %v1261 = vadd.f32 %v1259, %v1260
  %1262 = vst [vmem:[%s5 + $0x1] sm:$0x1] %v1261
  // Predicated region
  $region18: #{bottleneck_forward.7} parent=0 // pred_check
    _
  $region19: #{bottleneck_forward.7} parent=0 // pred_check_branch
    %1264 = sbr.rel (0) target = $region21
  $region20: #{bottleneck_forward.7} parent=0 // pred_region
    _
  $region21: #{bottleneck_forward.7} parent=0 // pred_fallthru
    _
  // Predicated region
  $region22: #{bottleneck_forward.7} parent=0 // pred_check
    _
  $region23: #{bottleneck_forward.7} parent=0 // pred_check_branch
    %1266 = sbr.rel (0) target = $region25
  $region24: #{bottleneck_forward.7} parent=0 // pred_region
    _
  $region25: #{bottleneck_forward.7} parent=0 // pred_fallthru
    _
  // Predicated region
  $region26: #{bottleneck_forward.7} parent=0 // pred_check
    _
  $region27: #{bottleneck_forward.7} parent=0 // pred_check_branch
    %1268 = sbr.rel (0) target = $region29
  $region28: #{bottleneck_forward.7} parent=0 // pred_region
    _
  $region29: #{bottleneck_forward.7} parent=0 // pred_fallthru
    _
  // Predicated region
  $region30: #{bottleneck_forward.7} parent=0 // pred_check
    _
  $region31: #{bottleneck_forward.7} parent=0 // pred_check_branch
    %1270 = sbr.rel (0) target = $region33
  $region32: #{bottleneck_forward.7} parent=0 // pred_region
    _
  $region33: #{bottleneck_forward.7} parent=0 // pred_fallthru
    _

// kernel: bottleneck_forward.9
$region0: #{bottleneck_forward.9}
  #allocation0 [shape = 'u32[]', space=smem, size = 0x4, offset = 0x4, fixed_abs, tag = 'smem constant byte address 0x4 - core index']
  #allocation1 [shape = 'u32[144,128]{1,0:T(1,128)}', space=vmem, size = 0x12000, scoped, tag = 'internal scratch']
  %s0 = inlined_call_operand.vmem [shape: bf16[512,128], index: 0, kind: input, shape index: {}]
  %s1 = inlined_call_operand.vmem [shape: f32[1,128], index: 1, kind: input, shape index: {}]
  %s2 = inlined_call_operand.vmem [shape: f32[1,128], index: 2, kind: input, shape index: {}]
  %s3 = inlined_call_operand.vmem [shape: bf16[512,128], index: 3, kind: input, shape index: {}]
  %s4 = inlined_call_operand.vmem [shape: f32[1,128], index: 4, kind: input, shape index: {}]
  %s5 = inlined_call_operand.vmem [shape: f32[1,128], index: 5, kind: input, shape index: {}]
  %s6 = inlined_call_operand.vmem [shape: f32[512,128], index: 6, kind: output, shape index: {}]
  %s7 = sld [smem:[#allocation0]]
  $region34: #{bottleneck_forward.9} parent=0
    _
  %s9 = ssub.s32 1, %s7
  %s10 = scalar_select 0, %s9, %s7
  // Predicated region
  $region2: #{bottleneck_forward.9} parent=0 // pred_check
    _
  $region3: #{bottleneck_forward.9} parent=0 // pred_check_branch
    %12 = sbr.rel (0) target = $region5
  $region4: #{bottleneck_forward.9} parent=0 // pred_region
    _
  $region5: #{bottleneck_forward.9} parent=0 // pred_fallthru
    _
  // Predicated region
  $region6: #{bottleneck_forward.9} parent=0 // pred_check
    _
  $region7: #{bottleneck_forward.9} parent=0 // pred_check_branch
    %14 = sbr.rel (0) target = $region9
  $region8: #{bottleneck_forward.9} parent=0 // pred_region
    _
  $region9: #{bottleneck_forward.9} parent=0 // pred_fallthru
    _
  // Predicated region
  $region10: #{bottleneck_forward.9} parent=0 // pred_check
    _
  $region11: #{bottleneck_forward.9} parent=0 // pred_check_branch
    %16 = sbr.rel (0) target = $region13
  $region12: #{bottleneck_forward.9} parent=0 // pred_region
    _
  $region13: #{bottleneck_forward.9} parent=0 // pred_fallthru
    _
  // Predicated region
  $region14: #{bottleneck_forward.9} parent=0 // pred_check
    _
  $region15: #{bottleneck_forward.9} parent=0 // pred_check_branch
    %18 = sbr.rel (0) target = $region17
  $region16: #{bottleneck_forward.9} parent=0 // pred_region
    _
  $region17: #{bottleneck_forward.9} parent=0 // pred_fallthru
    _
  // Predicated region
  $region18: #{bottleneck_forward.9} parent=0 // pred_check
    _
  $region19: #{bottleneck_forward.9} parent=0 // pred_check_branch
    %20 = sbr.rel (0) target = $region21
  $region20: #{bottleneck_forward.9} parent=0 // pred_region
    _
  $region21: #{bottleneck_forward.9} parent=0 // pred_fallthru
    _
  // Predicated region
  $region22: #{bottleneck_forward.9} parent=0 // pred_check
    _
  $region23: #{bottleneck_forward.9} parent=0 // pred_check_branch
    %22 = sbr.rel (0) target = $region25
  $region24: #{bottleneck_forward.9} parent=0 // pred_region
    _
  $region25: #{bottleneck_forward.9} parent=0 // pred_fallthru
    _
  %v23 = vld [vmem:[%s0] sm:$0xf]
  %v24 = vld [vmem:[%s0 + $0x4] sm:$0xf]
  %v25 = vld [vmem:[%s0 + $0x8] sm:$0xf]
  %v26 = vld [vmem:[%s0 + $0xc] sm:$0xf]
  %v27 = vld [vmem:[%s0 + $0x10] sm:$0xf]
  %v28 = vld [vmem:[%s0 + $0x14] sm:$0xf]
  %v29 = vld [vmem:[%s0 + $0x18] sm:$0xf]
  %v30 = vld [vmem:[%s0 + $0x1c] sm:$0xf]
  %v31 = vld [vmem:[%s0 + $0x20] sm:$0xf]
  %v32 = vld [vmem:[%s0 + $0x24] sm:$0xf]
  %v33 = vld [vmem:[%s0 + $0x28] sm:$0xf]
  %v34 = vld [vmem:[%s0 + $0x2c] sm:$0xf]
  %v35 = vld [vmem:[%s0 + $0x30] sm:$0xf]
  %v36 = vld [vmem:[%s0 + $0x34] sm:$0xf]
  %v37 = vld [vmem:[%s0 + $0x38] sm:$0xf]
  %v38 = vld [vmem:[%s0 + $0x3c] sm:$0xf]
  %v39 = vld [vmem:[%s0 + $0x40] sm:$0xf]
  %v40 = vld [vmem:[%s0 + $0x44] sm:$0xf]
  %v41 = vld [vmem:[%s0 + $0x48] sm:$0xf]
  %v42 = vld [vmem:[%s0 + $0x4c] sm:$0xf]
  %v43 = vld [vmem:[%s0 + $0x50] sm:$0xf]
  %v44 = vld [vmem:[%s0 + $0x54] sm:$0xf]
  %v45 = vld [vmem:[%s0 + $0x58] sm:$0xf]
  %v46 = vld [vmem:[%s0 + $0x5c] sm:$0xf]
  %v47 = vld [vmem:[%s0 + $0x60] sm:$0xf]
  %v48 = vld [vmem:[%s0 + $0x64] sm:$0xf]
  %v49 = vld [vmem:[%s0 + $0x68] sm:$0xf]
  %v50 = vld [vmem:[%s0 + $0x6c] sm:$0xf]
  %v51 = vld [vmem:[%s0 + $0x70] sm:$0xf]
  %v52 = vld [vmem:[%s0 + $0x74] sm:$0xf]
  %v53 = vld [vmem:[%s0 + $0x78] sm:$0xf]
  %v54 = vld [vmem:[%s0 + $0x7c] sm:$0xf]
  %v55 = vld [vmem:[%s0 + $0x80] sm:$0xf]
  %v56 = vld [vmem:[%s0 + $0x84] sm:$0xf]
  %v57 = vld [vmem:[%s0 + $0x88] sm:$0xf]
  %v58 = vld [vmem:[%s0 + $0x8c] sm:$0xf]
  %v59 = vld [vmem:[%s0 + $0x90] sm:$0xf]
  %v60 = vld [vmem:[%s0 + $0x94] sm:$0xf]
  %v61 = vld [vmem:[%s0 + $0x98] sm:$0xf]
  %v62 = vld [vmem:[%s0 + $0x9c] sm:$0xf]
  %v63 = vld [vmem:[%s0 + $0xa0] sm:$0xf]
  %v64 = vld [vmem:[%s0 + $0xa4] sm:$0xf]
  %v65 = vld [vmem:[%s0 + $0xa8] sm:$0xf]
  %v66 = vld [vmem:[%s0 + $0xac] sm:$0xf]
  %v67 = vld [vmem:[%s0 + $0xb0] sm:$0xf]
  %v68 = vld [vmem:[%s0 + $0xb4] sm:$0xf]
  %v69 = vld [vmem:[%s0 + $0xb8] sm:$0xf]
  %v70 = vld [vmem:[%s0 + $0xbc] sm:$0xf]
  %v71 = vld [vmem:[%s0 + $0xc0] sm:$0xf]
  %v72 = vld [vmem:[%s0 + $0xc4] sm:$0xf]
  %v73 = vld [vmem:[%s0 + $0xc8] sm:$0xf]
  %v74 = vld [vmem:[%s0 + $0xcc] sm:$0xf]
  %v75 = vld [vmem:[%s0 + $0xd0] sm:$0xf]
  %v76 = vld [vmem:[%s0 + $0xd4] sm:$0xf]
  %v77 = vld [vmem:[%s0 + $0xd8] sm:$0xf]
  %v78 = vld [vmem:[%s0 + $0xdc] sm:$0xf]
  %v79 = vld [vmem:[%s0 + $0xe0] sm:$0xf]
  %v80 = vld [vmem:[%s0 + $0xe4] sm:$0xf]
  %v81 = vld [vmem:[%s0 + $0xe8] sm:$0xf]
  %v82 = vld [vmem:[%s0 + $0xec] sm:$0xf]
  %v83 = vld [vmem:[%s0 + $0xf0] sm:$0xf]
  %v84 = vld [vmem:[%s0 + $0xf4] sm:$0xf]
  %v85 = vld [vmem:[%s0 + $0xf8] sm:$0xf]
  %v86 = vld [vmem:[%s0 + $0xfc] sm:$0xf]
  %v87 = vunpack.c.l.bf16 %v23
  %v88 = vunpack.c.l.bf16 %v24
  %v89 = vunpack.c.l.bf16 %v25
  %v90 = vunpack.c.l.bf16 %v26
  %v91 = vunpack.c.l.bf16 %v27
  %v92 = vunpack.c.l.bf16 %v28
  %v93 = vunpack.c.l.bf16 %v29
  %v94 = vunpack.c.l.bf16 %v30
  %v95 = vunpack.c.l.bf16 %v31
  %v96 = vunpack.c.l.bf16 %v32
  %v97 = vunpack.c.l.bf16 %v33
  %v98 = vunpack.c.l.bf16 %v34
  %v99 = vunpack.c.l.bf16 %v35
  %v100 = vunpack.c.l.bf16 %v36
  %v101 = vunpack.c.l.bf16 %v37
  %v102 = vunpack.c.l.bf16 %v38
  %v103 = vunpack.c.l.bf16 %v39
  %v104 = vunpack.c.l.bf16 %v40
  %v105 = vunpack.c.l.bf16 %v41
  %v106 = vunpack.c.l.bf16 %v42
  %v107 = vunpack.c.l.bf16 %v43
  %v108 = vunpack.c.l.bf16 %v44
  %v109 = vunpack.c.l.bf16 %v45
  %v110 = vunpack.c.l.bf16 %v46
  %v111 = vunpack.c.l.bf16 %v47
  %v112 = vunpack.c.l.bf16 %v48
  %v113 = vunpack.c.l.bf16 %v49
  %v114 = vunpack.c.l.bf16 %v50
  %v115 = vunpack.c.l.bf16 %v51
  %v116 = vunpack.c.l.bf16 %v52
  %v117 = vunpack.c.l.bf16 %v53
  %v118 = vunpack.c.l.bf16 %v54
  %v119 = vunpack.c.l.bf16 %v55
  %v120 = vunpack.c.l.bf16 %v56
  %v121 = vunpack.c.l.bf16 %v57
  %v122 = vunpack.c.l.bf16 %v58
  %v123 = vunpack.c.l.bf16 %v59
  %v124 = vunpack.c.l.bf16 %v60
  %v125 = vunpack.c.l.bf16 %v61
  %v126 = vunpack.c.l.bf16 %v62
  %v127 = vunpack.c.l.bf16 %v63
  %v128 = vunpack.c.l.bf16 %v64
  %v129 = vunpack.c.l.bf16 %v65
  %v130 = vunpack.c.l.bf16 %v66
  %v131 = vunpack.c.l.bf16 %v67
  %v132 = vunpack.c.l.bf16 %v68
  %v133 = vunpack.c.l.bf16 %v69
  %v134 = vunpack.c.l.bf16 %v70
  %v135 = vunpack.c.l.bf16 %v71
  %v136 = vunpack.c.l.bf16 %v72
  %v137 = vunpack.c.l.bf16 %v73
  %v138 = vunpack.c.l.bf16 %v74
  %v139 = vunpack.c.l.bf16 %v75
  %v140 = vunpack.c.l.bf16 %v76
  %v141 = vunpack.c.l.bf16 %v77
  %v142 = vunpack.c.l.bf16 %v78
  %v143 = vunpack.c.l.bf16 %v79
  %v144 = vunpack.c.l.bf16 %v80
  %v145 = vunpack.c.l.bf16 %v81
  %v146 = vunpack.c.l.bf16 %v82
  %v147 = vunpack.c.l.bf16 %v83
  %v148 = vunpack.c.l.bf16 %v84
  %v149 = vunpack.c.l.bf16 %v85
  %v150 = vunpack.c.l.bf16 %v86
  %v151 = vld [vmem:[%s1] sm:$0x1]
  %v153 = vlaneseq
  %v154 = vshrl.u32 %v153, 7
  %v155 = vsub.s32 0, %v154
  %v156 = vrot.slane %v151, %v155
  %v158 = vmul.f32 %v87, %v156
  %v159 = vmul.f32 %v88, %v156
  %v160 = vmul.f32 %v89, %v156
  %v161 = vmul.f32 %v90, %v156
  %v162 = vmul.f32 %v91, %v156
  %v163 = vmul.f32 %v92, %v156
  %v164 = vmul.f32 %v93, %v156
  %v165 = vmul.f32 %v94, %v156
  %v166 = vmul.f32 %v95, %v156
  %v167 = vmul.f32 %v96, %v156
  %v168 = vmul.f32 %v97, %v156
  %v169 = vmul.f32 %v98, %v156
  %v170 = vmul.f32 %v99, %v156
  %v171 = vmul.f32 %v100, %v156
  %v172 = vmul.f32 %v101, %v156
  %v173 = vmul.f32 %v102, %v156
  %v174 = vmul.f32 %v103, %v156
  %v175 = vmul.f32 %v104, %v156
  %v176 = vmul.f32 %v105, %v156
  %v177 = vmul.f32 %v106, %v156
  %v178 = vmul.f32 %v107, %v156
  %v179 = vmul.f32 %v108, %v156
  %v180 = vmul.f32 %v109, %v156
  %v181 = vmul.f32 %v110, %v156
  %v182 = vmul.f32 %v111, %v156
  %v183 = vmul.f32 %v112, %v156
  %v184 = vmul.f32 %v113, %v156
  %v185 = vmul.f32 %v114, %v156
  %v186 = vmul.f32 %v115, %v156
  %v187 = vmul.f32 %v116, %v156
  %v188 = vmul.f32 %v117, %v156
  %v189 = vmul.f32 %v118, %v156
  %v190 = vmul.f32 %v119, %v156
  %v191 = vmul.f32 %v120, %v156
  %v192 = vmul.f32 %v121, %v156
  %v193 = vmul.f32 %v122, %v156
  %v194 = vmul.f32 %v123, %v156
  %v195 = vmul.f32 %v124, %v156
  %v196 = vmul.f32 %v125, %v156
  %v197 = vmul.f32 %v126, %v156
  %v198 = vmul.f32 %v127, %v156
  %v199 = vmul.f32 %v128, %v156
  %v200 = vmul.f32 %v129, %v156
  %v201 = vmul.f32 %v130, %v156
  %v202 = vmul.f32 %v131, %v156
  %v203 = vmul.f32 %v132, %v156
  %v204 = vmul.f32 %v133, %v156
  %v205 = vmul.f32 %v134, %v156
  %v206 = vmul.f32 %v135, %v156
  %v207 = vmul.f32 %v136, %v156
  %v208 = vmul.f32 %v137, %v156
  %v209 = vmul.f32 %v138, %v156
  %v210 = vmul.f32 %v139, %v156
  %v211 = vmul.f32 %v140, %v156
  %v212 = vmul.f32 %v141, %v156
  %v213 = vmul.f32 %v142, %v156
  %v214 = vmul.f32 %v143, %v156
  %v215 = vmul.f32 %v144, %v156
  %v216 = vmul.f32 %v145, %v156
  %v217 = vmul.f32 %v146, %v156
  %v218 = vmul.f32 %v147, %v156
  %v219 = vmul.f32 %v148, %v156
  %v220 = vmul.f32 %v149, %v156
  %v221 = vmul.f32 %v150, %v156
  %v222 = vld [vmem:[%s2] sm:$0x1]
  %v224 = vlaneseq
  %v225 = vshrl.u32 %v224, 7
  %v226 = vsub.s32 0, %v225
  %v227 = vrot.slane %v222, %v226
  %v229 = vadd.f32 %v158, %v227
  %v230 = vadd.f32 %v159, %v227
  %v231 = vadd.f32 %v160, %v227
  %v232 = vadd.f32 %v161, %v227
  %v233 = vadd.f32 %v162, %v227
  %v234 = vadd.f32 %v163, %v227
  %v235 = vadd.f32 %v164, %v227
  %v236 = vadd.f32 %v165, %v227
  %v237 = vadd.f32 %v166, %v227
  %v238 = vadd.f32 %v167, %v227
  %v239 = vadd.f32 %v168, %v227
  %v240 = vadd.f32 %v169, %v227
  %v241 = vadd.f32 %v170, %v227
  %v242 = vadd.f32 %v171, %v227
  %v243 = vadd.f32 %v172, %v227
  %v244 = vadd.f32 %v173, %v227
  %v245 = vadd.f32 %v174, %v227
  %v246 = vadd.f32 %v175, %v227
  %v247 = vadd.f32 %v176, %v227
  %v248 = vadd.f32 %v177, %v227
  %v249 = vadd.f32 %v178, %v227
  %v250 = vadd.f32 %v179, %v227
  %v251 = vadd.f32 %v180, %v227
  %v252 = vadd.f32 %v181, %v227
  %v253 = vadd.f32 %v182, %v227
  %v254 = vadd.f32 %v183, %v227
  %v255 = vadd.f32 %v184, %v227
  %v256 = vadd.f32 %v185, %v227
  %v257 = vadd.f32 %v186, %v227
  %v258 = vadd.f32 %v187, %v227
  %v259 = vadd.f32 %v188, %v227
  %v260 = vadd.f32 %v189, %v227
  %v261 = vadd.f32 %v190, %v227
  %v262 = vadd.f32 %v191, %v227
  %v263 = vadd.f32 %v192, %v227
  %v264 = vadd.f32 %v193, %v227
  %v265 = vadd.f32 %v194, %v227
  %v266 = vadd.f32 %v195, %v227
  %v267 = vadd.f32 %v196, %v227
  %v268 = vadd.f32 %v197, %v227
  %v269 = vadd.f32 %v198, %v227
  %v270 = vadd.f32 %v199, %v227
  %v271 = vadd.f32 %v200, %v227
  %v272 = vadd.f32 %v201, %v227
  %v273 = vadd.f32 %v202, %v227
  %v274 = vadd.f32 %v203, %v227
  %v275 = vadd.f32 %v204, %v227
  %v276 = vadd.f32 %v205, %v227
  %v277 = vadd.f32 %v206, %v227
  %v278 = vadd.f32 %v207, %v227
  %v279 = vadd.f32 %v208, %v227
  %v280 = vadd.f32 %v209, %v227
  %v281 = vadd.f32 %v210, %v227
  %v282 = vadd.f32 %v211, %v227
  %v283 = vadd.f32 %v212, %v227
  %v284 = vadd.f32 %v213, %v227
  %v285 = vadd.f32 %v214, %v227
  %v286 = vadd.f32 %v215, %v227
  %v287 = vadd.f32 %v216, %v227
  %v288 = vadd.f32 %v217, %v227
  %v289 = vadd.f32 %v218, %v227
  %v290 = vadd.f32 %v219, %v227
  %v291 = vadd.f32 %v220, %v227
  %v292 = vadd.f32 %v221, %v227
  %v293 = vld [vmem:[%s3] sm:$0xf]
  %v294 = vld [vmem:[%s3 + $0x4] sm:$0xf]
  %v295 = vld [vmem:[%s3 + $0x8] sm:$0xf]
  %v296 = vld [vmem:[%s3 + $0xc] sm:$0xf]
  %v297 = vld [vmem:[%s3 + $0x10] sm:$0xf]
  %v298 = vld [vmem:[%s3 + $0x14] sm:$0xf]
  %v299 = vld [vmem:[%s3 + $0x18] sm:$0xf]
  %v300 = vld [vmem:[%s3 + $0x1c] sm:$0xf]
  %v301 = vld [vmem:[%s3 + $0x20] sm:$0xf]
  %v302 = vld [vmem:[%s3 + $0x24] sm:$0xf]
  %v303 = vld [vmem:[%s3 + $0x28] sm:$0xf]
  %v304 = vld [vmem:[%s3 + $0x2c] sm:$0xf]
  %v305 = vld [vmem:[%s3 + $0x30] sm:$0xf]
  %v306 = vld [vmem:[%s3 + $0x34] sm:$0xf]
  %v307 = vld [vmem:[%s3 + $0x38] sm:$0xf]
  %v308 = vld [vmem:[%s3 + $0x3c] sm:$0xf]
  %v309 = vld [vmem:[%s3 + $0x40] sm:$0xf]
  %v310 = vld [vmem:[%s3 + $0x44] sm:$0xf]
  %v311 = vld [vmem:[%s3 + $0x48] sm:$0xf]
  %v312 = vld [vmem:[%s3 + $0x4c] sm:$0xf]
  %v313 = vld [vmem:[%s3 + $0x50] sm:$0xf]
  %v314 = vld [vmem:[%s3 + $0x54] sm:$0xf]
  %v315 = vld [vmem:[%s3 + $0x58] sm:$0xf]
  %v316 = vld [vmem:[%s3 + $0x5c] sm:$0xf]
  %v317 = vld [vmem:[%s3 + $0x60] sm:$0xf]
  %v318 = vld [vmem:[%s3 + $0x64] sm:$0xf]
  %v319 = vld [vmem:[%s3 + $0x68] sm:$0xf]
  %v320 = vld [vmem:[%s3 + $0x6c] sm:$0xf]
  %v321 = vld [vmem:[%s3 + $0x70] sm:$0xf]
  %v322 = vld [vmem:[%s3 + $0x74] sm:$0xf]
  %v323 = vld [vmem:[%s3 + $0x78] sm:$0xf]
  %v324 = vld [vmem:[%s3 + $0x7c] sm:$0xf]
  %v325 = vld [vmem:[%s3 + $0x80] sm:$0xf]
  %v326 = vld [vmem:[%s3 + $0x84] sm:$0xf]
  %v327 = vld [vmem:[%s3 + $0x88] sm:$0xf]
  %v328 = vld [vmem:[%s3 + $0x8c] sm:$0xf]
  %v329 = vld [vmem:[%s3 + $0x90] sm:$0xf]
  %v330 = vld [vmem:[%s3 + $0x94] sm:$0xf]
  %v331 = vld [vmem:[%s3 + $0x98] sm:$0xf]
  %v332 = vld [vmem:[%s3 + $0x9c] sm:$0xf]
  %v333 = vld [vmem:[%s3 + $0xa0] sm:$0xf]
  %v334 = vld [vmem:[%s3 + $0xa4] sm:$0xf]
  %v335 = vld [vmem:[%s3 + $0xa8] sm:$0xf]
  %v336 = vld [vmem:[%s3 + $0xac] sm:$0xf]
  %v337 = vld [vmem:[%s3 + $0xb0] sm:$0xf]
  %v338 = vld [vmem:[%s3 + $0xb4] sm:$0xf]
  %v339 = vld [vmem:[%s3 + $0xb8] sm:$0xf]
  %v340 = vld [vmem:[%s3 + $0xbc] sm:$0xf]
  %v341 = vld [vmem:[%s3 + $0xc0] sm:$0xf]
  %v342 = vld [vmem:[%s3 + $0xc4] sm:$0xf]
  %v343 = vld [vmem:[%s3 + $0xc8] sm:$0xf]
  %v344 = vld [vmem:[%s3 + $0xcc] sm:$0xf]
  %v345 = vld [vmem:[%s3 + $0xd0] sm:$0xf]
  %v346 = vld [vmem:[%s3 + $0xd4] sm:$0xf]
  %v347 = vld [vmem:[%s3 + $0xd8] sm:$0xf]
  %v348 = vld [vmem:[%s3 + $0xdc] sm:$0xf]
  %v349 = vld [vmem:[%s3 + $0xe0] sm:$0xf]
  %v350 = vld [vmem:[%s3 + $0xe4] sm:$0xf]
  %v351 = vld [vmem:[%s3 + $0xe8] sm:$0xf]
  %v352 = vld [vmem:[%s3 + $0xec] sm:$0xf]
  %v353 = vld [vmem:[%s3 + $0xf0] sm:$0xf]
  %v354 = vld [vmem:[%s3 + $0xf4] sm:$0xf]
  %v355 = vld [vmem:[%s3 + $0xf8] sm:$0xf]
  %v356 = vld [vmem:[%s3 + $0xfc] sm:$0xf]
  %v357 = vunpack.c.l.bf16 %v293
  %v358 = vunpack.c.l.bf16 %v294
  %v359 = vunpack.c.l.bf16 %v295
  %v360 = vunpack.c.l.bf16 %v296
  %v361 = vunpack.c.l.bf16 %v297
  %v362 = vunpack.c.l.bf16 %v298
  %v363 = vunpack.c.l.bf16 %v299
  %v364 = vunpack.c.l.bf16 %v300
  %v365 = vunpack.c.l.bf16 %v301
  %v366 = vunpack.c.l.bf16 %v302
  %v367 = vunpack.c.l.bf16 %v303
  %v368 = vunpack.c.l.bf16 %v304
  %v369 = vunpack.c.l.bf16 %v305
  %v370 = vunpack.c.l.bf16 %v306
  %v371 = vunpack.c.l.bf16 %v307
  %v372 = vunpack.c.l.bf16 %v308
  %v373 = vunpack.c.l.bf16 %v309
  %v374 = vunpack.c.l.bf16 %v310
  %v375 = vunpack.c.l.bf16 %v311
  %v376 = vunpack.c.l.bf16 %v312
  %v377 = vunpack.c.l.bf16 %v313
  %v378 = vunpack.c.l.bf16 %v314
  %v379 = vunpack.c.l.bf16 %v315
  %v380 = vunpack.c.l.bf16 %v316
  %v381 = vunpack.c.l.bf16 %v317
  %v382 = vunpack.c.l.bf16 %v318
  %v383 = vunpack.c.l.bf16 %v319
  %v384 = vunpack.c.l.bf16 %v320
  %v385 = vunpack.c.l.bf16 %v321
  %v386 = vunpack.c.l.bf16 %v322
  %v387 = vunpack.c.l.bf16 %v323
  %v388 = vunpack.c.l.bf16 %v324
  %v389 = vunpack.c.l.bf16 %v325
  %v390 = vunpack.c.l.bf16 %v326
  %v391 = vunpack.c.l.bf16 %v327
  %v392 = vunpack.c.l.bf16 %v328
  %v393 = vunpack.c.l.bf16 %v329
  %v394 = vunpack.c.l.bf16 %v330
  %v395 = vunpack.c.l.bf16 %v331
  %v396 = vunpack.c.l.bf16 %v332
  %v397 = vunpack.c.l.bf16 %v333
  %v398 = vunpack.c.l.bf16 %v334
  %v399 = vunpack.c.l.bf16 %v335
  %v400 = vunpack.c.l.bf16 %v336
  %v401 = vunpack.c.l.bf16 %v337
  %v402 = vunpack.c.l.bf16 %v338
  %v403 = vunpack.c.l.bf16 %v339
  %v404 = vunpack.c.l.bf16 %v340
  %v405 = vunpack.c.l.bf16 %v341
  %v406 = vunpack.c.l.bf16 %v342
  %v407 = vunpack.c.l.bf16 %v343
  %v408 = vunpack.c.l.bf16 %v344
  %v409 = vunpack.c.l.bf16 %v345
  %v410 = vunpack.c.l.bf16 %v346
  %v411 = vunpack.c.l.bf16 %v347
  %v412 = vunpack.c.l.bf16 %v348
  %v413 = vunpack.c.l.bf16 %v349
  %v414 = vunpack.c.l.bf16 %v350
  %v415 = vunpack.c.l.bf16 %v351
  %v416 = vunpack.c.l.bf16 %v352
  %v417 = vunpack.c.l.bf16 %v353
  %v418 = vunpack.c.l.bf16 %v354
  %v419 = vunpack.c.l.bf16 %v355
  %v420 = vunpack.c.l.bf16 %v356
  %v421 = vld [vmem:[%s4] sm:$0x1]
  %v423 = vlaneseq
  %v424 = vshrl.u32 %v423, 7
  %v425 = vsub.s32 0, %v424
  %v426 = vrot.slane %v421, %v425
  %v428 = vmul.f32 %v357, %v426
  %v429 = vmul.f32 %v358, %v426
  %v430 = vmul.f32 %v359, %v426
  %v431 = vmul.f32 %v360, %v426
  %v432 = vmul.f32 %v361, %v426
  %v433 = vmul.f32 %v362, %v426
  %v434 = vmul.f32 %v363, %v426
  %v435 = vmul.f32 %v364, %v426
  %v436 = vmul.f32 %v365, %v426
  %v437 = vmul.f32 %v366, %v426
  %v438 = vmul.f32 %v367, %v426
  %v439 = vmul.f32 %v368, %v426
  %v440 = vmul.f32 %v369, %v426
  %v441 = vmul.f32 %v370, %v426
  %v442 = vmul.f32 %v371, %v426
  %v443 = vmul.f32 %v372, %v426
  %v444 = vmul.f32 %v373, %v426
  %v445 = vmul.f32 %v374, %v426
  %v446 = vmul.f32 %v375, %v426
  %v447 = vmul.f32 %v376, %v426
  %v448 = vmul.f32 %v377, %v426
  %v449 = vmul.f32 %v378, %v426
  %v450 = vmul.f32 %v379, %v426
  %v451 = vmul.f32 %v380, %v426
  %v452 = vmul.f32 %v381, %v426
  %v453 = vmul.f32 %v382, %v426
  %v454 = vmul.f32 %v383, %v426
  %v455 = vmul.f32 %v384, %v426
  %v456 = vmul.f32 %v385, %v426
  %v457 = vmul.f32 %v386, %v426
  %v458 = vmul.f32 %v387, %v426
  %v459 = vmul.f32 %v388, %v426
  %v460 = vmul.f32 %v389, %v426
  %v461 = vmul.f32 %v390, %v426
  %v462 = vmul.f32 %v391, %v426
  %v463 = vmul.f32 %v392, %v426
  %v464 = vmul.f32 %v393, %v426
  %v465 = vmul.f32 %v394, %v426
  %v466 = vmul.f32 %v395, %v426
  %v467 = vmul.f32 %v396, %v426
  %v468 = vmul.f32 %v397, %v426
  %v469 = vmul.f32 %v398, %v426
  %v470 = vmul.f32 %v399, %v426
  %v471 = vmul.f32 %v400, %v426
  %v472 = vmul.f32 %v401, %v426
  %v473 = vmul.f32 %v402, %v426
  %v474 = vmul.f32 %v403, %v426
  %v475 = vmul.f32 %v404, %v426
  %v476 = vmul.f32 %v405, %v426
  %v477 = vmul.f32 %v406, %v426
  %v478 = vmul.f32 %v407, %v426
  %v479 = vmul.f32 %v408, %v426
  %v480 = vmul.f32 %v409, %v426
  %v481 = vmul.f32 %v410, %v426
  %v482 = vmul.f32 %v411, %v426
  %v483 = vmul.f32 %v412, %v426
  %v484 = vmul.f32 %v413, %v426
  %v485 = vmul.f32 %v414, %v426
  %v486 = vmul.f32 %v415, %v426
  %v487 = vmul.f32 %v416, %v426
  %v488 = vmul.f32 %v417, %v426
  %v489 = vmul.f32 %v418, %v426
  %v490 = vmul.f32 %v419, %v426
  %v491 = vmul.f32 %v420, %v426
  %v492 = vld [vmem:[%s5] sm:$0x1]
  %v494 = vlaneseq
  %v495 = vshrl.u32 %v494, 7
  %v496 = vsub.s32 0, %v495
  %v497 = vrot.slane %v492, %v496
  %v499 = vadd.f32 %v428, %v497
  %v500 = vadd.f32 %v429, %v497
  %v501 = vadd.f32 %v430, %v497
  %v502 = vadd.f32 %v431, %v497
  %v503 = vadd.f32 %v432, %v497
  %v504 = vadd.f32 %v433, %v497
  %v505 = vadd.f32 %v434, %v497
  %v506 = vadd.f32 %v435, %v497
  %v507 = vadd.f32 %v436, %v497
  %v508 = vadd.f32 %v437, %v497
  %v509 = vadd.f32 %v438, %v497
  %v510 = vadd.f32 %v439, %v497
  %v511 = vadd.f32 %v440, %v497
  %v512 = vadd.f32 %v441, %v497
  %v513 = vadd.f32 %v442, %v497
  %v514 = vadd.f32 %v443, %v497
  %v515 = vadd.f32 %v444, %v497
  %v516 = vadd.f32 %v445, %v497
  %v517 = vadd.f32 %v446, %v497
  %v518 = vadd.f32 %v447, %v497
  %v519 = vadd.f32 %v448, %v497
  %v520 = vadd.f32 %v449, %v497
  %v521 = vadd.f32 %v450, %v497
  %v522 = vadd.f32 %v451, %v497
  %v523 = vadd.f32 %v452, %v497
  %v524 = vadd.f32 %v453, %v497
  %v525 = vadd.f32 %v454, %v497
  %v526 = vadd.f32 %v455, %v497
  %v527 = vadd.f32 %v456, %v497
  %v528 = vadd.f32 %v457, %v497
  %v529 = vadd.f32 %v458, %v497
  %v530 = vadd.f32 %v459, %v497
  %v531 = vadd.f32 %v460, %v497
  %v532 = vadd.f32 %v461, %v497
  %v533 = vadd.f32 %v462, %v497
  %v534 = vadd.f32 %v463, %v497
  %v535 = vadd.f32 %v464, %v497
  %v536 = vadd.f32 %v465, %v497
  %v537 = vadd.f32 %v466, %v497
  %v538 = vadd.f32 %v467, %v497
  %v539 = vadd.f32 %v468, %v497
  %v540 = vadd.f32 %v469, %v497
  %v541 = vadd.f32 %v470, %v497
  %v542 = vadd.f32 %v471, %v497
  %v543 = vadd.f32 %v472, %v497
  %v544 = vadd.f32 %v473, %v497
  %v545 = vadd.f32 %v474, %v497
  %v546 = vadd.f32 %v475, %v497
  %v547 = vadd.f32 %v476, %v497
  %v548 = vadd.f32 %v477, %v497
  %v549 = vadd.f32 %v478, %v497
  %v550 = vadd.f32 %v479, %v497
  %v551 = vadd.f32 %v480, %v497
  %v552 = vadd.f32 %v481, %v497
  %v553 = vadd.f32 %v482, %v497
  %v554 = vadd.f32 %v483, %v497
  %v555 = vadd.f32 %v484, %v497
  %v556 = vadd.f32 %v485, %v497
  %v557 = vadd.f32 %v486, %v497
  %v558 = vadd.f32 %v487, %v497
  %v559 = vadd.f32 %v488, %v497
  %v560 = vadd.f32 %v489, %v497
  %v561 = vadd.f32 %v490, %v497
  %v562 = vadd.f32 %v491, %v497
  %v563 = vadd.f32 %v229, %v499
  %v564 = vadd.f32 %v230, %v500
  %v565 = vadd.f32 %v231, %v501
  %v566 = vadd.f32 %v232, %v502
  %v567 = vadd.f32 %v233, %v503
  %v568 = vadd.f32 %v234, %v504
  %v569 = vadd.f32 %v235, %v505
  %v570 = vadd.f32 %v236, %v506
  %v571 = vadd.f32 %v237, %v507
  %v572 = vadd.f32 %v238, %v508
  %v573 = vadd.f32 %v239, %v509
  %v574 = vadd.f32 %v240, %v510
  %v575 = vadd.f32 %v241, %v511
  %v576 = vadd.f32 %v242, %v512
  %v577 = vadd.f32 %v243, %v513
  %v578 = vadd.f32 %v244, %v514
  %v579 = vadd.f32 %v245, %v515
  %v580 = vadd.f32 %v246, %v516
  %v581 = vadd.f32 %v247, %v517
  %v582 = vadd.f32 %v248, %v518
  %v583 = vadd.f32 %v249, %v519
  %v584 = vadd.f32 %v250, %v520
  %v585 = vadd.f32 %v251, %v521
  %v586 = vadd.f32 %v252, %v522
  %v587 = vadd.f32 %v253, %v523
  %v588 = vadd.f32 %v254, %v524
  %v589 = vadd.f32 %v255, %v525
  %v590 = vadd.f32 %v256, %v526
  %v591 = vadd.f32 %v257, %v527
  %v592 = vadd.f32 %v258, %v528
  %v593 = vadd.f32 %v259, %v529
  %v594 = vadd.f32 %v260, %v530
  %v595 = vadd.f32 %v261, %v531
  %v596 = vadd.f32 %v262, %v532
  %v597 = vadd.f32 %v263, %v533
  %v598 = vadd.f32 %v264, %v534
  %v599 = vadd.f32 %v265, %v535
  %v600 = vadd.f32 %v266, %v536
  %v601 = vadd.f32 %v267, %v537
  %v602 = vadd.f32 %v268, %v538
  %v603 = vadd.f32 %v269, %v539
  %v604 = vadd.f32 %v270, %v540
  %v605 = vadd.f32 %v271, %v541
  %v606 = vadd.f32 %v272, %v542
  %v607 = vadd.f32 %v273, %v543
  %v608 = vadd.f32 %v274, %v544
  %v609 = vadd.f32 %v275, %v545
  %v610 = vadd.f32 %v276, %v546
  %v611 = vadd.f32 %v277, %v547
  %v612 = vadd.f32 %v278, %v548
  %v613 = vadd.f32 %v279, %v549
  %v614 = vadd.f32 %v280, %v550
  %v615 = vadd.f32 %v281, %v551
  %v616 = vadd.f32 %v282, %v552
  %v617 = vadd.f32 %v283, %v553
  %v618 = vadd.f32 %v284, %v554
  %v619 = vadd.f32 %v285, %v555
  %v620 = vadd.f32 %v286, %v556
  %v621 = vadd.f32 %v287, %v557
  %v622 = vadd.f32 %v288, %v558
  %v623 = vadd.f32 %v289, %v559
  %v624 = vadd.f32 %v290, %v560
  %v625 = vadd.f32 %v291, %v561
  %v626 = vadd.f32 %v292, %v562
  %v627 = vmax.f32 %v563, 0.0
  %v628 = vmax.f32 %v564, 0.0
  %v629 = vmax.f32 %v565, 0.0
  %v630 = vmax.f32 %v566, 0.0
  %v631 = vmax.f32 %v567, 0.0
  %v632 = vmax.f32 %v568, 0.0
  %v633 = vmax.f32 %v569, 0.0
  %v634 = vmax.f32 %v570, 0.0
  %v635 = vmax.f32 %v571, 0.0
  %v636 = vmax.f32 %v572, 0.0
  %v637 = vmax.f32 %v573, 0.0
  %v638 = vmax.f32 %v574, 0.0
  %v639 = vmax.f32 %v575, 0.0
  %v640 = vmax.f32 %v576, 0.0
  %v641 = vmax.f32 %v577, 0.0
  %v642 = vmax.f32 %v578, 0.0
  %v643 = vmax.f32 %v579, 0.0
  %v644 = vmax.f32 %v580, 0.0
  %v645 = vmax.f32 %v581, 0.0
  %v646 = vmax.f32 %v582, 0.0
  %v647 = vmax.f32 %v583, 0.0
  %v648 = vmax.f32 %v584, 0.0
  %v649 = vmax.f32 %v585, 0.0
  %v650 = vmax.f32 %v586, 0.0
  %v651 = vmax.f32 %v587, 0.0
  %v652 = vmax.f32 %v588, 0.0
  %v653 = vmax.f32 %v589, 0.0
  %v654 = vmax.f32 %v590, 0.0
  %v655 = vmax.f32 %v591, 0.0
  %v656 = vmax.f32 %v592, 0.0
  %v657 = vmax.f32 %v593, 0.0
  %v658 = vmax.f32 %v594, 0.0
  %v659 = vmax.f32 %v595, 0.0
  %v660 = vmax.f32 %v596, 0.0
  %v661 = vmax.f32 %v597, 0.0
  %v662 = vmax.f32 %v598, 0.0
  %v663 = vmax.f32 %v599, 0.0
  %v664 = vmax.f32 %v600, 0.0
  %v665 = vmax.f32 %v601, 0.0
  %v666 = vmax.f32 %v602, 0.0
  %v667 = vmax.f32 %v603, 0.0
  %v668 = vmax.f32 %v604, 0.0
  %v669 = vmax.f32 %v605, 0.0
  %v670 = vmax.f32 %v606, 0.0
  %v671 = vmax.f32 %v607, 0.0
  %v672 = vmax.f32 %v608, 0.0
  %v673 = vmax.f32 %v609, 0.0
  %v674 = vmax.f32 %v610, 0.0
  %v675 = vmax.f32 %v611, 0.0
  %v676 = vmax.f32 %v612, 0.0
  %v677 = vmax.f32 %v613, 0.0
  %v678 = vmax.f32 %v614, 0.0
  %v679 = vmax.f32 %v615, 0.0
  %v680 = vmax.f32 %v616, 0.0
  %v681 = vmax.f32 %v617, 0.0
  %v682 = vmax.f32 %v618, 0.0
  %v683 = vmax.f32 %v619, 0.0
  %v684 = vmax.f32 %v620, 0.0
  %v685 = vmax.f32 %v621, 0.0
  %v686 = vmax.f32 %v622, 0.0
  %v687 = vmax.f32 %v623, 0.0
  %v688 = vmax.f32 %v624, 0.0
  %v689 = vmax.f32 %v625, 0.0
  %v690 = vmax.f32 %v626, 0.0
  %691 = vst [vmem:[%s6] sm:$0xff] %v627
  %692 = vst [vmem:[%s6 + $0x8] sm:$0xff] %v628
  %693 = vst [vmem:[%s6 + $0x10] sm:$0xff] %v629
  %694 = vst [vmem:[%s6 + $0x18] sm:$0xff] %v630
  %695 = vst [vmem:[%s6 + $0x20] sm:$0xff] %v631
  %696 = vst [vmem:[%s6 + $0x28] sm:$0xff] %v632
  %697 = vst [vmem:[%s6 + $0x30] sm:$0xff] %v633
  %698 = vst [vmem:[%s6 + $0x38] sm:$0xff] %v634
  %699 = vst [vmem:[%s6 + $0x40] sm:$0xff] %v635
  %700 = vst [vmem:[%s6 + $0x48] sm:$0xff] %v636
  %701 = vst [vmem:[%s6 + $0x50] sm:$0xff] %v637
  %702 = vst [vmem:[%s6 + $0x58] sm:$0xff] %v638
  %703 = vst [vmem:[%s6 + $0x60] sm:$0xff] %v639
  %704 = vst [vmem:[%s6 + $0x68] sm:$0xff] %v640
  %705 = vst [vmem:[%s6 + $0x70] sm:$0xff] %v641
  %706 = vst [vmem:[%s6 + $0x78] sm:$0xff] %v642
  %707 = vst [vmem:[%s6 + $0x80] sm:$0xff] %v643
  %708 = vst [vmem:[%s6 + $0x88] sm:$0xff] %v644
  %709 = vst [vmem:[%s6 + $0x90] sm:$0xff] %v645
  %710 = vst [vmem:[%s6 + $0x98] sm:$0xff] %v646
  %711 = vst [vmem:[%s6 + $0xa0] sm:$0xff] %v647
  %712 = vst [vmem:[%s6 + $0xa8] sm:$0xff] %v648
  %713 = vst [vmem:[%s6 + $0xb0] sm:$0xff] %v649
  %714 = vst [vmem:[%s6 + $0xb8] sm:$0xff] %v650
  %715 = vst [vmem:[%s6 + $0xc0] sm:$0xff] %v651
  %716 = vst [vmem:[%s6 + $0xc8] sm:$0xff] %v652
  %717 = vst [vmem:[%s6 + $0xd0] sm:$0xff] %v653
  %718 = vst [vmem:[%s6 + $0xd8] sm:$0xff] %v654
  %719 = vst [vmem:[%s6 + $0xe0] sm:$0xff] %v655
  %720 = vst [vmem:[%s6 + $0xe8] sm:$0xff] %v656
  %721 = vst [vmem:[%s6 + $0xf0] sm:$0xff] %v657
  %722 = vst [vmem:[%s6 + $0xf8] sm:$0xff] %v658
  %723 = vst [vmem:[%s6 + $0x100] sm:$0xff] %v659
  %724 = vst [vmem:[%s6 + $0x108] sm:$0xff] %v660
  %725 = vst [vmem:[%s6 + $0x110] sm:$0xff] %v661
  %726 = vst [vmem:[%s6 + $0x118] sm:$0xff] %v662
  %727 = vst [vmem:[%s6 + $0x120] sm:$0xff] %v663
  %728 = vst [vmem:[%s6 + $0x128] sm:$0xff] %v664
  %729 = vst [vmem:[%s6 + $0x130] sm:$0xff] %v665
  %730 = vst [vmem:[%s6 + $0x138] sm:$0xff] %v666
  %731 = vst [vmem:[%s6 + $0x140] sm:$0xff] %v667
  %732 = vst [vmem:[%s6 + $0x148] sm:$0xff] %v668
  %733 = vst [vmem:[%s6 + $0x150] sm:$0xff] %v669
  %734 = vst [vmem:[%s6 + $0x158] sm:$0xff] %v670
  %735 = vst [vmem:[%s6 + $0x160] sm:$0xff] %v671
  %736 = vst [vmem:[%s6 + $0x168] sm:$0xff] %v672
  %737 = vst [vmem:[%s6 + $0x170] sm:$0xff] %v673
  %738 = vst [vmem:[%s6 + $0x178] sm:$0xff] %v674
  %739 = vst [vmem:[%s6 + $0x180] sm:$0xff] %v675
  %740 = vst [vmem:[%s6 + $0x188] sm:$0xff] %v676
  %741 = vst [vmem:[%s6 + $0x190] sm:$0xff] %v677
  %742 = vst [vmem:[%s6 + $0x198] sm:$0xff] %v678
  %743 = vst [vmem:[%s6 + $0x1a0] sm:$0xff] %v679
  %744 = vst [vmem:[%s6 + $0x1a8] sm:$0xff] %v680
  %745 = vst [vmem:[%s6 + $0x1b0] sm:$0xff] %v681
  %746 = vst [vmem:[%s6 + $0x1b8] sm:$0xff] %v682
  %747 = vst [vmem:[%s6 + $0x1c0] sm:$0xff] %v683
  %748 = vst [vmem:[%s6 + $0x1c8] sm:$0xff] %v684
  %749 = vst [vmem:[%s6 + $0x1d0] sm:$0xff] %v685
  %750 = vst [vmem:[%s6 + $0x1d8] sm:$0xff] %v686
  %751 = vst [vmem:[%s6 + $0x1e0] sm:$0xff] %v687
  %752 = vst [vmem:[%s6 + $0x1e8] sm:$0xff] %v688
  %753 = vst [vmem:[%s6 + $0x1f0] sm:$0xff] %v689
  %754 = vst [vmem:[%s6 + $0x1f8] sm:$0xff] %v690
  // Predicated region
  $region26: #{bottleneck_forward.9} parent=0 // pred_check
    _
  $region27: #{bottleneck_forward.9} parent=0 // pred_check_branch
    %756 = sbr.rel (0) target = $region29
  $region28: #{bottleneck_forward.9} parent=0 // pred_region
    _
  $region29: #{bottleneck_forward.9} parent=0 // pred_fallthru
    _
  // Predicated region
  $region30: #{bottleneck_forward.9} parent=0 // pred_check
    _
  $region31: #{bottleneck_forward.9} parent=0 // pred_check_branch
    %758 = sbr.rel (0) target = $region33
  $region32: #{bottleneck_forward.9} parent=0 // pred_region
    _
  $region33: #{bottleneck_forward.9} parent=0 // pred_fallthru
    _

// kernel: bottleneck_forward.6
$region0: #{bottleneck_forward.6}
  #allocation0 [shape = 'u32[]', space=smem, size = 0x4, offset = 0x4, fixed_abs, tag = 'smem constant byte address 0x4 - core index']
  #allocation1 [shape = 'u32[144,128]{1,0:T(1,128)}', space=vmem, size = 0x12000, scoped, tag = 'internal scratch']
  #allocation2 [shape = 'bf16[18,18,128]{2,1,0:T(8,128)(2,1)}', space=vmem, size = 0x1b000, scoped, tag = 'scratch operand']
  %s0 = inlined_call_operand.vmem [shape: bf16[2,16,16,128], index: 0, kind: input, shape index: {}]
  %s1 = inlined_call_operand.vmem [shape: f32[1,128], index: 1, kind: input, shape index: {}]
  %s2 = inlined_call_operand.vmem [shape: f32[1,128], index: 2, kind: input, shape index: {}]
  %s3 = inlined_call_operand.vmem [shape: bf16[3,384,128], index: 3, kind: input, shape index: {}]
  %s4 = inlined_call_operand.vmem [shape: bf16[2,16,16,128], index: 4, kind: output, shape index: {0}]
  %s5 = inlined_call_operand.vmem [shape: f32[2,1,2,128], index: 5, kind: output, shape index: {1}]
  %6 = xla_tuple %s4, %s5
  %s7 = sld [smem:[#allocation0]]
  $region61: #{bottleneck_forward.6} parent=0
    _
  %s9 = ssub.s32 1, %s7
  %s10 = scalar_select 0, %s9, %s7
  loop: start=0, step=1, limit=4
  $region2: #{bottleneck_forward.6} parent=0 // loop_pre_header
    _
  $region3: #{bottleneck_forward.6} parent=0 // loop_header
    %s12 = sphi 0, %s16
    %p13 = scmp.ge.s32.totalorder %s12, 4
    %s19 = sphi 0, %s31
    %s20 = sphi 0, %s27
    %s21 = sphi 0, %s19
    %s22 = sphi 0, %s20
    %s23 = sphi 0, %s21
    %s24 = sphi 0, %s22
    %s34 = sphi 0, %s36
    %s37 = sphi 0, %s34
    %s38 = sphi 0, %s37
    %s54 = sphi 0, %s38
    %s58 = sphi 0, %s58
    %s60 = sphi 0, %s58
    %s61 = sphi 0, %s60
    %s75 = sphi 0, %s61
    %s79 = sphi 0, %s79
    %s81 = sphi 0, %s79
    %s82 = sphi 0, %s81
    %s96 = sphi 0, %s82
    %s100 = sphi 0, %s100
    %s102 = sphi 0, %s100
    %s103 = sphi 0, %s102
    %s117 = sphi 0, %s103
    %s125 = sphi 0, %s127
    %s128 = sphi 0, %s125
    %s129 = sphi 0, %s128
    %s145 = sphi 0, %s129
    %s153 = sphi 0, %s155
    %s156 = sphi 0, %s153
    %s157 = sphi 0, %s156
    %s173 = sphi 0, %s157
  $region4: #{bottleneck_forward.6} parent=0 // loop_header_branch
    %15 = sbr.rel (%p13) target = $region8
  $region5: #{bottleneck_forward.6} parent=0 // loop_body
    %s17 = ssub.s32 %s12, 1
    %s18 = ssub.s32 %s12, 2
    %s25 = sadd.s32 1, %s20
    %p26 = scmp.ge.s32.totalorder %s25, 1
    %s27 = scalar_select %p26, 0, %s25
    %s28 = sadd.s32 1, %s19
    %s29 = scalar_select %p26, %s28, %s19
    %p30 = scmp.ge.s32.totalorder %s29, 2
    %s31 = scalar_select %p30, 0, %s29
    %s32 = ssub.s32 %s19, %s31
    %p33 = scmp.eq.s32.totalorder %s32, 0
    %s35 = sadd.s32 %s34, 1
    %s36 = scalar_select %p33, %s34, %s35
    %p39 = pneg %p33
    %p40 = scmp.eq.s32.totalorder %s12, 1
    %p41 = por %p39, %p40
    %p42 = scmp.ne.s32.totalorder %s34, %s37
    %p43 = scmp.eq.s32.totalorder %s12, 0
    %p44 = por %p42, %p43
    %p45 = scmp.ne.s32.totalorder %s34, %s37
    %p46 = scmp.eq.s32.totalorder %s17, 1
    %p47 = por %p45, %p46
    %p48 = scmp.ne.s32.totalorder %s37, %s38
    %p49 = scmp.eq.s32.totalorder %s17, 0
    %p50 = por %p48, %p49
    %p51 = scmp.ne.s32.totalorder %s37, %s38
    %p52 = scmp.eq.s32.totalorder %s18, 1
    %p53 = por %p51, %p52
    %p55 = scmp.ne.s32.totalorder %s38, %s54
    %p56 = scmp.eq.s32.totalorder %s18, 0
    %p57 = por %p55, %p56
    %s59 = sadd.s32 %s58, 1
    %p62 = scmp.eq.s32.totalorder %s12, 1
    %p63 = scmp.ne.s32.totalorder %s58, %s60
    %p64 = scmp.eq.s32.totalorder %s12, 0
    %p65 = por %p63, %p64
    %p66 = scmp.ne.s32.totalorder %s58, %s60
    %p67 = scmp.eq.s32.totalorder %s17, 1
    %p68 = por %p66, %p67
    %p69 = scmp.ne.s32.totalorder %s60, %s61
    %p70 = scmp.eq.s32.totalorder %s17, 0
    %p71 = por %p69, %p70
    %p72 = scmp.ne.s32.totalorder %s60, %s61
    %p73 = scmp.eq.s32.totalorder %s18, 1
    %p74 = por %p72, %p73
    %p76 = scmp.ne.s32.totalorder %s61, %s75
    %p77 = scmp.eq.s32.totalorder %s18, 0
    %p78 = por %p76, %p77
    %s80 = sadd.s32 %s79, 1
    %p83 = scmp.eq.s32.totalorder %s12, 1
    %p84 = scmp.ne.s32.totalorder %s79, %s81
    %p85 = scmp.eq.s32.totalorder %s12, 0
    %p86 = por %p84, %p85
    %p87 = scmp.ne.s32.totalorder %s79, %s81
    %p88 = scmp.eq.s32.totalorder %s17, 1
    %p89 = por %p87, %p88
    %p90 = scmp.ne.s32.totalorder %s81, %s82
    %p91 = scmp.eq.s32.totalorder %s17, 0
    %p92 = por %p90, %p91
    %p93 = scmp.ne.s32.totalorder %s81, %s82
    %p94 = scmp.eq.s32.totalorder %s18, 1
    %p95 = por %p93, %p94
    %p97 = scmp.ne.s32.totalorder %s82, %s96
    %p98 = scmp.eq.s32.totalorder %s18, 0
    %p99 = por %p97, %p98
    %s101 = sadd.s32 %s100, 1
    %p104 = scmp.eq.s32.totalorder %s12, 1
    %p105 = scmp.ne.s32.totalorder %s100, %s102
    %p106 = scmp.eq.s32.totalorder %s12, 0
    %p107 = por %p105, %p106
    %p108 = scmp.ne.s32.totalorder %s100, %s102
    %p109 = scmp.eq.s32.totalorder %s17, 1
    %p110 = por %p108, %p109
    %p111 = scmp.ne.s32.totalorder %s102, %s103
    %p112 = scmp.eq.s32.totalorder %s17, 0
    %p113 = por %p111, %p112
    %p114 = scmp.ne.s32.totalorder %s102, %s103
    %p115 = scmp.eq.s32.totalorder %s18, 1
    %p116 = por %p114, %p115
    %p118 = scmp.ne.s32.totalorder %s103, %s117
    %p119 = scmp.eq.s32.totalorder %s18, 0
    %p120 = por %p118, %p119
    %s121 = ssub.s32 %s19, %s31
    %s122 = ssub.s32 %s20, %s27
    %s123 = sor.u32 %s121, %s122
    %p124 = scmp.eq.s32.totalorder %s123, 0
    %s126 = sadd.s32 %s125, 1
    %s127 = scalar_select %p124, %s125, %s126
    %p130 = pneg %p124
    %p131 = scmp.eq.s32.totalorder %s12, 1
    %p132 = por %p130, %p131
    %p133 = scmp.ne.s32.totalorder %s125, %s128
    %p134 = scmp.eq.s32.totalorder %s12, 0
    %p135 = por %p133, %p134
    %p136 = scmp.ne.s32.totalorder %s125, %s128
    %p137 = scmp.eq.s32.totalorder %s17, 1
    %p138 = por %p136, %p137
    %p139 = scmp.ne.s32.totalorder %s128, %s129
    %p140 = scmp.eq.s32.totalorder %s17, 0
    %p141 = por %p139, %p140
    %p142 = scmp.ne.s32.totalorder %s128, %s129
    %p143 = scmp.eq.s32.totalorder %s18, 1
    %p144 = por %p142, %p143
    %p146 = scmp.ne.s32.totalorder %s129, %s145
    %p147 = scmp.eq.s32.totalorder %s18, 0
    %p148 = por %p146, %p147
    %s149 = ssub.s32 %s19, %s31
    %s150 = ssub.s32 %s20, %s27
    %s151 = sor.u32 %s149, %s150
    %p152 = scmp.eq.s32.totalorder %s151, 0
    %s154 = sadd.s32 %s153, 1
    %s155 = scalar_select %p152, %s153, %s154
    %p158 = pneg %p152
    %p159 = scmp.eq.s32.totalorder %s12, 1
    %p160 = por %p158, %p159
    %p161 = scmp.ne.s32.totalorder %s153, %s156
    %p162 = scmp.eq.s32.totalorder %s12, 0
    %p163 = por %p161, %p162
    %p164 = scmp.ne.s32.totalorder %s153, %s156
    %p165 = scmp.eq.s32.totalorder %s17, 1
    %p166 = por %p164, %p165
    %p167 = scmp.ne.s32.totalorder %s156, %s157
    %p168 = scmp.eq.s32.totalorder %s17, 0
    %p169 = por %p167, %p168
    %p170 = scmp.ne.s32.totalorder %s156, %s157
    %p171 = scmp.eq.s32.totalorder %s18, 1
    %p172 = por %p170, %p171
    %p174 = scmp.ne.s32.totalorder %s157, %s173
    %p175 = scmp.eq.s32.totalorder %s18, 0
    %p176 = por %p174, %p175
    %p177 = scmp.le.s32.totalorder 1, %s12
    %p178 = scmp.lt.s32.totalorder %s12, 3
    %p179 = pnand %p177, %p178
    %p180 = pneg %p179
    // Predicated region
    $region9: #{bottleneck_forward.6} parent=5 // pred_check
      _
    $region10: #{bottleneck_forward.6} parent=5 // pred_check_branch
      %182 = sbr.rel (%p179) target = $region12
    $region11: #{bottleneck_forward.6} parent=5 // pred_region
      %s183 = ssub.s32 %s12, 1
      // Predicated region
      $region13: #{bottleneck_forward.6} parent=11 // pred_check
        %p184 = pneg %p71
      $region14: #{bottleneck_forward.6} parent=11 // pred_check_branch
        %186 = sbr.rel (%p184) target = $region16
      $region15: #{bottleneck_forward.6} parent=11 // pred_region
        _
      $region16: #{bottleneck_forward.6} parent=11 // pred_fallthru
        _
      // Predicated region
      $region17: #{bottleneck_forward.6} parent=11 // pred_check
        %p187 = pneg %p92
      $region18: #{bottleneck_forward.6} parent=11 // pred_check_branch
        %189 = sbr.rel (%p187) target = $region20
      $region19: #{bottleneck_forward.6} parent=11 // pred_region
        _
      $region20: #{bottleneck_forward.6} parent=11 // pred_fallthru
        _
      // Predicated region
      $region21: #{bottleneck_forward.6} parent=11 // pred_check
        %p190 = pneg %p113
      $region22: #{bottleneck_forward.6} parent=11 // pred_check_branch
        %192 = sbr.rel (%p190) target = $region24
      $region23: #{bottleneck_forward.6} parent=11 // pred_region
        _
      $region24: #{bottleneck_forward.6} parent=11 // pred_fallthru
        _
    $region12: #{bottleneck_forward.6} parent=5 // pred_fallthru
      _
    %p193 = scmp.lt.s32.totalorder %s12, 2
    // Predicated region
    $region25: #{bottleneck_forward.6} parent=5 // pred_check
      %p194 = pneg %p193
    $region26: #{bottleneck_forward.6} parent=5 // pred_check_branch
      %196 = sbr.rel (%p194) target = $region28
    $region27: #{bottleneck_forward.6} parent=5 // pred_region
      // Predicated region
      $region29: #{bottleneck_forward.6} parent=27 // pred_check
        %p197 = pneg %p44
      $region30: #{bottleneck_forward.6} parent=27 // pred_check_branch
        %199 = sbr.rel (%p197) target = $region32
      $region31: #{bottleneck_forward.6} parent=27 // pred_region
        %p200 = scmp.lt.s32.totalorder %s19, 1
        %s201 = scalar_select %p200, %s19, 1
        %s202 = smul.addr %s201, 32
        %s203 = smul.addr %s202, 4
        %s204 = scalar_lea.vmem %s0, %s203
      $region32: #{bottleneck_forward.6} parent=27 // pred_fallthru
        _
    $region28: #{bottleneck_forward.6} parent=5 // pred_fallthru
      _
    %p205 = scmp.le.s32.totalorder 1, %s12
    %p206 = scmp.lt.s32.totalorder %s12, 3
    %p207 = pnand %p205, %p206
    %p208 = pneg %p207
    // Predicated region
    $region33: #{bottleneck_forward.6} parent=5 // pred_check
      _
    $region34: #{bottleneck_forward.6} parent=5 // pred_check_branch
      %210 = sbr.rel (%p207) target = $region36
    $region35: #{bottleneck_forward.6} parent=5 // pred_region
      %s211 = ssub.s32 %s12, 1
      %p212 = scmp.lt.s32.totalorder %s21, 1
      %s213 = scalar_select %p212, %s21, 1
      %s214 = smul.addr %s213, 32
      %s215 = smul.addr %s214, 4
      %s216 = scalar_lea.vmem %s0, %s215
      %p217 = pneg %p50
      %p218 = pneg %p47
      %p219 = pneg %p71
      %p220 = pneg %p68
      %p221 = pneg %p92
      %p222 = pneg %p89
      %p223 = pneg %p113
      %p224 = pneg %p110
      %p225 = pneg %p141
      %p226 = pneg %p138
      %s227 = smul.u32 16, %s22
      %p228 = scmp.lt.s32.totalorder %s21, 1
      %s229 = scalar_select %p228, %s21, 1
      %p230 = scmp.lt.s32.totalorder %s227, 15
      %s231 = scalar_select %p230, %s227, 15
      %s232 = smul.addr %s231, 2
      %s233 = smul.addr %s229, 32
      %s234 = sadd.s32 %s232, %s233
      %s235 = smul.addr %s234, 4
      %s236 = scalar_lea.vmem %s4, %s235
      %p237 = pneg %p169
      %p238 = pneg %p166
      %p239 = scmp.lt.s32.totalorder %s21, 1
      %s240 = scalar_select %p239, %s21, 1
      %p241 = scmp.lt.s32.totalorder %s22, 0
      %s242 = scalar_select %p241, %s22, 0
      %s243 = sadd.s32 %s242, %s240
      %s244 = smul.addr %s243, 2
      %s245 = scalar_lea.vmem %s5, %s244
      %p246 = scmp.lt.s32.totalorder %s21, 1
      %s247 = scalar_select %p246, %s21, 1
      %s248 = smul.addr %s247, 32
      %s249 = smul.addr %s248, 4
      %s250 = scalar_lea.vmem %s0, %s249
      %s251 = smul.u32 16, %s22
      %p252 = scmp.lt.s32.totalorder %s21, 1
      %s253 = scalar_select %p252, %s21, 1
      %p254 = scmp.lt.s32.totalorder %s251, 15
      %s255 = scalar_select %p254, %s251, 15
      %s256 = smul.addr %s255, 2
      %s257 = smul.addr %s253, 32
      %s258 = sadd.s32 %s256, %s257
      %s259 = smul.addr %s258, 4
      %s260 = scalar_lea.vmem %s4, %s259
      %s261 = smul.u32 16, %s22
      %p262 = scmp.lt.s32.totalorder %s21, 1
      %s263 = scalar_select %p262, %s21, 1
      %p264 = scmp.lt.s32.totalorder %s22, 0
      %s265 = scalar_select %p264, %s22, 0
      %s266 = sadd.s32 %s265, %s263
      %s267 = smul.addr %s266, 2
      %s268 = scalar_lea.vmem %s5, %s267
      %p270 = scmp.eq.s32.totalorder %s22, 0
      // Predicated region
      $region37: #{bottleneck_forward.6} parent=35 // pred_check
        %p271 = pneg %p270
      $region38: #{bottleneck_forward.6} parent=35 // pred_check_branch
        %273 = sbr.rel (%p271) target = $region40
      $region39: #{bottleneck_forward.6} parent=35 // pred_region
        %274 = vst [vmem:[#allocation2] sm:$0xf] 0
        %275 = vst [vmem:[#allocation2 + $0x4] sm:$0xf] 0
        %276 = vst [vmem:[#allocation2 + $0x8] sm:$0x1] 0
        %277 = vst [vmem:[#allocation2 + $0xc] sm:$0xf] 0
        %278 = vst [vmem:[#allocation2 + $0x10] sm:$0xf] 0
        %279 = vst [vmem:[#allocation2 + $0x14] sm:$0x1] 0
        %280 = vst [vmem:[#allocation2 + $0x18] sm:$0xf] 0
        %281 = vst [vmem:[#allocation2 + $0x1c] sm:$0xf] 0
        %282 = vst [vmem:[#allocation2 + $0x20] sm:$0x1] 0
        %283 = vst [vmem:[#allocation2 + $0x24] sm:$0xf] 0
        %284 = vst [vmem:[#allocation2 + $0x28] sm:$0xf] 0
        %285 = vst [vmem:[#allocation2 + $0x2c] sm:$0x1] 0
        %286 = vst [vmem:[#allocation2 + $0x30] sm:$0xf] 0
        %287 = vst [vmem:[#allocation2 + $0x34] sm:$0xf] 0
        %288 = vst [vmem:[#allocation2 + $0x38] sm:$0x1] 0
        %289 = vst [vmem:[#allocation2 + $0x3c] sm:$0xf] 0
        %290 = vst [vmem:[#allocation2 + $0x40] sm:$0xf] 0
        %291 = vst [vmem:[#allocation2 + $0x44] sm:$0x1] 0
        %292 = vst [vmem:[#allocation2 + $0x48] sm:$0xf] 0
        %293 = vst [vmem:[#allocation2 + $0x4c] sm:$0xf] 0
        %294 = vst [vmem:[#allocation2 + $0x50] sm:$0x1] 0
        %295 = vst [vmem:[#allocation2 + $0x54] sm:$0xf] 0
        %296 = vst [vmem:[#allocation2 + $0x58] sm:$0xf] 0
        %297 = vst [vmem:[#allocation2 + $0x5c] sm:$0x1] 0
        %298 = vst [vmem:[#allocation2 + $0x60] sm:$0xf] 0
        %299 = vst [vmem:[#allocation2 + $0x64] sm:$0xf] 0
        %300 = vst [vmem:[#allocation2 + $0x68] sm:$0x1] 0
        %301 = vst [vmem:[#allocation2 + $0x6c] sm:$0xf] 0
        %302 = vst [vmem:[#allocation2 + $0x70] sm:$0xf] 0
        %303 = vst [vmem:[#allocation2 + $0x74] sm:$0x1] 0
        %304 = vst [vmem:[#allocation2 + $0x78] sm:$0xf] 0
        %305 = vst [vmem:[#allocation2 + $0x7c] sm:$0xf] 0
        %306 = vst [vmem:[#allocation2 + $0x80] sm:$0x1] 0
        %307 = vst [vmem:[#allocation2 + $0x84] sm:$0xf] 0
        %308 = vst [vmem:[#allocation2 + $0x88] sm:$0xf] 0
        %309 = vst [vmem:[#allocation2 + $0x8c] sm:$0x1] 0
        %310 = vst [vmem:[#allocation2 + $0x90] sm:$0xf] 0
        %311 = vst [vmem:[#allocation2 + $0x94] sm:$0xf] 0
        %312 = vst [vmem:[#allocation2 + $0x98] sm:$0x1] 0
        %313 = vst [vmem:[#allocation2 + $0x9c] sm:$0xf] 0
        %314 = vst [vmem:[#allocation2 + $0xa0] sm:$0xf] 0
        %315 = vst [vmem:[#allocation2 + $0xa4] sm:$0x1] 0
        %316 = vst [vmem:[#allocation2 + $0xa8] sm:$0xf] 0
        %317 = vst [vmem:[#allocation2 + $0xac] sm:$0xf] 0
        %318 = vst [vmem:[#allocation2 + $0xb0] sm:$0x1] 0
        %319 = vst [vmem:[#allocation2 + $0xb4] sm:$0xf] 0
        %320 = vst [vmem:[#allocation2 + $0xb8] sm:$0xf] 0
        %321 = vst [vmem:[#allocation2 + $0xbc] sm:$0x1] 0
        %322 = vst [vmem:[#allocation2 + $0xc0] sm:$0xf] 0
        %323 = vst [vmem:[#allocation2 + $0xc4] sm:$0xf] 0
        %324 = vst [vmem:[#allocation2 + $0xc8] sm:$0x1] 0
        %325 = vst [vmem:[#allocation2 + $0xcc] sm:$0xf] 0
        %326 = vst [vmem:[#allocation2 + $0xd0] sm:$0xf] 0
        %327 = vst [vmem:[#allocation2 + $0xd4] sm:$0x1] 0
        %v328 = vld [vmem:[%s250] sm:$0xf]
        %v329 = vld [vmem:[%s250 + $0x4] sm:$0xf]
        %v330 = vld [vmem:[%s250 + $0x8] sm:$0xf]
        %v331 = vld [vmem:[%s250 + $0xc] sm:$0xf]
        %v332 = vld [vmem:[%s250 + $0x10] sm:$0xf]
        %v333 = vld [vmem:[%s250 + $0x14] sm:$0xf]
        %v334 = vld [vmem:[%s250 + $0x18] sm:$0xf]
        %v335 = vld [vmem:[%s250 + $0x1c] sm:$0xf]
        %v336 = vld [vmem:[%s250 + $0x20] sm:$0xf]
        %v337 = vld [vmem:[%s250 + $0x24] sm:$0xf]
        %v338 = vld [vmem:[%s250 + $0x28] sm:$0xf]
        %v339 = vld [vmem:[%s250 + $0x2c] sm:$0xf]
        %v340 = vld [vmem:[%s250 + $0x30] sm:$0xf]
        %v341 = vld [vmem:[%s250 + $0x34] sm:$0xf]
        %v342 = vld [vmem:[%s250 + $0x38] sm:$0xf]
        %v343 = vld [vmem:[%s250 + $0x3c] sm:$0xf]
        %v344 = vld [vmem:[%s250 + $0x40] sm:$0xf]
        %v345 = vld [vmem:[%s250 + $0x44] sm:$0xf]
        %v346 = vld [vmem:[%s250 + $0x48] sm:$0xf]
        %v347 = vld [vmem:[%s250 + $0x4c] sm:$0xf]
        %v348 = vld [vmem:[%s250 + $0x50] sm:$0xf]
        %v349 = vld [vmem:[%s250 + $0x54] sm:$0xf]
        %v350 = vld [vmem:[%s250 + $0x58] sm:$0xf]
        %v351 = vld [vmem:[%s250 + $0x5c] sm:$0xf]
        %v352 = vld [vmem:[%s250 + $0x60] sm:$0xf]
        %v353 = vld [vmem:[%s250 + $0x64] sm:$0xf]
        %v354 = vld [vmem:[%s250 + $0x68] sm:$0xf]
        %v355 = vld [vmem:[%s250 + $0x6c] sm:$0xf]
        %v356 = vld [vmem:[%s250 + $0x70] sm:$0xf]
        %v357 = vld [vmem:[%s250 + $0x74] sm:$0xf]
        %v358 = vld [vmem:[%s250 + $0x78] sm:$0xf]
        %v359 = vld [vmem:[%s250 + $0x7c] sm:$0xf]
        %v360 = vunpack.c.l.bf16 %v328
        %v361 = vunpack.c.l.bf16 %v329
        %v362 = vunpack.c.l.bf16 %v330
        %v363 = vunpack.c.l.bf16 %v331
        %v364 = vunpack.c.l.bf16 %v332
        %v365 = vunpack.c.l.bf16 %v333
        %v366 = vunpack.c.l.bf16 %v334
        %v367 = vunpack.c.l.bf16 %v335
        %v368 = vunpack.c.l.bf16 %v336
        %v369 = vunpack.c.l.bf16 %v337
        %v370 = vunpack.c.l.bf16 %v338
        %v371 = vunpack.c.l.bf16 %v339
        %v372 = vunpack.c.l.bf16 %v340
        %v373 = vunpack.c.l.bf16 %v341
        %v374 = vunpack.c.l.bf16 %v342
        %v375 = vunpack.c.l.bf16 %v343
        %v376 = vunpack.c.l.bf16 %v344
        %v377 = vunpack.c.l.bf16 %v345
        %v378 = vunpack.c.l.bf16 %v346
        %v379 = vunpack.c.l.bf16 %v347
        %v380 = vunpack.c.l.bf16 %v348
        %v381 = vunpack.c.l.bf16 %v349
        %v382 = vunpack.c.l.bf16 %v350
        %v383 = vunpack.c.l.bf16 %v351
        %v384 = vunpack.c.l.bf16 %v352
        %v385 = vunpack.c.l.bf16 %v353
        %v386 = vunpack.c.l.bf16 %v354
        %v387 = vunpack.c.l.bf16 %v355
        %v388 = vunpack.c.l.bf16 %v356
        %v389 = vunpack.c.l.bf16 %v357
        %v390 = vunpack.c.l.bf16 %v358
        %v391 = vunpack.c.l.bf16 %v359
        %v392 = vld [vmem:[%s1] sm:$0x1]
        %v394 = vlaneseq
        %v395 = vshrl.u32 %v394, 7
        %v396 = vsub.s32 0, %v395
        %v397 = vrot.slane %v392, %v396
        %v399 = vmul.f32 %v360, %v397
        %v400 = vmul.f32 %v361, %v397
        %v401 = vmul.f32 %v362, %v397
        %v402 = vmul.f32 %v363, %v397
        %v403 = vmul.f32 %v364, %v397
        %v404 = vmul.f32 %v365, %v397
        %v405 = vmul.f32 %v366, %v397
        %v406 = vmul.f32 %v367, %v397
        %v407 = vmul.f32 %v368, %v397
        %v408 = vmul.f32 %v369, %v397
        %v409 = vmul.f32 %v370, %v397
        %v410 = vmul.f32 %v371, %v397
        %v411 = vmul.f32 %v372, %v397
        %v412 = vmul.f32 %v373, %v397
        %v413 = vmul.f32 %v374, %v397
        %v414 = vmul.f32 %v375, %v397
        %v415 = vmul.f32 %v376, %v397
        %v416 = vmul.f32 %v377, %v397
        %v417 = vmul.f32 %v378, %v397
        %v418 = vmul.f32 %v379, %v397
        %v419 = vmul.f32 %v380, %v397
        %v420 = vmul.f32 %v381, %v397
        %v421 = vmul.f32 %v382, %v397
        %v422 = vmul.f32 %v383, %v397
        %v423 = vmul.f32 %v384, %v397
        %v424 = vmul.f32 %v385, %v397
        %v425 = vmul.f32 %v386, %v397
        %v426 = vmul.f32 %v387, %v397
        %v427 = vmul.f32 %v388, %v397
        %v428 = vmul.f32 %v389, %v397
        %v429 = vmul.f32 %v390, %v397
        %v430 = vmul.f32 %v391, %v397
        %v431 = vld [vmem:[%s2] sm:$0x1]
        %v433 = vlaneseq
        %v434 = vshrl.u32 %v433, 7
        %v435 = vsub.s32 0, %v434
        %v436 = vrot.slane %v431, %v435
        %v438 = vadd.f32 %v399, %v436
        %v439 = vadd.f32 %v400, %v436
        %v440 = vadd.f32 %v401, %v436
        %v441 = vadd.f32 %v402, %v436
        %v442 = vadd.f32 %v403, %v436
        %v443 = vadd.f32 %v404, %v436
        %v444 = vadd.f32 %v405, %v436
        %v445 = vadd.f32 %v406, %v436
        %v446 = vadd.f32 %v407, %v436
        %v447 = vadd.f32 %v408, %v436
        %v448 = vadd.f32 %v409, %v436
        %v449 = vadd.f32 %v410, %v436
        %v450 = vadd.f32 %v411, %v436
        %v451 = vadd.f32 %v412, %v436
        %v452 = vadd.f32 %v413, %v436
        %v453 = vadd.f32 %v414, %v436
        %v454 = vadd.f32 %v415, %v436
        %v455 = vadd.f32 %v416, %v436
        %v456 = vadd.f32 %v417, %v436
        %v457 = vadd.f32 %v418, %v436
        %v458 = vadd.f32 %v419, %v436
        %v459 = vadd.f32 %v420, %v436
        %v460 = vadd.f32 %v421, %v436
        %v461 = vadd.f32 %v422, %v436
        %v462 = vadd.f32 %v423, %v436
        %v463 = vadd.f32 %v424, %v436
        %v464 = vadd.f32 %v425, %v436
        %v465 = vadd.f32 %v426, %v436
        %v466 = vadd.f32 %v427, %v436
        %v467 = vadd.f32 %v428, %v436
        %v468 = vadd.f32 %v429, %v436
        %v469 = vadd.f32 %v430, %v436
        %v470 = vmax.f32 %v438, 0.0
        %v471 = vmax.f32 %v439, 0.0
        %v472 = vmax.f32 %v440, 0.0
        %v473 = vmax.f32 %v441, 0.0
        %v474 = vmax.f32 %v442, 0.0
        %v475 = vmax.f32 %v443, 0.0
        %v476 = vmax.f32 %v444, 0.0
        %v477 = vmax.f32 %v445, 0.0
        %v478 = vmax.f32 %v446, 0.0
        %v479 = vmax.f32 %v447, 0.0
        %v480 = vmax.f32 %v448, 0.0
        %v481 = vmax.f32 %v449, 0.0
        %v482 = vmax.f32 %v450, 0.0
        %v483 = vmax.f32 %v451, 0.0
        %v484 = vmax.f32 %v452, 0.0
        %v485 = vmax.f32 %v453, 0.0
        %v486 = vmax.f32 %v454, 0.0
        %v487 = vmax.f32 %v455, 0.0
        %v488 = vmax.f32 %v456, 0.0
        %v489 = vmax.f32 %v457, 0.0
        %v490 = vmax.f32 %v458, 0.0
        %v491 = vmax.f32 %v459, 0.0
        %v492 = vmax.f32 %v460, 0.0
        %v493 = vmax.f32 %v461, 0.0
        %v494 = vmax.f32 %v462, 0.0
        %v495 = vmax.f32 %v463, 0.0
        %v496 = vmax.f32 %v464, 0.0
        %v497 = vmax.f32 %v465, 0.0
        %v498 = vmax.f32 %v466, 0.0
        %v499 = vmax.f32 %v467, 0.0
        %v500 = vmax.f32 %v468, 0.0
        %v501 = vmax.f32 %v469, 0.0
        %v502 = vpack.c.bf16 %v471, %v470
        %v503 = vpack.c.bf16 %v473, %v472
        %v504 = vpack.c.bf16 %v475, %v474
        %v505 = vpack.c.bf16 %v477, %v476
        %v506 = vpack.c.bf16 %v479, %v478
        %v507 = vpack.c.bf16 %v481, %v480
        %v508 = vpack.c.bf16 %v483, %v482
        %v509 = vpack.c.bf16 %v485, %v484
        %v510 = vpack.c.bf16 %v487, %v486
        %v511 = vpack.c.bf16 %v489, %v488
        %v512 = vpack.c.bf16 %v491, %v490
        %v513 = vpack.c.bf16 %v493, %v492
        %v514 = vpack.c.bf16 %v495, %v494
        %v515 = vpack.c.bf16 %v497, %v496
        %v516 = vpack.c.bf16 %v499, %v498
        %v517 = vpack.c.bf16 %v501, %v500
        %v534 = vunpack.c.l.b16 %v502
        %v535 = vunpack.c.h.b16 %v502
        %v536 = vunpack.c.l.b16 %v503
        %v537 = vunpack.c.h.b16 %v503
        %v538 = vunpack.c.l.b16 %v504
        %v539 = vunpack.c.h.b16 %v504
        %v540 = vunpack.c.l.b16 %v505
        %v541 = vunpack.c.h.b16 %v505
        %v542 = vunpack.c.l.b16 %v506
        %v543 = vunpack.c.h.b16 %v506
        %v544 = vunpack.c.l.b16 %v507
        %v545 = vunpack.c.h.b16 %v507
        %v546 = vunpack.c.l.b16 %v508
        %v547 = vunpack.c.h.b16 %v508
        %v548 = vunpack.c.l.b16 %v509
        %v549 = vunpack.c.h.b16 %v509
        %v550 = vunpack.c.l.b16 %v510
        %v551 = vunpack.c.h.b16 %v510
        %v552 = vunpack.c.l.b16 %v511
        %v553 = vunpack.c.h.b16 %v511
        %v554 = vunpack.c.l.b16 %v512
        %v555 = vunpack.c.h.b16 %v512
        %v556 = vunpack.c.l.b16 %v513
        %v557 = vunpack.c.h.b16 %v513
        %v558 = vunpack.c.l.b16 %v514
        %v559 = vunpack.c.h.b16 %v514
        %v560 = vunpack.c.l.b16 %v515
        %v561 = vunpack.c.h.b16 %v515
        %v562 = vunpack.c.l.b16 %v516
        %v563 = vunpack.c.h.b16 %v516
        %v564 = vunpack.c.l.b16 %v517
        %v565 = vunpack.c.h.b16 %v517
        %v566 = vpack.c.b16 %v534, %v534
        %v567 = vpack.c.b16 %v535, %v535
        %v568 = vpack.c.b16 %v536, %v536
        %v569 = vpack.c.b16 %v537, %v537
        %v570 = vpack.c.b16 %v538, %v538
        %v571 = vpack.c.b16 %v539, %v539
        %v572 = vpack.c.b16 %v540, %v540
        %v573 = vpack.c.b16 %v541, %v541
        %v574 = vpack.c.b16 %v542, %v542
        %v575 = vpack.c.b16 %v543, %v543
        %v576 = vpack.c.b16 %v544, %v544
        %v577 = vpack.c.b16 %v545, %v545
        %v578 = vpack.c.b16 %v546, %v546
        %v579 = vpack.c.b16 %v547, %v547
        %v580 = vpack.c.b16 %v548, %v548
        %v581 = vpack.c.b16 %v549, %v549
        %v582 = vpack.c.b16 %v550, %v550
        %v583 = vpack.c.b16 %v551, %v551
        %v584 = vpack.c.b16 %v552, %v552
        %v585 = vpack.c.b16 %v553, %v553
        %v586 = vpack.c.b16 %v554, %v554
        %v587 = vpack.c.b16 %v555, %v555
        %v588 = vpack.c.b16 %v556, %v556
        %v589 = vpack.c.b16 %v557, %v557
        %v590 = vpack.c.b16 %v558, %v558
        %v591 = vpack.c.b16 %v559, %v559
        %v592 = vpack.c.b16 %v560, %v560
        %v593 = vpack.c.b16 %v561, %v561
        %v594 = vpack.c.b16 %v562, %v562
        %v595 = vpack.c.b16 %v563, %v563
        %v596 = vpack.c.b16 %v564, %v564
        %v597 = vpack.c.b16 %v565, %v565
        %vm598 = vsmask.f32 256
        %vm599 = vsmask.f32 4368
        %vm600 = vmor %vm598, %vm599
        %v602 = vshrl.u32 %v566, 16
        %v604 = vrot.slane %v602, 7
        %v605 = vshll.u32 %v566, 16
        %v607 = vor.u32 %v604, %v605
        %v608 = vrot.slane %v604, 4
        %v610 = vshrl.u32 %v567, 16
        %v612 = vrot.slane %v610, 7
        %v613 = vshll.u32 %v567, 16
        %v615 = vor.u32 %v612, %v613
        %v616 = vsel %vm600, %v608, %v615
        %v617 = vrot.slane %v612, 4
        %v619 = vshrl.u32 %v568, 16
        %v621 = vrot.slane %v619, 7
        %v622 = vshll.u32 %v568, 16
        %v624 = vor.u32 %v621, %v622
        %v625 = vrot.slane %v621, 4
        %v627 = vshrl.u32 %v569, 16
        %v629 = vrot.slane %v627, 7
        %v630 = vshll.u32 %v569, 16
        %v632 = vor.u32 %v629, %v630
        %v633 = vsel %vm600, %v625, %v632
        %v634 = vrot.slane %v629, 4
        %v636 = vshrl.u32 %v570, 16
        %v638 = vrot.slane %v636, 7
        %v639 = vshll.u32 %v570, 16
        %v641 = vor.u32 %v638, %v639
        %v642 = vrot.slane %v638, 4
        %v644 = vshrl.u32 %v571, 16
        %v646 = vrot.slane %v644, 7
        %v647 = vshll.u32 %v571, 16
        %v649 = vor.u32 %v646, %v647
        %v650 = vsel %vm600, %v642, %v649
        %v651 = vrot.slane %v646, 4
        %v653 = vshrl.u32 %v572, 16
        %v655 = vrot.slane %v653, 7
        %v656 = vshll.u32 %v572, 16
        %v658 = vor.u32 %v655, %v656
        %v659 = vrot.slane %v655, 4
        %v661 = vshrl.u32 %v573, 16
        %v663 = vrot.slane %v661, 7
        %v664 = vshll.u32 %v573, 16
        %v666 = vor.u32 %v663, %v664
        %v667 = vsel %vm600, %v659, %v666
        %v668 = vrot.slane %v663, 4
        %v670 = vshrl.u32 %v574, 16
        %v672 = vrot.slane %v670, 7
        %v673 = vshll.u32 %v574, 16
        %v675 = vor.u32 %v672, %v673
        %v676 = vrot.slane %v672, 4
        %v678 = vshrl.u32 %v575, 16
        %v680 = vrot.slane %v678, 7
        %v681 = vshll.u32 %v575, 16
        %v683 = vor.u32 %v680, %v681
        %v684 = vsel %vm600, %v676, %v683
        %v685 = vrot.slane %v680, 4
        %v687 = vshrl.u32 %v576, 16
        %v689 = vrot.slane %v687, 7
        %v690 = vshll.u32 %v576, 16
        %v692 = vor.u32 %v689, %v690
        %v693 = vrot.slane %v689, 4
        %v695 = vshrl.u32 %v577, 16
        %v697 = vrot.slane %v695, 7
        %v698 = vshll.u32 %v577, 16
        %v700 = vor.u32 %v697, %v698
        %v701 = vsel %vm600, %v693, %v700
        %v702 = vrot.slane %v697, 4
        %v704 = vshrl.u32 %v578, 16
        %v706 = vrot.slane %v704, 7
        %v707 = vshll.u32 %v578, 16
        %v709 = vor.u32 %v706, %v707
        %v710 = vrot.slane %v706, 4
        %v712 = vshrl.u32 %v579, 16
        %v714 = vrot.slane %v712, 7
        %v715 = vshll.u32 %v579, 16
        %v717 = vor.u32 %v714, %v715
        %v718 = vsel %vm600, %v710, %v717
        %v719 = vrot.slane %v714, 4
        %v721 = vshrl.u32 %v580, 16
        %v723 = vrot.slane %v721, 7
        %v724 = vshll.u32 %v580, 16
        %v726 = vor.u32 %v723, %v724
        %v727 = vrot.slane %v723, 4
        %v729 = vshrl.u32 %v581, 16
        %v731 = vrot.slane %v729, 7
        %v732 = vshll.u32 %v581, 16
        %v734 = vor.u32 %v731, %v732
        %v735 = vsel %vm600, %v727, %v734
        %v736 = vrot.slane %v731, 4
        %v738 = vshrl.u32 %v582, 16
        %v740 = vrot.slane %v738, 7
        %v741 = vshll.u32 %v582, 16
        %v743 = vor.u32 %v740, %v741
        %v744 = vrot.slane %v740, 4
        %v746 = vshrl.u32 %v583, 16
        %v748 = vrot.slane %v746, 7
        %v749 = vshll.u32 %v583, 16
        %v751 = vor.u32 %v748, %v749
        %v752 = vsel %vm600, %v744, %v751
        %v753 = vrot.slane %v748, 4
        %v755 = vshrl.u32 %v584, 16
        %v757 = vrot.slane %v755, 7
        %v758 = vshll.u32 %v584, 16
        %v760 = vor.u32 %v757, %v758
        %v761 = vrot.slane %v757, 4
        %v763 = vshrl.u32 %v585, 16
        %v765 = vrot.slane %v763, 7
        %v766 = vshll.u32 %v585, 16
        %v768 = vor.u32 %v765, %v766
        %v769 = vsel %vm600, %v761, %v768
        %v770 = vrot.slane %v765, 4
        %v772 = vshrl.u32 %v586, 16
        %v774 = vrot.slane %v772, 7
        %v775 = vshll.u32 %v586, 16
        %v777 = vor.u32 %v774, %v775
        %v778 = vrot.slane %v774, 4
        %v780 = vshrl.u32 %v587, 16
        %v782 = vrot.slane %v780, 7
        %v783 = vshll.u32 %v587, 16
        %v785 = vor.u32 %v782, %v783
        %v786 = vsel %vm600, %v778, %v785
        %v787 = vrot.slane %v782, 4
        %v789 = vshrl.u32 %v588, 16
        %v791 = vrot.slane %v789, 7
        %v792 = vshll.u32 %v588, 16
        %v794 = vor.u32 %v791, %v792
        %v795 = vrot.slane %v791, 4
        %v797 = vshrl.u32 %v589, 16
        %v799 = vrot.slane %v797, 7
        %v800 = vshll.u32 %v589, 16
        %v802 = vor.u32 %v799, %v800
        %v803 = vsel %vm600, %v795, %v802
        %v804 = vrot.slane %v799, 4
        %v806 = vshrl.u32 %v590, 16
        %v808 = vrot.slane %v806, 7
        %v809 = vshll.u32 %v590, 16
        %v811 = vor.u32 %v808, %v809
        %v812 = vrot.slane %v808, 4
        %v814 = vshrl.u32 %v591, 16
        %v816 = vrot.slane %v814, 7
        %v817 = vshll.u32 %v591, 16
        %v819 = vor.u32 %v816, %v817
        %v820 = vsel %vm600, %v812, %v819
        %v821 = vrot.slane %v816, 4
        %v823 = vshrl.u32 %v592, 16
        %v825 = vrot.slane %v823, 7
        %v826 = vshll.u32 %v592, 16
        %v828 = vor.u32 %v825, %v826
        %v829 = vrot.slane %v825, 4
        %v831 = vshrl.u32 %v593, 16
        %v833 = vrot.slane %v831, 7
        %v834 = vshll.u32 %v593, 16
        %v836 = vor.u32 %v833, %v834
        %v837 = vsel %vm600, %v829, %v836
        %v838 = vrot.slane %v833, 4
        %v840 = vshrl.u32 %v594, 16
        %v842 = vrot.slane %v840, 7
        %v843 = vshll.u32 %v594, 16
        %v845 = vor.u32 %v842, %v843
        %v846 = vrot.slane %v842, 4
        %v848 = vshrl.u32 %v595, 16
        %v850 = vrot.slane %v848, 7
        %v851 = vshll.u32 %v595, 16
        %v853 = vor.u32 %v850, %v851
        %v854 = vsel %vm600, %v846, %v853
        %v855 = vrot.slane %v850, 4
        %v857 = vshrl.u32 %v596, 16
        %v859 = vrot.slane %v857, 7
        %v860 = vshll.u32 %v596, 16
        %v862 = vor.u32 %v859, %v860
        %v863 = vrot.slane %v859, 4
        %v865 = vshrl.u32 %v597, 16
        %v867 = vrot.slane %v865, 7
        %v868 = vshll.u32 %v597, 16
        %v870 = vor.u32 %v867, %v868
        %v871 = vsel %vm600, %v863, %v870
        %v872 = vrot.slane %v867, 4
        %s921 = scalar_lea.vmem [#allocation2], 12
        %vm922 = vcmask 1043456
        %vm923 = vsmask.f32 7938
        %vm924 = vmand %vm922, %vm923
        %v925 = vld [vmem:[%s921] sm:$0xf]
        %v926 = vsel %vm924, %v607, %v925
        %927 = vst [vmem:[%s921] sm:$0xf] %v926
        %928 = vst [vmem:[%s921 + $0x4] sm:$0xf] %v616
        %vm929 = vcmask 1040384
        %vm930 = vmand %vm929, %vm598
        %v931 = vld [vmem:[%s921 + $0x8] sm:$0x1]
        %v932 = vsel %vm930, %v617, %v931
        %933 = vst [vmem:[%s921 + $0x8] sm:$0x1] %v932
        %v934 = vld [vmem:[%s921 + $0xc] sm:$0xf]
        %v935 = vsel %vm924, %v624, %v934
        %936 = vst [vmem:[%s921 + $0xc] sm:$0xf] %v935
        %937 = vst [vmem:[%s921 + $0x10] sm:$0xf] %v633
        %v938 = vld [vmem:[%s921 + $0x14] sm:$0x1]
        %v939 = vsel %vm930, %v634, %v938
        %940 = vst [vmem:[%s921 + $0x14] sm:$0x1] %v939
        %v941 = vld [vmem:[%s921 + $0x18] sm:$0xf]
        %v942 = vsel %vm924, %v641, %v941
        %943 = vst [vmem:[%s921 + $0x18] sm:$0xf] %v942
        %944 = vst [vmem:[%s921 + $0x1c] sm:$0xf] %v650
        %v945 = vld [vmem:[%s921 + $0x20] sm:$0x1]
        %v946 = vsel %vm930, %v651, %v945
        %947 = vst [vmem:[%s921 + $0x20] sm:$0x1] %v946
        %v948 = vld [vmem:[%s921 + $0x24] sm:$0xf]
        %v949 = vsel %vm924, %v658, %v948
        %950 = vst [vmem:[%s921 + $0x24] sm:$0xf] %v949
        %951 = vst [vmem:[%s921 + $0x28] sm:$0xf] %v667
        %v952 = vld [vmem:[%s921 + $0x2c] sm:$0x1]
        %v953 = vsel %vm930, %v668, %v952
        %954 = vst [vmem:[%s921 + $0x2c] sm:$0x1] %v953
        %v955 = vld [vmem:[%s921 + $0x30] sm:$0xf]
        %v956 = vsel %vm924, %v675, %v955
        %957 = vst [vmem:[%s921 + $0x30] sm:$0xf] %v956
        %958 = vst [vmem:[%s921 + $0x34] sm:$0xf] %v684
        %v959 = vld [vmem:[%s921 + $0x38] sm:$0x1]
        %v960 = vsel %vm930, %v685, %v959
        %961 = vst [vmem:[%s921 + $0x38] sm:$0x1] %v960
        %v962 = vld [vmem:[%s921 + $0x3c] sm:$0xf]
        %v963 = vsel %vm924, %v692, %v962
        %964 = vst [vmem:[%s921 + $0x3c] sm:$0xf] %v963
        %965 = vst [vmem:[%s921 + $0x40] sm:$0xf] %v701
        %v966 = vld [vmem:[%s921 + $0x44] sm:$0x1]
        %v967 = vsel %vm930, %v702, %v966
        %968 = vst [vmem:[%s921 + $0x44] sm:$0x1] %v967
        %v969 = vld [vmem:[%s921 + $0x48] sm:$0xf]
        %v970 = vsel %vm924, %v709, %v969
        %971 = vst [vmem:[%s921 + $0x48] sm:$0xf] %v970
        %972 = vst [vmem:[%s921 + $0x4c] sm:$0xf] %v718
        %v973 = vld [vmem:[%s921 + $0x50] sm:$0x1]
        %v974 = vsel %vm930, %v719, %v973
        %975 = vst [vmem:[%s921 + $0x50] sm:$0x1] %v974
        %v976 = vld [vmem:[%s921 + $0x54] sm:$0xf]
        %v977 = vsel %vm924, %v726, %v976
        %978 = vst [vmem:[%s921 + $0x54] sm:$0xf] %v977
        %979 = vst [vmem:[%s921 + $0x58] sm:$0xf] %v735
        %v980 = vld [vmem:[%s921 + $0x5c] sm:$0x1]
        %v981 = vsel %vm930, %v736, %v980
        %982 = vst [vmem:[%s921 + $0x5c] sm:$0x1] %v981
        %v983 = vld [vmem:[%s921 + $0x60] sm:$0xf]
        %v984 = vsel %vm924, %v743, %v983
        %985 = vst [vmem:[%s921 + $0x60] sm:$0xf] %v984
        %986 = vst [vmem:[%s921 + $0x64] sm:$0xf] %v752
        %v987 = vld [vmem:[%s921 + $0x68] sm:$0x1]
        %v988 = vsel %vm930, %v753, %v987
        %989 = vst [vmem:[%s921 + $0x68] sm:$0x1] %v988
        %v990 = vld [vmem:[%s921 + $0x6c] sm:$0xf]
        %v991 = vsel %vm924, %v760, %v990
        %992 = vst [vmem:[%s921 + $0x6c] sm:$0xf] %v991
        %993 = vst [vmem:[%s921 + $0x70] sm:$0xf] %v769
        %v994 = vld [vmem:[%s921 + $0x74] sm:$0x1]
        %v995 = vsel %vm930, %v770, %v994
        %996 = vst [vmem:[%s921 + $0x74] sm:$0x1] %v995
        %v997 = vld [vmem:[%s921 + $0x78] sm:$0xf]
        %v998 = vsel %vm924, %v777, %v997
        %999 = vst [vmem:[%s921 + $0x78] sm:$0xf] %v998
        %1000 = vst [vmem:[%s921 + $0x7c] sm:$0xf] %v786
        %v1001 = vld [vmem:[%s921 + $0x80] sm:$0x1]
        %v1002 = vsel %vm930, %v787, %v1001
        %1003 = vst [vmem:[%s921 + $0x80] sm:$0x1] %v1002
        %v1004 = vld [vmem:[%s921 + $0x84] sm:$0xf]
        %v1005 = vsel %vm924, %v794, %v1004
        %1006 = vst [vmem:[%s921 + $0x84] sm:$0xf] %v1005
        %1007 = vst [vmem:[%s921 + $0x88] sm:$0xf] %v803
        %v1008 = vld [vmem:[%s921 + $0x8c] sm:$0x1]
        %v1009 = vsel %vm930, %v804, %v1008
        %1010 = vst [vmem:[%s921 + $0x8c] sm:$0x1] %v1009
        %v1011 = vld [vmem:[%s921 + $0x90] sm:$0xf]
        %v1012 = vsel %vm924, %v811, %v1011
        %1013 = vst [vmem:[%s921 + $0x90] sm:$0xf] %v1012
        %1014 = vst [vmem:[%s921 + $0x94] sm:$0xf] %v820
        %v1015 = vld [vmem:[%s921 + $0x98] sm:$0x1]
        %v1016 = vsel %vm930, %v821, %v1015
        %1017 = vst [vmem:[%s921 + $0x98] sm:$0x1] %v1016
        %v1018 = vld [vmem:[%s921 + $0x9c] sm:$0xf]
        %v1019 = vsel %vm924, %v828, %v1018
        %1020 = vst [vmem:[%s921 + $0x9c] sm:$0xf] %v1019
        %1021 = vst [vmem:[%s921 + $0xa0] sm:$0xf] %v837
        %v1022 = vld [vmem:[%s921 + $0xa4] sm:$0x1]
        %v1023 = vsel %vm930, %v838, %v1022
        %1024 = vst [vmem:[%s921 + $0xa4] sm:$0x1] %v1023
        %v1025 = vld [vmem:[%s921 + $0xa8] sm:$0xf]
        %v1026 = vsel %vm924, %v845, %v1025
        %1027 = vst [vmem:[%s921 + $0xa8] sm:$0xf] %v1026
        %1028 = vst [vmem:[%s921 + $0xac] sm:$0xf] %v854
        %v1029 = vld [vmem:[%s921 + $0xb0] sm:$0x1]
        %v1030 = vsel %vm930, %v855, %v1029
        %1031 = vst [vmem:[%s921 + $0xb0] sm:$0x1] %v1030
        %v1032 = vld [vmem:[%s921 + $0xb4] sm:$0xf]
        %v1033 = vsel %vm924, %v862, %v1032
        %1034 = vst [vmem:[%s921 + $0xb4] sm:$0xf] %v1033
        %1035 = vst [vmem:[%s921 + $0xb8] sm:$0xf] %v871
        %v1036 = vld [vmem:[%s921 + $0xbc] sm:$0x1]
        %v1037 = vsel %vm930, %v872, %v1036
        %1038 = vst [vmem:[%s921 + $0xbc] sm:$0x1] %v1037
      $region40: #{bottleneck_forward.6} parent=35 // pred_fallthru
        _
      %s1039 = smul.u32 %s22, 16
      %s1040 = smul.u32 %s1039, 3
      %s1041 = smul.addr %s1040, 4
      %s1042 = scalar_lea.vmem [#allocation2], %s1041
      %v1043 = vld [vmem:[%s1042] sm:$0xf]
      %v1044 = vld [vmem:[%s1042 + $0x4] sm:$0xf]
      %v1045 = vld [vmem:[%s1042 + $0xc] sm:$0xf]
      %v1046 = vld [vmem:[%s1042 + $0x10] sm:$0xf]
      %v1047 = vld [vmem:[%s1042 + $0x18] sm:$0xf]
      %v1048 = vld [vmem:[%s1042 + $0x1c] sm:$0xf]
      %v1049 = vld [vmem:[%s1042 + $0x24] sm:$0xf]
      %v1050 = vld [vmem:[%s1042 + $0x28] sm:$0xf]
      %v1051 = vld [vmem:[%s1042 + $0x30] sm:$0xf]
      %v1052 = vld [vmem:[%s1042 + $0x34] sm:$0xf]
      %v1053 = vld [vmem:[%s1042 + $0x3c] sm:$0xf]
      %v1054 = vld [vmem:[%s1042 + $0x40] sm:$0xf]
      %v1055 = vld [vmem:[%s1042 + $0x48] sm:$0xf]
      %v1056 = vld [vmem:[%s1042 + $0x4c] sm:$0xf]
      %v1057 = vld [vmem:[%s1042 + $0x54] sm:$0xf]
      %v1058 = vld [vmem:[%s1042 + $0x58] sm:$0xf]
      %v1059 = vld [vmem:[%s1042 + $0x60] sm:$0xf]
      %v1060 = vld [vmem:[%s1042 + $0x64] sm:$0xf]
      %v1061 = vld [vmem:[%s1042 + $0x6c] sm:$0xf]
      %v1062 = vld [vmem:[%s1042 + $0x70] sm:$0xf]
      %v1063 = vld [vmem:[%s1042 + $0x78] sm:$0xf]
      %v1064 = vld [vmem:[%s1042 + $0x7c] sm:$0xf]
      %v1065 = vld [vmem:[%s1042 + $0x84] sm:$0xf]
      %v1066 = vld [vmem:[%s1042 + $0x88] sm:$0xf]
      %v1067 = vld [vmem:[%s1042 + $0x90] sm:$0xf]
      %v1068 = vld [vmem:[%s1042 + $0x94] sm:$0xf]
      %v1069 = vld [vmem:[%s1042 + $0x9c] sm:$0xf]
      %v1070 = vld [vmem:[%s1042 + $0xa0] sm:$0xf]
      %v1071 = vld [vmem:[%s1042 + $0xa8] sm:$0xf]
      %v1072 = vld [vmem:[%s1042 + $0xac] sm:$0xf]
      %v1073 = vld [vmem:[%s1042 + $0xb4] sm:$0xf]
      %v1074 = vld [vmem:[%s1042 + $0xb8] sm:$0xf]
      %v1075 = vld [vmem:[%s1042 + $0x8] sm:$0x1]
      %v1076 = vld [vmem:[%s1042 + $0x14] sm:$0x1]
      %v1077 = vld [vmem:[%s1042 + $0x20] sm:$0x1]
      %v1078 = vld [vmem:[%s1042 + $0x2c] sm:$0x1]
      %v1079 = vld [vmem:[%s1042 + $0x38] sm:$0x1]
      %v1080 = vld [vmem:[%s1042 + $0x44] sm:$0x1]
      %v1081 = vld [vmem:[%s1042 + $0x50] sm:$0x1]
      %v1082 = vld [vmem:[%s1042 + $0x5c] sm:$0x1]
      %v1083 = vld [vmem:[%s1042 + $0x68] sm:$0x1]
      %v1084 = vld [vmem:[%s1042 + $0x74] sm:$0x1]
      %v1085 = vld [vmem:[%s1042 + $0x80] sm:$0x1]
      %v1086 = vld [vmem:[%s1042 + $0x8c] sm:$0x1]
      %v1087 = vld [vmem:[%s1042 + $0x98] sm:$0x1]
      %v1088 = vld [vmem:[%s1042 + $0xa4] sm:$0x1]
      %v1089 = vld [vmem:[%s1042 + $0xb0] sm:$0x1]
      %v1090 = vld [vmem:[%s1042 + $0xbc] sm:$0x1]
      %vm1091 = vsmask.f32 3328
      %vm1092 = vsmask.f32 7440
      %vm1093 = vmor %vm1091, %vm1092
      %v1095 = vshrl.u32 %v1043, 16
      %v1097 = vrot.slane %v1095, 4
      %v1098 = vshll.u32 %v1043, 16
      %v1100 = vrot.slane %v1098, 5
      %v1101 = vor.u32 %v1097, %v1100
      %v1102 = vrot.slane %v1101, 4
      %v1104 = vshll.u32 %v1044, 16
      %v1106 = vrot.slane %v1104, 5
      %v1107 = vsel %vm1093, %v1102, %v1106
      %v1108 = vshrl.u32 %v1044, 16
      %v1110 = vrot.slane %v1108, 4
      %v1111 = vor.u32 %v1110, %v1106
      %v1112 = vrot.slane %v1111, 4
      %v1114 = vshll.u32 %v1075, 16
      %v1116 = vrot.slane %v1114, 5
      %v1117 = vsel %vm1093, %v1112, %v1116
      %v1119 = vshrl.u32 %v1045, 16
      %v1121 = vrot.slane %v1119, 4
      %v1122 = vshll.u32 %v1045, 16
      %v1124 = vrot.slane %v1122, 5
      %v1125 = vor.u32 %v1121, %v1124
      %v1126 = vrot.slane %v1125, 4
      %v1128 = vshll.u32 %v1046, 16
      %v1130 = vrot.slane %v1128, 5
      %v1131 = vsel %vm1093, %v1126, %v1130
      %v1132 = vshrl.u32 %v1046, 16
      %v1134 = vrot.slane %v1132, 4
      %v1135 = vor.u32 %v1134, %v1130
      %v1136 = vrot.slane %v1135, 4
      %v1138 = vshll.u32 %v1076, 16
      %v1140 = vrot.slane %v1138, 5
      %v1141 = vsel %vm1093, %v1136, %v1140
      %v1143 = vshrl.u32 %v1047, 16
      %v1145 = vrot.slane %v1143, 4
      %v1146 = vshll.u32 %v1047, 16
      %v1148 = vrot.slane %v1146, 5
      %v1149 = vor.u32 %v1145, %v1148
      %v1150 = vrot.slane %v1149, 4
      %v1152 = vshll.u32 %v1048, 16
      %v1154 = vrot.slane %v1152, 5
      %v1155 = vsel %vm1093, %v1150, %v1154
      %v1156 = vshrl.u32 %v1048, 16
      %v1158 = vrot.slane %v1156, 4
      %v1159 = vor.u32 %v1158, %v1154
      %v1160 = vrot.slane %v1159, 4
      %v1162 = vshll.u32 %v1077, 16
      %v1164 = vrot.slane %v1162, 5
      %v1165 = vsel %vm1093, %v1160, %v1164
      %v1167 = vshrl.u32 %v1049, 16
      %v1169 = vrot.slane %v1167, 4
      %v1170 = vshll.u32 %v1049, 16
      %v1172 = vrot.slane %v1170, 5
      %v1173 = vor.u32 %v1169, %v1172
      %v1174 = vrot.slane %v1173, 4
      %v1176 = vshll.u32 %v1050, 16
      %v1178 = vrot.slane %v1176, 5
      %v1179 = vsel %vm1093, %v1174, %v1178
      %v1180 = vshrl.u32 %v1050, 16
      %v1182 = vrot.slane %v1180, 4
      %v1183 = vor.u32 %v1182, %v1178
      %v1184 = vrot.slane %v1183, 4
      %v1186 = vshll.u32 %v1078, 16
      %v1188 = vrot.slane %v1186, 5
      %v1189 = vsel %vm1093, %v1184, %v1188
      %v1191 = vshrl.u32 %v1051, 16
      %v1193 = vrot.slane %v1191, 4
      %v1194 = vshll.u32 %v1051, 16
      %v1196 = vrot.slane %v1194, 5
      %v1197 = vor.u32 %v1193, %v1196
      %v1198 = vrot.slane %v1197, 4
      %v1200 = vshll.u32 %v1052, 16
      %v1202 = vrot.slane %v1200, 5
      %v1203 = vsel %vm1093, %v1198, %v1202
      %v1204 = vshrl.u32 %v1052, 16
      %v1206 = vrot.slane %v1204, 4
      %v1207 = vor.u32 %v1206, %v1202
      %v1208 = vrot.slane %v1207, 4
      %v1210 = vshll.u32 %v1079, 16
      %v1212 = vrot.slane %v1210, 5
      %v1213 = vsel %vm1093, %v1208, %v1212
      %v1215 = vshrl.u32 %v1053, 16
      %v1217 = vrot.slane %v1215, 4
      %v1218 = vshll.u32 %v1053, 16
      %v1220 = vrot.slane %v1218, 5
      %v1221 = vor.u32 %v1217, %v1220
      %v1222 = vrot.slane %v1221, 4
      %v1224 = vshll.u32 %v1054, 16
      %v1226 = vrot.slane %v1224, 5
      %v1227 = vsel %vm1093, %v1222, %v1226
      %v1228 = vshrl.u32 %v1054, 16
      %v1230 = vrot.slane %v1228, 4
      %v1231 = vor.u32 %v1230, %v1226
      %v1232 = vrot.slane %v1231, 4
      %v1234 = vshll.u32 %v1080, 16
      %v1236 = vrot.slane %v1234, 5
      %v1237 = vsel %vm1093, %v1232, %v1236
      %v1239 = vshrl.u32 %v1055, 16
      %v1241 = vrot.slane %v1239, 4
      %v1242 = vshll.u32 %v1055, 16
      %v1244 = vrot.slane %v1242, 5
      %v1245 = vor.u32 %v1241, %v1244
      %v1246 = vrot.slane %v1245, 4
      %v1248 = vshll.u32 %v1056, 16
      %v1250 = vrot.slane %v1248, 5
      %v1251 = vsel %vm1093, %v1246, %v1250
      %v1252 = vshrl.u32 %v1056, 16
      %v1254 = vrot.slane %v1252, 4
      %v1255 = vor.u32 %v1254, %v1250
      %v1256 = vrot.slane %v1255, 4
      %v1258 = vshll.u32 %v1081, 16
      %v1260 = vrot.slane %v1258, 5
      %v1261 = vsel %vm1093, %v1256, %v1260
      %v1263 = vshrl.u32 %v1057, 16
      %v1265 = vrot.slane %v1263, 4
      %v1266 = vshll.u32 %v1057, 16
      %v1268 = vrot.slane %v1266, 5
      %v1269 = vor.u32 %v1265, %v1268
      %v1270 = vrot.slane %v1269, 4
      %v1272 = vshll.u32 %v1058, 16
      %v1274 = vrot.slane %v1272, 5
      %v1275 = vsel %vm1093, %v1270, %v1274
      %v1276 = vshrl.u32 %v1058, 16
      %v1278 = vrot.slane %v1276, 4
      %v1279 = vor.u32 %v1278, %v1274
      %v1280 = vrot.slane %v1279, 4
      %v1282 = vshll.u32 %v1082, 16
      %v1284 = vrot.slane %v1282, 5
      %v1285 = vsel %vm1093, %v1280, %v1284
      %v1287 = vshrl.u32 %v1059, 16
      %v1289 = vrot.slane %v1287, 4
      %v1290 = vshll.u32 %v1059, 16
      %v1292 = vrot.slane %v1290, 5
      %v1293 = vor.u32 %v1289, %v1292
      %v1294 = vrot.slane %v1293, 4
      %v1296 = vshll.u32 %v1060, 16
      %v1298 = vrot.slane %v1296, 5
      %v1299 = vsel %vm1093, %v1294, %v1298
      %v1300 = vshrl.u32 %v1060, 16
      %v1302 = vrot.slane %v1300, 4
      %v1303 = vor.u32 %v1302, %v1298
      %v1304 = vrot.slane %v1303, 4
      %v1306 = vshll.u32 %v1083, 16
      %v1308 = vrot.slane %v1306, 5
      %v1309 = vsel %vm1093, %v1304, %v1308
      %v1311 = vshrl.u32 %v1061, 16
      %v1313 = vrot.slane %v1311, 4
      %v1314 = vshll.u32 %v1061, 16
      %v1316 = vrot.slane %v1314, 5
      %v1317 = vor.u32 %v1313, %v1316
      %v1318 = vrot.slane %v1317, 4
      %v1320 = vshll.u32 %v1062, 16
      %v1322 = vrot.slane %v1320, 5
      %v1323 = vsel %vm1093, %v1318, %v1322
      %v1324 = vshrl.u32 %v1062, 16
      %v1326 = vrot.slane %v1324, 4
      %v1327 = vor.u32 %v1326, %v1322
      %v1328 = vrot.slane %v1327, 4
      %v1330 = vshll.u32 %v1084, 16
      %v1332 = vrot.slane %v1330, 5
      %v1333 = vsel %vm1093, %v1328, %v1332
      %v1335 = vshrl.u32 %v1063, 16
      %v1337 = vrot.slane %v1335, 4
      %v1338 = vshll.u32 %v1063, 16
      %v1340 = vrot.slane %v1338, 5
      %v1341 = vor.u32 %v1337, %v1340
      %v1342 = vrot.slane %v1341, 4
      %v1344 = vshll.u32 %v1064, 16
      %v1346 = vrot.slane %v1344, 5
      %v1347 = vsel %vm1093, %v1342, %v1346
      %v1348 = vshrl.u32 %v1064, 16
      %v1350 = vrot.slane %v1348, 4
      %v1351 = vor.u32 %v1350, %v1346
      %v1352 = vrot.slane %v1351, 4
      %v1354 = vshll.u32 %v1085, 16
      %v1356 = vrot.slane %v1354, 5
      %v1357 = vsel %vm1093, %v1352, %v1356
      %v1359 = vshrl.u32 %v1065, 16
      %v1361 = vrot.slane %v1359, 4
      %v1362 = vshll.u32 %v1065, 16
      %v1364 = vrot.slane %v1362, 5
      %v1365 = vor.u32 %v1361, %v1364
      %v1366 = vrot.slane %v1365, 4
      %v1368 = vshll.u32 %v1066, 16
      %v1370 = vrot.slane %v1368, 5
      %v1371 = vsel %vm1093, %v1366, %v1370
      %v1372 = vshrl.u32 %v1066, 16
      %v1374 = vrot.slane %v1372, 4
      %v1375 = vor.u32 %v1374, %v1370
      %v1376 = vrot.slane %v1375, 4
      %v1378 = vshll.u32 %v1086, 16
      %v1380 = vrot.slane %v1378, 5
      %v1381 = vsel %vm1093, %v1376, %v1380
      %v1383 = vshrl.u32 %v1067, 16
      %v1385 = vrot.slane %v1383, 4
      %v1386 = vshll.u32 %v1067, 16
      %v1388 = vrot.slane %v1386, 5
      %v1389 = vor.u32 %v1385, %v1388
      %v1390 = vrot.slane %v1389, 4
      %v1392 = vshll.u32 %v1068, 16
      %v1394 = vrot.slane %v1392, 5
      %v1395 = vsel %vm1093, %v1390, %v1394
      %v1396 = vshrl.u32 %v1068, 16
      %v1398 = vrot.slane %v1396, 4
      %v1399 = vor.u32 %v1398, %v1394
      %v1400 = vrot.slane %v1399, 4
      %v1402 = vshll.u32 %v1087, 16
      %v1404 = vrot.slane %v1402, 5
      %v1405 = vsel %vm1093, %v1400, %v1404
      %v1407 = vshrl.u32 %v1069, 16
      %v1409 = vrot.slane %v1407, 4
      %v1410 = vshll.u32 %v1069, 16
      %v1412 = vrot.slane %v1410, 5
      %v1413 = vor.u32 %v1409, %v1412
      %v1414 = vrot.slane %v1413, 4
      %v1416 = vshll.u32 %v1070, 16
      %v1418 = vrot.slane %v1416, 5
      %v1419 = vsel %vm1093, %v1414, %v1418
      %v1420 = vshrl.u32 %v1070, 16
      %v1422 = vrot.slane %v1420, 4
      %v1423 = vor.u32 %v1422, %v1418
      %v1424 = vrot.slane %v1423, 4
      %v1426 = vshll.u32 %v1088, 16
      %v1428 = vrot.slane %v1426, 5
      %v1429 = vsel %vm1093, %v1424, %v1428
      %v1431 = vshrl.u32 %v1071, 16
      %v1433 = vrot.slane %v1431, 4
      %v1434 = vshll.u32 %v1071, 16
      %v1436 = vrot.slane %v1434, 5
      %v1437 = vor.u32 %v1433, %v1436
      %v1438 = vrot.slane %v1437, 4
      %v1440 = vshll.u32 %v1072, 16
      %v1442 = vrot.slane %v1440, 5
      %v1443 = vsel %vm1093, %v1438, %v1442
      %v1444 = vshrl.u32 %v1072, 16
      %v1446 = vrot.slane %v1444, 4
      %v1447 = vor.u32 %v1446, %v1442
      %v1448 = vrot.slane %v1447, 4
      %v1450 = vshll.u32 %v1089, 16
      %v1452 = vrot.slane %v1450, 5
      %v1453 = vsel %vm1093, %v1448, %v1452
      %v1455 = vshrl.u32 %v1073, 16
      %v1457 = vrot.slane %v1455, 4
      %v1458 = vshll.u32 %v1073, 16
      %v1460 = vrot.slane %v1458, 5
      %v1461 = vor.u32 %v1457, %v1460
      %v1462 = vrot.slane %v1461, 4
      %v1464 = vshll.u32 %v1074, 16
      %v1466 = vrot.slane %v1464, 5
      %v1467 = vsel %vm1093, %v1462, %v1466
      %v1468 = vshrl.u32 %v1074, 16
      %v1470 = vrot.slane %v1468, 4
      %v1471 = vor.u32 %v1470, %v1466
      %v1472 = vrot.slane %v1471, 4
      %v1474 = vshll.u32 %v1090, 16
      %v1476 = vrot.slane %v1474, 5
      %v1477 = vsel %vm1093, %v1472, %v1476
      %v1478 = vld [vmem:[%s1042] sm:$0xe]
      %v1479 = vld [vmem:[%s1042 + $0xc] sm:$0xe]
      %v1480 = vld [vmem:[%s1042 + $0x18] sm:$0xe]
      %v1481 = vld [vmem:[%s1042 + $0x24] sm:$0xe]
      %v1482 = vld [vmem:[%s1042 + $0x30] sm:$0xe]
      %v1483 = vld [vmem:[%s1042 + $0x3c] sm:$0xe]
      %v1484 = vld [vmem:[%s1042 + $0x48] sm:$0xe]
      %v1485 = vld [vmem:[%s1042 + $0x54] sm:$0xe]
      %v1486 = vld [vmem:[%s1042 + $0x60] sm:$0xe]
      %v1487 = vld [vmem:[%s1042 + $0x6c] sm:$0xe]
      %v1488 = vld [vmem:[%s1042 + $0x78] sm:$0xe]
      %v1489 = vld [vmem:[%s1042 + $0x84] sm:$0xe]
      %v1490 = vld [vmem:[%s1042 + $0x90] sm:$0xe]
      %v1491 = vld [vmem:[%s1042 + $0x9c] sm:$0xe]
      %v1492 = vld [vmem:[%s1042 + $0xa8] sm:$0xe]
      %v1493 = vld [vmem:[%s1042 + $0xb4] sm:$0xe]
      %vm1542 = vcmask 1042432
      %vm1543 = vcmask 1046532
      %vm1544 = vmor %vm1542, %vm1543
      %v1545 = vrot.slane %v1478, 5
      %v1546 = vrot.slane %v1545, 4
      %v1547 = vrot.slane %v1044, 5
      %v1548 = vsel %vm1544, %v1546, %v1547
      %v1549 = vrot.slane %v1547, 4
      %v1550 = vrot.slane %v1075, 5
      %v1551 = vsel %vm1544, %v1549, %v1550
      %v1552 = vrot.slane %v1479, 5
      %v1553 = vrot.slane %v1552, 4
      %v1554 = vrot.slane %v1046, 5
      %v1555 = vsel %vm1544, %v1553, %v1554
      %v1556 = vrot.slane %v1554, 4
      %v1557 = vrot.slane %v1076, 5
      %v1558 = vsel %vm1544, %v1556, %v1557
      %v1559 = vrot.slane %v1480, 5
      %v1560 = vrot.slane %v1559, 4
      %v1561 = vrot.slane %v1048, 5
      %v1562 = vsel %vm1544, %v1560, %v1561
      %v1563 = vrot.slane %v1561, 4
      %v1564 = vrot.slane %v1077, 5
      %v1565 = vsel %vm1544, %v1563, %v1564
      %v1566 = vrot.slane %v1481, 5
      %v1567 = vrot.slane %v1566, 4
      %v1568 = vrot.slane %v1050, 5
      %v1569 = vsel %vm1544, %v1567, %v1568
      %v1570 = vrot.slane %v1568, 4
      %v1571 = vrot.slane %v1078, 5
      %v1572 = vsel %vm1544, %v1570, %v1571
      %v1573 = vrot.slane %v1482, 5
      %v1574 = vrot.slane %v1573, 4
      %v1575 = vrot.slane %v1052, 5
      %v1576 = vsel %vm1544, %v1574, %v1575
      %v1577 = vrot.slane %v1575, 4
      %v1578 = vrot.slane %v1079, 5
      %v1579 = vsel %vm1544, %v1577, %v1578
      %v1580 = vrot.slane %v1483, 5
      %v1581 = vrot.slane %v1580, 4
      %v1582 = vrot.slane %v1054, 5
      %v1583 = vsel %vm1544, %v1581, %v1582
      %v1584 = vrot.slane %v1582, 4
      %v1585 = vrot.slane %v1080, 5
      %v1586 = vsel %vm1544, %v1584, %v1585
      %v1587 = vrot.slane %v1484, 5
      %v1588 = vrot.slane %v1587, 4
      %v1589 = vrot.slane %v1056, 5
      %v1590 = vsel %vm1544, %v1588, %v1589
      %v1591 = vrot.slane %v1589, 4
      %v1592 = vrot.slane %v1081, 5
      %v1593 = vsel %vm1544, %v1591, %v1592
      %v1594 = vrot.slane %v1485, 5
      %v1595 = vrot.slane %v1594, 4
      %v1596 = vrot.slane %v1058, 5
      %v1597 = vsel %vm1544, %v1595, %v1596
      %v1598 = vrot.slane %v1596, 4
      %v1599 = vrot.slane %v1082, 5
      %v1600 = vsel %vm1544, %v1598, %v1599
      %v1601 = vrot.slane %v1486, 5
      %v1602 = vrot.slane %v1601, 4
      %v1603 = vrot.slane %v1060, 5
      %v1604 = vsel %vm1544, %v1602, %v1603
      %v1605 = vrot.slane %v1603, 4
      %v1606 = vrot.slane %v1083, 5
      %v1607 = vsel %vm1544, %v1605, %v1606
      %v1608 = vrot.slane %v1487, 5
      %v1609 = vrot.slane %v1608, 4
      %v1610 = vrot.slane %v1062, 5
      %v1611 = vsel %vm1544, %v1609, %v1610
      %v1612 = vrot.slane %v1610, 4
      %v1613 = vrot.slane %v1084, 5
      %v1614 = vsel %vm1544, %v1612, %v1613
      %v1615 = vrot.slane %v1488, 5
      %v1616 = vrot.slane %v1615, 4
      %v1617 = vrot.slane %v1064, 5
      %v1618 = vsel %vm1544, %v1616, %v1617
      %v1619 = vrot.slane %v1617, 4
      %v1620 = vrot.slane %v1085, 5
      %v1621 = vsel %vm1544, %v1619, %v1620
      %v1622 = vrot.slane %v1489, 5
      %v1623 = vrot.slane %v1622, 4
      %v1624 = vrot.slane %v1066, 5
      %v1625 = vsel %vm1544, %v1623, %v1624
      %v1626 = vrot.slane %v1624, 4
      %v1627 = vrot.slane %v1086, 5
      %v1628 = vsel %vm1544, %v1626, %v1627
      %v1629 = vrot.slane %v1490, 5
      %v1630 = vrot.slane %v1629, 4
      %v1631 = vrot.slane %v1068, 5
      %v1632 = vsel %vm1544, %v1630, %v1631
      %v1633 = vrot.slane %v1631, 4
      %v1634 = vrot.slane %v1087, 5
      %v1635 = vsel %vm1544, %v1633, %v1634
      %v1636 = vrot.slane %v1491, 5
      %v1637 = vrot.slane %v1636, 4
      %v1638 = vrot.slane %v1070, 5
      %v1639 = vsel %vm1544, %v1637, %v1638
      %v1640 = vrot.slane %v1638, 4
      %v1641 = vrot.slane %v1088, 5
      %v1642 = vsel %vm1544, %v1640, %v1641
      %v1643 = vrot.slane %v1492, 5
      %v1644 = vrot.slane %v1643, 4
      %v1645 = vrot.slane %v1072, 5
      %v1646 = vsel %vm1544, %v1644, %v1645
      %v1647 = vrot.slane %v1645, 4
      %v1648 = vrot.slane %v1089, 5
      %v1649 = vsel %vm1544, %v1647, %v1648
      %v1650 = vrot.slane %v1493, 5
      %v1651 = vrot.slane %v1650, 4
      %v1652 = vrot.slane %v1074, 5
      %v1653 = vsel %vm1544, %v1651, %v1652
      %v1654 = vrot.slane %v1652, 4
      %v1655 = vrot.slane %v1090, 5
      %v1656 = vsel %vm1544, %v1654, %v1655
      %v1673 = vunpack.c.l.b16 %v1043
      %v1674 = vunpack.c.l.b16 %v1044
      %v1675 = vunpack.c.l.b16 %v1045
      %v1676 = vunpack.c.l.b16 %v1046
      %v1677 = vunpack.c.l.b16 %v1047
      %v1678 = vunpack.c.l.b16 %v1048
      %v1679 = vunpack.c.l.b16 %v1049
      %v1680 = vunpack.c.l.b16 %v1050
      %v1681 = vunpack.c.l.b16 %v1051
      %v1682 = vunpack.c.l.b16 %v1052
      %v1683 = vunpack.c.l.b16 %v1053
      %v1684 = vunpack.c.l.b16 %v1054
      %v1685 = vunpack.c.l.b16 %v1055
      %v1686 = vunpack.c.l.b16 %v1056
      %v1687 = vunpack.c.l.b16 %v1057
      %v1688 = vunpack.c.l.b16 %v1058
      %v1689 = vunpack.c.l.b16 %v1059
      %v1690 = vunpack.c.l.b16 %v1060
      %v1691 = vunpack.c.l.b16 %v1061
      %v1692 = vunpack.c.l.b16 %v1062
      %v1693 = vunpack.c.l.b16 %v1063
      %v1694 = vunpack.c.l.b16 %v1064
      %v1695 = vunpack.c.l.b16 %v1065
      %v1696 = vunpack.c.l.b16 %v1066
      %v1697 = vunpack.c.l.b16 %v1067
      %v1698 = vunpack.c.l.b16 %v1068
      %v1699 = vunpack.c.l.b16 %v1069
      %v1700 = vunpack.c.l.b16 %v1070
      %v1701 = vunpack.c.l.b16 %v1071
      %v1702 = vunpack.c.l.b16 %v1072
      %v1703 = vunpack.c.l.b16 %v1073
      %v1704 = vunpack.c.l.b16 %v1074
      %v1705 = vpack.c.b16 %v1674, %v1673
      %v1706 = vpack.c.b16 %v1676, %v1675
      %v1707 = vpack.c.b16 %v1678, %v1677
      %v1708 = vpack.c.b16 %v1680, %v1679
      %v1709 = vpack.c.b16 %v1682, %v1681
      %v1710 = vpack.c.b16 %v1684, %v1683
      %v1711 = vpack.c.b16 %v1686, %v1685
      %v1712 = vpack.c.b16 %v1688, %v1687
      %v1713 = vpack.c.b16 %v1690, %v1689
      %v1714 = vpack.c.b16 %v1692, %v1691
      %v1715 = vpack.c.b16 %v1694, %v1693
      %v1716 = vpack.c.b16 %v1696, %v1695
      %v1717 = vpack.c.b16 %v1698, %v1697
      %v1718 = vpack.c.b16 %v1700, %v1699
      %v1719 = vpack.c.b16 %v1702, %v1701
      %v1720 = vpack.c.b16 %v1704, %v1703
      %v1737 = vunpack.c.l.b16 %v1107
      %v1738 = vunpack.c.l.b16 %v1117
      %v1739 = vunpack.c.l.b16 %v1131
      %v1740 = vunpack.c.l.b16 %v1141
      %v1741 = vunpack.c.l.b16 %v1155
      %v1742 = vunpack.c.l.b16 %v1165
      %v1743 = vunpack.c.l.b16 %v1179
      %v1744 = vunpack.c.l.b16 %v1189
      %v1745 = vunpack.c.l.b16 %v1203
      %v1746 = vunpack.c.l.b16 %v1213
      %v1747 = vunpack.c.l.b16 %v1227
      %v1748 = vunpack.c.l.b16 %v1237
      %v1749 = vunpack.c.l.b16 %v1251
      %v1750 = vunpack.c.l.b16 %v1261
      %v1751 = vunpack.c.l.b16 %v1275
      %v1752 = vunpack.c.l.b16 %v1285
      %v1753 = vunpack.c.l.b16 %v1299
      %v1754 = vunpack.c.l.b16 %v1309
      %v1755 = vunpack.c.l.b16 %v1323
      %v1756 = vunpack.c.l.b16 %v1333
      %v1757 = vunpack.c.l.b16 %v1347
      %v1758 = vunpack.c.l.b16 %v1357
      %v1759 = vunpack.c.l.b16 %v1371
      %v1760 = vunpack.c.l.b16 %v1381
      %v1761 = vunpack.c.l.b16 %v1395
      %v1762 = vunpack.c.l.b16 %v1405
      %v1763 = vunpack.c.l.b16 %v1419
      %v1764 = vunpack.c.l.b16 %v1429
      %v1765 = vunpack.c.l.b16 %v1443
      %v1766 = vunpack.c.l.b16 %v1453
      %v1767 = vunpack.c.l.b16 %v1467
      %v1768 = vunpack.c.l.b16 %v1477
      %v1769 = vpack.c.b16 %v1738, %v1737
      %v1770 = vpack.c.b16 %v1740, %v1739
      %v1771 = vpack.c.b16 %v1742, %v1741
      %v1772 = vpack.c.b16 %v1744, %v1743
      %v1773 = vpack.c.b16 %v1746, %v1745
      %v1774 = vpack.c.b16 %v1748, %v1747
      %v1775 = vpack.c.b16 %v1750, %v1749
      %v1776 = vpack.c.b16 %v1752, %v1751
      %v1777 = vpack.c.b16 %v1754, %v1753
      %v1778 = vpack.c.b16 %v1756, %v1755
      %v1779 = vpack.c.b16 %v1758, %v1757
      %v1780 = vpack.c.b16 %v1760, %v1759
      %v1781 = vpack.c.b16 %v1762, %v1761
      %v1782 = vpack.c.b16 %v1764, %v1763
      %v1783 = vpack.c.b16 %v1766, %v1765
      %v1784 = vpack.c.b16 %v1768, %v1767
      %v1801 = vunpack.c.l.b16 %v1548
      %v1802 = vunpack.c.l.b16 %v1551
      %v1803 = vunpack.c.l.b16 %v1555
      %v1804 = vunpack.c.l.b16 %v1558
      %v1805 = vunpack.c.l.b16 %v1562
      %v1806 = vunpack.c.l.b16 %v1565
      %v1807 = vunpack.c.l.b16 %v1569
      %v1808 = vunpack.c.l.b16 %v1572
      %v1809 = vunpack.c.l.b16 %v1576
      %v1810 = vunpack.c.l.b16 %v1579
      %v1811 = vunpack.c.l.b16 %v1583
      %v1812 = vunpack.c.l.b16 %v1586
      %v1813 = vunpack.c.l.b16 %v1590
      %v1814 = vunpack.c.l.b16 %v1593
      %v1815 = vunpack.c.l.b16 %v1597
      %v1816 = vunpack.c.l.b16 %v1600
      %v1817 = vunpack.c.l.b16 %v1604
      %v1818 = vunpack.c.l.b16 %v1607
      %v1819 = vunpack.c.l.b16 %v1611
      %v1820 = vunpack.c.l.b16 %v1614
      %v1821 = vunpack.c.l.b16 %v1618
      %v1822 = vunpack.c.l.b16 %v1621
      %v1823 = vunpack.c.l.b16 %v1625
      %v1824 = vunpack.c.l.b16 %v1628
      %v1825 = vunpack.c.l.b16 %v1632
      %v1826 = vunpack.c.l.b16 %v1635
      %v1827 = vunpack.c.l.b16 %v1639
      %v1828 = vunpack.c.l.b16 %v1642
      %v1829 = vunpack.c.l.b16 %v1646
      %v1830 = vunpack.c.l.b16 %v1649
      %v1831 = vunpack.c.l.b16 %v1653
      %v1832 = vunpack.c.l.b16 %v1656
      %v1833 = vpack.c.b16 %v1802, %v1801
      %v1834 = vpack.c.b16 %v1804, %v1803
      %v1835 = vpack.c.b16 %v1806, %v1805
      %v1836 = vpack.c.b16 %v1808, %v1807
      %v1837 = vpack.c.b16 %v1810, %v1809
      %v1838 = vpack.c.b16 %v1812, %v1811
      %v1839 = vpack.c.b16 %v1814, %v1813
      %v1840 = vpack.c.b16 %v1816, %v1815
      %v1841 = vpack.c.b16 %v1818, %v1817
      %v1842 = vpack.c.b16 %v1820, %v1819
      %v1843 = vpack.c.b16 %v1822, %v1821
      %v1844 = vpack.c.b16 %v1824, %v1823
      %v1845 = vpack.c.b16 %v1826, %v1825
      %v1846 = vpack.c.b16 %v1828, %v1827
      %v1847 = vpack.c.b16 %v1830, %v1829
      %v1848 = vpack.c.b16 %v1832, %v1831
      %v1865 = vld [vmem:[%s3] sm:$0xf]
      %v1866 = vld [vmem:[%s3 + $0x4] sm:$0xf]
      %v1867 = vld [vmem:[%s3 + $0x8] sm:$0xf]
      %v1868 = vld [vmem:[%s3 + $0xc] sm:$0xf]
      %v1869 = vld [vmem:[%s3 + $0x10] sm:$0xf]
      %v1870 = vld [vmem:[%s3 + $0x14] sm:$0xf]
      %v1871 = vld [vmem:[%s3 + $0x18] sm:$0xf]
      %v1872 = vld [vmem:[%s3 + $0x1c] sm:$0xf]
      %v1873 = vld [vmem:[%s3 + $0x20] sm:$0xf]
      %v1874 = vld [vmem:[%s3 + $0x24] sm:$0xf]
      %v1875 = vld [vmem:[%s3 + $0x28] sm:$0xf]
      %v1876 = vld [vmem:[%s3 + $0x2c] sm:$0xf]
      %v1877 = vld [vmem:[%s3 + $0x30] sm:$0xf]
      %v1878 = vld [vmem:[%s3 + $0x34] sm:$0xf]
      %v1879 = vld [vmem:[%s3 + $0x38] sm:$0xf]
      %v1880 = vld [vmem:[%s3 + $0x3c] sm:$0xf]
      %v1881 = vld [vmem:[%s3 + $0x40] sm:$0xf]
      %v1882 = vld [vmem:[%s3 + $0x44] sm:$0xf]
      %v1883 = vld [vmem:[%s3 + $0x48] sm:$0xf]
      %v1884 = vld [vmem:[%s3 + $0x4c] sm:$0xf]
      %v1885 = vld [vmem:[%s3 + $0x50] sm:$0xf]
      %v1886 = vld [vmem:[%s3 + $0x54] sm:$0xf]
      %v1887 = vld [vmem:[%s3 + $0x58] sm:$0xf]
      %v1888 = vld [vmem:[%s3 + $0x5c] sm:$0xf]
      %v1889 = vld [vmem:[%s3 + $0x60] sm:$0xf]
      %v1890 = vld [vmem:[%s3 + $0x64] sm:$0xf]
      %v1891 = vld [vmem:[%s3 + $0x68] sm:$0xf]
      %v1892 = vld [vmem:[%s3 + $0x6c] sm:$0xf]
      %v1893 = vld [vmem:[%s3 + $0x70] sm:$0xf]
      %v1894 = vld [vmem:[%s3 + $0x74] sm:$0xf]
      %v1895 = vld [vmem:[%s3 + $0x78] sm:$0xf]
      %v1896 = vld [vmem:[%s3 + $0x7c] sm:$0xf]
      %v1897 = vld [vmem:[%s3 + $0x80] sm:$0xf]
      %v1898 = vld [vmem:[%s3 + $0x84] sm:$0xf]
      %v1899 = vld [vmem:[%s3 + $0x88] sm:$0xf]
      %v1900 = vld [vmem:[%s3 + $0x8c] sm:$0xf]
      %v1901 = vld [vmem:[%s3 + $0x90] sm:$0xf]
      %v1902 = vld [vmem:[%s3 + $0x94] sm:$0xf]
      %v1903 = vld [vmem:[%s3 + $0x98] sm:$0xf]
      %v1904 = vld [vmem:[%s3 + $0x9c] sm:$0xf]
      %v1905 = vld [vmem:[%s3 + $0xa0] sm:$0xf]
      %v1906 = vld [vmem:[%s3 + $0xa4] sm:$0xf]
      %v1907 = vld [vmem:[%s3 + $0xa8] sm:$0xf]
      %v1908 = vld [vmem:[%s3 + $0xac] sm:$0xf]
      %v1909 = vld [vmem:[%s3 + $0xb0] sm:$0xf]
      %v1910 = vld [vmem:[%s3 + $0xb4] sm:$0xf]
      %v1911 = vld [vmem:[%s3 + $0xb8] sm:$0xf]
      %v1912 = vld [vmem:[%s3 + $0xbc] sm:$0xf]
      %s1913 = sadd.s32 %s1039, 1
      %s1914 = smul.u32 %s1913, 3
      %s1915 = smul.addr %s1914, 4
      %s1916 = scalar_lea.vmem [#allocation2], %s1915
      %v1917 = vld [vmem:[%s1916] sm:$0xf]
      %v1918 = vld [vmem:[%s1916 + $0x4] sm:$0xf]
      %v1919 = vld [vmem:[%s1916 + $0xc] sm:$0xf]
      %v1920 = vld [vmem:[%s1916 + $0x10] sm:$0xf]
      %v1921 = vld [vmem:[%s1916 + $0x18] sm:$0xf]
      %v1922 = vld [vmem:[%s1916 + $0x1c] sm:$0xf]
      %v1923 = vld [vmem:[%s1916 + $0x24] sm:$0xf]
      %v1924 = vld [vmem:[%s1916 + $0x28] sm:$0xf]
      %v1925 = vld [vmem:[%s1916 + $0x30] sm:$0xf]
      %v1926 = vld [vmem:[%s1916 + $0x34] sm:$0xf]
      %v1927 = vld [vmem:[%s1916 + $0x3c] sm:$0xf]
      %v1928 = vld [vmem:[%s1916 + $0x40] sm:$0xf]
      %v1929 = vld [vmem:[%s1916 + $0x48] sm:$0xf]
      %v1930 = vld [vmem:[%s1916 + $0x4c] sm:$0xf]
      %v1931 = vld [vmem:[%s1916 + $0x54] sm:$0xf]
      %v1932 = vld [vmem:[%s1916 + $0x58] sm:$0xf]
      %v1933 = vld [vmem:[%s1916 + $0x60] sm:$0xf]
      %v1934 = vld [vmem:[%s1916 + $0x64] sm:$0xf]
      %v1935 = vld [vmem:[%s1916 + $0x6c] sm:$0xf]
      %v1936 = vld [vmem:[%s1916 + $0x70] sm:$0xf]
      %v1937 = vld [vmem:[%s1916 + $0x78] sm:$0xf]
      %v1938 = vld [vmem:[%s1916 + $0x7c] sm:$0xf]
      %v1939 = vld [vmem:[%s1916 + $0x84] sm:$0xf]
      %v1940 = vld [vmem:[%s1916 + $0x88] sm:$0xf]
      %v1941 = vld [vmem:[%s1916 + $0x90] sm:$0xf]
      %v1942 = vld [vmem:[%s1916 + $0x94] sm:$0xf]
      %v1943 = vld [vmem:[%s1916 + $0x9c] sm:$0xf]
      %v1944 = vld [vmem:[%s1916 + $0xa0] sm:$0xf]
      %v1945 = vld [vmem:[%s1916 + $0xa8] sm:$0xf]
      %v1946 = vld [vmem:[%s1916 + $0xac] sm:$0xf]
      %v1947 = vld [vmem:[%s1916 + $0xb4] sm:$0xf]
      %v1948 = vld [vmem:[%s1916 + $0xb8] sm:$0xf]
      %v1949 = vld [vmem:[%s1916 + $0x8] sm:$0x1]
      %v1950 = vld [vmem:[%s1916 + $0x14] sm:$0x1]
      %v1951 = vld [vmem:[%s1916 + $0x20] sm:$0x1]
      %v1952 = vld [vmem:[%s1916 + $0x2c] sm:$0x1]
      %v1953 = vld [vmem:[%s1916 + $0x38] sm:$0x1]
      %v1954 = vld [vmem:[%s1916 + $0x44] sm:$0x1]
      %v1955 = vld [vmem:[%s1916 + $0x50] sm:$0x1]
      %v1956 = vld [vmem:[%s1916 + $0x5c] sm:$0x1]
      %v1957 = vld [vmem:[%s1916 + $0x68] sm:$0x1]
      %v1958 = vld [vmem:[%s1916 + $0x74] sm:$0x1]
      %v1959 = vld [vmem:[%s1916 + $0x80] sm:$0x1]
      %v1960 = vld [vmem:[%s1916 + $0x8c] sm:$0x1]
      %v1961 = vld [vmem:[%s1916 + $0x98] sm:$0x1]
      %v1962 = vld [vmem:[%s1916 + $0xa4] sm:$0x1]
      %v1963 = vld [vmem:[%s1916 + $0xb0] sm:$0x1]
      %v1964 = vld [vmem:[%s1916 + $0xbc] sm:$0x1]
      %v1966 = vshrl.u32 %v1917, 16
      %v1968 = vrot.slane %v1966, 4
      %v1969 = vshll.u32 %v1917, 16
      %v1971 = vrot.slane %v1969, 5
      %v1972 = vor.u32 %v1968, %v1971
      %v1973 = vrot.slane %v1972, 4
      %v1975 = vshll.u32 %v1918, 16
      %v1977 = vrot.slane %v1975, 5
      %v1978 = vsel %vm1093, %v1973, %v1977
      %v1979 = vshrl.u32 %v1918, 16
      %v1981 = vrot.slane %v1979, 4
      %v1982 = vor.u32 %v1981, %v1977
      %v1983 = vrot.slane %v1982, 4
      %v1985 = vshll.u32 %v1949, 16
      %v1987 = vrot.slane %v1985, 5
      %v1988 = vsel %vm1093, %v1983, %v1987
      %v1990 = vshrl.u32 %v1919, 16
      %v1992 = vrot.slane %v1990, 4
      %v1993 = vshll.u32 %v1919, 16
      %v1995 = vrot.slane %v1993, 5
      %v1996 = vor.u32 %v1992, %v1995
      %v1997 = vrot.slane %v1996, 4
      %v1999 = vshll.u32 %v1920, 16
      %v2001 = vrot.slane %v1999, 5
      %v2002 = vsel %vm1093, %v1997, %v2001
      %v2003 = vshrl.u32 %v1920, 16
      %v2005 = vrot.slane %v2003, 4
      %v2006 = vor.u32 %v2005, %v2001
      %v2007 = vrot.slane %v2006, 4
      %v2009 = vshll.u32 %v1950, 16
      %v2011 = vrot.slane %v2009, 5
      %v2012 = vsel %vm1093, %v2007, %v2011
      %v2014 = vshrl.u32 %v1921, 16
      %v2016 = vrot.slane %v2014, 4
      %v2017 = vshll.u32 %v1921, 16
      %v2019 = vrot.slane %v2017, 5
      %v2020 = vor.u32 %v2016, %v2019
      %v2021 = vrot.slane %v2020, 4
      %v2023 = vshll.u32 %v1922, 16
      %v2025 = vrot.slane %v2023, 5
      %v2026 = vsel %vm1093, %v2021, %v2025
      %v2027 = vshrl.u32 %v1922, 16
      %v2029 = vrot.slane %v2027, 4
      %v2030 = vor.u32 %v2029, %v2025
      %v2031 = vrot.slane %v2030, 4
      %v2033 = vshll.u32 %v1951, 16
      %v2035 = vrot.slane %v2033, 5
      %v2036 = vsel %vm1093, %v2031, %v2035
      %v2038 = vshrl.u32 %v1923, 16
      %v2040 = vrot.slane %v2038, 4
      %v2041 = vshll.u32 %v1923, 16
      %v2043 = vrot.slane %v2041, 5
      %v2044 = vor.u32 %v2040, %v2043
      %v2045 = vrot.slane %v2044, 4
      %v2047 = vshll.u32 %v1924, 16
      %v2049 = vrot.slane %v2047, 5
      %v2050 = vsel %vm1093, %v2045, %v2049
      %v2051 = vshrl.u32 %v1924, 16
      %v2053 = vrot.slane %v2051, 4
      %v2054 = vor.u32 %v2053, %v2049
      %v2055 = vrot.slane %v2054, 4
      %v2057 = vshll.u32 %v1952, 16
      %v2059 = vrot.slane %v2057, 5
      %v2060 = vsel %vm1093, %v2055, %v2059
      %v2062 = vshrl.u32 %v1925, 16
      %v2064 = vrot.slane %v2062, 4
      %v2065 = vshll.u32 %v1925, 16
      %v2067 = vrot.slane %v2065, 5
      %v2068 = vor.u32 %v2064, %v2067
      %v2069 = vrot.slane %v2068, 4
      %v2071 = vshll.u32 %v1926, 16
      %v2073 = vrot.slane %v2071, 5
      %v2074 = vsel %vm1093, %v2069, %v2073
      %v2075 = vshrl.u32 %v1926, 16
      %v2077 = vrot.slane %v2075, 4
      %v2078 = vor.u32 %v2077, %v2073
      %v2079 = vrot.slane %v2078, 4
      %v2081 = vshll.u32 %v1953, 16
      %v2083 = vrot.slane %v2081, 5
      %v2084 = vsel %vm1093, %v2079, %v2083
      %v2086 = vshrl.u32 %v1927, 16
      %v2088 = vrot.slane %v2086, 4
      %v2089 = vshll.u32 %v1927, 16
      %v2091 = vrot.slane %v2089, 5
      %v2092 = vor.u32 %v2088, %v2091
      %v2093 = vrot.slane %v2092, 4
      %v2095 = vshll.u32 %v1928, 16
      %v2097 = vrot.slane %v2095, 5
      %v2098 = vsel %vm1093, %v2093, %v2097
      %v2099 = vshrl.u32 %v1928, 16
      %v2101 = vrot.slane %v2099, 4
      %v2102 = vor.u32 %v2101, %v2097
      %v2103 = vrot.slane %v2102, 4
      %v2105 = vshll.u32 %v1954, 16
      %v2107 = vrot.slane %v2105, 5
      %v2108 = vsel %vm1093, %v2103, %v2107
      %v2110 = vshrl.u32 %v1929, 16
      %v2112 = vrot.slane %v2110, 4
      %v2113 = vshll.u32 %v1929, 16
      %v2115 = vrot.slane %v2113, 5
      %v2116 = vor.u32 %v2112, %v2115
      %v2117 = vrot.slane %v2116, 4
      %v2119 = vshll.u32 %v1930, 16
      %v2121 = vrot.slane %v2119, 5
      %v2122 = vsel %vm1093, %v2117, %v2121
      %v2123 = vshrl.u32 %v1930, 16
      %v2125 = vrot.slane %v2123, 4
      %v2126 = vor.u32 %v2125, %v2121
      %v2127 = vrot.slane %v2126, 4
      %v2129 = vshll.u32 %v1955, 16
      %v2131 = vrot.slane %v2129, 5
      %v2132 = vsel %vm1093, %v2127, %v2131
      %v2134 = vshrl.u32 %v1931, 16
      %v2136 = vrot.slane %v2134, 4
      %v2137 = vshll.u32 %v1931, 16
      %v2139 = vrot.slane %v2137, 5
      %v2140 = vor.u32 %v2136, %v2139
      %v2141 = vrot.slane %v2140, 4
      %v2143 = vshll.u32 %v1932, 16
      %v2145 = vrot.slane %v2143, 5
      %v2146 = vsel %vm1093, %v2141, %v2145
      %v2147 = vshrl.u32 %v1932, 16
      %v2149 = vrot.slane %v2147, 4
      %v2150 = vor.u32 %v2149, %v2145
      %v2151 = vrot.slane %v2150, 4
      %v2153 = vshll.u32 %v1956, 16
      %v2155 = vrot.slane %v2153, 5
      %v2156 = vsel %vm1093, %v2151, %v2155
      %v2158 = vshrl.u32 %v1933, 16
      %v2160 = vrot.slane %v2158, 4
      %v2161 = vshll.u32 %v1933, 16
      %v2163 = vrot.slane %v2161, 5
      %v2164 = vor.u32 %v2160, %v2163
      %v2165 = vrot.slane %v2164, 4
      %v2167 = vshll.u32 %v1934, 16
      %v2169 = vrot.slane %v2167, 5
      %v2170 = vsel %vm1093, %v2165, %v2169
      %v2171 = vshrl.u32 %v1934, 16
      %v2173 = vrot.slane %v2171, 4
      %v2174 = vor.u32 %v2173, %v2169
      %v2175 = vrot.slane %v2174, 4
      %v2177 = vshll.u32 %v1957, 16
      %v2179 = vrot.slane %v2177, 5
      %v2180 = vsel %vm1093, %v2175, %v2179
      %v2182 = vshrl.u32 %v1935, 16
      %v2184 = vrot.slane %v2182, 4
      %v2185 = vshll.u32 %v1935, 16
      %v2187 = vrot.slane %v2185, 5
      %v2188 = vor.u32 %v2184, %v2187
      %v2189 = vrot.slane %v2188, 4
      %v2191 = vshll.u32 %v1936, 16
      %v2193 = vrot.slane %v2191, 5
      %v2194 = vsel %vm1093, %v2189, %v2193
      %v2195 = vshrl.u32 %v1936, 16
      %v2197 = vrot.slane %v2195, 4
      %v2198 = vor.u32 %v2197, %v2193
      %v2199 = vrot.slane %v2198, 4
      %v2201 = vshll.u32 %v1958, 16
      %v2203 = vrot.slane %v2201, 5
      %v2204 = vsel %vm1093, %v2199, %v2203
      %v2206 = vshrl.u32 %v1937, 16
      %v2208 = vrot.slane %v2206, 4
      %v2209 = vshll.u32 %v1937, 16
      %v2211 = vrot.slane %v2209, 5
      %v2212 = vor.u32 %v2208, %v2211
      %v2213 = vrot.slane %v2212, 4
      %v2215 = vshll.u32 %v1938, 16
      %v2217 = vrot.slane %v2215, 5
      %v2218 = vsel %vm1093, %v2213, %v2217
      %v2219 = vshrl.u32 %v1938, 16
      %v2221 = vrot.slane %v2219, 4
      %v2222 = vor.u32 %v2221, %v2217
      %v2223 = vrot.slane %v2222, 4
      %v2225 = vshll.u32 %v1959, 16
      %v2227 = vrot.slane %v2225, 5
      %v2228 = vsel %vm1093, %v2223, %v2227
      %v2230 = vshrl.u32 %v1939, 16
      %v2232 = vrot.slane %v2230, 4
      %v2233 = vshll.u32 %v1939, 16
      %v2235 = vrot.slane %v2233, 5
      %v2236 = vor.u32 %v2232, %v2235
      %v2237 = vrot.slane %v2236, 4
      %v2239 = vshll.u32 %v1940, 16
      %v2241 = vrot.slane %v2239, 5
      %v2242 = vsel %vm1093, %v2237, %v2241
      %v2243 = vshrl.u32 %v1940, 16
      %v2245 = vrot.slane %v2243, 4
      %v2246 = vor.u32 %v2245, %v2241
      %v2247 = vrot.slane %v2246, 4
      %v2249 = vshll.u32 %v1960, 16
      %v2251 = vrot.slane %v2249, 5
      %v2252 = vsel %vm1093, %v2247, %v2251
      %v2254 = vshrl.u32 %v1941, 16
      %v2256 = vrot.slane %v2254, 4
      %v2257 = vshll.u32 %v1941, 16
      %v2259 = vrot.slane %v2257, 5
      %v2260 = vor.u32 %v2256, %v2259
      %v2261 = vrot.slane %v2260, 4
      %v2263 = vshll.u32 %v1942, 16
      %v2265 = vrot.slane %v2263, 5
      %v2266 = vsel %vm1093, %v2261, %v2265
      %v2267 = vshrl.u32 %v1942, 16
      %v2269 = vrot.slane %v2267, 4
      %v2270 = vor.u32 %v2269, %v2265
      %v2271 = vrot.slane %v2270, 4
      %v2273 = vshll.u32 %v1961, 16
      %v2275 = vrot.slane %v2273, 5
      %v2276 = vsel %vm1093, %v2271, %v2275
      %v2278 = vshrl.u32 %v1943, 16
      %v2280 = vrot.slane %v2278, 4
      %v2281 = vshll.u32 %v1943, 16
      %v2283 = vrot.slane %v2281, 5
      %v2284 = vor.u32 %v2280, %v2283
      %v2285 = vrot.slane %v2284, 4
      %v2287 = vshll.u32 %v1944, 16
      %v2289 = vrot.slane %v2287, 5
      %v2290 = vsel %vm1093, %v2285, %v2289
      %v2291 = vshrl.u32 %v1944, 16
      %v2293 = vrot.slane %v2291, 4
      %v2294 = vor.u32 %v2293, %v2289
      %v2295 = vrot.slane %v2294, 4
      %v2297 = vshll.u32 %v1962, 16
      %v2299 = vrot.slane %v2297, 5
      %v2300 = vsel %vm1093, %v2295, %v2299
      %v2302 = vshrl.u32 %v1945, 16
      %v2304 = vrot.slane %v2302, 4
      %v2305 = vshll.u32 %v1945, 16
      %v2307 = vrot.slane %v2305, 5
      %v2308 = vor.u32 %v2304, %v2307
      %v2309 = vrot.slane %v2308, 4
      %v2311 = vshll.u32 %v1946, 16
      %v2313 = vrot.slane %v2311, 5
      %v2314 = vsel %vm1093, %v2309, %v2313
      %v2315 = vshrl.u32 %v1946, 16
      %v2317 = vrot.slane %v2315, 4
      %v2318 = vor.u32 %v2317, %v2313
      %v2319 = vrot.slane %v2318, 4
      %v2321 = vshll.u32 %v1963, 16
      %v2323 = vrot.slane %v2321, 5
      %v2324 = vsel %vm1093, %v2319, %v2323
      %v2326 = vshrl.u32 %v1947, 16
      %v2328 = vrot.slane %v2326, 4
      %v2329 = vshll.u32 %v1947, 16
      %v2331 = vrot.slane %v2329, 5
      %v2332 = vor.u32 %v2328, %v2331
      %v2333 = vrot.slane %v2332, 4
      %v2335 = vshll.u32 %v1948, 16
      %v2337 = vrot.slane %v2335, 5
      %v2338 = vsel %vm1093, %v2333, %v2337
      %v2339 = vshrl.u32 %v1948, 16
      %v2341 = vrot.slane %v2339, 4
      %v2342 = vor.u32 %v2341, %v2337
      %v2343 = vrot.slane %v2342, 4
      %v2345 = vshll.u32 %v1964, 16
      %v2347 = vrot.slane %v2345, 5
      %v2348 = vsel %vm1093, %v2343, %v2347
      %v2349 = vld [vmem:[%s1916] sm:$0xe]
      %v2350 = vld [vmem:[%s1916 + $0xc] sm:$0xe]
      %v2351 = vld [vmem:[%s1916 + $0x18] sm:$0xe]
      %v2352 = vld [vmem:[%s1916 + $0x24] sm:$0xe]
      %v2353 = vld [vmem:[%s1916 + $0x30] sm:$0xe]
      %v2354 = vld [vmem:[%s1916 + $0x3c] sm:$0xe]
      %v2355 = vld [vmem:[%s1916 + $0x48] sm:$0xe]
      %v2356 = vld [vmem:[%s1916 + $0x54] sm:$0xe]
      %v2357 = vld [vmem:[%s1916 + $0x60] sm:$0xe]
      %v2358 = vld [vmem:[%s1916 + $0x6c] sm:$0xe]
      %v2359 = vld [vmem:[%s1916 + $0x78] sm:$0xe]
      %v2360 = vld [vmem:[%s1916 + $0x84] sm:$0xe]
      %v2361 = vld [vmem:[%s1916 + $0x90] sm:$0xe]
      %v2362 = vld [vmem:[%s1916 + $0x9c] sm:$0xe]
      %v2363 = vld [vmem:[%s1916 + $0xa8] sm:$0xe]
      %v2364 = vld [vmem:[%s1916 + $0xb4] sm:$0xe]
      %v2413 = vrot.slane %v2349, 5
      %v2414 = vrot.slane %v2413, 4
      %v2415 = vrot.slane %v1918, 5
      %v2416 = vsel %vm1544, %v2414, %v2415
      %v2417 = vrot.slane %v2415, 4
      %v2418 = vrot.slane %v1949, 5
      %v2419 = vsel %vm1544, %v2417, %v2418
      %v2420 = vrot.slane %v2350, 5
      %v2421 = vrot.slane %v2420, 4
      %v2422 = vrot.slane %v1920, 5
      %v2423 = vsel %vm1544, %v2421, %v2422
      %v2424 = vrot.slane %v2422, 4
      %v2425 = vrot.slane %v1950, 5
      %v2426 = vsel %vm1544, %v2424, %v2425
      %v2427 = vrot.slane %v2351, 5
      %v2428 = vrot.slane %v2427, 4
      %v2429 = vrot.slane %v1922, 5
      %v2430 = vsel %vm1544, %v2428, %v2429
      %v2431 = vrot.slane %v2429, 4
      %v2432 = vrot.slane %v1951, 5
      %v2433 = vsel %vm1544, %v2431, %v2432
      %v2434 = vrot.slane %v2352, 5
      %v2435 = vrot.slane %v2434, 4
      %v2436 = vrot.slane %v1924, 5
      %v2437 = vsel %vm1544, %v2435, %v2436
      %v2438 = vrot.slane %v2436, 4
      %v2439 = vrot.slane %v1952, 5
      %v2440 = vsel %vm1544, %v2438, %v2439
      %v2441 = vrot.slane %v2353, 5
      %v2442 = vrot.slane %v2441, 4
      %v2443 = vrot.slane %v1926, 5
      %v2444 = vsel %vm1544, %v2442, %v2443
      %v2445 = vrot.slane %v2443, 4
      %v2446 = vrot.slane %v1953, 5
      %v2447 = vsel %vm1544, %v2445, %v2446
      %v2448 = vrot.slane %v2354, 5
      %v2449 = vrot.slane %v2448, 4
      %v2450 = vrot.slane %v1928, 5
      %v2451 = vsel %vm1544, %v2449, %v2450
      %v2452 = vrot.slane %v2450, 4
      %v2453 = vrot.slane %v1954, 5
      %v2454 = vsel %vm1544, %v2452, %v2453
      %v2455 = vrot.slane %v2355, 5
      %v2456 = vrot.slane %v2455, 4
      %v2457 = vrot.slane %v1930, 5
      %v2458 = vsel %vm1544, %v2456, %v2457
      %v2459 = vrot.slane %v2457, 4
      %v2460 = vrot.slane %v1955, 5
      %v2461 = vsel %vm1544, %v2459, %v2460
      %v2462 = vrot.slane %v2356, 5
      %v2463 = vrot.slane %v2462, 4
      %v2464 = vrot.slane %v1932, 5
      %v2465 = vsel %vm1544, %v2463, %v2464
      %v2466 = vrot.slane %v2464, 4
      %v2467 = vrot.slane %v1956, 5
      %v2468 = vsel %vm1544, %v2466, %v2467
      %v2469 = vrot.slane %v2357, 5
      %v2470 = vrot.slane %v2469, 4
      %v2471 = vrot.slane %v1934, 5
      %v2472 = vsel %vm1544, %v2470, %v2471
      %v2473 = vrot.slane %v2471, 4
      %v2474 = vrot.slane %v1957, 5
      %v2475 = vsel %vm1544, %v2473, %v2474
      %v2476 = vrot.slane %v2358, 5
      %v2477 = vrot.slane %v2476, 4
      %v2478 = vrot.slane %v1936, 5
      %v2479 = vsel %vm1544, %v2477, %v2478
      %v2480 = vrot.slane %v2478, 4
      %v2481 = vrot.slane %v1958, 5
      %v2482 = vsel %vm1544, %v2480, %v2481
      %v2483 = vrot.slane %v2359, 5
      %v2484 = vrot.slane %v2483, 4
      %v2485 = vrot.slane %v1938, 5
      %v2486 = vsel %vm1544, %v2484, %v2485
      %v2487 = vrot.slane %v2485, 4
      %v2488 = vrot.slane %v1959, 5
      %v2489 = vsel %vm1544, %v2487, %v2488
      %v2490 = vrot.slane %v2360, 5
      %v2491 = vrot.slane %v2490, 4
      %v2492 = vrot.slane %v1940, 5
      %v2493 = vsel %vm1544, %v2491, %v2492
      %v2494 = vrot.slane %v2492, 4
      %v2495 = vrot.slane %v1960, 5
      %v2496 = vsel %vm1544, %v2494, %v2495
      %v2497 = vrot.slane %v2361, 5
      %v2498 = vrot.slane %v2497, 4
      %v2499 = vrot.slane %v1942, 5
      %v2500 = vsel %vm1544, %v2498, %v2499
      %v2501 = vrot.slane %v2499, 4
      %v2502 = vrot.slane %v1961, 5
      %v2503 = vsel %vm1544, %v2501, %v2502
      %v2504 = vrot.slane %v2362, 5
      %v2505 = vrot.slane %v2504, 4
      %v2506 = vrot.slane %v1944, 5
      %v2507 = vsel %vm1544, %v2505, %v2506
      %v2508 = vrot.slane %v2506, 4
      %v2509 = vrot.slane %v1962, 5
      %v2510 = vsel %vm1544, %v2508, %v2509
      %v2511 = vrot.slane %v2363, 5
      %v2512 = vrot.slane %v2511, 4
      %v2513 = vrot.slane %v1946, 5
      %v2514 = vsel %vm1544, %v2512, %v2513
      %v2515 = vrot.slane %v2513, 4
      %v2516 = vrot.slane %v1963, 5
      %v2517 = vsel %vm1544, %v2515, %v2516
      %v2518 = vrot.slane %v2364, 5
      %v2519 = vrot.slane %v2518, 4
      %v2520 = vrot.slane %v1948, 5
      %v2521 = vsel %vm1544, %v2519, %v2520
      %v2522 = vrot.slane %v2520, 4
      %v2523 = vrot.slane %v1964, 5
      %v2524 = vsel %vm1544, %v2522, %v2523
      %v2541 = vunpack.c.l.b16 %v1917
      %v2542 = vunpack.c.l.b16 %v1918
      %v2543 = vunpack.c.l.b16 %v1919
      %v2544 = vunpack.c.l.b16 %v1920
      %v2545 = vunpack.c.l.b16 %v1921
      %v2546 = vunpack.c.l.b16 %v1922
      %v2547 = vunpack.c.l.b16 %v1923
      %v2548 = vunpack.c.l.b16 %v1924
      %v2549 = vunpack.c.l.b16 %v1925
      %v2550 = vunpack.c.l.b16 %v1926
      %v2551 = vunpack.c.l.b16 %v1927
      %v2552 = vunpack.c.l.b16 %v1928
      %v2553 = vunpack.c.l.b16 %v1929
      %v2554 = vunpack.c.l.b16 %v1930
      %v2555 = vunpack.c.l.b16 %v1931
      %v2556 = vunpack.c.l.b16 %v1932
      %v2557 = vunpack.c.l.b16 %v1933
      %v2558 = vunpack.c.l.b16 %v1934
      %v2559 = vunpack.c.l.b16 %v1935
      %v2560 = vunpack.c.l.b16 %v1936
      %v2561 = vunpack.c.l.b16 %v1937
      %v2562 = vunpack.c.l.b16 %v1938
      %v2563 = vunpack.c.l.b16 %v1939
      %v2564 = vunpack.c.l.b16 %v1940
      %v2565 = vunpack.c.l.b16 %v1941
      %v2566 = vunpack.c.l.b16 %v1942
      %v2567 = vunpack.c.l.b16 %v1943
      %v2568 = vunpack.c.l.b16 %v1944
      %v2569 = vunpack.c.l.b16 %v1945
      %v2570 = vunpack.c.l.b16 %v1946
      %v2571 = vunpack.c.l.b16 %v1947
      %v2572 = vunpack.c.l.b16 %v1948
      %v2573 = vpack.c.b16 %v2542, %v2541
      %v2574 = vpack.c.b16 %v2544, %v2543
      %v2575 = vpack.c.b16 %v2546, %v2545
      %v2576 = vpack.c.b16 %v2548, %v2547
      %v2577 = vpack.c.b16 %v2550, %v2549
      %v2578 = vpack.c.b16 %v2552, %v2551
      %v2579 = vpack.c.b16 %v2554, %v2553
      %v2580 = vpack.c.b16 %v2556, %v2555
      %v2581 = vpack.c.b16 %v2558, %v2557
      %v2582 = vpack.c.b16 %v2560, %v2559
      %v2583 = vpack.c.b16 %v2562, %v2561
      %v2584 = vpack.c.b16 %v2564, %v2563
      %v2585 = vpack.c.b16 %v2566, %v2565
      %v2586 = vpack.c.b16 %v2568, %v2567
      %v2587 = vpack.c.b16 %v2570, %v2569
      %v2588 = vpack.c.b16 %v2572, %v2571
      %v2605 = vunpack.c.l.b16 %v1978
      %v2606 = vunpack.c.l.b16 %v1988
      %v2607 = vunpack.c.l.b16 %v2002
      %v2608 = vunpack.c.l.b16 %v2012
      %v2609 = vunpack.c.l.b16 %v2026
      %v2610 = vunpack.c.l.b16 %v2036
      %v2611 = vunpack.c.l.b16 %v2050
      %v2612 = vunpack.c.l.b16 %v2060
      %v2613 = vunpack.c.l.b16 %v2074
      %v2614 = vunpack.c.l.b16 %v2084
      %v2615 = vunpack.c.l.b16 %v2098
      %v2616 = vunpack.c.l.b16 %v2108
      %v2617 = vunpack.c.l.b16 %v2122
      %v2618 = vunpack.c.l.b16 %v2132
      %v2619 = vunpack.c.l.b16 %v2146
      %v2620 = vunpack.c.l.b16 %v2156
      %v2621 = vunpack.c.l.b16 %v2170
      %v2622 = vunpack.c.l.b16 %v2180
      %v2623 = vunpack.c.l.b16 %v2194
      %v2624 = vunpack.c.l.b16 %v2204
      %v2625 = vunpack.c.l.b16 %v2218
      %v2626 = vunpack.c.l.b16 %v2228
      %v2627 = vunpack.c.l.b16 %v2242
      %v2628 = vunpack.c.l.b16 %v2252
      %v2629 = vunpack.c.l.b16 %v2266
      %v2630 = vunpack.c.l.b16 %v2276
      %v2631 = vunpack.c.l.b16 %v2290
      %v2632 = vunpack.c.l.b16 %v2300
      %v2633 = vunpack.c.l.b16 %v2314
      %v2634 = vunpack.c.l.b16 %v2324
      %v2635 = vunpack.c.l.b16 %v2338
      %v2636 = vunpack.c.l.b16 %v2348
      %v2637 = vpack.c.b16 %v2606, %v2605
      %v2638 = vpack.c.b16 %v2608, %v2607
      %v2639 = vpack.c.b16 %v2610, %v2609
      %v2640 = vpack.c.b16 %v2612, %v2611
      %v2641 = vpack.c.b16 %v2614, %v2613
      %v2642 = vpack.c.b16 %v2616, %v2615
      %v2643 = vpack.c.b16 %v2618, %v2617
      %v2644 = vpack.c.b16 %v2620, %v2619
      %v2645 = vpack.c.b16 %v2622, %v2621
      %v2646 = vpack.c.b16 %v2624, %v2623
      %v2647 = vpack.c.b16 %v2626, %v2625
      %v2648 = vpack.c.b16 %v2628, %v2627
      %v2649 = vpack.c.b16 %v2630, %v2629
      %v2650 = vpack.c.b16 %v2632, %v2631
      %v2651 = vpack.c.b16 %v2634, %v2633
      %v2652 = vpack.c.b16 %v2636, %v2635
      %v2669 = vunpack.c.l.b16 %v2416
      %v2670 = vunpack.c.l.b16 %v2419
      %v2671 = vunpack.c.l.b16 %v2423
      %v2672 = vunpack.c.l.b16 %v2426
      %v2673 = vunpack.c.l.b16 %v2430
      %v2674 = vunpack.c.l.b16 %v2433
      %v2675 = vunpack.c.l.b16 %v2437
      %v2676 = vunpack.c.l.b16 %v2440
      %v2677 = vunpack.c.l.b16 %v2444
      %v2678 = vunpack.c.l.b16 %v2447
      %v2679 = vunpack.c.l.b16 %v2451
      %v2680 = vunpack.c.l.b16 %v2454
      %v2681 = vunpack.c.l.b16 %v2458
      %v2682 = vunpack.c.l.b16 %v2461
      %v2683 = vunpack.c.l.b16 %v2465
      %v2684 = vunpack.c.l.b16 %v2468
      %v2685 = vunpack.c.l.b16 %v2472
      %v2686 = vunpack.c.l.b16 %v2475
      %v2687 = vunpack.c.l.b16 %v2479
      %v2688 = vunpack.c.l.b16 %v2482
      %v2689 = vunpack.c.l.b16 %v2486
      %v2690 = vunpack.c.l.b16 %v2489
      %v2691 = vunpack.c.l.b16 %v2493
      %v2692 = vunpack.c.l.b16 %v2496
      %v2693 = vunpack.c.l.b16 %v2500
      %v2694 = vunpack.c.l.b16 %v2503
      %v2695 = vunpack.c.l.b16 %v2507
      %v2696 = vunpack.c.l.b16 %v2510
      %v2697 = vunpack.c.l.b16 %v2514
      %v2698 = vunpack.c.l.b16 %v2517
      %v2699 = vunpack.c.l.b16 %v2521
      %v2700 = vunpack.c.l.b16 %v2524
      %v2701 = vpack.c.b16 %v2670, %v2669
      %v2702 = vpack.c.b16 %v2672, %v2671
      %v2703 = vpack.c.b16 %v2674, %v2673
      %v2704 = vpack.c.b16 %v2676, %v2675
      %v2705 = vpack.c.b16 %v2678, %v2677
      %v2706 = vpack.c.b16 %v2680, %v2679
      %v2707 = vpack.c.b16 %v2682, %v2681
      %v2708 = vpack.c.b16 %v2684, %v2683
      %v2709 = vpack.c.b16 %v2686, %v2685
      %v2710 = vpack.c.b16 %v2688, %v2687
      %v2711 = vpack.c.b16 %v2690, %v2689
      %v2712 = vpack.c.b16 %v2692, %v2691
      %v2713 = vpack.c.b16 %v2694, %v2693
      %v2714 = vpack.c.b16 %v2696, %v2695
      %v2715 = vpack.c.b16 %v2698, %v2697
      %v2716 = vpack.c.b16 %v2700, %v2699
      %s2733 = scalar_lea.vmem %s3, 192
      %v2734 = vld [vmem:[%s2733] sm:$0xf]
      %v2735 = vld [vmem:[%s2733 + $0x4] sm:$0xf]
      %v2736 = vld [vmem:[%s2733 + $0x8] sm:$0xf]
      %v2737 = vld [vmem:[%s2733 + $0xc] sm:$0xf]
      %v2738 = vld [vmem:[%s2733 + $0x10] sm:$0xf]
      %v2739 = vld [vmem:[%s2733 + $0x14] sm:$0xf]
      %v2740 = vld [vmem:[%s2733 + $0x18] sm:$0xf]
      %v2741 = vld [vmem:[%s2733 + $0x1c] sm:$0xf]
      %v2742 = vld [vmem:[%s2733 + $0x20] sm:$0xf]
      %v2743 = vld [vmem:[%s2733 + $0x24] sm:$0xf]
      %v2744 = vld [vmem:[%s2733 + $0x28] sm:$0xf]
      %v2745 = vld [vmem:[%s2733 + $0x2c] sm:$0xf]
      %v2746 = vld [vmem:[%s2733 + $0x30] sm:$0xf]
      %v2747 = vld [vmem:[%s2733 + $0x34] sm:$0xf]
      %v2748 = vld [vmem:[%s2733 + $0x38] sm:$0xf]
      %v2749 = vld [vmem:[%s2733 + $0x3c] sm:$0xf]
      %v2750 = vld [vmem:[%s2733 + $0x40] sm:$0xf]
      %v2751 = vld [vmem:[%s2733 + $0x44] sm:$0xf]
      %v2752 = vld [vmem:[%s2733 + $0x48] sm:$0xf]
      %v2753 = vld [vmem:[%s2733 + $0x4c] sm:$0xf]
      %v2754 = vld [vmem:[%s2733 + $0x50] sm:$0xf]
      %v2755 = vld [vmem:[%s2733 + $0x54] sm:$0xf]
      %v2756 = vld [vmem:[%s2733 + $0x58] sm:$0xf]
      %v2757 = vld [vmem:[%s2733 + $0x5c] sm:$0xf]
      %v2758 = vld [vmem:[%s2733 + $0x60] sm:$0xf]
      %v2759 = vld [vmem:[%s2733 + $0x64] sm:$0xf]
      %v2760 = vld [vmem:[%s2733 + $0x68] sm:$0xf]
      %v2761 = vld [vmem:[%s2733 + $0x6c] sm:$0xf]
      %v2762 = vld [vmem:[%s2733 + $0x70] sm:$0xf]
      %v2763 = vld [vmem:[%s2733 + $0x74] sm:$0xf]
      %v2764 = vld [vmem:[%s2733 + $0x78] sm:$0xf]
      %v2765 = vld [vmem:[%s2733 + $0x7c] sm:$0xf]
      %v2766 = vld [vmem:[%s2733 + $0x80] sm:$0xf]
      %v2767 = vld [vmem:[%s2733 + $0x84] sm:$0xf]
      %v2768 = vld [vmem:[%s2733 + $0x88] sm:$0xf]
      %v2769 = vld [vmem:[%s2733 + $0x8c] sm:$0xf]
      %v2770 = vld [vmem:[%s2733 + $0x90] sm:$0xf]
      %v2771 = vld [vmem:[%s2733 + $0x94] sm:$0xf]
      %v2772 = vld [vmem:[%s2733 + $0x98] sm:$0xf]
      %v2773 = vld [vmem:[%s2733 + $0x9c] sm:$0xf]
      %v2774 = vld [vmem:[%s2733 + $0xa0] sm:$0xf]
      %v2775 = vld [vmem:[%s2733 + $0xa4] sm:$0xf]
      %v2776 = vld [vmem:[%s2733 + $0xa8] sm:$0xf]
      %v2777 = vld [vmem:[%s2733 + $0xac] sm:$0xf]
      %v2778 = vld [vmem:[%s2733 + $0xb0] sm:$0xf]
      %v2779 = vld [vmem:[%s2733 + $0xb4] sm:$0xf]
      %v2780 = vld [vmem:[%s2733 + $0xb8] sm:$0xf]
      %v2781 = vld [vmem:[%s2733 + $0xbc] sm:$0xf]
      %v2830 = vunpack.c.l.b16 %v2734
      %v2831 = vunpack.c.l.b16 %v2735
      %v2832 = vunpack.c.l.b16 %v2736
      %v2833 = vunpack.c.l.b16 %v2737
      %v2834 = vunpack.c.l.b16 %v2738
      %v2835 = vunpack.c.l.b16 %v2739
      %v2836 = vunpack.c.l.b16 %v2740
      %v2837 = vunpack.c.l.b16 %v2741
      %v2838 = vunpack.c.l.b16 %v2742
      %v2839 = vunpack.c.l.b16 %v2743
      %v2840 = vunpack.c.l.b16 %v2744
      %v2841 = vunpack.c.l.b16 %v2745
      %v2842 = vunpack.c.l.b16 %v2746
      %v2843 = vunpack.c.l.b16 %v2747
      %v2844 = vunpack.c.l.b16 %v2748
      %v2845 = vunpack.c.l.b16 %v2749
      %v2846 = vunpack.c.l.b16 %v2750
      %v2847 = vunpack.c.l.b16 %v2751
      %v2848 = vunpack.c.l.b16 %v2752
      %v2849 = vunpack.c.l.b16 %v2753
      %v2850 = vunpack.c.l.b16 %v2754
      %v2851 = vunpack.c.l.b16 %v2755
      %v2852 = vunpack.c.l.b16 %v2756
      %v2853 = vunpack.c.l.b16 %v2757
      %v2854 = vunpack.c.l.b16 %v2758
      %v2855 = vunpack.c.l.b16 %v2759
      %v2856 = vunpack.c.l.b16 %v2760
      %v2857 = vunpack.c.l.b16 %v2761
      %v2858 = vunpack.c.l.b16 %v2762
      %v2859 = vunpack.c.l.b16 %v2763
      %v2860 = vunpack.c.l.b16 %v2764
      %v2861 = vunpack.c.l.b16 %v2765
      %v2862 = vunpack.c.l.b16 %v2766
      %v2863 = vunpack.c.l.b16 %v2767
      %v2864 = vunpack.c.l.b16 %v2768
      %v2865 = vunpack.c.l.b16 %v2769
      %v2866 = vunpack.c.l.b16 %v2770
      %v2867 = vunpack.c.l.b16 %v2771
      %v2868 = vunpack.c.l.b16 %v2772
      %v2869 = vunpack.c.l.b16 %v2773
      %v2870 = vunpack.c.l.b16 %v2774
      %v2871 = vunpack.c.l.b16 %v2775
      %v2872 = vunpack.c.l.b16 %v2776
      %v2873 = vunpack.c.l.b16 %v2777
      %v2874 = vunpack.c.l.b16 %v2778
      %v2875 = vunpack.c.l.b16 %v2779
      %v2876 = vunpack.c.l.b16 %v2780
      %v2877 = vunpack.c.l.b16 %v2781
      %v2878 = vpack.c.b16 %v2831, %v2830
      %v2879 = vpack.c.b16 %v2833, %v2832
      %v2880 = vpack.c.b16 %v2835, %v2834
      %v2881 = vpack.c.b16 %v2837, %v2836
      %v2882 = vpack.c.b16 %v2839, %v2838
      %v2883 = vpack.c.b16 %v2841, %v2840
      %v2884 = vpack.c.b16 %v2843, %v2842
      %v2885 = vpack.c.b16 %v2845, %v2844
      %v2886 = vpack.c.b16 %v2847, %v2846
      %v2887 = vpack.c.b16 %v2849, %v2848
      %v2888 = vpack.c.b16 %v2851, %v2850
      %v2889 = vpack.c.b16 %v2853, %v2852
      %v2890 = vpack.c.b16 %v2855, %v2854
      %v2891 = vpack.c.b16 %v2857, %v2856
      %v2892 = vpack.c.b16 %v2859, %v2858
      %v2893 = vpack.c.b16 %v2861, %v2860
      %v2894 = vpack.c.b16 %v2863, %v2862
      %v2895 = vpack.c.b16 %v2865, %v2864
      %v2896 = vpack.c.b16 %v2867, %v2866
      %v2897 = vpack.c.b16 %v2869, %v2868
      %v2898 = vpack.c.b16 %v2871, %v2870
      %v2899 = vpack.c.b16 %v2873, %v2872
      %v2900 = vpack.c.b16 %v2875, %v2874
      %v2901 = vpack.c.b16 %v2877, %v2876
      %2926 = vmatprep.subr.bf16.mxu0 0
      %2927 = vmatpush1.bf16.msra.mxu0 %v2878
      %2928 = vmatprep.subr.bf16.mxu0 0
      %2929 = vmatpush1.bf16.msra.mxu0 %v2879
      %2930 = vmatprep.subr.bf16.mxu0 0
      %2931 = vmatpush1.bf16.msra.mxu0 %v2880
      %2932 = vmatprep.subr.bf16.mxu0 0
      %2933 = vmatpush1.bf16.msra.mxu0 %v2881
      %2934 = vmatprep.subr.bf16.mxu0 0
      %2935 = vmatpush1.bf16.msra.mxu0 %v2882
      %2936 = vmatprep.subr.bf16.mxu0 0
      %2937 = vmatpush1.bf16.msra.mxu0 %v2883
      %2938 = vmatprep.subr.bf16.mxu0 0
      %2939 = vmatpush1.bf16.msra.mxu0 %v2884
      %2940 = vmatprep.subr.bf16.mxu0 0
      %2941 = vmatpush1.bf16.msra.mxu0 %v2885
      %2942 = vmatprep.subr.bf16.mxu0 0
      %2943 = vmatpush1.bf16.msra.mxu0 %v2886
      %2944 = vmatprep.subr.bf16.mxu0 0
      %2945 = vmatpush1.bf16.msra.mxu0 %v2887
      %2946 = vmatprep.subr.bf16.mxu0 0
      %2947 = vmatpush1.bf16.msra.mxu0 %v2888
      %2948 = vmatprep.subr.bf16.mxu0 0
      %2949 = vmatpush1.bf16.msra.mxu0 %v2889
      %2950 = vmatprep.subr.bf16.mxu0 0
      %2951 = vmatpush1.bf16.msra.mxu0 %v2890
      %2952 = vmatprep.subr.bf16.mxu0 0
      %2953 = vmatpush1.bf16.msra.mxu0 %v2891
      %2954 = vmatprep.subr.bf16.mxu0 0
      %2955 = vmatpush1.bf16.msra.mxu0 %v2892
      %2956 = vmatprep.subr.bf16.mxu0 0
      %2957 = vmatpush1.bf16.msra.mxu0 %v2893
      %2958 = vmatprep.mubr.bf16.mxu0 %v2637
      %2959 = vmatmul.mubr.bf16.gmra.mrb[0].mxu0 %v2573
      %v2960 = vpop.f32.mrb[0].mxu0
      %v2961 = vadd.f32 0.0, %v2960
      %v2962 = vpop.f32.mrb[0].mxu0
      %v2963 = vpop.f32.mrb[0].mxu0
      %v2964 = vadd.f32 0.0, %v2963
      %v2965 = vpop.f32.mrb[0].mxu0
      %2966 = vmatprep.mubr.bf16.mxu0 %v2638
      %2967 = vmatmul.mubr.bf16.gmra.mrb[0].mxu0 %v2574
      %v2968 = vpop.f32.mrb[0].mxu0
      %v2969 = vadd.f32 0.0, %v2968
      %v2970 = vpop.f32.mrb[0].mxu0
      %v2971 = vpop.f32.mrb[0].mxu0
      %v2972 = vadd.f32 0.0, %v2971
      %v2973 = vpop.f32.mrb[0].mxu0
      %2974 = vmatprep.mubr.bf16.mxu0 %v2639
      %2975 = vmatmul.mubr.bf16.gmra.mrb[0].mxu0 %v2575
      %v2976 = vpop.f32.mrb[0].mxu0
      %v2977 = vadd.f32 0.0, %v2976
      %v2978 = vpop.f32.mrb[0].mxu0
      %v2979 = vpop.f32.mrb[0].mxu0
      %v2980 = vadd.f32 0.0, %v2979
      %v2981 = vpop.f32.mrb[0].mxu0
      %2982 = vmatprep.mubr.bf16.mxu0 %v2640
      %2983 = vmatmul.mubr.bf16.gmra.mrb[0].mxu0 %v2576
      %v2984 = vpop.f32.mrb[0].mxu0
      %v2985 = vadd.f32 0.0, %v2984
      %v2986 = vpop.f32.mrb[0].mxu0
      %v2987 = vpop.f32.mrb[0].mxu0
      %v2988 = vadd.f32 0.0, %v2987
      %v2989 = vpop.f32.mrb[0].mxu0
      %2990 = vmatprep.mubr.bf16.mxu0 %v2641
      %2991 = vmatmul.mubr.bf16.gmra.mrb[0].mxu0 %v2577
      %v2992 = vpop.f32.mrb[0].mxu0
      %v2993 = vadd.f32 0.0, %v2992
      %v2994 = vpop.f32.mrb[0].mxu0
      %v2995 = vpop.f32.mrb[0].mxu0
      %v2996 = vadd.f32 0.0, %v2995
      %v2997 = vpop.f32.mrb[0].mxu0
      %2998 = vmatprep.mubr.bf16.mxu0 %v2642
      %2999 = vmatmul.mubr.bf16.gmra.mrb[0].mxu0 %v2578
      %v3000 = vpop.f32.mrb[0].mxu0
      %v3001 = vadd.f32 0.0, %v3000
      %v3002 = vpop.f32.mrb[0].mxu0
      %v3003 = vpop.f32.mrb[0].mxu0
      %v3004 = vadd.f32 0.0, %v3003
      %v3005 = vpop.f32.mrb[0].mxu0
      %3006 = vmatprep.mubr.bf16.mxu0 %v2643
      %3007 = vmatmul.mubr.bf16.gmra.mrb[0].mxu0 %v2579
      %v3008 = vpop.f32.mrb[0].mxu0
      %v3009 = vadd.f32 0.0, %v3008
      %v3010 = vpop.f32.mrb[0].mxu0
      %v3011 = vpop.f32.mrb[0].mxu0
      %v3012 = vadd.f32 0.0, %v3011
      %v3013 = vpop.f32.mrb[0].mxu0
      %3014 = vmatprep.mubr.bf16.mxu0 %v2644
      %3015 = vmatmul.mubr.bf16.gmra.mrb[0].mxu0 %v2580
      %v3016 = vpop.f32.mrb[0].mxu0
      %v3017 = vadd.f32 0.0, %v3016
      %v3018 = vpop.f32.mrb[0].mxu0
      %v3019 = vpop.f32.mrb[0].mxu0
      %v3020 = vadd.f32 0.0, %v3019
      %v3021 = vpop.f32.mrb[0].mxu0
      %3022 = vmatprep.mubr.bf16.mxu0 %v2645
      %3023 = vmatmul.mubr.bf16.gmra.mrb[0].mxu0 %v2581
      %v3024 = vpop.f32.mrb[0].mxu0
      %v3025 = vadd.f32 0.0, %v3024
      %v3026 = vpop.f32.mrb[0].mxu0
      %v3027 = vpop.f32.mrb[0].mxu0
      %v3028 = vadd.f32 0.0, %v3027
      %v3029 = vpop.f32.mrb[0].mxu0
      %3030 = vmatprep.mubr.bf16.mxu0 %v2646
      %3031 = vmatmul.mubr.bf16.gmra.mrb[0].mxu0 %v2582
      %v3032 = vpop.f32.mrb[0].mxu0
      %v3033 = vadd.f32 0.0, %v3032
      %v3034 = vpop.f32.mrb[0].mxu0
      %v3035 = vpop.f32.mrb[0].mxu0
      %v3036 = vadd.f32 0.0, %v3035
      %v3037 = vpop.f32.mrb[0].mxu0
      %3038 = vmatprep.mubr.bf16.mxu0 %v2647
      %3039 = vmatmul.mubr.bf16.gmra.mrb[0].mxu0 %v2583
      %v3040 = vpop.f32.mrb[0].mxu0
      %v3041 = vadd.f32 0.0, %v3040
      %v3042 = vpop.f32.mrb[0].mxu0
      %v3043 = vpop.f32.mrb[0].mxu0
      %v3044 = vadd.f32 0.0, %v3043
      %v3045 = vpop.f32.mrb[0].mxu0
      %3046 = vmatprep.mubr.bf16.mxu0 %v2648
      %3047 = vmatmul.mubr.bf16.gmra.mrb[0].mxu0 %v2584
      %v3048 = vpop.f32.mrb[0].mxu0
      %v3049 = vadd.f32 0.0, %v3048
      %v3050 = vpop.f32.mrb[0].mxu0
      %v3051 = vpop.f32.mrb[0].mxu0
      %v3052 = vadd.f32 0.0, %v3051
      %v3053 = vpop.f32.mrb[0].mxu0
      %3054 = vmatprep.mubr.bf16.mxu0 %v2649
      %3055 = vmatmul.mubr.bf16.gmra.mrb[0].mxu0 %v2585
      %v3056 = vpop.f32.mrb[0].mxu0
      %v3057 = vadd.f32 0.0, %v3056
      %v3058 = vpop.f32.mrb[0].mxu0
      %v3059 = vpop.f32.mrb[0].mxu0
      %v3060 = vadd.f32 0.0, %v3059
      %v3061 = vpop.f32.mrb[0].mxu0
      %3062 = vmatprep.mubr.bf16.mxu0 %v2650
      %3063 = vmatmul.mubr.bf16.gmra.mrb[0].mxu0 %v2586
      %v3064 = vpop.f32.mrb[0].mxu0
      %v3065 = vadd.f32 0.0, %v3064
      %v3066 = vpop.f32.mrb[0].mxu0
      %v3067 = vpop.f32.mrb[0].mxu0
      %v3068 = vadd.f32 0.0, %v3067
      %v3069 = vpop.f32.mrb[0].mxu0
      %3070 = vmatprep.mubr.bf16.mxu0 %v2651
      %3071 = vmatmul.mubr.bf16.gmra.mrb[0].mxu0 %v2587
      %v3072 = vpop.f32.mrb[0].mxu0
      %v3073 = vadd.f32 0.0, %v3072
      %v3074 = vpop.f32.mrb[0].mxu0
      %v3075 = vpop.f32.mrb[0].mxu0
      %v3076 = vadd.f32 0.0, %v3075
      %v3077 = vpop.f32.mrb[0].mxu0
      %3078 = vmatprep.mubr.bf16.mxu0 %v2652
      %3079 = vmatmul.mubr.bf16.gmra.mrb[0].mxu0 %v2588
      %v3080 = vpop.f32.mrb[0].mxu0
      %v3081 = vadd.f32 0.0, %v3080
      %v3082 = vpop.f32.mrb[0].mxu0
      %v3083 = vpop.f32.mrb[0].mxu0
      %v3084 = vadd.f32 0.0, %v3083
      %v3085 = vpop.f32.mrb[0].mxu0
      %3086 = vdwg.mxu0
      %3087 = vmatprep.subr.bf16.mxu0 0
      %3088 = vmatpush1.bf16.msra.mxu0 %v2894
      %3089 = vmatprep.subr.bf16.mxu0 0
      %3090 = vmatpush1.bf16.msra.mxu0 %v2895
      %3091 = vmatprep.subr.bf16.mxu0 0
      %3092 = vmatpush1.bf16.msra.mxu0 %v2896
      %3093 = vmatprep.subr.bf16.mxu0 0
      %3094 = vmatpush1.bf16.msra.mxu0 %v2897
      %3095 = vmatprep.subr.bf16.mxu0 0
      %3096 = vmatpush1.bf16.msra.mxu0 %v2898
      %3097 = vmatprep.subr.bf16.mxu0 0
      %3098 = vmatpush1.bf16.msra.mxu0 %v2899
      %3099 = vmatprep.subr.bf16.mxu0 0
      %3100 = vmatpush1.bf16.msra.mxu0 %v2900
      %3101 = vmatprep.subr.bf16.mxu0 0
      %3102 = vmatpush1.bf16.msra.mxu0 %v2901
      %3103 = vmatprep.subr.bf16.mxu0 0
      %3104 = vmatpush1.bf16.msra.mxu0 0
      %3105 = vmatprep.subr.bf16.mxu0 0
      %3106 = vmatpush1.bf16.msra.mxu0 0
      %3107 = vmatprep.subr.bf16.mxu0 0
      %3108 = vmatpush1.bf16.msra.mxu0 0
      %3109 = vmatprep.subr.bf16.mxu0 0
      %3110 = vmatpush1.bf16.msra.mxu0 0
      %3111 = vmatprep.subr.bf16.mxu0 0
      %3112 = vmatpush1.bf16.msra.mxu0 0
      %3113 = vmatprep.subr.bf16.mxu0 0
      %3114 = vmatpush1.bf16.msra.mxu0 0
      %3115 = vmatprep.subr.bf16.mxu0 0
      %3116 = vmatpush1.bf16.msra.mxu0 0
      %3117 = vmatprep.subr.bf16.mxu0 0
      %3118 = vmatpush1.bf16.msra.mxu0 0
      %3119 = vmatprep.mubr.bf16.mxu0 0
      %3120 = vmatmul.mubr.bf16.gmra.mrb[0].mxu0 %v2701
      %v3121 = vpop.f32.mrb[0].mxu0
      %v3122 = vadd.f32 %v2961, %v3121
      %v3123 = vpop.f32.mrb[0].mxu0
      %v3124 = vpop.f32.mrb[0].mxu0
      %v3125 = vadd.f32 %v2964, %v3124
      %v3126 = vpop.f32.mrb[0].mxu0
      %3127 = vmatprep.mubr.bf16.mxu0 0
      %3128 = vmatmul.mubr.bf16.gmra.mrb[0].mxu0 %v2702
      %v3129 = vpop.f32.mrb[0].mxu0
      %v3130 = vadd.f32 %v2969, %v3129
      %v3131 = vpop.f32.mrb[0].mxu0
      %v3132 = vpop.f32.mrb[0].mxu0
      %v3133 = vadd.f32 %v2972, %v3132
      %v3134 = vpop.f32.mrb[0].mxu0
      %3135 = vmatprep.mubr.bf16.mxu0 0
      %3136 = vmatmul.mubr.bf16.gmra.mrb[0].mxu0 %v2703
      %v3137 = vpop.f32.mrb[0].mxu0
      %v3138 = vadd.f32 %v2977, %v3137
      %v3139 = vpop.f32.mrb[0].mxu0
      %v3140 = vpop.f32.mrb[0].mxu0
      %v3141 = vadd.f32 %v2980, %v3140
      %v3142 = vpop.f32.mrb[0].mxu0
      %3143 = vmatprep.mubr.bf16.mxu0 0
      %3144 = vmatmul.mubr.bf16.gmra.mrb[0].mxu0 %v2704
      %v3145 = vpop.f32.mrb[0].mxu0
      %v3146 = vadd.f32 %v2985, %v3145
      %v3147 = vpop.f32.mrb[0].mxu0
      %v3148 = vpop.f32.mrb[0].mxu0
      %v3149 = vadd.f32 %v2988, %v3148
      %v3150 = vpop.f32.mrb[0].mxu0
      %3151 = vmatprep.mubr.bf16.mxu0 0
      %3152 = vmatmul.mubr.bf16.gmra.mrb[0].mxu0 %v2705
      %v3153 = vpop.f32.mrb[0].mxu0
      %v3154 = vadd.f32 %v2993, %v3153
      %v3155 = vpop.f32.mrb[0].mxu0
      %v3156 = vpop.f32.mrb[0].mxu0
      %v3157 = vadd.f32 %v2996, %v3156
      %v3158 = vpop.f32.mrb[0].mxu0
      %3159 = vmatprep.mubr.bf16.mxu0 0
      %3160 = vmatmul.mubr.bf16.gmra.mrb[0].mxu0 %v2706
      %v3161 = vpop.f32.mrb[0].mxu0
      %v3162 = vadd.f32 %v3001, %v3161
      %v3163 = vpop.f32.mrb[0].mxu0
      %v3164 = vpop.f32.mrb[0].mxu0
      %v3165 = vadd.f32 %v3004, %v3164
      %v3166 = vpop.f32.mrb[0].mxu0
      %3167 = vmatprep.mubr.bf16.mxu0 0
      %3168 = vmatmul.mubr.bf16.gmra.mrb[0].mxu0 %v2707
      %v3169 = vpop.f32.mrb[0].mxu0
      %v3170 = vadd.f32 %v3009, %v3169
      %v3171 = vpop.f32.mrb[0].mxu0
      %v3172 = vpop.f32.mrb[0].mxu0
      %v3173 = vadd.f32 %v3012, %v3172
      %v3174 = vpop.f32.mrb[0].mxu0
      %3175 = vmatprep.mubr.bf16.mxu0 0
      %3176 = vmatmul.mubr.bf16.gmra.mrb[0].mxu0 %v2708
      %v3177 = vpop.f32.mrb[0].mxu0
      %v3178 = vadd.f32 %v3017, %v3177
      %v3179 = vpop.f32.mrb[0].mxu0
      %v3180 = vpop.f32.mrb[0].mxu0
      %v3181 = vadd.f32 %v3020, %v3180
      %v3182 = vpop.f32.mrb[0].mxu0
      %3183 = vmatprep.mubr.bf16.mxu0 0
      %3184 = vmatmul.mubr.bf16.gmra.mrb[0].mxu0 %v2709
      %v3185 = vpop.f32.mrb[0].mxu0
      %v3186 = vadd.f32 %v3025, %v3185
      %v3187 = vpop.f32.mrb[0].mxu0
      %v3188 = vpop.f32.mrb[0].mxu0
      %v3189 = vadd.f32 %v3028, %v3188
      %v3190 = vpop.f32.mrb[0].mxu0
      %3191 = vmatprep.mubr.bf16.mxu0 0
      %3192 = vmatmul.mubr.bf16.gmra.mrb[0].mxu0 %v2710
      %v3193 = vpop.f32.mrb[0].mxu0
      %v3194 = vadd.f32 %v3033, %v3193
      %v3195 = vpop.f32.mrb[0].mxu0
      %v3196 = vpop.f32.mrb[0].mxu0
      %v3197 = vadd.f32 %v3036, %v3196
      %v3198 = vpop.f32.mrb[0].mxu0
      %3199 = vmatprep.mubr.bf16.mxu0 0
      %3200 = vmatmul.mubr.bf16.gmra.mrb[0].mxu0 %v2711
      %v3201 = vpop.f32.mrb[0].mxu0
      %v3202 = vadd.f32 %v3041, %v3201
      %v3203 = vpop.f32.mrb[0].mxu0
      %v3204 = vpop.f32.mrb[0].mxu0
      %v3205 = vadd.f32 %v3044, %v3204
      %v3206 = vpop.f32.mrb[0].mxu0
      %3207 = vmatprep.mubr.bf16.mxu0 0
      %3208 = vmatmul.mubr.bf16.gmra.mrb[0].mxu0 %v2712
      %v3209 = vpop.f32.mrb[0].mxu0
      %v3210 = vadd.f32 %v3049, %v3209
      %v3211 = vpop.f32.mrb[0].mxu0
      %v3212 = vpop.f32.mrb[0].mxu0
      %v3213 = vadd.f32 %v3052, %v3212
      %v3214 = vpop.f32.mrb[0].mxu0
      %3215 = vmatprep.mubr.bf16.mxu0 0
      %3216 = vmatmul.mubr.bf16.gmra.mrb[0].mxu0 %v2713
      %v3217 = vpop.f32.mrb[0].mxu0
      %v3218 = vadd.f32 %v3057, %v3217
      %v3219 = vpop.f32.mrb[0].mxu0
      %v3220 = vpop.f32.mrb[0].mxu0
      %v3221 = vadd.f32 %v3060, %v3220
      %v3222 = vpop.f32.mrb[0].mxu0
      %3223 = vmatprep.mubr.bf16.mxu0 0
      %3224 = vmatmul.mubr.bf16.gmra.mrb[0].mxu0 %v2714
      %v3225 = vpop.f32.mrb[0].mxu0
      %v3226 = vadd.f32 %v3065, %v3225
      %v3227 = vpop.f32.mrb[0].mxu0
      %v3228 = vpop.f32.mrb[0].mxu0
      %v3229 = vadd.f32 %v3068, %v3228
      %v3230 = vpop.f32.mrb[0].mxu0
      %3231 = vmatprep.mubr.bf16.mxu0 0
      %3232 = vmatmul.mubr.bf16.gmra.mrb[0].mxu0 %v2715
      %v3233 = vpop.f32.mrb[0].mxu0
      %v3234 = vadd.f32 %v3073, %v3233
      %v3235 = vpop.f32.mrb[0].mxu0
      %v3236 = vpop.f32.mrb[0].mxu0
      %v3237 = vadd.f32 %v3076, %v3236
      %v3238 = vpop.f32.mrb[0].mxu0
      %3239 = vmatprep.mubr.bf16.mxu0 0
      %3240 = vmatmul.mubr.bf16.gmra.mrb[0].mxu0 %v2716
      %v3241 = vpop.f32.mrb[0].mxu0
      %v3242 = vadd.f32 %v3081, %v3241
      %v3243 = vpop.f32.mrb[0].mxu0
      %v3244 = vpop.f32.mrb[0].mxu0
      %v3245 = vadd.f32 %v3084, %v3244
      %v3246 = vpop.f32.mrb[0].mxu0
      %3247 = vdwg.mxu0
      %v3296 = vunpack.c.l.b16 %v1865
      %v3297 = vunpack.c.l.b16 %v1866
      %v3298 = vunpack.c.l.b16 %v1867
      %v3299 = vunpack.c.l.b16 %v1868
      %v3300 = vunpack.c.l.b16 %v1869
      %v3301 = vunpack.c.l.b16 %v1870
      %v3302 = vunpack.c.l.b16 %v1871
      %v3303 = vunpack.c.l.b16 %v1872
      %v3304 = vunpack.c.l.b16 %v1873
      %v3305 = vunpack.c.l.b16 %v1874
      %v3306 = vunpack.c.l.b16 %v1875
      %v3307 = vunpack.c.l.b16 %v1876
      %v3308 = vunpack.c.l.b16 %v1877
      %v3309 = vunpack.c.l.b16 %v1878
      %v3310 = vunpack.c.l.b16 %v1879
      %v3311 = vunpack.c.l.b16 %v1880
      %v3312 = vunpack.c.l.b16 %v1881
      %v3313 = vunpack.c.l.b16 %v1882
      %v3314 = vunpack.c.l.b16 %v1883
      %v3315 = vunpack.c.l.b16 %v1884
      %v3316 = vunpack.c.l.b16 %v1885
      %v3317 = vunpack.c.l.b16 %v1886
      %v3318 = vunpack.c.l.b16 %v1887
      %v3319 = vunpack.c.l.b16 %v1888
      %v3320 = vunpack.c.l.b16 %v1889
      %v3321 = vunpack.c.l.b16 %v1890
      %v3322 = vunpack.c.l.b16 %v1891
      %v3323 = vunpack.c.l.b16 %v1892
      %v3324 = vunpack.c.l.b16 %v1893
      %v3325 = vunpack.c.l.b16 %v1894
      %v3326 = vunpack.c.l.b16 %v1895
      %v3327 = vunpack.c.l.b16 %v1896
      %v3328 = vunpack.c.l.b16 %v1897
      %v3329 = vunpack.c.l.b16 %v1898
      %v3330 = vunpack.c.l.b16 %v1899
      %v3331 = vunpack.c.l.b16 %v1900
      %v3332 = vunpack.c.l.b16 %v1901
      %v3333 = vunpack.c.l.b16 %v1902
      %v3334 = vunpack.c.l.b16 %v1903
      %v3335 = vunpack.c.l.b16 %v1904
      %v3336 = vunpack.c.l.b16 %v1905
      %v3337 = vunpack.c.l.b16 %v1906
      %v3338 = vunpack.c.l.b16 %v1907
      %v3339 = vunpack.c.l.b16 %v1908
      %v3340 = vunpack.c.l.b16 %v1909
      %v3341 = vunpack.c.l.b16 %v1910
      %v3342 = vunpack.c.l.b16 %v1911
      %v3343 = vunpack.c.l.b16 %v1912
      %v3344 = vpack.c.b16 %v3297, %v3296
      %v3345 = vpack.c.b16 %v3299, %v3298
      %v3346 = vpack.c.b16 %v3301, %v3300
      %v3347 = vpack.c.b16 %v3303, %v3302
      %v3348 = vpack.c.b16 %v3305, %v3304
      %v3349 = vpack.c.b16 %v3307, %v3306
      %v3350 = vpack.c.b16 %v3309, %v3308
      %v3351 = vpack.c.b16 %v3311, %v3310
      %v3352 = vpack.c.b16 %v3313, %v3312
      %v3353 = vpack.c.b16 %v3315, %v3314
      %v3354 = vpack.c.b16 %v3317, %v3316
      %v3355 = vpack.c.b16 %v3319, %v3318
      %v3356 = vpack.c.b16 %v3321, %v3320
      %v3357 = vpack.c.b16 %v3323, %v3322
      %v3358 = vpack.c.b16 %v3325, %v3324
      %v3359 = vpack.c.b16 %v3327, %v3326
      %v3360 = vpack.c.b16 %v3329, %v3328
      %v3361 = vpack.c.b16 %v3331, %v3330
      %v3362 = vpack.c.b16 %v3333, %v3332
      %v3363 = vpack.c.b16 %v3335, %v3334
      %v3364 = vpack.c.b16 %v3337, %v3336
      %v3365 = vpack.c.b16 %v3339, %v3338
      %v3366 = vpack.c.b16 %v3341, %v3340
      %v3367 = vpack.c.b16 %v3343, %v3342
      %3392 = vmatprep.subr.bf16.mxu0 0
      %3393 = vmatpush1.bf16.msra.mxu0 %v3344
      %3394 = vmatprep.subr.bf16.mxu0 0
      %3395 = vmatpush1.bf16.msra.mxu0 %v3345
      %3396 = vmatprep.subr.bf16.mxu0 0
      %3397 = vmatpush1.bf16.msra.mxu0 %v3346
      %3398 = vmatprep.subr.bf16.mxu0 0
      %3399 = vmatpush1.bf16.msra.mxu0 %v3347
      %3400 = vmatprep.subr.bf16.mxu0 0
      %3401 = vmatpush1.bf16.msra.mxu0 %v3348
      %3402 = vmatprep.subr.bf16.mxu0 0
      %3403 = vmatpush1.bf16.msra.mxu0 %v3349
      %3404 = vmatprep.subr.bf16.mxu0 0
      %3405 = vmatpush1.bf16.msra.mxu0 %v3350
      %3406 = vmatprep.subr.bf16.mxu0 0
      %3407 = vmatpush1.bf16.msra.mxu0 %v3351
      %3408 = vmatprep.subr.bf16.mxu0 0
      %3409 = vmatpush1.bf16.msra.mxu0 %v3352
      %3410 = vmatprep.subr.bf16.mxu0 0
      %3411 = vmatpush1.bf16.msra.mxu0 %v3353
      %3412 = vmatprep.subr.bf16.mxu0 0
      %3413 = vmatpush1.bf16.msra.mxu0 %v3354
      %3414 = vmatprep.subr.bf16.mxu0 0
      %3415 = vmatpush1.bf16.msra.mxu0 %v3355
      %3416 = vmatprep.subr.bf16.mxu0 0
      %3417 = vmatpush1.bf16.msra.mxu0 %v3356
      %3418 = vmatprep.subr.bf16.mxu0 0
      %3419 = vmatpush1.bf16.msra.mxu0 %v3357
      %3420 = vmatprep.subr.bf16.mxu0 0
      %3421 = vmatpush1.bf16.msra.mxu0 %v3358
      %3422 = vmatprep.subr.bf16.mxu0 0
      %3423 = vmatpush1.bf16.msra.mxu0 %v3359
      %3424 = vmatprep.mubr.bf16.mxu0 %v1769
      %3425 = vmatmul.mubr.bf16.gmra.mrb[0].mxu0 %v1705
      %v3426 = vpop.f32.mrb[0].mxu0
      %v3427 = vadd.f32 %v3122, %v3426
      %v3428 = vpop.f32.mrb[0].mxu0
      %v3429 = vpop.f32.mrb[0].mxu0
      %v3430 = vadd.f32 %v3125, %v3429
      %v3431 = vpop.f32.mrb[0].mxu0
      %3432 = vmatprep.mubr.bf16.mxu0 %v1770
      %3433 = vmatmul.mubr.bf16.gmra.mrb[0].mxu0 %v1706
      %v3434 = vpop.f32.mrb[0].mxu0
      %v3435 = vadd.f32 %v3130, %v3434
      %v3436 = vpop.f32.mrb[0].mxu0
      %v3437 = vpop.f32.mrb[0].mxu0
      %v3438 = vadd.f32 %v3133, %v3437
      %v3439 = vpop.f32.mrb[0].mxu0
      %3440 = vmatprep.mubr.bf16.mxu0 %v1771
      %3441 = vmatmul.mubr.bf16.gmra.mrb[0].mxu0 %v1707
      %v3442 = vpop.f32.mrb[0].mxu0
      %v3443 = vadd.f32 %v3138, %v3442
      %v3444 = vpop.f32.mrb[0].mxu0
      %v3445 = vpop.f32.mrb[0].mxu0
      %v3446 = vadd.f32 %v3141, %v3445
      %v3447 = vpop.f32.mrb[0].mxu0
      %3448 = vmatprep.mubr.bf16.mxu0 %v1772
      %3449 = vmatmul.mubr.bf16.gmra.mrb[0].mxu0 %v1708
      %v3450 = vpop.f32.mrb[0].mxu0
      %v3451 = vadd.f32 %v3146, %v3450
      %v3452 = vpop.f32.mrb[0].mxu0
      %v3453 = vpop.f32.mrb[0].mxu0
      %v3454 = vadd.f32 %v3149, %v3453
      %v3455 = vpop.f32.mrb[0].mxu0
      %3456 = vmatprep.mubr.bf16.mxu0 %v1773
      %3457 = vmatmul.mubr.bf16.gmra.mrb[0].mxu0 %v1709
      %v3458 = vpop.f32.mrb[0].mxu0
      %v3459 = vadd.f32 %v3154, %v3458
      %v3460 = vpop.f32.mrb[0].mxu0
      %v3461 = vpop.f32.mrb[0].mxu0
      %v3462 = vadd.f32 %v3157, %v3461
      %v3463 = vpop.f32.mrb[0].mxu0
      %3464 = vmatprep.mubr.bf16.mxu0 %v1774
      %3465 = vmatmul.mubr.bf16.gmra.mrb[0].mxu0 %v1710
      %v3466 = vpop.f32.mrb[0].mxu0
      %v3467 = vadd.f32 %v3162, %v3466
      %v3468 = vpop.f32.mrb[0].mxu0
      %v3469 = vpop.f32.mrb[0].mxu0
      %v3470 = vadd.f32 %v3165, %v3469
      %v3471 = vpop.f32.mrb[0].mxu0
      %3472 = vmatprep.mubr.bf16.mxu0 %v1775
      %3473 = vmatmul.mubr.bf16.gmra.mrb[0].mxu0 %v1711
      %v3474 = vpop.f32.mrb[0].mxu0
      %v3475 = vadd.f32 %v3170, %v3474
      %v3476 = vpop.f32.mrb[0].mxu0
      %v3477 = vpop.f32.mrb[0].mxu0
      %v3478 = vadd.f32 %v3173, %v3477
      %v3479 = vpop.f32.mrb[0].mxu0
      %3480 = vmatprep.mubr.bf16.mxu0 %v1776
      %3481 = vmatmul.mubr.bf16.gmra.mrb[0].mxu0 %v1712
      %v3482 = vpop.f32.mrb[0].mxu0
      %v3483 = vadd.f32 %v3178, %v3482
      %v3484 = vpop.f32.mrb[0].mxu0
      %v3485 = vpop.f32.mrb[0].mxu0
      %v3486 = vadd.f32 %v3181, %v3485
      %v3487 = vpop.f32.mrb[0].mxu0
      %3488 = vmatprep.mubr.bf16.mxu0 %v1777
      %3489 = vmatmul.mubr.bf16.gmra.mrb[0].mxu0 %v1713
      %v3490 = vpop.f32.mrb[0].mxu0
      %v3491 = vadd.f32 %v3186, %v3490
      %v3492 = vpop.f32.mrb[0].mxu0
      %v3493 = vpop.f32.mrb[0].mxu0
      %v3494 = vadd.f32 %v3189, %v3493
      %v3495 = vpop.f32.mrb[0].mxu0
      %3496 = vmatprep.mubr.bf16.mxu0 %v1778
      %3497 = vmatmul.mubr.bf16.gmra.mrb[0].mxu0 %v1714
      %v3498 = vpop.f32.mrb[0].mxu0
      %v3499 = vadd.f32 %v3194, %v3498
      %v3500 = vpop.f32.mrb[0].mxu0
      %v3501 = vpop.f32.mrb[0].mxu0
      %v3502 = vadd.f32 %v3197, %v3501
      %v3503 = vpop.f32.mrb[0].mxu0
      %3504 = vmatprep.mubr.bf16.mxu0 %v1779
      %3505 = vmatmul.mubr.bf16.gmra.mrb[0].mxu0 %v1715
      %v3506 = vpop.f32.mrb[0].mxu0
      %v3507 = vadd.f32 %v3202, %v3506
      %v3508 = vpop.f32.mrb[0].mxu0
      %v3509 = vpop.f32.mrb[0].mxu0
      %v3510 = vadd.f32 %v3205, %v3509
      %v3511 = vpop.f32.mrb[0].mxu0
      %3512 = vmatprep.mubr.bf16.mxu0 %v1780
      %3513 = vmatmul.mubr.bf16.gmra.mrb[0].mxu0 %v1716
      %v3514 = vpop.f32.mrb[0].mxu0
      %v3515 = vadd.f32 %v3210, %v3514
      %v3516 = vpop.f32.mrb[0].mxu0
      %v3517 = vpop.f32.mrb[0].mxu0
      %v3518 = vadd.f32 %v3213, %v3517
      %v3519 = vpop.f32.mrb[0].mxu0
      %3520 = vmatprep.mubr.bf16.mxu0 %v1781
      %3521 = vmatmul.mubr.bf16.gmra.mrb[0].mxu0 %v1717
      %v3522 = vpop.f32.mrb[0].mxu0
      %v3523 = vadd.f32 %v3218, %v3522
      %v3524 = vpop.f32.mrb[0].mxu0
      %v3525 = vpop.f32.mrb[0].mxu0
      %v3526 = vadd.f32 %v3221, %v3525
      %v3527 = vpop.f32.mrb[0].mxu0
      %3528 = vmatprep.mubr.bf16.mxu0 %v1782
      %3529 = vmatmul.mubr.bf16.gmra.mrb[0].mxu0 %v1718
      %v3530 = vpop.f32.mrb[0].mxu0
      %v3531 = vadd.f32 %v3226, %v3530
      %v3532 = vpop.f32.mrb[0].mxu0
      %v3533 = vpop.f32.mrb[0].mxu0
      %v3534 = vadd.f32 %v3229, %v3533
      %v3535 = vpop.f32.mrb[0].mxu0
      %3536 = vmatprep.mubr.bf16.mxu0 %v1783
      %3537 = vmatmul.mubr.bf16.gmra.mrb[0].mxu0 %v1719
      %v3538 = vpop.f32.mrb[0].mxu0
      %v3539 = vadd.f32 %v3234, %v3538
      %v3540 = vpop.f32.mrb[0].mxu0
      %v3541 = vpop.f32.mrb[0].mxu0
      %v3542 = vadd.f32 %v3237, %v3541
      %v3543 = vpop.f32.mrb[0].mxu0
      %3544 = vmatprep.mubr.bf16.mxu0 %v1784
      %3545 = vmatmul.mubr.bf16.gmra.mrb[0].mxu0 %v1720
      %v3546 = vpop.f32.mrb[0].mxu0
      %v3547 = vadd.f32 %v3242, %v3546
      %v3548 = vpop.f32.mrb[0].mxu0
      %v3549 = vpop.f32.mrb[0].mxu0
      %v3550 = vadd.f32 %v3245, %v3549
      %v3551 = vpop.f32.mrb[0].mxu0
      %3552 = vdwg.mxu0
      %3553 = vmatprep.subr.bf16.mxu0 0
      %3554 = vmatpush1.bf16.msra.mxu0 %v3360
      %3555 = vmatprep.subr.bf16.mxu0 0
      %3556 = vmatpush1.bf16.msra.mxu0 %v3361
      %3557 = vmatprep.subr.bf16.mxu0 0
      %3558 = vmatpush1.bf16.msra.mxu0 %v3362
      %3559 = vmatprep.subr.bf16.mxu0 0
      %3560 = vmatpush1.bf16.msra.mxu0 %v3363
      %3561 = vmatprep.subr.bf16.mxu0 0
      %3562 = vmatpush1.bf16.msra.mxu0 %v3364
      %3563 = vmatprep.subr.bf16.mxu0 0
      %3564 = vmatpush1.bf16.msra.mxu0 %v3365
      %3565 = vmatprep.subr.bf16.mxu0 0
      %3566 = vmatpush1.bf16.msra.mxu0 %v3366
      %3567 = vmatprep.subr.bf16.mxu0 0
      %3568 = vmatpush1.bf16.msra.mxu0 %v3367
      %3569 = vmatprep.subr.bf16.mxu0 0
      %3570 = vmatpush1.bf16.msra.mxu0 0
      %3571 = vmatprep.subr.bf16.mxu0 0
      %3572 = vmatpush1.bf16.msra.mxu0 0
      %3573 = vmatprep.subr.bf16.mxu0 0
      %3574 = vmatpush1.bf16.msra.mxu0 0
      %3575 = vmatprep.subr.bf16.mxu0 0
      %3576 = vmatpush1.bf16.msra.mxu0 0
      %3577 = vmatprep.subr.bf16.mxu0 0
      %3578 = vmatpush1.bf16.msra.mxu0 0
      %3579 = vmatprep.subr.bf16.mxu0 0
      %3580 = vmatpush1.bf16.msra.mxu0 0
      %3581 = vmatprep.subr.bf16.mxu0 0
      %3582 = vmatpush1.bf16.msra.mxu0 0
      %3583 = vmatprep.subr.bf16.mxu0 0
      %3584 = vmatpush1.bf16.msra.mxu0 0
      %3585 = vmatprep.mubr.bf16.mxu0 0
      %3586 = vmatmul.mubr.bf16.gmra.mrb[0].mxu0 %v1833
      %v3587 = vpop.f32.mrb[0].mxu0
      %v3588 = vadd.f32 %v3427, %v3587
      %v3589 = vpop.f32.mrb[0].mxu0
      %v3590 = vpop.f32.mrb[0].mxu0
      %v3591 = vadd.f32 %v3430, %v3590
      %v3592 = vpop.f32.mrb[0].mxu0
      %3593 = vmatprep.mubr.bf16.mxu0 0
      %3594 = vmatmul.mubr.bf16.gmra.mrb[0].mxu0 %v1834
      %v3595 = vpop.f32.mrb[0].mxu0
      %v3596 = vadd.f32 %v3435, %v3595
      %v3597 = vpop.f32.mrb[0].mxu0
      %v3598 = vpop.f32.mrb[0].mxu0
      %v3599 = vadd.f32 %v3438, %v3598
      %v3600 = vpop.f32.mrb[0].mxu0
      %3601 = vmatprep.mubr.bf16.mxu0 0
      %3602 = vmatmul.mubr.bf16.gmra.mrb[0].mxu0 %v1835
      %v3603 = vpop.f32.mrb[0].mxu0
      %v3604 = vadd.f32 %v3443, %v3603
      %v3605 = vpop.f32.mrb[0].mxu0
      %v3606 = vpop.f32.mrb[0].mxu0
      %v3607 = vadd.f32 %v3446, %v3606
      %v3608 = vpop.f32.mrb[0].mxu0
      %3609 = vmatprep.mubr.bf16.mxu0 0
      %3610 = vmatmul.mubr.bf16.gmra.mrb[0].mxu0 %v1836
      %v3611 = vpop.f32.mrb[0].mxu0
      %v3612 = vadd.f32 %v3451, %v3611
      %v3613 = vpop.f32.mrb[0].mxu0
      %v3614 = vpop.f32.mrb[0].mxu0
      %v3615 = vadd.f32 %v3454, %v3614
      %v3616 = vpop.f32.mrb[0].mxu0
      %3617 = vmatprep.mubr.bf16.mxu0 0
      %3618 = vmatmul.mubr.bf16.gmra.mrb[0].mxu0 %v1837
      %v3619 = vpop.f32.mrb[0].mxu0
      %v3620 = vadd.f32 %v3459, %v3619
      %v3621 = vpop.f32.mrb[0].mxu0
      %v3622 = vpop.f32.mrb[0].mxu0
      %v3623 = vadd.f32 %v3462, %v3622
      %v3624 = vpop.f32.mrb[0].mxu0
      %3625 = vmatprep.mubr.bf16.mxu0 0
      %3626 = vmatmul.mubr.bf16.gmra.mrb[0].mxu0 %v1838
      %v3627 = vpop.f32.mrb[0].mxu0
      %v3628 = vadd.f32 %v3467, %v3627
      %v3629 = vpop.f32.mrb[0].mxu0
      %v3630 = vpop.f32.mrb[0].mxu0
      %v3631 = vadd.f32 %v3470, %v3630
      %v3632 = vpop.f32.mrb[0].mxu0
      %3633 = vmatprep.mubr.bf16.mxu0 0
      %3634 = vmatmul.mubr.bf16.gmra.mrb[0].mxu0 %v1839
      %v3635 = vpop.f32.mrb[0].mxu0
      %v3636 = vadd.f32 %v3475, %v3635
      %v3637 = vpop.f32.mrb[0].mxu0
      %v3638 = vpop.f32.mrb[0].mxu0
      %v3639 = vadd.f32 %v3478, %v3638
      %v3640 = vpop.f32.mrb[0].mxu0
      %3641 = vmatprep.mubr.bf16.mxu0 0
      %3642 = vmatmul.mubr.bf16.gmra.mrb[0].mxu0 %v1840
      %v3643 = vpop.f32.mrb[0].mxu0
      %v3644 = vadd.f32 %v3483, %v3643
      %v3645 = vpop.f32.mrb[0].mxu0
      %v3646 = vpop.f32.mrb[0].mxu0
      %v3647 = vadd.f32 %v3486, %v3646
      %v3648 = vpop.f32.mrb[0].mxu0
      %3649 = vmatprep.mubr.bf16.mxu0 0
      %3650 = vmatmul.mubr.bf16.gmra.mrb[0].mxu0 %v1841
      %v3651 = vpop.f32.mrb[0].mxu0
      %v3652 = vadd.f32 %v3491, %v3651
      %v3653 = vpop.f32.mrb[0].mxu0
      %v3654 = vpop.f32.mrb[0].mxu0
      %v3655 = vadd.f32 %v3494, %v3654
      %v3656 = vpop.f32.mrb[0].mxu0
      %3657 = vmatprep.mubr.bf16.mxu0 0
      %3658 = vmatmul.mubr.bf16.gmra.mrb[0].mxu0 %v1842
      %v3659 = vpop.f32.mrb[0].mxu0
      %v3660 = vadd.f32 %v3499, %v3659
      %v3661 = vpop.f32.mrb[0].mxu0
      %v3662 = vpop.f32.mrb[0].mxu0
      %v3663 = vadd.f32 %v3502, %v3662
      %v3664 = vpop.f32.mrb[0].mxu0
      %3665 = vmatprep.mubr.bf16.mxu0 0
      %3666 = vmatmul.mubr.bf16.gmra.mrb[0].mxu0 %v1843
      %v3667 = vpop.f32.mrb[0].mxu0
      %v3668 = vadd.f32 %v3507, %v3667
      %v3669 = vpop.f32.mrb[0].mxu0
      %v3670 = vpop.f32.mrb[0].mxu0
      %v3671 = vadd.f32 %v3510, %v3670
      %v3672 = vpop.f32.mrb[0].mxu0
      %3673 = vmatprep.mubr.bf16.mxu0 0
      %3674 = vmatmul.mubr.bf16.gmra.mrb[0].mxu0 %v1844
      %v3675 = vpop.f32.mrb[0].mxu0
      %v3676 = vadd.f32 %v3515, %v3675
      %v3677 = vpop.f32.mrb[0].mxu0
      %v3678 = vpop.f32.mrb[0].mxu0
      %v3679 = vadd.f32 %v3518, %v3678
      %v3680 = vpop.f32.mrb[0].mxu0
      %3681 = vmatprep.mubr.bf16.mxu0 0
      %3682 = vmatmul.mubr.bf16.gmra.mrb[0].mxu0 %v1845
      %v3683 = vpop.f32.mrb[0].mxu0
      %v3684 = vadd.f32 %v3523, %v3683
      %v3685 = vpop.f32.mrb[0].mxu0
      %v3686 = vpop.f32.mrb[0].mxu0
      %v3687 = vadd.f32 %v3526, %v3686
      %v3688 = vpop.f32.mrb[0].mxu0
      %3689 = vmatprep.mubr.bf16.mxu0 0
      %3690 = vmatmul.mubr.bf16.gmra.mrb[0].mxu0 %v1846
      %v3691 = vpop.f32.mrb[0].mxu0
      %v3692 = vadd.f32 %v3531, %v3691
      %v3693 = vpop.f32.mrb[0].mxu0
      %v3694 = vpop.f32.mrb[0].mxu0
      %v3695 = vadd.f32 %v3534, %v3694
      %v3696 = vpop.f32.mrb[0].mxu0
      %3697 = vmatprep.mubr.bf16.mxu0 0
      %3698 = vmatmul.mubr.bf16.gmra.mrb[0].mxu0 %v1847
      %v3699 = vpop.f32.mrb[0].mxu0
      %v3700 = vadd.f32 %v3539, %v3699
      %v3701 = vpop.f32.mrb[0].mxu0
      %v3702 = vpop.f32.mrb[0].mxu0
      %v3703 = vadd.f32 %v3542, %v3702
      %v3704 = vpop.f32.mrb[0].mxu0
      %3705 = vmatprep.mubr.bf16.mxu0 0
      %3706 = vmatmul.mubr.bf16.gmra.mrb[0].mxu0 %v1848
      %v3707 = vpop.f32.mrb[0].mxu0
      %v3708 = vadd.f32 %v3547, %v3707
      %v3709 = vpop.f32.mrb[0].mxu0
      %v3710 = vpop.f32.mrb[0].mxu0
      %v3711 = vadd.f32 %v3550, %v3710
      %v3712 = vpop.f32.mrb[0].mxu0
      %3713 = vdwg.mxu0
      %s3714 = sadd.s32 %s1039, 2
      %s3715 = smul.u32 %s3714, 3
      %s3716 = smul.addr %s3715, 4
      %s3717 = scalar_lea.vmem [#allocation2], %s3716
      %v3718 = vld [vmem:[%s3717] sm:$0xf]
      %v3719 = vld [vmem:[%s3717 + $0x4] sm:$0xf]
      %v3720 = vld [vmem:[%s3717 + $0xc] sm:$0xf]
      %v3721 = vld [vmem:[%s3717 + $0x10] sm:$0xf]
      %v3722 = vld [vmem:[%s3717 + $0x18] sm:$0xf]
      %v3723 = vld [vmem:[%s3717 + $0x1c] sm:$0xf]
      %v3724 = vld [vmem:[%s3717 + $0x24] sm:$0xf]
      %v3725 = vld [vmem:[%s3717 + $0x28] sm:$0xf]
      %v3726 = vld [vmem:[%s3717 + $0x30] sm:$0xf]
      %v3727 = vld [vmem:[%s3717 + $0x34] sm:$0xf]
      %v3728 = vld [vmem:[%s3717 + $0x3c] sm:$0xf]
      %v3729 = vld [vmem:[%s3717 + $0x40] sm:$0xf]
      %v3730 = vld [vmem:[%s3717 + $0x48] sm:$0xf]
      %v3731 = vld [vmem:[%s3717 + $0x4c] sm:$0xf]
      %v3732 = vld [vmem:[%s3717 + $0x54] sm:$0xf]
      %v3733 = vld [vmem:[%s3717 + $0x58] sm:$0xf]
      %v3734 = vld [vmem:[%s3717 + $0x60] sm:$0xf]
      %v3735 = vld [vmem:[%s3717 + $0x64] sm:$0xf]
      %v3736 = vld [vmem:[%s3717 + $0x6c] sm:$0xf]
      %v3737 = vld [vmem:[%s3717 + $0x70] sm:$0xf]
      %v3738 = vld [vmem:[%s3717 + $0x78] sm:$0xf]
      %v3739 = vld [vmem:[%s3717 + $0x7c] sm:$0xf]
      %v3740 = vld [vmem:[%s3717 + $0x84] sm:$0xf]
      %v3741 = vld [vmem:[%s3717 + $0x88] sm:$0xf]
      %v3742 = vld [vmem:[%s3717 + $0x90] sm:$0xf]
      %v3743 = vld [vmem:[%s3717 + $0x94] sm:$0xf]
      %v3744 = vld [vmem:[%s3717 + $0x9c] sm:$0xf]
      %v3745 = vld [vmem:[%s3717 + $0xa0] sm:$0xf]
      %v3746 = vld [vmem:[%s3717 + $0xa8] sm:$0xf]
      %v3747 = vld [vmem:[%s3717 + $0xac] sm:$0xf]
      %v3748 = vld [vmem:[%s3717 + $0xb4] sm:$0xf]
      %v3749 = vld [vmem:[%s3717 + $0xb8] sm:$0xf]
      %v3750 = vld [vmem:[%s3717 + $0x8] sm:$0x1]
      %v3751 = vld [vmem:[%s3717 + $0x14] sm:$0x1]
      %v3752 = vld [vmem:[%s3717 + $0x20] sm:$0x1]
      %v3753 = vld [vmem:[%s3717 + $0x2c] sm:$0x1]
      %v3754 = vld [vmem:[%s3717 + $0x38] sm:$0x1]
      %v3755 = vld [vmem:[%s3717 + $0x44] sm:$0x1]
      %v3756 = vld [vmem:[%s3717 + $0x50] sm:$0x1]
      %v3757 = vld [vmem:[%s3717 + $0x5c] sm:$0x1]
      %v3758 = vld [vmem:[%s3717 + $0x68] sm:$0x1]
      %v3759 = vld [vmem:[%s3717 + $0x74] sm:$0x1]
      %v3760 = vld [vmem:[%s3717 + $0x80] sm:$0x1]
      %v3761 = vld [vmem:[%s3717 + $0x8c] sm:$0x1]
      %v3762 = vld [vmem:[%s3717 + $0x98] sm:$0x1]
      %v3763 = vld [vmem:[%s3717 + $0xa4] sm:$0x1]
      %v3764 = vld [vmem:[%s3717 + $0xb0] sm:$0x1]
      %v3765 = vld [vmem:[%s3717 + $0xbc] sm:$0x1]
      %v3767 = vshrl.u32 %v3718, 16
      %v3769 = vrot.slane %v3767, 4
      %v3770 = vshll.u32 %v3718, 16
      %v3772 = vrot.slane %v3770, 5
      %v3773 = vor.u32 %v3769, %v3772
      %v3774 = vrot.slane %v3773, 4
      %v3776 = vshll.u32 %v3719, 16
      %v3778 = vrot.slane %v3776, 5
      %v3779 = vsel %vm1093, %v3774, %v3778
      %v3780 = vshrl.u32 %v3719, 16
      %v3782 = vrot.slane %v3780, 4
      %v3783 = vor.u32 %v3782, %v3778
      %v3784 = vrot.slane %v3783, 4
      %v3786 = vshll.u32 %v3750, 16
      %v3788 = vrot.slane %v3786, 5
      %v3789 = vsel %vm1093, %v3784, %v3788
      %v3791 = vshrl.u32 %v3720, 16
      %v3793 = vrot.slane %v3791, 4
      %v3794 = vshll.u32 %v3720, 16
      %v3796 = vrot.slane %v3794, 5
      %v3797 = vor.u32 %v3793, %v3796
      %v3798 = vrot.slane %v3797, 4
      %v3800 = vshll.u32 %v3721, 16
      %v3802 = vrot.slane %v3800, 5
      %v3803 = vsel %vm1093, %v3798, %v3802
      %v3804 = vshrl.u32 %v3721, 16
      %v3806 = vrot.slane %v3804, 4
      %v3807 = vor.u32 %v3806, %v3802
      %v3808 = vrot.slane %v3807, 4
      %v3810 = vshll.u32 %v3751, 16
      %v3812 = vrot.slane %v3810, 5
      %v3813 = vsel %vm1093, %v3808, %v3812
      %v3815 = vshrl.u32 %v3722, 16
      %v3817 = vrot.slane %v3815, 4
      %v3818 = vshll.u32 %v3722, 16
      %v3820 = vrot.slane %v3818, 5
      %v3821 = vor.u32 %v3817, %v3820
      %v3822 = vrot.slane %v3821, 4
      %v3824 = vshll.u32 %v3723, 16
      %v3826 = vrot.slane %v3824, 5
      %v3827 = vsel %vm1093, %v3822, %v3826
      %v3828 = vshrl.u32 %v3723, 16
      %v3830 = vrot.slane %v3828, 4
      %v3831 = vor.u32 %v3830, %v3826
      %v3832 = vrot.slane %v3831, 4
      %v3834 = vshll.u32 %v3752, 16
      %v3836 = vrot.slane %v3834, 5
      %v3837 = vsel %vm1093, %v3832, %v3836
      %v3839 = vshrl.u32 %v3724, 16
      %v3841 = vrot.slane %v3839, 4
      %v3842 = vshll.u32 %v3724, 16
      %v3844 = vrot.slane %v3842, 5
      %v3845 = vor.u32 %v3841, %v3844
      %v3846 = vrot.slane %v3845, 4
      %v3848 = vshll.u32 %v3725, 16
      %v3850 = vrot.slane %v3848, 5
      %v3851 = vsel %vm1093, %v3846, %v3850
      %v3852 = vshrl.u32 %v3725, 16
      %v3854 = vrot.slane %v3852, 4
      %v3855 = vor.u32 %v3854, %v3850
      %v3856 = vrot.slane %v3855, 4
      %v3858 = vshll.u32 %v3753, 16
      %v3860 = vrot.slane %v3858, 5
      %v3861 = vsel %vm1093, %v3856, %v3860
      %v3863 = vshrl.u32 %v3726, 16
      %v3865 = vrot.slane %v3863, 4
      %v3866 = vshll.u32 %v3726, 16
      %v3868 = vrot.slane %v3866, 5
      %v3869 = vor.u32 %v3865, %v3868
      %v3870 = vrot.slane %v3869, 4
      %v3872 = vshll.u32 %v3727, 16
      %v3874 = vrot.slane %v3872, 5
      %v3875 = vsel %vm1093, %v3870, %v3874
      %v3876 = vshrl.u32 %v3727, 16
      %v3878 = vrot.slane %v3876, 4
      %v3879 = vor.u32 %v3878, %v3874
      %v3880 = vrot.slane %v3879, 4
      %v3882 = vshll.u32 %v3754, 16
      %v3884 = vrot.slane %v3882, 5
      %v3885 = vsel %vm1093, %v3880, %v3884
      %v3887 = vshrl.u32 %v3728, 16
      %v3889 = vrot.slane %v3887, 4
      %v3890 = vshll.u32 %v3728, 16
      %v3892 = vrot.slane %v3890, 5
      %v3893 = vor.u32 %v3889, %v3892
      %v3894 = vrot.slane %v3893, 4
      %v3896 = vshll.u32 %v3729, 16
      %v3898 = vrot.slane %v3896, 5
      %v3899 = vsel %vm1093, %v3894, %v3898
      %v3900 = vshrl.u32 %v3729, 16
      %v3902 = vrot.slane %v3900, 4
      %v3903 = vor.u32 %v3902, %v3898
      %v3904 = vrot.slane %v3903, 4
      %v3906 = vshll.u32 %v3755, 16
      %v3908 = vrot.slane %v3906, 5
      %v3909 = vsel %vm1093, %v3904, %v3908
      %v3911 = vshrl.u32 %v3730, 16
      %v3913 = vrot.slane %v3911, 4
      %v3914 = vshll.u32 %v3730, 16
      %v3916 = vrot.slane %v3914, 5
      %v3917 = vor.u32 %v3913, %v3916
      %v3918 = vrot.slane %v3917, 4
      %v3920 = vshll.u32 %v3731, 16
      %v3922 = vrot.slane %v3920, 5
      %v3923 = vsel %vm1093, %v3918, %v3922
      %v3924 = vshrl.u32 %v3731, 16
      %v3926 = vrot.slane %v3924, 4
      %v3927 = vor.u32 %v3926, %v3922
      %v3928 = vrot.slane %v3927, 4
      %v3930 = vshll.u32 %v3756, 16
      %v3932 = vrot.slane %v3930, 5
      %v3933 = vsel %vm1093, %v3928, %v3932
      %v3935 = vshrl.u32 %v3732, 16
      %v3937 = vrot.slane %v3935, 4
      %v3938 = vshll.u32 %v3732, 16
      %v3940 = vrot.slane %v3938, 5
      %v3941 = vor.u32 %v3937, %v3940
      %v3942 = vrot.slane %v3941, 4
      %v3944 = vshll.u32 %v3733, 16
      %v3946 = vrot.slane %v3944, 5
      %v3947 = vsel %vm1093, %v3942, %v3946
      %v3948 = vshrl.u32 %v3733, 16
      %v3950 = vrot.slane %v3948, 4
      %v3951 = vor.u32 %v3950, %v3946
      %v3952 = vrot.slane %v3951, 4
      %v3954 = vshll.u32 %v3757, 16
      %v3956 = vrot.slane %v3954, 5
      %v3957 = vsel %vm1093, %v3952, %v3956
      %v3959 = vshrl.u32 %v3734, 16
      %v3961 = vrot.slane %v3959, 4
      %v3962 = vshll.u32 %v3734, 16
      %v3964 = vrot.slane %v3962, 5
      %v3965 = vor.u32 %v3961, %v3964
      %v3966 = vrot.slane %v3965, 4
      %v3968 = vshll.u32 %v3735, 16
      %v3970 = vrot.slane %v3968, 5
      %v3971 = vsel %vm1093, %v3966, %v3970
      %v3972 = vshrl.u32 %v3735, 16
      %v3974 = vrot.slane %v3972, 4
      %v3975 = vor.u32 %v3974, %v3970
      %v3976 = vrot.slane %v3975, 4
      %v3978 = vshll.u32 %v3758, 16
      %v3980 = vrot.slane %v3978, 5
      %v3981 = vsel %vm1093, %v3976, %v3980
      %v3983 = vshrl.u32 %v3736, 16
      %v3985 = vrot.slane %v3983, 4
      %v3986 = vshll.u32 %v3736, 16
      %v3988 = vrot.slane %v3986, 5
      %v3989 = vor.u32 %v3985, %v3988
      %v3990 = vrot.slane %v3989, 4
      %v3992 = vshll.u32 %v3737, 16
      %v3994 = vrot.slane %v3992, 5
      %v3995 = vsel %vm1093, %v3990, %v3994
      %v3996 = vshrl.u32 %v3737, 16
      %v3998 = vrot.slane %v3996, 4
      %v3999 = vor.u32 %v3998, %v3994
      %v4000 = vrot.slane %v3999, 4
      %v4002 = vshll.u32 %v3759, 16
      %v4004 = vrot.slane %v4002, 5
      %v4005 = vsel %vm1093, %v4000, %v4004
      %v4007 = vshrl.u32 %v3738, 16
      %v4009 = vrot.slane %v4007, 4
      %v4010 = vshll.u32 %v3738, 16
      %v4012 = vrot.slane %v4010, 5
      %v4013 = vor.u32 %v4009, %v4012
      %v4014 = vrot.slane %v4013, 4
      %v4016 = vshll.u32 %v3739, 16
      %v4018 = vrot.slane %v4016, 5
      %v4019 = vsel %vm1093, %v4014, %v4018
      %v4020 = vshrl.u32 %v3739, 16
      %v4022 = vrot.slane %v4020, 4
      %v4023 = vor.u32 %v4022, %v4018
      %v4024 = vrot.slane %v4023, 4
      %v4026 = vshll.u32 %v3760, 16
      %v4028 = vrot.slane %v4026, 5
      %v4029 = vsel %vm1093, %v4024, %v4028
      %v4031 = vshrl.u32 %v3740, 16
      %v4033 = vrot.slane %v4031, 4
      %v4034 = vshll.u32 %v3740, 16
      %v4036 = vrot.slane %v4034, 5
      %v4037 = vor.u32 %v4033, %v4036
      %v4038 = vrot.slane %v4037, 4
      %v4040 = vshll.u32 %v3741, 16
      %v4042 = vrot.slane %v4040, 5
      %v4043 = vsel %vm1093, %v4038, %v4042
      %v4044 = vshrl.u32 %v3741, 16
      %v4046 = vrot.slane %v4044, 4
      %v4047 = vor.u32 %v4046, %v4042
      %v4048 = vrot.slane %v4047, 4
      %v4050 = vshll.u32 %v3761, 16
      %v4052 = vrot.slane %v4050, 5
      %v4053 = vsel %vm1093, %v4048, %v4052
      %v4055 = vshrl.u32 %v3742, 16
      %v4057 = vrot.slane %v4055, 4
      %v4058 = vshll.u32 %v3742, 16
      %v4060 = vrot.slane %v4058, 5
      %v4061 = vor.u32 %v4057, %v4060
      %v4062 = vrot.slane %v4061, 4
      %v4064 = vshll.u32 %v3743, 16
      %v4066 = vrot.slane %v4064, 5
      %v4067 = vsel %vm1093, %v4062, %v4066
      %v4068 = vshrl.u32 %v3743, 16
      %v4070 = vrot.slane %v4068, 4
      %v4071 = vor.u32 %v4070, %v4066
      %v4072 = vrot.slane %v4071, 4
      %v4074 = vshll.u32 %v3762, 16
      %v4076 = vrot.slane %v4074, 5
      %v4077 = vsel %vm1093, %v4072, %v4076
      %v4079 = vshrl.u32 %v3744, 16
      %v4081 = vrot.slane %v4079, 4
      %v4082 = vshll.u32 %v3744, 16
      %v4084 = vrot.slane %v4082, 5
      %v4085 = vor.u32 %v4081, %v4084
      %v4086 = vrot.slane %v4085, 4
      %v4088 = vshll.u32 %v3745, 16
      %v4090 = vrot.slane %v4088, 5
      %v4091 = vsel %vm1093, %v4086, %v4090
      %v4092 = vshrl.u32 %v3745, 16
      %v4094 = vrot.slane %v4092, 4
      %v4095 = vor.u32 %v4094, %v4090
      %v4096 = vrot.slane %v4095, 4
      %v4098 = vshll.u32 %v3763, 16
      %v4100 = vrot.slane %v4098, 5
      %v4101 = vsel %vm1093, %v4096, %v4100
      %v4103 = vshrl.u32 %v3746, 16
      %v4105 = vrot.slane %v4103, 4
      %v4106 = vshll.u32 %v3746, 16
      %v4108 = vrot.slane %v4106, 5
      %v4109 = vor.u32 %v4105, %v4108
      %v4110 = vrot.slane %v4109, 4
      %v4112 = vshll.u32 %v3747, 16
      %v4114 = vrot.slane %v4112, 5
      %v4115 = vsel %vm1093, %v4110, %v4114
      %v4116 = vshrl.u32 %v3747, 16
      %v4118 = vrot.slane %v4116, 4
      %v4119 = vor.u32 %v4118, %v4114
      %v4120 = vrot.slane %v4119, 4
      %v4122 = vshll.u32 %v3764, 16
      %v4124 = vrot.slane %v4122, 5
      %v4125 = vsel %vm1093, %v4120, %v4124
      %v4127 = vshrl.u32 %v3748, 16
      %v4129 = vrot.slane %v4127, 4
      %v4130 = vshll.u32 %v3748, 16
      %v4132 = vrot.slane %v4130, 5
      %v4133 = vor.u32 %v4129, %v4132
      %v4134 = vrot.slane %v4133, 4
      %v4136 = vshll.u32 %v3749, 16
      %v4138 = vrot.slane %v4136, 5
      %v4139 = vsel %vm1093, %v4134, %v4138
      %v4140 = vshrl.u32 %v3749, 16
      %v4142 = vrot.slane %v4140, 4
      %v4143 = vor.u32 %v4142, %v4138
      %v4144 = vrot.slane %v4143, 4
      %v4146 = vshll.u32 %v3765, 16
      %v4148 = vrot.slane %v4146, 5
      %v4149 = vsel %vm1093, %v4144, %v4148
      %v4150 = vld [vmem:[%s3717] sm:$0xe]
      %v4151 = vld [vmem:[%s3717 + $0xc] sm:$0xe]
      %v4152 = vld [vmem:[%s3717 + $0x18] sm:$0xe]
      %v4153 = vld [vmem:[%s3717 + $0x24] sm:$0xe]
      %v4154 = vld [vmem:[%s3717 + $0x30] sm:$0xe]
      %v4155 = vld [vmem:[%s3717 + $0x3c] sm:$0xe]
      %v4156 = vld [vmem:[%s3717 + $0x48] sm:$0xe]
      %v4157 = vld [vmem:[%s3717 + $0x54] sm:$0xe]
      %v4158 = vld [vmem:[%s3717 + $0x60] sm:$0xe]
      %v4159 = vld [vmem:[%s3717 + $0x6c] sm:$0xe]
      %v4160 = vld [vmem:[%s3717 + $0x78] sm:$0xe]
      %v4161 = vld [vmem:[%s3717 + $0x84] sm:$0xe]
      %v4162 = vld [vmem:[%s3717 + $0x90] sm:$0xe]
      %v4163 = vld [vmem:[%s3717 + $0x9c] sm:$0xe]
      %v4164 = vld [vmem:[%s3717 + $0xa8] sm:$0xe]
      %v4165 = vld [vmem:[%s3717 + $0xb4] sm:$0xe]
      %v4214 = vrot.slane %v4150, 5
      %v4215 = vrot.slane %v4214, 4
      %v4216 = vrot.slane %v3719, 5
      %v4217 = vsel %vm1544, %v4215, %v4216
      %v4218 = vrot.slane %v4216, 4
      %v4219 = vrot.slane %v3750, 5
      %v4220 = vsel %vm1544, %v4218, %v4219
      %v4221 = vrot.slane %v4151, 5
      %v4222 = vrot.slane %v4221, 4
      %v4223 = vrot.slane %v3721, 5
      %v4224 = vsel %vm1544, %v4222, %v4223
      %v4225 = vrot.slane %v4223, 4
      %v4226 = vrot.slane %v3751, 5
      %v4227 = vsel %vm1544, %v4225, %v4226
      %v4228 = vrot.slane %v4152, 5
      %v4229 = vrot.slane %v4228, 4
      %v4230 = vrot.slane %v3723, 5
      %v4231 = vsel %vm1544, %v4229, %v4230
      %v4232 = vrot.slane %v4230, 4
      %v4233 = vrot.slane %v3752, 5
      %v4234 = vsel %vm1544, %v4232, %v4233
      %v4235 = vrot.slane %v4153, 5
      %v4236 = vrot.slane %v4235, 4
      %v4237 = vrot.slane %v3725, 5
      %v4238 = vsel %vm1544, %v4236, %v4237
      %v4239 = vrot.slane %v4237, 4
      %v4240 = vrot.slane %v3753, 5
      %v4241 = vsel %vm1544, %v4239, %v4240
      %v4242 = vrot.slane %v4154, 5
      %v4243 = vrot.slane %v4242, 4
      %v4244 = vrot.slane %v3727, 5
      %v4245 = vsel %vm1544, %v4243, %v4244
      %v4246 = vrot.slane %v4244, 4
      %v4247 = vrot.slane %v3754, 5
      %v4248 = vsel %vm1544, %v4246, %v4247
      %v4249 = vrot.slane %v4155, 5
      %v4250 = vrot.slane %v4249, 4
      %v4251 = vrot.slane %v3729, 5
      %v4252 = vsel %vm1544, %v4250, %v4251
      %v4253 = vrot.slane %v4251, 4
      %v4254 = vrot.slane %v3755, 5
      %v4255 = vsel %vm1544, %v4253, %v4254
      %v4256 = vrot.slane %v4156, 5
      %v4257 = vrot.slane %v4256, 4
      %v4258 = vrot.slane %v3731, 5
      %v4259 = vsel %vm1544, %v4257, %v4258
      %v4260 = vrot.slane %v4258, 4
      %v4261 = vrot.slane %v3756, 5
      %v4262 = vsel %vm1544, %v4260, %v4261
      %v4263 = vrot.slane %v4157, 5
      %v4264 = vrot.slane %v4263, 4
      %v4265 = vrot.slane %v3733, 5
      %v4266 = vsel %vm1544, %v4264, %v4265
      %v4267 = vrot.slane %v4265, 4
      %v4268 = vrot.slane %v3757, 5
      %v4269 = vsel %vm1544, %v4267, %v4268
      %v4270 = vrot.slane %v4158, 5
      %v4271 = vrot.slane %v4270, 4
      %v4272 = vrot.slane %v3735, 5
      %v4273 = vsel %vm1544, %v4271, %v4272
      %v4274 = vrot.slane %v4272, 4
      %v4275 = vrot.slane %v3758, 5
      %v4276 = vsel %vm1544, %v4274, %v4275
      %v4277 = vrot.slane %v4159, 5
      %v4278 = vrot.slane %v4277, 4
      %v4279 = vrot.slane %v3737, 5
      %v4280 = vsel %vm1544, %v4278, %v4279
      %v4281 = vrot.slane %v4279, 4
      %v4282 = vrot.slane %v3759, 5
      %v4283 = vsel %vm1544, %v4281, %v4282
      %v4284 = vrot.slane %v4160, 5
      %v4285 = vrot.slane %v4284, 4
      %v4286 = vrot.slane %v3739, 5
      %v4287 = vsel %vm1544, %v4285, %v4286
      %v4288 = vrot.slane %v4286, 4
      %v4289 = vrot.slane %v3760, 5
      %v4290 = vsel %vm1544, %v4288, %v4289
      %v4291 = vrot.slane %v4161, 5
      %v4292 = vrot.slane %v4291, 4
      %v4293 = vrot.slane %v3741, 5
      %v4294 = vsel %vm1544, %v4292, %v4293
      %v4295 = vrot.slane %v4293, 4
      %v4296 = vrot.slane %v3761, 5
      %v4297 = vsel %vm1544, %v4295, %v4296
      %v4298 = vrot.slane %v4162, 5
      %v4299 = vrot.slane %v4298, 4
      %v4300 = vrot.slane %v3743, 5
      %v4301 = vsel %vm1544, %v4299, %v4300
      %v4302 = vrot.slane %v4300, 4
      %v4303 = vrot.slane %v3762, 5
      %v4304 = vsel %vm1544, %v4302, %v4303
      %v4305 = vrot.slane %v4163, 5
      %v4306 = vrot.slane %v4305, 4
      %v4307 = vrot.slane %v3745, 5
      %v4308 = vsel %vm1544, %v4306, %v4307
      %v4309 = vrot.slane %v4307, 4
      %v4310 = vrot.slane %v3763, 5
      %v4311 = vsel %vm1544, %v4309, %v4310
      %v4312 = vrot.slane %v4164, 5
      %v4313 = vrot.slane %v4312, 4
      %v4314 = vrot.slane %v3747, 5
      %v4315 = vsel %vm1544, %v4313, %v4314
      %v4316 = vrot.slane %v4314, 4
      %v4317 = vrot.slane %v3764, 5
      %v4318 = vsel %vm1544, %v4316, %v4317
      %v4319 = vrot.slane %v4165, 5
      %v4320 = vrot.slane %v4319, 4
      %v4321 = vrot.slane %v3749, 5
      %v4322 = vsel %vm1544, %v4320, %v4321
      %v4323 = vrot.slane %v4321, 4
      %v4324 = vrot.slane %v3765, 5
      %v4325 = vsel %vm1544, %v4323, %v4324
      %v4342 = vunpack.c.l.b16 %v3718
      %v4343 = vunpack.c.l.b16 %v3719
      %v4344 = vunpack.c.l.b16 %v3720
      %v4345 = vunpack.c.l.b16 %v3721
      %v4346 = vunpack.c.l.b16 %v3722
      %v4347 = vunpack.c.l.b16 %v3723
      %v4348 = vunpack.c.l.b16 %v3724
      %v4349 = vunpack.c.l.b16 %v3725
      %v4350 = vunpack.c.l.b16 %v3726
      %v4351 = vunpack.c.l.b16 %v3727
      %v4352 = vunpack.c.l.b16 %v3728
      %v4353 = vunpack.c.l.b16 %v3729
      %v4354 = vunpack.c.l.b16 %v3730
      %v4355 = vunpack.c.l.b16 %v3731
      %v4356 = vunpack.c.l.b16 %v3732
      %v4357 = vunpack.c.l.b16 %v3733
      %v4358 = vunpack.c.l.b16 %v3734
      %v4359 = vunpack.c.l.b16 %v3735
      %v4360 = vunpack.c.l.b16 %v3736
      %v4361 = vunpack.c.l.b16 %v3737
      %v4362 = vunpack.c.l.b16 %v3738
      %v4363 = vunpack.c.l.b16 %v3739
      %v4364 = vunpack.c.l.b16 %v3740
      %v4365 = vunpack.c.l.b16 %v3741
      %v4366 = vunpack.c.l.b16 %v3742
      %v4367 = vunpack.c.l.b16 %v3743
      %v4368 = vunpack.c.l.b16 %v3744
      %v4369 = vunpack.c.l.b16 %v3745
      %v4370 = vunpack.c.l.b16 %v3746
      %v4371 = vunpack.c.l.b16 %v3747
      %v4372 = vunpack.c.l.b16 %v3748
      %v4373 = vunpack.c.l.b16 %v3749
      %v4374 = vpack.c.b16 %v4343, %v4342
      %v4375 = vpack.c.b16 %v4345, %v4344
      %v4376 = vpack.c.b16 %v4347, %v4346
      %v4377 = vpack.c.b16 %v4349, %v4348
      %v4378 = vpack.c.b16 %v4351, %v4350
      %v4379 = vpack.c.b16 %v4353, %v4352
      %v4380 = vpack.c.b16 %v4355, %v4354
      %v4381 = vpack.c.b16 %v4357, %v4356
      %v4382 = vpack.c.b16 %v4359, %v4358
      %v4383 = vpack.c.b16 %v4361, %v4360
      %v4384 = vpack.c.b16 %v4363, %v4362
      %v4385 = vpack.c.b16 %v4365, %v4364
      %v4386 = vpack.c.b16 %v4367, %v4366
      %v4387 = vpack.c.b16 %v4369, %v4368
      %v4388 = vpack.c.b16 %v4371, %v4370
      %v4389 = vpack.c.b16 %v4373, %v4372
      %v4406 = vunpack.c.l.b16 %v3779
      %v4407 = vunpack.c.l.b16 %v3789
      %v4408 = vunpack.c.l.b16 %v3803
      %v4409 = vunpack.c.l.b16 %v3813
      %v4410 = vunpack.c.l.b16 %v3827
      %v4411 = vunpack.c.l.b16 %v3837
      %v4412 = vunpack.c.l.b16 %v3851
      %v4413 = vunpack.c.l.b16 %v3861
      %v4414 = vunpack.c.l.b16 %v3875
      %v4415 = vunpack.c.l.b16 %v3885
      %v4416 = vunpack.c.l.b16 %v3899
      %v4417 = vunpack.c.l.b16 %v3909
      %v4418 = vunpack.c.l.b16 %v3923
      %v4419 = vunpack.c.l.b16 %v3933
      %v4420 = vunpack.c.l.b16 %v3947
      %v4421 = vunpack.c.l.b16 %v3957
      %v4422 = vunpack.c.l.b16 %v3971
      %v4423 = vunpack.c.l.b16 %v3981
      %v4424 = vunpack.c.l.b16 %v3995
      %v4425 = vunpack.c.l.b16 %v4005
      %v4426 = vunpack.c.l.b16 %v4019
      %v4427 = vunpack.c.l.b16 %v4029
      %v4428 = vunpack.c.l.b16 %v4043
      %v4429 = vunpack.c.l.b16 %v4053
      %v4430 = vunpack.c.l.b16 %v4067
      %v4431 = vunpack.c.l.b16 %v4077
      %v4432 = vunpack.c.l.b16 %v4091
      %v4433 = vunpack.c.l.b16 %v4101
      %v4434 = vunpack.c.l.b16 %v4115
      %v4435 = vunpack.c.l.b16 %v4125
      %v4436 = vunpack.c.l.b16 %v4139
      %v4437 = vunpack.c.l.b16 %v4149
      %v4438 = vpack.c.b16 %v4407, %v4406
      %v4439 = vpack.c.b16 %v4409, %v4408
      %v4440 = vpack.c.b16 %v4411, %v4410
      %v4441 = vpack.c.b16 %v4413, %v4412
      %v4442 = vpack.c.b16 %v4415, %v4414
      %v4443 = vpack.c.b16 %v4417, %v4416
      %v4444 = vpack.c.b16 %v4419, %v4418
      %v4445 = vpack.c.b16 %v4421, %v4420
      %v4446 = vpack.c.b16 %v4423, %v4422
      %v4447 = vpack.c.b16 %v4425, %v4424
      %v4448 = vpack.c.b16 %v4427, %v4426
      %v4449 = vpack.c.b16 %v4429, %v4428
      %v4450 = vpack.c.b16 %v4431, %v4430
      %v4451 = vpack.c.b16 %v4433, %v4432
      %v4452 = vpack.c.b16 %v4435, %v4434
      %v4453 = vpack.c.b16 %v4437, %v4436
      %v4470 = vunpack.c.l.b16 %v4217
      %v4471 = vunpack.c.l.b16 %v4220
      %v4472 = vunpack.c.l.b16 %v4224
      %v4473 = vunpack.c.l.b16 %v4227
      %v4474 = vunpack.c.l.b16 %v4231
      %v4475 = vunpack.c.l.b16 %v4234
      %v4476 = vunpack.c.l.b16 %v4238
      %v4477 = vunpack.c.l.b16 %v4241
      %v4478 = vunpack.c.l.b16 %v4245
      %v4479 = vunpack.c.l.b16 %v4248
      %v4480 = vunpack.c.l.b16 %v4252
      %v4481 = vunpack.c.l.b16 %v4255
      %v4482 = vunpack.c.l.b16 %v4259
      %v4483 = vunpack.c.l.b16 %v4262
      %v4484 = vunpack.c.l.b16 %v4266
      %v4485 = vunpack.c.l.b16 %v4269
      %v4486 = vunpack.c.l.b16 %v4273
      %v4487 = vunpack.c.l.b16 %v4276
      %v4488 = vunpack.c.l.b16 %v4280
      %v4489 = vunpack.c.l.b16 %v4283
      %v4490 = vunpack.c.l.b16 %v4287
      %v4491 = vunpack.c.l.b16 %v4290
      %v4492 = vunpack.c.l.b16 %v4294
      %v4493 = vunpack.c.l.b16 %v4297
      %v4494 = vunpack.c.l.b16 %v4301
      %v4495 = vunpack.c.l.b16 %v4304
      %v4496 = vunpack.c.l.b16 %v4308
      %v4497 = vunpack.c.l.b16 %v4311
      %v4498 = vunpack.c.l.b16 %v4315
      %v4499 = vunpack.c.l.b16 %v4318
      %v4500 = vunpack.c.l.b16 %v4322
      %v4501 = vunpack.c.l.b16 %v4325
      %v4502 = vpack.c.b16 %v4471, %v4470
      %v4503 = vpack.c.b16 %v4473, %v4472
      %v4504 = vpack.c.b16 %v4475, %v4474
      %v4505 = vpack.c.b16 %v4477, %v4476
      %v4506 = vpack.c.b16 %v4479, %v4478
      %v4507 = vpack.c.b16 %v4481, %v4480
      %v4508 = vpack.c.b16 %v4483, %v4482
      %v4509 = vpack.c.b16 %v4485, %v4484
      %v4510 = vpack.c.b16 %v4487, %v4486
      %v4511 = vpack.c.b16 %v4489, %v4488
      %v4512 = vpack.c.b16 %v4491, %v4490
      %v4513 = vpack.c.b16 %v4493, %v4492
      %v4514 = vpack.c.b16 %v4495, %v4494
      %v4515 = vpack.c.b16 %v4497, %v4496
      %v4516 = vpack.c.b16 %v4499, %v4498
      %v4517 = vpack.c.b16 %v4501, %v4500
      %s4534 = scalar_lea.vmem %s3, 384
      %v4535 = vld [vmem:[%s4534] sm:$0xf]
      %v4536 = vld [vmem:[%s4534 + $0x4] sm:$0xf]
      %v4537 = vld [vmem:[%s4534 + $0x8] sm:$0xf]
      %v4538 = vld [vmem:[%s4534 + $0xc] sm:$0xf]
      %v4539 = vld [vmem:[%s4534 + $0x10] sm:$0xf]
      %v4540 = vld [vmem:[%s4534 + $0x14] sm:$0xf]
      %v4541 = vld [vmem:[%s4534 + $0x18] sm:$0xf]
      %v4542 = vld [vmem:[%s4534 + $0x1c] sm:$0xf]
      %v4543 = vld [vmem:[%s4534 + $0x20] sm:$0xf]
      %v4544 = vld [vmem:[%s4534 + $0x24] sm:$0xf]
      %v4545 = vld [vmem:[%s4534 + $0x28] sm:$0xf]
      %v4546 = vld [vmem:[%s4534 + $0x2c] sm:$0xf]
      %v4547 = vld [vmem:[%s4534 + $0x30] sm:$0xf]
      %v4548 = vld [vmem:[%s4534 + $0x34] sm:$0xf]
      %v4549 = vld [vmem:[%s4534 + $0x38] sm:$0xf]
      %v4550 = vld [vmem:[%s4534 + $0x3c] sm:$0xf]
      %v4551 = vld [vmem:[%s4534 + $0x40] sm:$0xf]
      %v4552 = vld [vmem:[%s4534 + $0x44] sm:$0xf]
      %v4553 = vld [vmem:[%s4534 + $0x48] sm:$0xf]
      %v4554 = vld [vmem:[%s4534 + $0x4c] sm:$0xf]
      %v4555 = vld [vmem:[%s4534 + $0x50] sm:$0xf]
      %v4556 = vld [vmem:[%s4534 + $0x54] sm:$0xf]
      %v4557 = vld [vmem:[%s4534 + $0x58] sm:$0xf]
      %v4558 = vld [vmem:[%s4534 + $0x5c] sm:$0xf]
      %v4559 = vld [vmem:[%s4534 + $0x60] sm:$0xf]
      %v4560 = vld [vmem:[%s4534 + $0x64] sm:$0xf]
      %v4561 = vld [vmem:[%s4534 + $0x68] sm:$0xf]
      %v4562 = vld [vmem:[%s4534 + $0x6c] sm:$0xf]
      %v4563 = vld [vmem:[%s4534 + $0x70] sm:$0xf]
      %v4564 = vld [vmem:[%s4534 + $0x74] sm:$0xf]
      %v4565 = vld [vmem:[%s4534 + $0x78] sm:$0xf]
      %v4566 = vld [vmem:[%s4534 + $0x7c] sm:$0xf]
      %v4567 = vld [vmem:[%s4534 + $0x80] sm:$0xf]
      %v4568 = vld [vmem:[%s4534 + $0x84] sm:$0xf]
      %v4569 = vld [vmem:[%s4534 + $0x88] sm:$0xf]
      %v4570 = vld [vmem:[%s4534 + $0x8c] sm:$0xf]
      %v4571 = vld [vmem:[%s4534 + $0x90] sm:$0xf]
      %v4572 = vld [vmem:[%s4534 + $0x94] sm:$0xf]
      %v4573 = vld [vmem:[%s4534 + $0x98] sm:$0xf]
      %v4574 = vld [vmem:[%s4534 + $0x9c] sm:$0xf]
      %v4575 = vld [vmem:[%s4534 + $0xa0] sm:$0xf]
      %v4576 = vld [vmem:[%s4534 + $0xa4] sm:$0xf]
      %v4577 = vld [vmem:[%s4534 + $0xa8] sm:$0xf]
      %v4578 = vld [vmem:[%s4534 + $0xac] sm:$0xf]
      %v4579 = vld [vmem:[%s4534 + $0xb0] sm:$0xf]
      %v4580 = vld [vmem:[%s4534 + $0xb4] sm:$0xf]
      %v4581 = vld [vmem:[%s4534 + $0xb8] sm:$0xf]
      %v4582 = vld [vmem:[%s4534 + $0xbc] sm:$0xf]
      %v4631 = vunpack.c.l.b16 %v4535
      %v4632 = vunpack.c.l.b16 %v4536
      %v4633 = vunpack.c.l.b16 %v4537
      %v4634 = vunpack.c.l.b16 %v4538
      %v4635 = vunpack.c.l.b16 %v4539
      %v4636 = vunpack.c.l.b16 %v4540
      %v4637 = vunpack.c.l.b16 %v4541
      %v4638 = vunpack.c.l.b16 %v4542
      %v4639 = vunpack.c.l.b16 %v4543
      %v4640 = vunpack.c.l.b16 %v4544
      %v4641 = vunpack.c.l.b16 %v4545
      %v4642 = vunpack.c.l.b16 %v4546
      %v4643 = vunpack.c.l.b16 %v4547
      %v4644 = vunpack.c.l.b16 %v4548
      %v4645 = vunpack.c.l.b16 %v4549
      %v4646 = vunpack.c.l.b16 %v4550
      %v4647 = vunpack.c.l.b16 %v4551
      %v4648 = vunpack.c.l.b16 %v4552
      %v4649 = vunpack.c.l.b16 %v4553
      %v4650 = vunpack.c.l.b16 %v4554
      %v4651 = vunpack.c.l.b16 %v4555
      %v4652 = vunpack.c.l.b16 %v4556
      %v4653 = vunpack.c.l.b16 %v4557
      %v4654 = vunpack.c.l.b16 %v4558
      %v4655 = vunpack.c.l.b16 %v4559
      %v4656 = vunpack.c.l.b16 %v4560
      %v4657 = vunpack.c.l.b16 %v4561
      %v4658 = vunpack.c.l.b16 %v4562
      %v4659 = vunpack.c.l.b16 %v4563
      %v4660 = vunpack.c.l.b16 %v4564
      %v4661 = vunpack.c.l.b16 %v4565
      %v4662 = vunpack.c.l.b16 %v4566
      %v4663 = vunpack.c.l.b16 %v4567
      %v4664 = vunpack.c.l.b16 %v4568
      %v4665 = vunpack.c.l.b16 %v4569
      %v4666 = vunpack.c.l.b16 %v4570
      %v4667 = vunpack.c.l.b16 %v4571
      %v4668 = vunpack.c.l.b16 %v4572
      %v4669 = vunpack.c.l.b16 %v4573
      %v4670 = vunpack.c.l.b16 %v4574
      %v4671 = vunpack.c.l.b16 %v4575
      %v4672 = vunpack.c.l.b16 %v4576
      %v4673 = vunpack.c.l.b16 %v4577
      %v4674 = vunpack.c.l.b16 %v4578
      %v4675 = vunpack.c.l.b16 %v4579
      %v4676 = vunpack.c.l.b16 %v4580
      %v4677 = vunpack.c.l.b16 %v4581
      %v4678 = vunpack.c.l.b16 %v4582
      %v4679 = vpack.c.b16 %v4632, %v4631
      %v4680 = vpack.c.b16 %v4634, %v4633
      %v4681 = vpack.c.b16 %v4636, %v4635
      %v4682 = vpack.c.b16 %v4638, %v4637
      %v4683 = vpack.c.b16 %v4640, %v4639
      %v4684 = vpack.c.b16 %v4642, %v4641
      %v4685 = vpack.c.b16 %v4644, %v4643
      %v4686 = vpack.c.b16 %v4646, %v4645
      %v4687 = vpack.c.b16 %v4648, %v4647
      %v4688 = vpack.c.b16 %v4650, %v4649
      %v4689 = vpack.c.b16 %v4652, %v4651
      %v4690 = vpack.c.b16 %v4654, %v4653
      %v4691 = vpack.c.b16 %v4656, %v4655
      %v4692 = vpack.c.b16 %v4658, %v4657
      %v4693 = vpack.c.b16 %v4660, %v4659
      %v4694 = vpack.c.b16 %v4662, %v4661
      %v4695 = vpack.c.b16 %v4664, %v4663
      %v4696 = vpack.c.b16 %v4666, %v4665
      %v4697 = vpack.c.b16 %v4668, %v4667
      %v4698 = vpack.c.b16 %v4670, %v4669
      %v4699 = vpack.c.b16 %v4672, %v4671
      %v4700 = vpack.c.b16 %v4674, %v4673
      %v4701 = vpack.c.b16 %v4676, %v4675
      %v4702 = vpack.c.b16 %v4678, %v4677
      %4727 = vmatprep.subr.bf16.mxu0 0
      %4728 = vmatpush1.bf16.msra.mxu0 %v4679
      %4729 = vmatprep.subr.bf16.mxu0 0
      %4730 = vmatpush1.bf16.msra.mxu0 %v4680
      %4731 = vmatprep.subr.bf16.mxu0 0
      %4732 = vmatpush1.bf16.msra.mxu0 %v4681
      %4733 = vmatprep.subr.bf16.mxu0 0
      %4734 = vmatpush1.bf16.msra.mxu0 %v4682
      %4735 = vmatprep.subr.bf16.mxu0 0
      %4736 = vmatpush1.bf16.msra.mxu0 %v4683
      %4737 = vmatprep.subr.bf16.mxu0 0
      %4738 = vmatpush1.bf16.msra.mxu0 %v4684
      %4739 = vmatprep.subr.bf16.mxu0 0
      %4740 = vmatpush1.bf16.msra.mxu0 %v4685
      %4741 = vmatprep.subr.bf16.mxu0 0
      %4742 = vmatpush1.bf16.msra.mxu0 %v4686
      %4743 = vmatprep.subr.bf16.mxu0 0
      %4744 = vmatpush1.bf16.msra.mxu0 %v4687
      %4745 = vmatprep.subr.bf16.mxu0 0
      %4746 = vmatpush1.bf16.msra.mxu0 %v4688
      %4747 = vmatprep.subr.bf16.mxu0 0
      %4748 = vmatpush1.bf16.msra.mxu0 %v4689
      %4749 = vmatprep.subr.bf16.mxu0 0
      %4750 = vmatpush1.bf16.msra.mxu0 %v4690
      %4751 = vmatprep.subr.bf16.mxu0 0
      %4752 = vmatpush1.bf16.msra.mxu0 %v4691
      %4753 = vmatprep.subr.bf16.mxu0 0
      %4754 = vmatpush1.bf16.msra.mxu0 %v4692
      %4755 = vmatprep.subr.bf16.mxu0 0
      %4756 = vmatpush1.bf16.msra.mxu0 %v4693
      %4757 = vmatprep.subr.bf16.mxu0 0
      %4758 = vmatpush1.bf16.msra.mxu0 %v4694
      %4759 = vmatprep.mubr.bf16.mxu0 %v4438
      %4760 = vmatmul.mubr.bf16.gmra.mrb[0].mxu0 %v4374
      %v4761 = vpop.f32.mrb[0].mxu0
      %v4762 = vadd.f32 0.0, %v4761
      %v4763 = vpop.f32.mrb[0].mxu0
      %v4764 = vpop.f32.mrb[0].mxu0
      %v4765 = vadd.f32 0.0, %v4764
      %v4766 = vpop.f32.mrb[0].mxu0
      %4767 = vmatprep.mubr.bf16.mxu0 %v4439
      %4768 = vmatmul.mubr.bf16.gmra.mrb[0].mxu0 %v4375
      %v4769 = vpop.f32.mrb[0].mxu0
      %v4770 = vadd.f32 0.0, %v4769
      %v4771 = vpop.f32.mrb[0].mxu0
      %v4772 = vpop.f32.mrb[0].mxu0
      %v4773 = vadd.f32 0.0, %v4772
      %v4774 = vpop.f32.mrb[0].mxu0
      %4775 = vmatprep.mubr.bf16.mxu0 %v4440
      %4776 = vmatmul.mubr.bf16.gmra.mrb[0].mxu0 %v4376
      %v4777 = vpop.f32.mrb[0].mxu0
      %v4778 = vadd.f32 0.0, %v4777
      %v4779 = vpop.f32.mrb[0].mxu0
      %v4780 = vpop.f32.mrb[0].mxu0
      %v4781 = vadd.f32 0.0, %v4780
      %v4782 = vpop.f32.mrb[0].mxu0
      %4783 = vmatprep.mubr.bf16.mxu0 %v4441
      %4784 = vmatmul.mubr.bf16.gmra.mrb[0].mxu0 %v4377
      %v4785 = vpop.f32.mrb[0].mxu0
      %v4786 = vadd.f32 0.0, %v4785
      %v4787 = vpop.f32.mrb[0].mxu0
      %v4788 = vpop.f32.mrb[0].mxu0
      %v4789 = vadd.f32 0.0, %v4788
      %v4790 = vpop.f32.mrb[0].mxu0
      %4791 = vmatprep.mubr.bf16.mxu0 %v4442
      %4792 = vmatmul.mubr.bf16.gmra.mrb[0].mxu0 %v4378
      %v4793 = vpop.f32.mrb[0].mxu0
      %v4794 = vadd.f32 0.0, %v4793
      %v4795 = vpop.f32.mrb[0].mxu0
      %v4796 = vpop.f32.mrb[0].mxu0
      %v4797 = vadd.f32 0.0, %v4796
      %v4798 = vpop.f32.mrb[0].mxu0
      %4799 = vmatprep.mubr.bf16.mxu0 %v4443
      %4800 = vmatmul.mubr.bf16.gmra.mrb[0].mxu0 %v4379
      %v4801 = vpop.f32.mrb[0].mxu0
      %v4802 = vadd.f32 0.0, %v4801
      %v4803 = vpop.f32.mrb[0].mxu0
      %v4804 = vpop.f32.mrb[0].mxu0
      %v4805 = vadd.f32 0.0, %v4804
      %v4806 = vpop.f32.mrb[0].mxu0
      %4807 = vmatprep.mubr.bf16.mxu0 %v4444
      %4808 = vmatmul.mubr.bf16.gmra.mrb[0].mxu0 %v4380
      %v4809 = vpop.f32.mrb[0].mxu0
      %v4810 = vadd.f32 0.0, %v4809
      %v4811 = vpop.f32.mrb[0].mxu0
      %v4812 = vpop.f32.mrb[0].mxu0
      %v4813 = vadd.f32 0.0, %v4812
      %v4814 = vpop.f32.mrb[0].mxu0
      %4815 = vmatprep.mubr.bf16.mxu0 %v4445
      %4816 = vmatmul.mubr.bf16.gmra.mrb[0].mxu0 %v4381
      %v4817 = vpop.f32.mrb[0].mxu0
      %v4818 = vadd.f32 0.0, %v4817
      %v4819 = vpop.f32.mrb[0].mxu0
      %v4820 = vpop.f32.mrb[0].mxu0
      %v4821 = vadd.f32 0.0, %v4820
      %v4822 = vpop.f32.mrb[0].mxu0
      %4823 = vmatprep.mubr.bf16.mxu0 %v4446
      %4824 = vmatmul.mubr.bf16.gmra.mrb[0].mxu0 %v4382
      %v4825 = vpop.f32.mrb[0].mxu0
      %v4826 = vadd.f32 0.0, %v4825
      %v4827 = vpop.f32.mrb[0].mxu0
      %v4828 = vpop.f32.mrb[0].mxu0
      %v4829 = vadd.f32 0.0, %v4828
      %v4830 = vpop.f32.mrb[0].mxu0
      %4831 = vmatprep.mubr.bf16.mxu0 %v4447
      %4832 = vmatmul.mubr.bf16.gmra.mrb[0].mxu0 %v4383
      %v4833 = vpop.f32.mrb[0].mxu0
      %v4834 = vadd.f32 0.0, %v4833
      %v4835 = vpop.f32.mrb[0].mxu0
      %v4836 = vpop.f32.mrb[0].mxu0
      %v4837 = vadd.f32 0.0, %v4836
      %v4838 = vpop.f32.mrb[0].mxu0
      %4839 = vmatprep.mubr.bf16.mxu0 %v4448
      %4840 = vmatmul.mubr.bf16.gmra.mrb[0].mxu0 %v4384
      %v4841 = vpop.f32.mrb[0].mxu0
      %v4842 = vadd.f32 0.0, %v4841
      %v4843 = vpop.f32.mrb[0].mxu0
      %v4844 = vpop.f32.mrb[0].mxu0
      %v4845 = vadd.f32 0.0, %v4844
      %v4846 = vpop.f32.mrb[0].mxu0
      %4847 = vmatprep.mubr.bf16.mxu0 %v4449
      %4848 = vmatmul.mubr.bf16.gmra.mrb[0].mxu0 %v4385
      %v4849 = vpop.f32.mrb[0].mxu0
      %v4850 = vadd.f32 0.0, %v4849
      %v4851 = vpop.f32.mrb[0].mxu0
      %v4852 = vpop.f32.mrb[0].mxu0
      %v4853 = vadd.f32 0.0, %v4852
      %v4854 = vpop.f32.mrb[0].mxu0
      %4855 = vmatprep.mubr.bf16.mxu0 %v4450
      %4856 = vmatmul.mubr.bf16.gmra.mrb[0].mxu0 %v4386
      %v4857 = vpop.f32.mrb[0].mxu0
      %v4858 = vadd.f32 0.0, %v4857
      %v4859 = vpop.f32.mrb[0].mxu0
      %v4860 = vpop.f32.mrb[0].mxu0
      %v4861 = vadd.f32 0.0, %v4860
      %v4862 = vpop.f32.mrb[0].mxu0
      %4863 = vmatprep.mubr.bf16.mxu0 %v4451
      %4864 = vmatmul.mubr.bf16.gmra.mrb[0].mxu0 %v4387
      %v4865 = vpop.f32.mrb[0].mxu0
      %v4866 = vadd.f32 0.0, %v4865
      %v4867 = vpop.f32.mrb[0].mxu0
      %v4868 = vpop.f32.mrb[0].mxu0
      %v4869 = vadd.f32 0.0, %v4868
      %v4870 = vpop.f32.mrb[0].mxu0
      %4871 = vmatprep.mubr.bf16.mxu0 %v4452
      %4872 = vmatmul.mubr.bf16.gmra.mrb[0].mxu0 %v4388
      %v4873 = vpop.f32.mrb[0].mxu0
      %v4874 = vadd.f32 0.0, %v4873
      %v4875 = vpop.f32.mrb[0].mxu0
      %v4876 = vpop.f32.mrb[0].mxu0
      %v4877 = vadd.f32 0.0, %v4876
      %v4878 = vpop.f32.mrb[0].mxu0
      %4879 = vmatprep.mubr.bf16.mxu0 %v4453
      %4880 = vmatmul.mubr.bf16.gmra.mrb[0].mxu0 %v4389
      %v4881 = vpop.f32.mrb[0].mxu0
      %v4882 = vadd.f32 0.0, %v4881
      %v4883 = vpop.f32.mrb[0].mxu0
      %v4884 = vpop.f32.mrb[0].mxu0
      %v4885 = vadd.f32 0.0, %v4884
      %v4886 = vpop.f32.mrb[0].mxu0
      %4887 = vdwg.mxu0
      %4888 = vmatprep.subr.bf16.mxu0 0
      %4889 = vmatpush1.bf16.msra.mxu0 %v4695
      %4890 = vmatprep.subr.bf16.mxu0 0
      %4891 = vmatpush1.bf16.msra.mxu0 %v4696
      %4892 = vmatprep.subr.bf16.mxu0 0
      %4893 = vmatpush1.bf16.msra.mxu0 %v4697
      %4894 = vmatprep.subr.bf16.mxu0 0
      %4895 = vmatpush1.bf16.msra.mxu0 %v4698
      %4896 = vmatprep.subr.bf16.mxu0 0
      %4897 = vmatpush1.bf16.msra.mxu0 %v4699
      %4898 = vmatprep.subr.bf16.mxu0 0
      %4899 = vmatpush1.bf16.msra.mxu0 %v4700
      %4900 = vmatprep.subr.bf16.mxu0 0
      %4901 = vmatpush1.bf16.msra.mxu0 %v4701
      %4902 = vmatprep.subr.bf16.mxu0 0
      %4903 = vmatpush1.bf16.msra.mxu0 %v4702
      %4904 = vmatprep.subr.bf16.mxu0 0
      %4905 = vmatpush1.bf16.msra.mxu0 0
      %4906 = vmatprep.subr.bf16.mxu0 0
      %4907 = vmatpush1.bf16.msra.mxu0 0
      %4908 = vmatprep.subr.bf16.mxu0 0
      %4909 = vmatpush1.bf16.msra.mxu0 0
      %4910 = vmatprep.subr.bf16.mxu0 0
      %4911 = vmatpush1.bf16.msra.mxu0 0
      %4912 = vmatprep.subr.bf16.mxu0 0
      %4913 = vmatpush1.bf16.msra.mxu0 0
      %4914 = vmatprep.subr.bf16.mxu0 0
      %4915 = vmatpush1.bf16.msra.mxu0 0
      %4916 = vmatprep.subr.bf16.mxu0 0
      %4917 = vmatpush1.bf16.msra.mxu0 0
      %4918 = vmatprep.subr.bf16.mxu0 0
      %4919 = vmatpush1.bf16.msra.mxu0 0
      %4920 = vmatprep.mubr.bf16.mxu0 0
      %4921 = vmatmul.mubr.bf16.gmra.mrb[0].mxu0 %v4502
      %v4922 = vpop.f32.mrb[0].mxu0
      %v4923 = vadd.f32 %v4762, %v4922
      %v4924 = vpop.f32.mrb[0].mxu0
      %v4925 = vpop.f32.mrb[0].mxu0
      %v4926 = vadd.f32 %v4765, %v4925
      %v4927 = vpop.f32.mrb[0].mxu0
      %4928 = vmatprep.mubr.bf16.mxu0 0
      %4929 = vmatmul.mubr.bf16.gmra.mrb[0].mxu0 %v4503
      %v4930 = vpop.f32.mrb[0].mxu0
      %v4931 = vadd.f32 %v4770, %v4930
      %v4932 = vpop.f32.mrb[0].mxu0
      %v4933 = vpop.f32.mrb[0].mxu0
      %v4934 = vadd.f32 %v4773, %v4933
      %v4935 = vpop.f32.mrb[0].mxu0
      %4936 = vmatprep.mubr.bf16.mxu0 0
      %4937 = vmatmul.mubr.bf16.gmra.mrb[0].mxu0 %v4504
      %v4938 = vpop.f32.mrb[0].mxu0
      %v4939 = vadd.f32 %v4778, %v4938
      %v4940 = vpop.f32.mrb[0].mxu0
      %v4941 = vpop.f32.mrb[0].mxu0
      %v4942 = vadd.f32 %v4781, %v4941
      %v4943 = vpop.f32.mrb[0].mxu0
      %4944 = vmatprep.mubr.bf16.mxu0 0
      %4945 = vmatmul.mubr.bf16.gmra.mrb[0].mxu0 %v4505
      %v4946 = vpop.f32.mrb[0].mxu0
      %v4947 = vadd.f32 %v4786, %v4946
      %v4948 = vpop.f32.mrb[0].mxu0
      %v4949 = vpop.f32.mrb[0].mxu0
      %v4950 = vadd.f32 %v4789, %v4949
      %v4951 = vpop.f32.mrb[0].mxu0
      %4952 = vmatprep.mubr.bf16.mxu0 0
      %4953 = vmatmul.mubr.bf16.gmra.mrb[0].mxu0 %v4506
      %v4954 = vpop.f32.mrb[0].mxu0
      %v4955 = vadd.f32 %v4794, %v4954
      %v4956 = vpop.f32.mrb[0].mxu0
      %v4957 = vpop.f32.mrb[0].mxu0
      %v4958 = vadd.f32 %v4797, %v4957
      %v4959 = vpop.f32.mrb[0].mxu0
      %4960 = vmatprep.mubr.bf16.mxu0 0
      %4961 = vmatmul.mubr.bf16.gmra.mrb[0].mxu0 %v4507
      %v4962 = vpop.f32.mrb[0].mxu0
      %v4963 = vadd.f32 %v4802, %v4962
      %v4964 = vpop.f32.mrb[0].mxu0
      %v4965 = vpop.f32.mrb[0].mxu0
      %v4966 = vadd.f32 %v4805, %v4965
      %v4967 = vpop.f32.mrb[0].mxu0
      %4968 = vmatprep.mubr.bf16.mxu0 0
      %4969 = vmatmul.mubr.bf16.gmra.mrb[0].mxu0 %v4508
      %v4970 = vpop.f32.mrb[0].mxu0
      %v4971 = vadd.f32 %v4810, %v4970
      %v4972 = vpop.f32.mrb[0].mxu0
      %v4973 = vpop.f32.mrb[0].mxu0
      %v4974 = vadd.f32 %v4813, %v4973
      %v4975 = vpop.f32.mrb[0].mxu0
      %4976 = vmatprep.mubr.bf16.mxu0 0
      %4977 = vmatmul.mubr.bf16.gmra.mrb[0].mxu0 %v4509
      %v4978 = vpop.f32.mrb[0].mxu0
      %v4979 = vadd.f32 %v4818, %v4978
      %v4980 = vpop.f32.mrb[0].mxu0
      %v4981 = vpop.f32.mrb[0].mxu0
      %v4982 = vadd.f32 %v4821, %v4981
      %v4983 = vpop.f32.mrb[0].mxu0
      %4984 = vmatprep.mubr.bf16.mxu0 0
      %4985 = vmatmul.mubr.bf16.gmra.mrb[0].mxu0 %v4510
      %v4986 = vpop.f32.mrb[0].mxu0
      %v4987 = vadd.f32 %v4826, %v4986
      %v4988 = vpop.f32.mrb[0].mxu0
      %v4989 = vpop.f32.mrb[0].mxu0
      %v4990 = vadd.f32 %v4829, %v4989
      %v4991 = vpop.f32.mrb[0].mxu0
      %4992 = vmatprep.mubr.bf16.mxu0 0
      %4993 = vmatmul.mubr.bf16.gmra.mrb[0].mxu0 %v4511
      %v4994 = vpop.f32.mrb[0].mxu0
      %v4995 = vadd.f32 %v4834, %v4994
      %v4996 = vpop.f32.mrb[0].mxu0
      %v4997 = vpop.f32.mrb[0].mxu0
      %v4998 = vadd.f32 %v4837, %v4997
      %v4999 = vpop.f32.mrb[0].mxu0
      %5000 = vmatprep.mubr.bf16.mxu0 0
      %5001 = vmatmul.mubr.bf16.gmra.mrb[0].mxu0 %v4512
      %v5002 = vpop.f32.mrb[0].mxu0
      %v5003 = vadd.f32 %v4842, %v5002
      %v5004 = vpop.f32.mrb[0].mxu0
      %v5005 = vpop.f32.mrb[0].mxu0
      %v5006 = vadd.f32 %v4845, %v5005
      %v5007 = vpop.f32.mrb[0].mxu0
      %5008 = vmatprep.mubr.bf16.mxu0 0
      %5009 = vmatmul.mubr.bf16.gmra.mrb[0].mxu0 %v4513
      %v5010 = vpop.f32.mrb[0].mxu0
      %v5011 = vadd.f32 %v4850, %v5010
      %v5012 = vpop.f32.mrb[0].mxu0
      %v5013 = vpop.f32.mrb[0].mxu0
      %v5014 = vadd.f32 %v4853, %v5013
      %v5015 = vpop.f32.mrb[0].mxu0
      %5016 = vmatprep.mubr.bf16.mxu0 0
      %5017 = vmatmul.mubr.bf16.gmra.mrb[0].mxu0 %v4514
      %v5018 = vpop.f32.mrb[0].mxu0
      %v5019 = vadd.f32 %v4858, %v5018
      %v5020 = vpop.f32.mrb[0].mxu0
      %v5021 = vpop.f32.mrb[0].mxu0
      %v5022 = vadd.f32 %v4861, %v5021
      %v5023 = vpop.f32.mrb[0].mxu0
      %5024 = vmatprep.mubr.bf16.mxu0 0
      %5025 = vmatmul.mubr.bf16.gmra.mrb[0].mxu0 %v4515
      %v5026 = vpop.f32.mrb[0].mxu0
      %v5027 = vadd.f32 %v4866, %v5026
      %v5028 = vpop.f32.mrb[0].mxu0
      %v5029 = vpop.f32.mrb[0].mxu0
      %v5030 = vadd.f32 %v4869, %v5029
      %v5031 = vpop.f32.mrb[0].mxu0
      %5032 = vmatprep.mubr.bf16.mxu0 0
      %5033 = vmatmul.mubr.bf16.gmra.mrb[0].mxu0 %v4516
      %v5034 = vpop.f32.mrb[0].mxu0
      %v5035 = vadd.f32 %v4874, %v5034
      %v5036 = vpop.f32.mrb[0].mxu0
      %v5037 = vpop.f32.mrb[0].mxu0
      %v5038 = vadd.f32 %v4877, %v5037
      %v5039 = vpop.f32.mrb[0].mxu0
      %5040 = vmatprep.mubr.bf16.mxu0 0
      %5041 = vmatmul.mubr.bf16.gmra.mrb[0].mxu0 %v4517
      %v5042 = vpop.f32.mrb[0].mxu0
      %v5043 = vadd.f32 %v4882, %v5042
      %v5044 = vpop.f32.mrb[0].mxu0
      %v5045 = vpop.f32.mrb[0].mxu0
      %v5046 = vadd.f32 %v4885, %v5045
      %v5047 = vpop.f32.mrb[0].mxu0
      %5048 = vdwg.mxu0
      %v5049 = vadd.f32 %v3588, %v4923
      %v5050 = vadd.f32 %v3591, %v4926
      %v5051 = vadd.f32 %v3596, %v4931
      %v5052 = vadd.f32 %v3599, %v4934
      %v5053 = vadd.f32 %v3604, %v4939
      %v5054 = vadd.f32 %v3607, %v4942
      %v5055 = vadd.f32 %v3612, %v4947
      %v5056 = vadd.f32 %v3615, %v4950
      %v5057 = vadd.f32 %v3620, %v4955
      %v5058 = vadd.f32 %v3623, %v4958
      %v5059 = vadd.f32 %v3628, %v4963
      %v5060 = vadd.f32 %v3631, %v4966
      %v5061 = vadd.f32 %v3636, %v4971
      %v5062 = vadd.f32 %v3639, %v4974
      %v5063 = vadd.f32 %v3644, %v4979
      %v5064 = vadd.f32 %v3647, %v4982
      %v5065 = vadd.f32 %v3652, %v4987
      %v5066 = vadd.f32 %v3655, %v4990
      %v5067 = vadd.f32 %v3660, %v4995
      %v5068 = vadd.f32 %v3663, %v4998
      %v5069 = vadd.f32 %v3668, %v5003
      %v5070 = vadd.f32 %v3671, %v5006
      %v5071 = vadd.f32 %v3676, %v5011
      %v5072 = vadd.f32 %v3679, %v5014
      %v5073 = vadd.f32 %v3684, %v5019
      %v5074 = vadd.f32 %v3687, %v5022
      %v5075 = vadd.f32 %v3692, %v5027
      %v5076 = vadd.f32 %v3695, %v5030
      %v5077 = vadd.f32 %v3700, %v5035
      %v5078 = vadd.f32 %v3703, %v5038
      %v5079 = vadd.f32 %v3708, %v5043
      %v5080 = vadd.f32 %v3711, %v5046
      %v5081 = vpack.c.bf16 %v5050, %v5049
      %v5082 = vpack.c.bf16 %v5052, %v5051
      %v5083 = vpack.c.bf16 %v5054, %v5053
      %v5084 = vpack.c.bf16 %v5056, %v5055
      %v5085 = vpack.c.bf16 %v5058, %v5057
      %v5086 = vpack.c.bf16 %v5060, %v5059
      %v5087 = vpack.c.bf16 %v5062, %v5061
      %v5088 = vpack.c.bf16 %v5064, %v5063
      %v5089 = vpack.c.bf16 %v5066, %v5065
      %v5090 = vpack.c.bf16 %v5068, %v5067
      %v5091 = vpack.c.bf16 %v5070, %v5069
      %v5092 = vpack.c.bf16 %v5072, %v5071
      %v5093 = vpack.c.bf16 %v5074, %v5073
      %v5094 = vpack.c.bf16 %v5076, %v5075
      %v5095 = vpack.c.bf16 %v5078, %v5077
      %v5096 = vpack.c.bf16 %v5080, %v5079
      %v5113 = vunpack.c.l.b16 %v5081
      %v5114 = vunpack.c.h.b16 %v5081
      %v5115 = vunpack.c.l.b16 %v5082
      %v5116 = vunpack.c.h.b16 %v5082
      %v5117 = vunpack.c.l.b16 %v5083
      %v5118 = vunpack.c.h.b16 %v5083
      %v5119 = vunpack.c.l.b16 %v5084
      %v5120 = vunpack.c.h.b16 %v5084
      %v5121 = vunpack.c.l.b16 %v5085
      %v5122 = vunpack.c.h.b16 %v5085
      %v5123 = vunpack.c.l.b16 %v5086
      %v5124 = vunpack.c.h.b16 %v5086
      %v5125 = vunpack.c.l.b16 %v5087
      %v5126 = vunpack.c.h.b16 %v5087
      %v5127 = vunpack.c.l.b16 %v5088
      %v5128 = vunpack.c.h.b16 %v5088
      %v5129 = vunpack.c.l.b16 %v5089
      %v5130 = vunpack.c.h.b16 %v5089
      %v5131 = vunpack.c.l.b16 %v5090
      %v5132 = vunpack.c.h.b16 %v5090
      %v5133 = vunpack.c.l.b16 %v5091
      %v5134 = vunpack.c.h.b16 %v5091
      %v5135 = vunpack.c.l.b16 %v5092
      %v5136 = vunpack.c.h.b16 %v5092
      %v5137 = vunpack.c.l.b16 %v5093
      %v5138 = vunpack.c.h.b16 %v5093
      %v5139 = vunpack.c.l.b16 %v5094
      %v5140 = vunpack.c.h.b16 %v5094
      %v5141 = vunpack.c.l.b16 %v5095
      %v5142 = vunpack.c.h.b16 %v5095
      %v5143 = vunpack.c.l.b16 %v5096
      %v5144 = vunpack.c.h.b16 %v5096
      %v5145 = vpack.c.b16 %v5113, %v5113
      %v5146 = vpack.c.b16 %v5114, %v5114
      %v5147 = vpack.c.b16 %v5115, %v5115
      %v5148 = vpack.c.b16 %v5116, %v5116
      %v5149 = vpack.c.b16 %v5117, %v5117
      %v5150 = vpack.c.b16 %v5118, %v5118
      %v5151 = vpack.c.b16 %v5119, %v5119
      %v5152 = vpack.c.b16 %v5120, %v5120
      %v5153 = vpack.c.b16 %v5121, %v5121
      %v5154 = vpack.c.b16 %v5122, %v5122
      %v5155 = vpack.c.b16 %v5123, %v5123
      %v5156 = vpack.c.b16 %v5124, %v5124
      %v5157 = vpack.c.b16 %v5125, %v5125
      %v5158 = vpack.c.b16 %v5126, %v5126
      %v5159 = vpack.c.b16 %v5127, %v5127
      %v5160 = vpack.c.b16 %v5128, %v5128
      %v5161 = vpack.c.b16 %v5129, %v5129
      %v5162 = vpack.c.b16 %v5130, %v5130
      %v5163 = vpack.c.b16 %v5131, %v5131
      %v5164 = vpack.c.b16 %v5132, %v5132
      %v5165 = vpack.c.b16 %v5133, %v5133
      %v5166 = vpack.c.b16 %v5134, %v5134
      %v5167 = vpack.c.b16 %v5135, %v5135
      %v5168 = vpack.c.b16 %v5136, %v5136
      %v5169 = vpack.c.b16 %v5137, %v5137
      %v5170 = vpack.c.b16 %v5138, %v5138
      %v5171 = vpack.c.b16 %v5139, %v5139
      %v5172 = vpack.c.b16 %v5140, %v5140
      %v5173 = vpack.c.b16 %v5141, %v5141
      %v5174 = vpack.c.b16 %v5142, %v5142
      %v5175 = vpack.c.b16 %v5143, %v5143
      %v5176 = vpack.c.b16 %v5144, %v5144
      %5209 = vst [vmem:[%s260] sm:$0xf] %v5145
      %5210 = vst [vmem:[%s260 + $0x4] sm:$0xf] %v5146
      %5211 = vst [vmem:[%s260 + $0x8] sm:$0xf] %v5147
      %5212 = vst [vmem:[%s260 + $0xc] sm:$0xf] %v5148
      %5213 = vst [vmem:[%s260 + $0x10] sm:$0xf] %v5149
      %5214 = vst [vmem:[%s260 + $0x14] sm:$0xf] %v5150
      %5215 = vst [vmem:[%s260 + $0x18] sm:$0xf] %v5151
      %5216 = vst [vmem:[%s260 + $0x1c] sm:$0xf] %v5152
      %5217 = vst [vmem:[%s260 + $0x20] sm:$0xf] %v5153
      %5218 = vst [vmem:[%s260 + $0x24] sm:$0xf] %v5154
      %5219 = vst [vmem:[%s260 + $0x28] sm:$0xf] %v5155
      %5220 = vst [vmem:[%s260 + $0x2c] sm:$0xf] %v5156
      %5221 = vst [vmem:[%s260 + $0x30] sm:$0xf] %v5157
      %5222 = vst [vmem:[%s260 + $0x34] sm:$0xf] %v5158
      %5223 = vst [vmem:[%s260 + $0x38] sm:$0xf] %v5159
      %5224 = vst [vmem:[%s260 + $0x3c] sm:$0xf] %v5160
      %5225 = vst [vmem:[%s260 + $0x40] sm:$0xf] %v5161
      %5226 = vst [vmem:[%s260 + $0x44] sm:$0xf] %v5162
      %5227 = vst [vmem:[%s260 + $0x48] sm:$0xf] %v5163
      %5228 = vst [vmem:[%s260 + $0x4c] sm:$0xf] %v5164
      %5229 = vst [vmem:[%s260 + $0x50] sm:$0xf] %v5165
      %5230 = vst [vmem:[%s260 + $0x54] sm:$0xf] %v5166
      %5231 = vst [vmem:[%s260 + $0x58] sm:$0xf] %v5167
      %5232 = vst [vmem:[%s260 + $0x5c] sm:$0xf] %v5168
      %5233 = vst [vmem:[%s260 + $0x60] sm:$0xf] %v5169
      %5234 = vst [vmem:[%s260 + $0x64] sm:$0xf] %v5170
      %5235 = vst [vmem:[%s260 + $0x68] sm:$0xf] %v5171
      %5236 = vst [vmem:[%s260 + $0x6c] sm:$0xf] %v5172
      %5237 = vst [vmem:[%s260 + $0x70] sm:$0xf] %v5173
      %5238 = vst [vmem:[%s260 + $0x74] sm:$0xf] %v5174
      %5239 = vst [vmem:[%s260 + $0x78] sm:$0xf] %v5175
      %5240 = vst [vmem:[%s260 + $0x7c] sm:$0xf] %v5176
      %v5241 = vadd.f32 %v5049, %v5050
      %v5242 = vadd.f32 %v5241, %v5051
      %v5243 = vadd.f32 %v5242, %v5052
      %v5244 = vadd.f32 %v5243, %v5053
      %v5245 = vadd.f32 %v5244, %v5054
      %v5246 = vadd.f32 %v5245, %v5055
      %v5247 = vadd.f32 %v5246, %v5056
      %v5248 = vadd.f32 %v5247, %v5057
      %v5249 = vadd.f32 %v5248, %v5058
      %v5250 = vadd.f32 %v5249, %v5059
      %v5251 = vadd.f32 %v5250, %v5060
      %v5252 = vadd.f32 %v5251, %v5061
      %v5253 = vadd.f32 %v5252, %v5062
      %v5254 = vadd.f32 %v5253, %v5063
      %v5255 = vadd.f32 %v5254, %v5064
      %v5256 = vadd.f32 %v5255, %v5065
      %v5257 = vadd.f32 %v5256, %v5066
      %v5258 = vadd.f32 %v5257, %v5067
      %v5259 = vadd.f32 %v5258, %v5068
      %v5260 = vadd.f32 %v5259, %v5069
      %v5261 = vadd.f32 %v5260, %v5070
      %v5262 = vadd.f32 %v5261, %v5071
      %v5263 = vadd.f32 %v5262, %v5072
      %v5264 = vadd.f32 %v5263, %v5073
      %v5265 = vadd.f32 %v5264, %v5074
      %v5266 = vadd.f32 %v5265, %v5075
      %v5267 = vadd.f32 %v5266, %v5076
      %v5268 = vadd.f32 %v5267, %v5077
      %v5269 = vadd.f32 %v5268, %v5078
      %v5270 = vadd.f32 %v5269, %v5079
      %v5271 = vadd.f32 %v5270, %v5080
      %v5272 = vrot.slane %v5271, 4
      %v5273 = vadd.f32 %v5271, %v5272
      %v5274 = vrot.slane %v5273, 2
      %v5275 = vadd.f32 %v5273, %v5274
      %v5276 = vrot.slane %v5275, 1
      %v5277 = vadd.f32 %v5275, %v5276
      %5278 = vst [vmem:[%s268] sm:$0x1] %v5277
      %v5279 = vmul.f32 %v5049, %v5049
      %v5280 = vmul.f32 %v5050, %v5050
      %v5281 = vmul.f32 %v5051, %v5051
      %v5282 = vmul.f32 %v5052, %v5052
      %v5283 = vmul.f32 %v5053, %v5053
      %v5284 = vmul.f32 %v5054, %v5054
      %v5285 = vmul.f32 %v5055, %v5055
      %v5286 = vmul.f32 %v5056, %v5056
      %v5287 = vmul.f32 %v5057, %v5057
      %v5288 = vmul.f32 %v5058, %v5058
      %v5289 = vmul.f32 %v5059, %v5059
      %v5290 = vmul.f32 %v5060, %v5060
      %v5291 = vmul.f32 %v5061, %v5061
      %v5292 = vmul.f32 %v5062, %v5062
      %v5293 = vmul.f32 %v5063, %v5063
      %v5294 = vmul.f32 %v5064, %v5064
      %v5295 = vmul.f32 %v5065, %v5065
      %v5296 = vmul.f32 %v5066, %v5066
      %v5297 = vmul.f32 %v5067, %v5067
      %v5298 = vmul.f32 %v5068, %v5068
      %v5299 = vmul.f32 %v5069, %v5069
      %v5300 = vmul.f32 %v5070, %v5070
      %v5301 = vmul.f32 %v5071, %v5071
      %v5302 = vmul.f32 %v5072, %v5072
      %v5303 = vmul.f32 %v5073, %v5073
      %v5304 = vmul.f32 %v5074, %v5074
      %v5305 = vmul.f32 %v5075, %v5075
      %v5306 = vmul.f32 %v5076, %v5076
      %v5307 = vmul.f32 %v5077, %v5077
      %v5308 = vmul.f32 %v5078, %v5078
      %v5309 = vmul.f32 %v5079, %v5079
      %v5310 = vmul.f32 %v5080, %v5080
      %v5311 = vadd.f32 %v5279, %v5280
      %v5312 = vadd.f32 %v5311, %v5281
      %v5313 = vadd.f32 %v5312, %v5282
      %v5314 = vadd.f32 %v5313, %v5283
      %v5315 = vadd.f32 %v5314, %v5284
      %v5316 = vadd.f32 %v5315, %v5285
      %v5317 = vadd.f32 %v5316, %v5286
      %v5318 = vadd.f32 %v5317, %v5287
      %v5319 = vadd.f32 %v5318, %v5288
      %v5320 = vadd.f32 %v5319, %v5289
      %v5321 = vadd.f32 %v5320, %v5290
      %v5322 = vadd.f32 %v5321, %v5291
      %v5323 = vadd.f32 %v5322, %v5292
      %v5324 = vadd.f32 %v5323, %v5293
      %v5325 = vadd.f32 %v5324, %v5294
      %v5326 = vadd.f32 %v5325, %v5295
      %v5327 = vadd.f32 %v5326, %v5296
      %v5328 = vadd.f32 %v5327, %v5297
      %v5329 = vadd.f32 %v5328, %v5298
      %v5330 = vadd.f32 %v5329, %v5299
      %v5331 = vadd.f32 %v5330, %v5300
      %v5332 = vadd.f32 %v5331, %v5301
      %v5333 = vadd.f32 %v5332, %v5302
      %v5334 = vadd.f32 %v5333, %v5303
      %v5335 = vadd.f32 %v5334, %v5304
      %v5336 = vadd.f32 %v5335, %v5305
      %v5337 = vadd.f32 %v5336, %v5306
      %v5338 = vadd.f32 %v5337, %v5307
      %v5339 = vadd.f32 %v5338, %v5308
      %v5340 = vadd.f32 %v5339, %v5309
      %v5341 = vadd.f32 %v5340, %v5310
      %v5342 = vrot.slane %v5341, 4
      %v5343 = vadd.f32 %v5341, %v5342
      %v5344 = vrot.slane %v5343, 2
      %v5345 = vadd.f32 %v5343, %v5344
      %v5346 = vrot.slane %v5345, 1
      %v5347 = vadd.f32 %v5345, %v5346
      %5348 = vst [vmem:[%s268 + $0x1] sm:$0x1] %v5347
      %s5349 = smul.u32 16, %s22
      %p5350 = scmp.lt.s32.totalorder %s21, 1
      %s5351 = scalar_select %p5350, %s21, 1
      %p5352 = scmp.lt.s32.totalorder %s5349, 15
      %s5353 = scalar_select %p5352, %s5349, 15
      %s5354 = smul.addr %s5353, 2
      %s5355 = smul.addr %s5351, 32
      %s5356 = sadd.s32 %s5354, %s5355
      %s5357 = smul.addr %s5356, 4
      %s5358 = scalar_lea.vmem %s4, %s5357
      %p5359 = scmp.lt.s32.totalorder %s21, 1
      %s5360 = scalar_select %p5359, %s21, 1
      %p5361 = scmp.lt.s32.totalorder %s22, 0
      %s5362 = scalar_select %p5361, %s22, 0
      %s5363 = sadd.s32 %s5362, %s5360
      %s5364 = smul.addr %s5363, 2
      %s5365 = scalar_lea.vmem %s5, %s5364
      // Predicated region
      $region41: #{bottleneck_forward.6} parent=35 // pred_check
        %p5366 = pneg %p138
      $region42: #{bottleneck_forward.6} parent=35 // pred_check_branch
        %5368 = sbr.rel (%p5366) target = $region44
      $region43: #{bottleneck_forward.6} parent=35 // pred_region
        %s5369 = smul.u32 16, %s22
      $region44: #{bottleneck_forward.6} parent=35 // pred_fallthru
        _
      // Predicated region
      $region45: #{bottleneck_forward.6} parent=35 // pred_check
        %p5370 = pneg %p166
      $region46: #{bottleneck_forward.6} parent=35 // pred_check_branch
        %5372 = sbr.rel (%p5370) target = $region48
      $region47: #{bottleneck_forward.6} parent=35 // pred_region
        _
      $region48: #{bottleneck_forward.6} parent=35 // pred_fallthru
        _
    $region36: #{bottleneck_forward.6} parent=5 // pred_fallthru
      _
    %p5373 = scmp.le.s32.totalorder 2, %s12
    // Predicated region
    $region49: #{bottleneck_forward.6} parent=5 // pred_check
      %p5374 = pneg %p5373
    $region50: #{bottleneck_forward.6} parent=5 // pred_check_branch
      %5376 = sbr.rel (%p5374) target = $region52
    $region51: #{bottleneck_forward.6} parent=5 // pred_region
      %s5377 = ssub.s32 %s12, 2
      // Predicated region
      $region53: #{bottleneck_forward.6} parent=51 // pred_check
        %p5378 = pneg %p144
      $region54: #{bottleneck_forward.6} parent=51 // pred_check_branch
        %5380 = sbr.rel (%p5378) target = $region56
      $region55: #{bottleneck_forward.6} parent=51 // pred_region
        %s5381 = smul.u32 16, %s24
        %p5382 = scmp.lt.s32.totalorder %s23, 1
        %s5383 = scalar_select %p5382, %s23, 1
        %p5384 = scmp.lt.s32.totalorder %s5381, 15
        %s5385 = scalar_select %p5384, %s5381, 15
        %s5386 = smul.addr %s5385, 2
        %s5387 = smul.addr %s5383, 32
        %s5388 = sadd.s32 %s5386, %s5387
        %s5389 = smul.addr %s5388, 4
        %s5390 = scalar_lea.vmem %s4, %s5389
      $region56: #{bottleneck_forward.6} parent=51 // pred_fallthru
        _
      // Predicated region
      $region57: #{bottleneck_forward.6} parent=51 // pred_check
        %p5391 = pneg %p172
      $region58: #{bottleneck_forward.6} parent=51 // pred_check_branch
        %5393 = sbr.rel (%p5391) target = $region60
      $region59: #{bottleneck_forward.6} parent=51 // pred_region
        %p5394 = scmp.lt.s32.totalorder %s23, 1
        %s5395 = scalar_select %p5394, %s23, 1
        %p5396 = scmp.lt.s32.totalorder %s24, 0
        %s5397 = scalar_select %p5396, %s24, 0
        %s5398 = sadd.s32 %s5397, %s5395
        %s5399 = smul.addr %s5398, 2
        %s5400 = scalar_lea.vmem %s5, %s5399
      $region60: #{bottleneck_forward.6} parent=51 // pred_fallthru
        _
    $region52: #{bottleneck_forward.6} parent=5 // pred_fallthru
      _
  $region6: #{bottleneck_forward.6} parent=0 // loop_footer
    %s16 = sadd.s32 1, %s12
  $region7: #{bottleneck_forward.6} parent=0 // loop_footer_branch
    %11 = sbr.rel target = $region3
  $region8: #{bottleneck_forward.6} parent=0 // loop_exit
    _

</llo_original>
